<compile_context>
chip_gen: v6e
topology: v6e:2x2x1
jax: 0.10.0
libtpu: 0.0.40
codegen_flags: <defaults>
</compile_context>

<pallas_src>
import functools

import jax
import jax.numpy as jnp
import numpy as np
from jax import lax
from jax.experimental import pallas as pl
from jax.experimental.pallas import tpu as pltpu

_FLAT = 18496               # 64 * 17 * 17, fixed by the module (flat_size)
_TK = 3712                  # dense-head K tile (29 * 128 -> lane-aligned blocks)
_KP = 5 * _TK               # 18560 = _FLAT zero-padded to a multiple of _TK (and 128)


# -----------------------------------------------------------------------------
# Fused Conv(3x3, VALID) + bias + ReLU + MaxPool(2x2, stride 2) kernel
# -----------------------------------------------------------------------------
def _conv_relu_pool_kernel(xe_ref, xo_ref, w_ref, b_ref, out_ref, *, hp, n_dy):
    """One grid step = one image.

    xe_ref / xo_ref : (1, Hs, wp, K) bf16 tap-stacked input, even / odd base columns.
    w_ref           : (n_dy, K, cout) bf16 stacked weights.
    b_ref           : (1, cout) f32 bias.
    out_ref         : (1, hp, wp, cout) f32 pooled output.

    For pooled row p, row-parity r, column-parity v the conv output row
    (pooled-column indexed) is sum_d X[2p+r+d] @ W[d]; the max over (r, v) is the
    2x2 max-pool, then bias + ReLU (ReLU/max commute; bias is shared by the window).
    """
    bias = b_ref[...]                                   # hoisted out of the row loop
    cout = out_ref.shape[-1]
    kdim = w_ref.shape[1]

    # Hoist weight reads only when they are tiny (conv1: (27,64) bf16 ~ 2 vregs).
    # For conv2/3 the 3 x (192,64) bf16 taps would pin ~36 vregs and force spills;
    # re-reading them from VMEM is a handful of vld hidden under the matmuls.
    hoist_w = (n_dy * kdim * cout * 2) <= (16 * 1024)
    w_taps = [w_ref[d] for d in range(n_dy)] if hoist_w else None

    def conv_row(src_ref, row0):
        # (wp, cout) f32: conv output at conv-row `row0` for one column parity.
        acc = None
        for d in range(n_dy):
            w_d = w_taps[d] if hoist_w else w_ref[d]
            part = jnp.dot(src_ref[0, row0 + d], w_d,
                           preferred_element_type=jnp.float32)
            acc = part if acc is None else acc + part
        return acc

    def row_body(p, carry):
        base = 2 * p
        # pairwise folding: at most two (wp, cout) f32 accumulators live at a time
        m = jnp.maximum(conv_row(xe_ref, base), conv_row(xo_ref, base))      # r=0
        m = jnp.maximum(m, conv_row(xe_ref, base + 1))                       # r=1, v=0
        m = jnp.maximum(m, conv_row(xo_ref, base + 1))                       # r=1, v=1
        out_ref[0, p] = jnp.maximum(m + bias, 0.0).astype(out_ref.dtype)
        return carry

    lax.fori_loop(0, hp, row_body, 0)


def conv_relu_pool(x_nhwc, w_stacked, b_2d):
    """x: (N,H,W,Cin) f32, w_stacked: (n_dy, K, Cout) bf16, b: (1, Cout) f32.

    Returns (N, Hp, Wp, Cout) f32 = Conv3x3(VALID) -> +bias -> ReLU -> MaxPool 2x2/2.
    """
    n, h, w, cin = x_nhwc.shape
    n_dy, kdim, cout = w_stacked.shape
    assert kdim == (9 if n_dy == 1 else 3) * cin
    hp, wp = (h - 2) // 2, (w - 2) // 2

    xb = x_nhwc.astype(jnp.bfloat16)
    if n_dy == 1:   # full im2col: stack (dy, dx, cin) on the contraction axis (conv1)
        stk = jnp.concatenate(
            [xb[:, dy:dy + h - 2, dx:dx + w - 2, :]
             for dy in range(3) for dx in range(3)], axis=-1)          # (N, H-2, W-2, 9*cin)
    else:           # dx-stacking: (dx, cin) on the contraction axis, dy loop in-kernel
        stk = jnp.concatenate(
            [xb[:, :, dx:dx + w - 2, :] for dx in range(3)], axis=-1)  # (N, H, W-2, 3*cin)
    # even / odd base columns -> every in-kernel read is a contiguous (wp, K) slab
    xe = stk[:, :, 0::2, :][:, :, :wp, :]
    xo = stk[:, :, 1::2, :][:, :, :wp, :]
    hs = xe.shape[1]

    kernel = functools.partial(_conv_relu_pool_kernel, hp=hp, n_dy=n_dy)
    return pl.pallas_call(
        kernel,
        out_shape=jax.ShapeDtypeStruct((n, hp, wp, cout), jnp.float32),
        grid_spec=pltpu.PrefetchScalarGridSpec(
            num_scalar_prefetch=0,
            grid=(n,),                                     # one grid step per image
            in_specs=[
                pl.BlockSpec((1, hs, wp, kdim), lambda b: (b, 0, 0, 0)),
                pl.BlockSpec((1, hs, wp, kdim), lambda b: (b, 0, 0, 0)),
                pl.BlockSpec((n_dy, kdim, cout), lambda b: (0, 0, 0)),
                pl.BlockSpec((1, cout), lambda b: (0, 0)),
            ],
            out_specs=pl.BlockSpec((1, hp, wp, cout), lambda b: (b, 0, 0, 0)),
        ),
        compiler_params=pltpu.CompilerParams(
            dimension_semantics=("parallel",),             # batch splits across TCs
            # Worst case (conv1) ~19 MiB: per-image xe/xo bf16 blocks are lane-padded
            # (K=27 -> 128 lanes), x2 double-buffering, + the f32 output slab.
            # 40 MiB keeps margin while staying well under v7x's 64 MiB physical VMEM.
            vmem_limit_bytes=40 * 1024 * 1024,
        ),
    )(xe, xo, w_stacked, b_2d)


# -----------------------------------------------------------------------------
# Dense head: FC(18496 -> 32) + ReLU + FC(32 -> 2), K-tiled with a VMEM accumulator
# -----------------------------------------------------------------------------
def _dense_head_kernel(x_ref, w1_ref, b1_ref, w2_ref, b2_ref, o_ref, acc_ref):
    k = pl.program_id(0)

    @pl.when(k == 0)
    def _():
        acc_ref[...] = jnp.zeros_like(acc_ref)

    acc_ref[...] += jnp.dot(x_ref[...], w1_ref[...],
                            preferred_element_type=jnp.float32)

    @pl.when(k == pl.num_programs(0) - 1)
    def _():
        hvec = jnp.maximum(acc_ref[...] + b1_ref[...], 0.0).astype(w2_ref.dtype)
        o_ref[...] = (jnp.dot(hvec, w2_ref[...], preferred_element_type=jnp.float32)
                      + b2_ref[...]).astype(o_ref.dtype)


def dense_head(c3_nhwc, w1, b1, w2, b2):
    """c3_nhwc: (N,17,17,64) f32 is flattened in NHWC order (fc1_w rows were permuted
    once at param-prep time to match), so no NCHW transpose is on the dense path.
    w1: (_KP, 32) bf16 zero-padded, w2: (32, 2) bf16, biases f32 (1, .)."""
    n = c3_nhwc.shape[0]
    flat = c3_nhwc.reshape(n, -1).astype(jnp.bfloat16)     # contiguous -> free reshape
    flat = jnp.pad(flat, ((0, 0), (0, w1.shape[0] - flat.shape[1])))
    nk = w1.shape[0] // _TK
    nh, nout = w2.shape

    return pl.pallas_call(
        _dense_head_kernel,
        out_shape=jax.ShapeDtypeStruct((n, nout), jnp.float32),
        grid_spec=pltpu.PrefetchScalarGridSpec(
            num_scalar_prefetch=0,
            grid=(nk,),                                    # reduction over K tiles
            in_specs=[
                pl.BlockSpec((n, _TK), lambda k: (0, k)),
                pl.BlockSpec((_TK, nh), lambda k: (k, 0)),
                pl.BlockSpec((1, nh), lambda k: (0, 0)),
                pl.BlockSpec((nh, nout), lambda k: (0, 0)),
                pl.BlockSpec((1, nout), lambda k: (0, 0)),
            ],
            out_specs=pl.BlockSpec((n, nout), lambda k: (0, 0)),
            scratch_shapes=[pltpu.VMEM((n, nh), jnp.float32)],
        ),
        compiler_params=pltpu.CompilerParams(
            dimension_semantics=("arbitrary",),            # K axis carries the accumulator
            vmem_limit_bytes=16 * 1024 * 1024,
        ),
    )(flat, w1, b1, w2, b2)


# -----------------------------------------------------------------------------
# Full forward pass (matches PetNet.forward)
# -----------------------------------------------------------------------------
def petnet_forward(x_nchw, kp):
    x = jnp.transpose(x_nchw, (0, 2, 3, 1))                # NCHW -> NHWC once (glue)
    c1 = conv_relu_pool(x,  kp["conv1_w"], kp["conv1_b"])
    c2 = conv_relu_pool(c1, kp["conv2_w"], kp["conv2_b"])
    c3 = conv_relu_pool(c2, kp["conv3_w"], kp["conv3_b"])
    dense = dense_head(c3, kp["fc1_w"], kp["fc1_b"], kp["fc2_w"], kp["fc2_b"])
    # aux conv outputs in NCHW only because the module's forward() returns them
    c1n = jnp.transpose(c1, (0, 3, 1, 2))
    c2n = jnp.transpose(c2, (0, 3, 1, 2))
    c3n = jnp.transpose(c3, (0, 3, 1, 2))
    return dense, (c1n, c2n, c3n)


# -----------------------------------------------------------------------------
# Parameters: PyTorch-layout init + one-time repack into kernel-friendly layouts
# -----------------------------------------------------------------------------
def init_params(key):
    nfeat = 64
    ks = jax.random.split(key, 10)
    conv_w = lambda k, co, ci: jax.random.normal(k, (co, ci, 3, 3), jnp.float32) * 0.05
    return {
        "conv1_w": conv_w(ks[0], nfeat, 3),
        "conv1_b": jax.random.normal(ks[1], (nfeat,), jnp.float32) * 0.05,
        "conv2_w": conv_w(ks[2], nfeat, nfeat),
        "conv2_b": jax.random.normal(ks[3], (nfeat,), jnp.float32) * 0.05,
        "conv3_w": conv_w(ks[4], nfeat, nfeat),
        "conv3_b": jax.random.normal(ks[5], (nfeat,), jnp.float32) * 0.05,
        "fc1_w": jax.random.normal(ks[6], (_FLAT, 32), jnp.float32) * 0.01,
        "fc1_b": jax.random.normal(ks[7], (32,), jnp.float32) * 0.01,
        "fc2_w": jax.random.normal(ks[8], (32, 2), jnp.float32) * 0.1,
        "fc2_b": jax.random.normal(ks[9], (2,), jnp.float32) * 0.1,
    }


def prepare_params(p):
    """One-time (outside jit) repack of PyTorch-layout weights into kernel layouts."""
    def stack_full(w):     # (cout,cin,3,3) -> (1, 9*cin, cout): [dy, dx, cin] on K
        cout, cin = w.shape[0], w.shape[1]
        return jnp.transpose(w, (2, 3, 1, 0)).reshape(1, 9 * cin, cout).astype(jnp.bfloat16)

    def stack_dx(w):       # (cout,cin,3,3) -> (3, 3*cin, cout): per-dy, [dx, cin] on K
        cout, cin = w.shape[0], w.shape[1]
        return jnp.transpose(w, (2, 3, 1, 0)).reshape(3, 3 * cin, cout).astype(jnp.bfloat16)

    # fc1_w rows are in NCHW-flatten order (c*17*17 + y*17 + x); permute once into the
    # NHWC-flatten order ((y*17 + x)*64 + c) used by the kernel, then zero-pad K -> _KP.
    w1 = p["fc1_w"].reshape(64, 17, 17, -1)
    w1 = jnp.transpose(w1, (1, 2, 0, 3)).reshape(_FLAT, -1)
    w1 = jnp.pad(w1, ((0, _KP - _FLAT), (0, 0))).astype(jnp.bfloat16)

    return {
        "conv1_w": stack_full(p["conv1_w"]), "conv1_b": p["conv1_b"].reshape(1, -1),
        "conv2_w": stack_dx(p["conv2_w"]),   "conv2_b": p["conv2_b"].reshape(1, -1),
        "conv3_w": stack_dx(p["conv3_w"]),   "conv3_b": p["conv3_b"].reshape(1, -1),
        "fc1_w": w1, "fc1_b": p["fc1_b"].reshape(1, -1),
        "fc2_w": p["fc2_w"].astype(jnp.bfloat16), "fc2_b": p["fc2_b"].reshape(1, -1),
    }


# -----------------------------------------------------------------------------
# Pure-JAX reference (f32) for a loose numerical check
# -----------------------------------------------------------------------------
def petnet_reference(x_nchw, params):
    def block(x, w, b):
        y = lax.conv_general_dilated(x, w, window_strides=(1, 1), padding="VALID",
                                     dimension_numbers=("NCHW", "OIHW", "NCHW"))
        y = jnp.maximum(y + b[None, :, None, None], 0.0)
        return lax.reduce_window(y, -jnp.inf, lax.max,
                                 (1, 1, 2, 2), (1, 1, 2, 2), "VALID")
    c1 = block(x_nchw, params["conv1_w"], params["conv1_b"])
    c2 = block(c1, params["conv2_w"], params["conv2_b"])
    c3 = block(c2, params["conv3_w"], params["conv3_b"])
    flat = c3.reshape(c3.shape[0], -1)
    h = jnp.maximum(flat @ params["fc1_w"] + params["fc1_b"], 0.0)
    return h @ params["fc2_w"] + params["fc2_b"], (c1, c2, c3)


if __name__ == "__main__":
    key = jax.random.PRNGKey(0)
    pkey, xkey = jax.random.split(key)
    params = init_params(pkey)
    kparams = prepare_params(params)      # one-time weight repack (outside jit)

    # batch=2; spatial 150x150 is forced by the module's flat_size = 18496 = 64*17*17
    x = jax.random.normal(xkey, (2, 3, 150, 150), jnp.float32)

    dense, (c1, c2, c3) = jax.jit(petnet_forward)(x, kparams)
    jax.block_until_ready(dense)

    assert dense.shape == (2, 2)
    assert c1.shape == (2, 64, 74, 74)
    assert c2.shape == (2, 64, 36, 36)
    assert c3.shape == (2, 64, 17, 17)

    # loose sanity check vs a pure-f32 reference (kernel uses bf16 MXU inputs)
    rdense, (rc1, rc2, rc3) = jax.jit(petnet_reference)(x, params)
    np.testing.assert_allclose(np.asarray(c1), np.asarray(rc1), rtol=5e-2, atol=5e-2)
    np.testing.assert_allclose(np.asarray(c2), np.asarray(rc2), rtol=5e-2, atol=5e-2)
    np.testing.assert_allclose(np.asarray(c3), np.asarray(rc3), rtol=5e-2, atol=5e-2)
    np.testing.assert_allclose(np.asarray(dense), np.asarray(rdense), rtol=5e-2, atol=5e-2)

    print("KERNEL_OK")
</pallas_src>

<mosaic_0001>
module attributes {stable_mosaic.version = 11 : i64} {
  func.func @_conv_relu_pool_kernel(%arg0: i32, %arg1: memref<1x148x74x27xbf16, #tpu.memory_space<vmem>>, %arg2: memref<1x148x74x27xbf16, #tpu.memory_space<vmem>>, %arg3: memref<1x27x64xbf16, #tpu.memory_space<vmem>>, %arg4: memref<1x64xf32, #tpu.memory_space<vmem>>, %arg5: memref<1x74x74x64xf32, #tpu.memory_space<vmem>>) attributes {dimension_semantics = [#tpu.dimension_semantics<parallel>], iteration_bounds = array<i64: 2>, scalar_prefetch = 0 : i64, scratch_operands = 0 : i64, tpu.core_type = #tpu.core_type<tc>, window_params = [{transform_indices = @transform_0, window_bounds = array<i64: 1, 148, 74, 27>}, {transform_indices = @transform_1, window_bounds = array<i64: 1, 148, 74, 27>}, {pipeline_mode = #tpu.pipeline_mode<synchronous>, transform_indices = @transform_2, window_bounds = array<i64: 1, 27, 64>}, {pipeline_mode = #tpu.pipeline_mode<synchronous>, transform_indices = @transform_3, window_bounds = array<i64: 1, 64>}, {transform_indices = @transform_4, window_bounds = array<i64: 1, 74, 74, 64>}]} {
    %c0 = arith.constant 0 : index
    %c0_0 = arith.constant 0 : index
    %0 = vector.load %arg4[%c0, %c0_0] : memref<1x64xf32, #tpu.memory_space<vmem>>, vector<1x64xf32>
    %c0_1 = arith.constant 0 : index
    %c0_2 = arith.constant 0 : index
    %c0_3 = arith.constant 0 : index
    %1 = vector.load %arg3[%c0_1, %c0_2, %c0_3] : memref<1x27x64xbf16, #tpu.memory_space<vmem>>, vector<1x27x64xbf16>
    %2 = vector.shape_cast %1 : vector<1x27x64xbf16> to vector<27x64xbf16>
    %c0_i32 = arith.constant 0 : i32
    %c74_i32 = arith.constant 74 : i32
    %3 = arith.addi %c0_i32, %c74_i32 : i32
    %c1_i32 = arith.constant 1 : i32
    scf.for %arg6 = %c0_i32 to %3 step %c1_i32  : i32 {
      %c2_i32 = arith.constant 2 : i32
      %4 = arith.muli %c2_i32, %arg6 : i32
      %c0_i32_5 = arith.constant 0 : i32
      %5 = arith.addi %4, %c0_i32_5 : i32
      %c0_6 = arith.constant 0 : index
      %6 = arith.index_cast %5 : i32 to index
      %c0_7 = arith.constant 0 : index
      %c0_8 = arith.constant 0 : index
      %7 = vector.load %arg1[%c0_6, %6, %c0_7, %c0_8] : memref<1x148x74x27xbf16, #tpu.memory_space<vmem>>, vector<1x1x74x27xbf16>
      %8 = vector.shape_cast %7 : vector<1x1x74x27xbf16> to vector<74x27xbf16>
      %cst = arith.constant dense<0.000000e+00> : vector<74x64xf32>
      %9 = tpu.matmul %8, %2, %cst {dimension_numbers = #tpu.dot_dimension_numbers<[1], [0], [0], [1], [0, 0, 1, 1], [], []>} : vector<74x27xbf16>, vector<27x64xbf16>, vector<74x64xf32> -> vector<74x64xf32>
      %c0_i32_9 = arith.constant 0 : i32
      %10 = arith.addi %4, %c0_i32_9 : i32
      %c0_10 = arith.constant 0 : index
      %11 = arith.index_cast %10 : i32 to index
      %c0_11 = arith.constant 0 : index
      %c0_12 = arith.constant 0 : index
      %12 = vector.load %arg2[%c0_10, %11, %c0_11, %c0_12] : memref<1x148x74x27xbf16, #tpu.memory_space<vmem>>, vector<1x1x74x27xbf16>
      %13 = vector.shape_cast %12 : vector<1x1x74x27xbf16> to vector<74x27xbf16>
      %cst_13 = arith.constant dense<0.000000e+00> : vector<74x64xf32>
      %14 = tpu.matmul %13, %2, %cst_13 {dimension_numbers = #tpu.dot_dimension_numbers<[1], [0], [0], [1], [0, 0, 1, 1], [], []>} : vector<74x27xbf16>, vector<27x64xbf16>, vector<74x64xf32> -> vector<74x64xf32>
      %15 = arith.maximumf %9, %14 : vector<74x64xf32>
      %c1_i32_14 = arith.constant 1 : i32
      %16 = arith.addi %4, %c1_i32_14 : i32
      %c0_i32_15 = arith.constant 0 : i32
      %17 = arith.addi %16, %c0_i32_15 : i32
      %c0_16 = arith.constant 0 : index
      %18 = arith.index_cast %17 : i32 to index
      %c0_17 = arith.constant 0 : index
      %c0_18 = arith.constant 0 : index
      %19 = vector.load %arg1[%c0_16, %18, %c0_17, %c0_18] : memref<1x148x74x27xbf16, #tpu.memory_space<vmem>>, vector<1x1x74x27xbf16>
      %20 = vector.shape_cast %19 : vector<1x1x74x27xbf16> to vector<74x27xbf16>
      %cst_19 = arith.constant dense<0.000000e+00> : vector<74x64xf32>
      %21 = tpu.matmul %20, %2, %cst_19 {dimension_numbers = #tpu.dot_dimension_numbers<[1], [0], [0], [1], [0, 0, 1, 1], [], []>} : vector<74x27xbf16>, vector<27x64xbf16>, vector<74x64xf32> -> vector<74x64xf32>
      %22 = arith.maximumf %15, %21 : vector<74x64xf32>
      %c1_i32_20 = arith.constant 1 : i32
      %23 = arith.addi %4, %c1_i32_20 : i32
      %c0_i32_21 = arith.constant 0 : i32
      %24 = arith.addi %23, %c0_i32_21 : i32
      %c0_22 = arith.constant 0 : index
      %25 = arith.index_cast %24 : i32 to index
      %c0_23 = arith.constant 0 : index
      %c0_24 = arith.constant 0 : index
      %26 = vector.load %arg2[%c0_22, %25, %c0_23, %c0_24] : memref<1x148x74x27xbf16, #tpu.memory_space<vmem>>, vector<1x1x74x27xbf16>
      %27 = vector.shape_cast %26 : vector<1x1x74x27xbf16> to vector<74x27xbf16>
      %cst_25 = arith.constant dense<0.000000e+00> : vector<74x64xf32>
      %28 = tpu.matmul %27, %2, %cst_25 {dimension_numbers = #tpu.dot_dimension_numbers<[1], [0], [0], [1], [0, 0, 1, 1], [], []>} : vector<74x27xbf16>, vector<27x64xbf16>, vector<74x64xf32> -> vector<74x64xf32>
      %29 = arith.maximumf %22, %28 : vector<74x64xf32>
      %30 = vector.broadcast %0 : vector<1x64xf32> to vector<74x64xf32>
      %31 = arith.addf %29, %30 : vector<74x64xf32>
      %cst_26 = arith.constant 0.000000e+00 : f32
      %32 = vector.broadcast %cst_26 : f32 to vector<74x64xf32>
      %33 = arith.maximumf %31, %32 : vector<74x64xf32>
      %c0_27 = arith.constant 0 : index
      %34 = arith.index_cast %arg6 : i32 to index
      %c0_28 = arith.constant 0 : index
      %c0_29 = arith.constant 0 : index
      %35 = vector.load %arg5[%c0_27, %34, %c0_28, %c0_29] : memref<1x74x74x64xf32, #tpu.memory_space<vmem>>, vector<1x1x74x64xf32>
      %36 = vector.shape_cast %35 : vector<1x1x74x64xf32> to vector<74x64xf32>
      %37 = vector.shape_cast %33 : vector<74x64xf32> to vector<1x1x74x64xf32>
      tpu.vector_store %arg5[%c0_27, %34, %c0_28, %c0_29], %37 {strides = array<i32>} : memref<1x74x74x64xf32, #tpu.memory_space<vmem>>, vector<1x1x74x64xf32>,
    }
    %c74_i32_4 = arith.constant 74 : i32
    return
  }
  func.func @transform_0(%arg0: i32) -> (i32, i32, i32, i32) {
    %c0_i32 = arith.constant 0 : i32
    %c0_i32_0 = arith.constant 0 : i32
    %c0_i32_1 = arith.constant 0 : i32
    %c0_i32_2 = arith.constant 0 : i32
    return %arg0, %c0_i32, %c0_i32_0, %c0_i32_1 : i32, i32, i32, i32
  }
  func.func @transform_1(%arg0: i32) -> (i32, i32, i32, i32) {
    %c0_i32 = arith.constant 0 : i32
    %c0_i32_0 = arith.constant 0 : i32
    %c0_i32_1 = arith.constant 0 : i32
    %c0_i32_2 = arith.constant 0 : i32
    return %arg0, %c0_i32, %c0_i32_0, %c0_i32_1 : i32, i32, i32, i32
  }
  func.func @transform_2(%arg0: i32) -> (i32, i32, i32) {
    %c0_i32 = arith.constant 0 : i32
    %c0_i32_0 = arith.constant 0 : i32
    %c0_i32_1 = arith.constant 0 : i32
    %c0_i32_2 = arith.constant 0 : i32
    return %c0_i32, %c0_i32_0, %c0_i32_1 : i32, i32, i32
  }
  func.func @transform_3(%arg0: i32) -> (i32, i32) {
    %c0_i32 = arith.constant 0 : i32
    %c0_i32_0 = arith.constant 0 : i32
    %c0_i32_1 = arith.constant 0 : i32
    return %c0_i32, %c0_i32_0 : i32, i32
  }
  func.func @transform_4(%arg0: i32) -> (i32, i32, i32, i32) {
    %c0_i32 = arith.constant 0 : i32
    %c0_i32_0 = arith.constant 0 : i32
    %c0_i32_1 = arith.constant 0 : i32
    %c0_i32_2 = arith.constant 0 : i32
    return %arg0, %c0_i32, %c0_i32_0, %c0_i32_1 : i32, i32, i32, i32
  }
}

module attributes {stable_mosaic.version = 11 : i64} {
  func.func @_conv_relu_pool_kernel(%arg0: i32, %arg1: memref<1x74x36x192xbf16, #tpu.memory_space<vmem>>, %arg2: memref<1x74x36x192xbf16, #tpu.memory_space<vmem>>, %arg3: memref<3x192x64xbf16, #tpu.memory_space<vmem>>, %arg4: memref<1x64xf32, #tpu.memory_space<vmem>>, %arg5: memref<1x36x36x64xf32, #tpu.memory_space<vmem>>) attributes {dimension_semantics = [#tpu.dimension_semantics<parallel>], iteration_bounds = array<i64: 2>, scalar_prefetch = 0 : i64, scratch_operands = 0 : i64, tpu.core_type = #tpu.core_type<tc>, window_params = [{transform_indices = @transform_0, window_bounds = array<i64: 1, 74, 36, 192>}, {transform_indices = @transform_1, window_bounds = array<i64: 1, 74, 36, 192>}, {pipeline_mode = #tpu.pipeline_mode<synchronous>, transform_indices = @transform_2, window_bounds = array<i64: 3, 192, 64>}, {pipeline_mode = #tpu.pipeline_mode<synchronous>, transform_indices = @transform_3, window_bounds = array<i64: 1, 64>}, {transform_indices = @transform_4, window_bounds = array<i64: 1, 36, 36, 64>}]} {
    %c0 = arith.constant 0 : index
    %c0_0 = arith.constant 0 : index
    %0 = vector.load %arg4[%c0, %c0_0] : memref<1x64xf32, #tpu.memory_space<vmem>>, vector<1x64xf32>
    %c0_i32 = arith.constant 0 : i32
    %c36_i32 = arith.constant 36 : i32
    %1 = arith.addi %c0_i32, %c36_i32 : i32
    %c1_i32 = arith.constant 1 : i32
    scf.for %arg6 = %c0_i32 to %1 step %c1_i32  : i32 {
      %c2_i32 = arith.constant 2 : i32
      %2 = arith.muli %c2_i32, %arg6 : i32
      %c0_2 = arith.constant 0 : index
      %c0_3 = arith.constant 0 : index
      %c0_4 = arith.constant 0 : index
      %3 = vector.load %arg3[%c0_2, %c0_3, %c0_4] : memref<3x192x64xbf16, #tpu.memory_space<vmem>>, vector<1x192x64xbf16>
      %4 = vector.shape_cast %3 : vector<1x192x64xbf16> to vector<192x64xbf16>
      %c0_i32_5 = arith.constant 0 : i32
      %5 = arith.addi %2, %c0_i32_5 : i32
      %c0_6 = arith.constant 0 : index
      %6 = arith.index_cast %5 : i32 to index
      %c0_7 = arith.constant 0 : index
      %c0_8 = arith.constant 0 : index
      %7 = vector.load %arg1[%c0_6, %6, %c0_7, %c0_8] : memref<1x74x36x192xbf16, #tpu.memory_space<vmem>>, vector<1x1x36x192xbf16>
      %8 = vector.shape_cast %7 : vector<1x1x36x192xbf16> to vector<36x192xbf16>
      %cst = arith.constant dense<0.000000e+00> : vector<36x64xf32>
      %9 = tpu.matmul %8, %4, %cst {dimension_numbers = #tpu.dot_dimension_numbers<[1], [0], [0], [1], [0, 0, 1, 1], [], []>} : vector<36x192xbf16>, vector<192x64xbf16>, vector<36x64xf32> -> vector<36x64xf32>
      %c1 = arith.constant 1 : index
      %c0_9 = arith.constant 0 : index
      %c0_10 = arith.constant 0 : index
      %10 = vector.load %arg3[%c1, %c0_9, %c0_10] : memref<3x192x64xbf16, #tpu.memory_space<vmem>>, vector<1x192x64xbf16>
      %11 = vector.shape_cast %10 : vector<1x192x64xbf16> to vector<192x64xbf16>
      %c1_i32_11 = arith.constant 1 : i32
      %12 = arith.addi %2, %c1_i32_11 : i32
      %c0_12 = arith.constant 0 : index
      %13 = arith.index_cast %12 : i32 to index
      %c0_13 = arith.constant 0 : index
      %c0_14 = arith.constant 0 : index
      %14 = vector.load %arg1[%c0_12, %13, %c0_13, %c0_14] : memref<1x74x36x192xbf16, #tpu.memory_space<vmem>>, vector<1x1x36x192xbf16>
      %15 = vector.shape_cast %14 : vector<1x1x36x192xbf16> to vector<36x192xbf16>
      %cst_15 = arith.constant dense<0.000000e+00> : vector<36x64xf32>
      %16 = tpu.matmul %15, %11, %cst_15 {dimension_numbers = #tpu.dot_dimension_numbers<[1], [0], [0], [1], [0, 0, 1, 1], [], []>} : vector<36x192xbf16>, vector<192x64xbf16>, vector<36x64xf32> -> vector<36x64xf32>
      %17 = arith.addf %9, %16 : vector<36x64xf32>
      %c2 = arith.constant 2 : index
      %c0_16 = arith.constant 0 : index
      %c0_17 = arith.constant 0 : index
      %18 = vector.load %arg3[%c2, %c0_16, %c0_17] : memref<3x192x64xbf16, #tpu.memory_space<vmem>>, vector<1x192x64xbf16>
      %19 = vector.shape_cast %18 : vector<1x192x64xbf16> to vector<192x64xbf16>
      %c2_i32_18 = arith.constant 2 : i32
      %20 = arith.addi %2, %c2_i32_18 : i32
      %c0_19 = arith.constant 0 : index
      %21 = arith.index_cast %20 : i32 to index
      %c0_20 = arith.constant 0 : index
      %c0_21 = arith.constant 0 : index
      %22 = vector.load %arg1[%c0_19, %21, %c0_20, %c0_21] : memref<1x74x36x192xbf16, #tpu.memory_space<vmem>>, vector<1x1x36x192xbf16>
      %23 = vector.shape_cast %22 : vector<1x1x36x192xbf16> to vector<36x192xbf16>
      %cst_22 = arith.constant dense<0.000000e+00> : vector<36x64xf32>
      %24 = tpu.matmul %23, %19, %cst_22 {dimension_numbers = #tpu.dot_dimension_numbers<[1], [0], [0], [1], [0, 0, 1, 1], [], []>} : vector<36x192xbf16>, vector<192x64xbf16>, vector<36x64xf32> -> vector<36x64xf32>
      %25 = arith.addf %17, %24 : vector<36x64xf32>
      %c0_23 = arith.constant 0 : index
      %c0_24 = arith.constant 0 : index
      %c0_25 = arith.constant 0 : index
      %26 = vector.load %arg3[%c0_23, %c0_24, %c0_25] : memref<3x192x64xbf16, #tpu.memory_space<vmem>>, vector<1x192x64xbf16>
      %27 = vector.shape_cast %26 : vector<1x192x64xbf16> to vector<192x64xbf16>
      %c0_i32_26 = arith.constant 0 : i32
      %28 = arith.addi %2, %c0_i32_26 : i32
      %c0_27 = arith.constant 0 : index
      %29 = arith.index_cast %28 : i32 to index
      %c0_28 = arith.constant 0 : index
      %c0_29 = arith.constant 0 : index
      %30 = vector.load %arg2[%c0_27, %29, %c0_28, %c0_29] : memref<1x74x36x192xbf16, #tpu.memory_space<vmem>>, vector<1x1x36x192xbf16>
      %31 = vector.shape_cast %30 : vector<1x1x36x192xbf16> to vector<36x192xbf16>
      %cst_30 = arith.constant dense<0.000000e+00> : vector<36x64xf32>
      %32 = tpu.matmul %31, %27, %cst_30 {dimension_numbers = #tpu.dot_dimension_numbers<[1], [0], [0], [1], [0, 0, 1, 1], [], []>} : vector<36x192xbf16>, vector<192x64xbf16>, vector<36x64xf32> -> vector<36x64xf32>
      %c1_31 = arith.constant 1 : index
      %c0_32 = arith.constant 0 : index
      %c0_33 = arith.constant 0 : index
      %33 = vector.load %arg3[%c1_31, %c0_32, %c0_33] : memref<3x192x64xbf16, #tpu.memory_space<vmem>>, vector<1x192x64xbf16>
      %34 = vector.shape_cast %33 : vector<1x192x64xbf16> to vector<192x64xbf16>
      %c1_i32_34 = arith.constant 1 : i32
      %35 = arith.addi %2, %c1_i32_34 : i32
      %c0_35 = arith.constant 0 : index
      %36 = arith.index_cast %35 : i32 to index
      %c0_36 = arith.constant 0 : index
      %c0_37 = arith.constant 0 : index
      %37 = vector.load %arg2[%c0_35, %36, %c0_36, %c0_37] : memref<1x74x36x192xbf16, #tpu.memory_space<vmem>>, vector<1x1x36x192xbf16>
      %38 = vector.shape_cast %37 : vector<1x1x36x192xbf16> to vector<36x192xbf16>
      %cst_38 = arith.constant dense<0.000000e+00> : vector<36x64xf32>
      %39 = tpu.matmul %38, %34, %cst_38 {dimension_numbers = #tpu.dot_dimension_numbers<[1], [0], [0], [1], [0, 0, 1, 1], [], []>} : vector<36x192xbf16>, vector<192x64xbf16>, vector<36x64xf32> -> vector<36x64xf32>
      %40 = arith.addf %32, %39 : vector<36x64xf32>
      %c2_39 = arith.constant 2 : index
      %c0_40 = arith.constant 0 : index
      %c0_41 = arith.constant 0 : index
      %41 = vector.load %arg3[%c2_39, %c0_40, %c0_41] : memref<3x192x64xbf16, #tpu.memory_space<vmem>>, vector<1x192x64xbf16>
      %42 = vector.shape_cast %41 : vector<1x192x64xbf16> to vector<192x64xbf16>
      %c2_i32_42 = arith.constant 2 : i32
      %43 = arith.addi %2, %c2_i32_42 : i32
      %c0_43 = arith.constant 0 : index
      %44 = arith.index_cast %43 : i32 to index
      %c0_44 = arith.constant 0 : index
      %c0_45 = arith.constant 0 : index
      %45 = vector.load %arg2[%c0_43, %44, %c0_44, %c0_45] : memref<1x74x36x192xbf16, #tpu.memory_space<vmem>>, vector<1x1x36x192xbf16>
      %46 = vector.shape_cast %45 : vector<1x1x36x192xbf16> to vector<36x192xbf16>
      %cst_46 = arith.constant dense<0.000000e+00> : vector<36x64xf32>
      %47 = tpu.matmul %46, %42, %cst_46 {dimension_numbers = #tpu.dot_dimension_numbers<[1], [0], [0], [1], [0, 0, 1, 1], [], []>} : vector<36x192xbf16>, vector<192x64xbf16>, vector<36x64xf32> -> vector<36x64xf32>
      %48 = arith.addf %40, %47 : vector<36x64xf32>
      %49 = arith.maximumf %25, %48 : vector<36x64xf32>
      %c1_i32_47 = arith.constant 1 : i32
      %50 = arith.addi %2, %c1_i32_47 : i32
      %c0_48 = arith.constant 0 : index
      %c0_49 = arith.constant 0 : index
      %c0_50 = arith.constant 0 : index
      %51 = vector.load %arg3[%c0_48, %c0_49, %c0_50] : memref<3x192x64xbf16, #tpu.memory_space<vmem>>, vector<1x192x64xbf16>
      %52 = vector.shape_cast %51 : vector<1x192x64xbf16> to vector<192x64xbf16>
      %c0_i32_51 = arith.constant 0 : i32
      %53 = arith.addi %50, %c0_i32_51 : i32
      %c0_52 = arith.constant 0 : index
      %54 = arith.index_cast %53 : i32 to index
      %c0_53 = arith.constant 0 : index
      %c0_54 = arith.constant 0 : index
      %55 = vector.load %arg1[%c0_52, %54, %c0_53, %c0_54] : memref<1x74x36x192xbf16, #tpu.memory_space<vmem>>, vector<1x1x36x192xbf16>
      %56 = vector.shape_cast %55 : vector<1x1x36x192xbf16> to vector<36x192xbf16>
      %cst_55 = arith.constant dense<0.000000e+00> : vector<36x64xf32>
      %57 = tpu.matmul %56, %52, %cst_55 {dimension_numbers = #tpu.dot_dimension_numbers<[1], [0], [0], [1], [0, 0, 1, 1], [], []>} : vector<36x192xbf16>, vector<192x64xbf16>, vector<36x64xf32> -> vector<36x64xf32>
      %c1_56 = arith.constant 1 : index
      %c0_57 = arith.constant 0 : index
      %c0_58 = arith.constant 0 : index
      %58 = vector.load %arg3[%c1_56, %c0_57, %c0_58] : memref<3x192x64xbf16, #tpu.memory_space<vmem>>, vector<1x192x64xbf16>
      %59 = vector.shape_cast %58 : vector<1x192x64xbf16> to vector<192x64xbf16>
      %c1_i32_59 = arith.constant 1 : i32
      %60 = arith.addi %50, %c1_i32_59 : i32
      %c0_60 = arith.constant 0 : index
      %61 = arith.index_cast %60 : i32 to index
      %c0_61 = arith.constant 0 : index
      %c0_62 = arith.constant 0 : index
      %62 = vector.load %arg1[%c0_60, %61, %c0_61, %c0_62] : memref<1x74x36x192xbf16, #tpu.memory_space<vmem>>, vector<1x1x36x192xbf16>
      %63 = vector.shape_cast %62 : vector<1x1x36x192xbf16> to vector<36x192xbf16>
      %cst_63 = arith.constant dense<0.000000e+00> : vector<36x64xf32>
      %64 = tpu.matmul %63, %59, %cst_63 {dimension_numbers = #tpu.dot_dimension_numbers<[1], [0], [0], [1], [0, 0, 1, 1], [], []>} : vector<36x192xbf16>, vector<192x64xbf16>, vector<36x64xf32> -> vector<36x64xf32>
      %65 = arith.addf %57, %64 : vector<36x64xf32>
      %c2_64 = arith.constant 2 : index
      %c0_65 = arith.constant 0 : index
      %c0_66 = arith.constant 0 : index
      %66 = vector.load %arg3[%c2_64, %c0_65, %c0_66] : memref<3x192x64xbf16, #tpu.memory_space<vmem>>, vector<1x192x64xbf16>
      %67 = vector.shape_cast %66 : vector<1x192x64xbf16> to vector<192x64xbf16>
      %c2_i32_67 = arith.constant 2 : i32
      %68 = arith.addi %50, %c2_i32_67 : i32
      %c0_68 = arith.constant 0 : index
      %69 = arith.index_cast %68 : i32 to index
      %c0_69 = arith.constant 0 : index
      %c0_70 = arith.constant 0 : index
      %70 = vector.load %arg1[%c0_68, %69, %c0_69, %c0_70] : memref<1x74x36x192xbf16, #tpu.memory_space<vmem>>, vector<1x1x36x192xbf16>
      %71 = vector.shape_cast %70 : vector<1x1x36x192xbf16> to vector<36x192xbf16>
      %cst_71 = arith.constant dense<0.000000e+00> : vector<36x64xf32>
      %72 = tpu.matmul %71, %67, %cst_71 {dimension_numbers = #tpu.dot_dimension_numbers<[1], [0], [0], [1], [0, 0, 1, 1], [], []>} : vector<36x192xbf16>, vector<192x64xbf16>, vector<36x64xf32> -> vector<36x64xf32>
      %73 = arith.addf %65, %72 : vector<36x64xf32>
      %74 = arith.maximumf %49, %73 : vector<36x64xf32>
      %c1_i32_72 = arith.constant 1 : i32
      %75 = arith.addi %2, %c1_i32_72 : i32
      %c0_73 = arith.constant 0 : index
      %c0_74 = arith.constant 0 : index
      %c0_75 = arith.constant 0 : index
      %76 = vector.load %arg3[%c0_73, %c0_74, %c0_75] : memref<3x192x64xbf16, #tpu.memory_space<vmem>>, vector<1x192x64xbf16>
      %77 = vector.shape_cast %76 : vector<1x192x64xbf16> to vector<192x64xbf16>
      %c0_i32_76 = arith.constant 0 : i32
      %78 = arith.addi %75, %c0_i32_76 : i32
      %c0_77 = arith.constant 0 : index
      %79 = arith.index_cast %78 : i32 to index
      %c0_78 = arith.constant 0 : index
      %c0_79 = arith.constant 0 : index
      %80 = vector.load %arg2[%c0_77, %79, %c0_78, %c0_79] : memref<1x74x36x192xbf16, #tpu.memory_space<vmem>>, vector<1x1x36x192xbf16>
      %81 = vector.shape_cast %80 : vector<1x1x36x192xbf16> to vector<36x192xbf16>
      %cst_80 = arith.constant dense<0.000000e+00> : vector<36x64xf32>
      %82 = tpu.matmul %81, %77, %cst_80 {dimension_numbers = #tpu.dot_dimension_numbers<[1], [0], [0], [1], [0, 0, 1, 1], [], []>} : vector<36x192xbf16>, vector<192x64xbf16>, vector<36x64xf32> -> vector<36x64xf32>
      %c1_81 = arith.constant 1 : index
      %c0_82 = arith.constant 0 : index
      %c0_83 = arith.constant 0 : index
      %83 = vector.load %arg3[%c1_81, %c0_82, %c0_83] : memref<3x192x64xbf16, #tpu.memory_space<vmem>>, vector<1x192x64xbf16>
      %84 = vector.shape_cast %83 : vector<1x192x64xbf16> to vector<192x64xbf16>
      %c1_i32_84 = arith.constant 1 : i32
      %85 = arith.addi %75, %c1_i32_84 : i32
      %c0_85 = arith.constant 0 : index
      %86 = arith.index_cast %85 : i32 to index
      %c0_86 = arith.constant 0 : index
      %c0_87 = arith.constant 0 : index
      %87 = vector.load %arg2[%c0_85, %86, %c0_86, %c0_87] : memref<1x74x36x192xbf16, #tpu.memory_space<vmem>>, vector<1x1x36x192xbf16>
      %88 = vector.shape_cast %87 : vector<1x1x36x192xbf16> to vector<36x192xbf16>
      %cst_88 = arith.constant dense<0.000000e+00> : vector<36x64xf32>
      %89 = tpu.matmul %88, %84, %cst_88 {dimension_numbers = #tpu.dot_dimension_numbers<[1], [0], [0], [1], [0, 0, 1, 1], [], []>} : vector<36x192xbf16>, vector<192x64xbf16>, vector<36x64xf32> -> vector<36x64xf32>
      %90 = arith.addf %82, %89 : vector<36x64xf32>
      %c2_89 = arith.constant 2 : index
      %c0_90 = arith.constant 0 : index
      %c0_91 = arith.constant 0 : index
      %91 = vector.load %arg3[%c2_89, %c0_90, %c0_91] : memref<3x192x64xbf16, #tpu.memory_space<vmem>>, vector<1x192x64xbf16>
      %92 = vector.shape_cast %91 : vector<1x192x64xbf16> to vector<192x64xbf16>
      %c2_i32_92 = arith.constant 2 : i32
      %93 = arith.addi %75, %c2_i32_92 : i32
      %c0_93 = arith.constant 0 : index
      %94 = arith.index_cast %93 : i32 to index
      %c0_94 = arith.constant 0 : index
      %c0_95 = arith.constant 0 : index
      %95 = vector.load %arg2[%c0_93, %94, %c0_94, %c0_95] : memref<1x74x36x192xbf16, #tpu.memory_space<vmem>>, vector<1x1x36x192xbf16>
      %96 = vector.shape_cast %95 : vector<1x1x36x192xbf16> to vector<36x192xbf16>
      %cst_96 = arith.constant dense<0.000000e+00> : vector<36x64xf32>
      %97 = tpu.matmul %96, %92, %cst_96 {dimension_numbers = #tpu.dot_dimension_numbers<[1], [0], [0], [1], [0, 0, 1, 1], [], []>} : vector<36x192xbf16>, vector<192x64xbf16>, vector<36x64xf32> -> vector<36x64xf32>
      %98 = arith.addf %90, %97 : vector<36x64xf32>
      %99 = arith.maximumf %74, %98 : vector<36x64xf32>
      %100 = vector.broadcast %0 : vector<1x64xf32> to vector<36x64xf32>
      %101 = arith.addf %99, %100 : vector<36x64xf32>
      %cst_97 = arith.constant 0.000000e+00 : f32
      %102 = vector.broadcast %cst_97 : f32 to vector<36x64xf32>
      %103 = arith.maximumf %101, %102 : vector<36x64xf32>
      %c0_98 = arith.constant 0 : index
      %104 = arith.index_cast %arg6 : i32 to index
      %c0_99 = arith.constant 0 : index
      %c0_100 = arith.constant 0 : index
      %105 = vector.load %arg5[%c0_98, %104, %c0_99, %c0_100] : memref<1x36x36x64xf32, #tpu.memory_space<vmem>>, vector<1x1x36x64xf32>
      %106 = vector.shape_cast %105 : vector<1x1x36x64xf32> to vector<36x64xf32>
      %107 = vector.shape_cast %103 : vector<36x64xf32> to vector<1x1x36x64xf32>
      tpu.vector_store %arg5[%c0_98, %104, %c0_99, %c0_100], %107 {strides = array<i32>} : memref<1x36x36x64xf32, #tpu.memory_space<vmem>>, vector<1x1x36x64xf32>,
    }
    %c36_i32_1 = arith.constant 36 : i32
    return
  }
  func.func @transform_0(%arg0: i32) -> (i32, i32, i32, i32) {
    %c0_i32 = arith.constant 0 : i32
    %c0_i32_0 = arith.constant 0 : i32
    %c0_i32_1 = arith.constant 0 : i32
    %c0_i32_2 = arith.constant 0 : i32
    return %arg0, %c0_i32, %c0_i32_0, %c0_i32_1 : i32, i32, i32, i32
  }
  func.func @transform_1(%arg0: i32) -> (i32, i32, i32, i32) {
    %c0_i32 = arith.constant 0 : i32
    %c0_i32_0 = arith.constant 0 : i32
    %c0_i32_1 = arith.constant 0 : i32
    %c0_i32_2 = arith.constant 0 : i32
    return %arg0, %c0_i32, %c0_i32_0, %c0_i32_1 : i32, i32, i32, i32
  }
  func.func @transform_2(%arg0: i32) -> (i32, i32, i32) {
    %c0_i32 = arith.constant 0 : i32
    %c0_i32_0 = arith.constant 0 : i32
    %c0_i32_1 = arith.constant 0 : i32
    %c0_i32_2 = arith.constant 0 : i32
    return %c0_i32, %c0_i32_0, %c0_i32_1 : i32, i32, i32
  }
  func.func @transform_3(%arg0: i32) -> (i32, i32) {
    %c0_i32 = arith.constant 0 : i32
    %c0_i32_0 = arith.constant 0 : i32
    %c0_i32_1 = arith.constant 0 : i32
    return %c0_i32, %c0_i32_0 : i32, i32
  }
  func.func @transform_4(%arg0: i32) -> (i32, i32, i32, i32) {
    %c0_i32 = arith.constant 0 : i32
    %c0_i32_0 = arith.constant 0 : i32
    %c0_i32_1 = arith.constant 0 : i32
    %c0_i32_2 = arith.constant 0 : i32
    return %arg0, %c0_i32, %c0_i32_0, %c0_i32_1 : i32, i32, i32, i32
  }
}

module attributes {stable_mosaic.version = 11 : i64} {
  func.func @_conv_relu_pool_kernel(%arg0: i32, %arg1: memref<1x36x17x192xbf16, #tpu.memory_space<vmem>>, %arg2: memref<1x36x17x192xbf16, #tpu.memory_space<vmem>>, %arg3: memref<3x192x64xbf16, #tpu.memory_space<vmem>>, %arg4: memref<1x64xf32, #tpu.memory_space<vmem>>, %arg5: memref<1x17x17x64xf32, #tpu.memory_space<vmem>>) attributes {dimension_semantics = [#tpu.dimension_semantics<parallel>], iteration_bounds = array<i64: 2>, scalar_prefetch = 0 : i64, scratch_operands = 0 : i64, tpu.core_type = #tpu.core_type<tc>, window_params = [{transform_indices = @transform_0, window_bounds = array<i64: 1, 36, 17, 192>}, {transform_indices = @transform_1, window_bounds = array<i64: 1, 36, 17, 192>}, {pipeline_mode = #tpu.pipeline_mode<synchronous>, transform_indices = @transform_2, window_bounds = array<i64: 3, 192, 64>}, {pipeline_mode = #tpu.pipeline_mode<synchronous>, transform_indices = @transform_3, window_bounds = array<i64: 1, 64>}, {transform_indices = @transform_4, window_bounds = array<i64: 1, 17, 17, 64>}]} {
    %c0 = arith.constant 0 : index
    %c0_0 = arith.constant 0 : index
    %0 = vector.load %arg4[%c0, %c0_0] : memref<1x64xf32, #tpu.memory_space<vmem>>, vector<1x64xf32>
    %c0_i32 = arith.constant 0 : i32
    %c17_i32 = arith.constant 17 : i32
    %1 = arith.addi %c0_i32, %c17_i32 : i32
    %c1_i32 = arith.constant 1 : i32
    scf.for %arg6 = %c0_i32 to %1 step %c1_i32  : i32 {
      %c2_i32 = arith.constant 2 : i32
      %2 = arith.muli %c2_i32, %arg6 : i32
      %c0_2 = arith.constant 0 : index
      %c0_3 = arith.constant 0 : index
      %c0_4 = arith.constant 0 : index
      %3 = vector.load %arg3[%c0_2, %c0_3, %c0_4] : memref<3x192x64xbf16, #tpu.memory_space<vmem>>, vector<1x192x64xbf16>
      %4 = vector.shape_cast %3 : vector<1x192x64xbf16> to vector<192x64xbf16>
      %c0_i32_5 = arith.constant 0 : i32
      %5 = arith.addi %2, %c0_i32_5 : i32
      %c0_6 = arith.constant 0 : index
      %6 = arith.index_cast %5 : i32 to index
      %c0_7 = arith.constant 0 : index
      %c0_8 = arith.constant 0 : index
      %7 = vector.load %arg1[%c0_6, %6, %c0_7, %c0_8] : memref<1x36x17x192xbf16, #tpu.memory_space<vmem>>, vector<1x1x17x192xbf16>
      %8 = vector.shape_cast %7 : vector<1x1x17x192xbf16> to vector<17x192xbf16>
      %cst = arith.constant dense<0.000000e+00> : vector<17x64xf32>
      %9 = tpu.matmul %8, %4, %cst {dimension_numbers = #tpu.dot_dimension_numbers<[1], [0], [0], [1], [0, 0, 1, 1], [], []>} : vector<17x192xbf16>, vector<192x64xbf16>, vector<17x64xf32> -> vector<17x64xf32>
      %c1 = arith.constant 1 : index
      %c0_9 = arith.constant 0 : index
      %c0_10 = arith.constant 0 : index
      %10 = vector.load %arg3[%c1, %c0_9, %c0_10] : memref<3x192x64xbf16, #tpu.memory_space<vmem>>, vector<1x192x64xbf16>
      %11 = vector.shape_cast %10 : vector<1x192x64xbf16> to vector<192x64xbf16>
      %c1_i32_11 = arith.constant 1 : i32
      %12 = arith.addi %2, %c1_i32_11 : i32
      %c0_12 = arith.constant 0 : index
      %13 = arith.index_cast %12 : i32 to index
      %c0_13 = arith.constant 0 : index
      %c0_14 = arith.constant 0 : index
      %14 = vector.load %arg1[%c0_12, %13, %c0_13, %c0_14] : memref<1x36x17x192xbf16, #tpu.memory_space<vmem>>, vector<1x1x17x192xbf16>
      %15 = vector.shape_cast %14 : vector<1x1x17x192xbf16> to vector<17x192xbf16>
      %cst_15 = arith.constant dense<0.000000e+00> : vector<17x64xf32>
      %16 = tpu.matmul %15, %11, %cst_15 {dimension_numbers = #tpu.dot_dimension_numbers<[1], [0], [0], [1], [0, 0, 1, 1], [], []>} : vector<17x192xbf16>, vector<192x64xbf16>, vector<17x64xf32> -> vector<17x64xf32>
      %17 = arith.addf %9, %16 : vector<17x64xf32>
      %c2 = arith.constant 2 : index
      %c0_16 = arith.constant 0 : index
      %c0_17 = arith.constant 0 : index
      %18 = vector.load %arg3[%c2, %c0_16, %c0_17] : memref<3x192x64xbf16, #tpu.memory_space<vmem>>, vector<1x192x64xbf16>
      %19 = vector.shape_cast %18 : vector<1x192x64xbf16> to vector<192x64xbf16>
      %c2_i32_18 = arith.constant 2 : i32
      %20 = arith.addi %2, %c2_i32_18 : i32
      %c0_19 = arith.constant 0 : index
      %21 = arith.index_cast %20 : i32 to index
      %c0_20 = arith.constant 0 : index
      %c0_21 = arith.constant 0 : index
      %22 = vector.load %arg1[%c0_19, %21, %c0_20, %c0_21] : memref<1x36x17x192xbf16, #tpu.memory_space<vmem>>, vector<1x1x17x192xbf16>
      %23 = vector.shape_cast %22 : vector<1x1x17x192xbf16> to vector<17x192xbf16>
      %cst_22 = arith.constant dense<0.000000e+00> : vector<17x64xf32>
      %24 = tpu.matmul %23, %19, %cst_22 {dimension_numbers = #tpu.dot_dimension_numbers<[1], [0], [0], [1], [0, 0, 1, 1], [], []>} : vector<17x192xbf16>, vector<192x64xbf16>, vector<17x64xf32> -> vector<17x64xf32>
      %25 = arith.addf %17, %24 : vector<17x64xf32>
      %c0_23 = arith.constant 0 : index
      %c0_24 = arith.constant 0 : index
      %c0_25 = arith.constant 0 : index
      %26 = vector.load %arg3[%c0_23, %c0_24, %c0_25] : memref<3x192x64xbf16, #tpu.memory_space<vmem>>, vector<1x192x64xbf16>
      %27 = vector.shape_cast %26 : vector<1x192x64xbf16> to vector<192x64xbf16>
      %c0_i32_26 = arith.constant 0 : i32
      %28 = arith.addi %2, %c0_i32_26 : i32
      %c0_27 = arith.constant 0 : index
      %29 = arith.index_cast %28 : i32 to index
      %c0_28 = arith.constant 0 : index
      %c0_29 = arith.constant 0 : index
      %30 = vector.load %arg2[%c0_27, %29, %c0_28, %c0_29] : memref<1x36x17x192xbf16, #tpu.memory_space<vmem>>, vector<1x1x17x192xbf16>
      %31 = vector.shape_cast %30 : vector<1x1x17x192xbf16> to vector<17x192xbf16>
      %cst_30 = arith.constant dense<0.000000e+00> : vector<17x64xf32>
      %32 = tpu.matmul %31, %27, %cst_30 {dimension_numbers = #tpu.dot_dimension_numbers<[1], [0], [0], [1], [0, 0, 1, 1], [], []>} : vector<17x192xbf16>, vector<192x64xbf16>, vector<17x64xf32> -> vector<17x64xf32>
      %c1_31 = arith.constant 1 : index
      %c0_32 = arith.constant 0 : index
      %c0_33 = arith.constant 0 : index
      %33 = vector.load %arg3[%c1_31, %c0_32, %c0_33] : memref<3x192x64xbf16, #tpu.memory_space<vmem>>, vector<1x192x64xbf16>
      %34 = vector.shape_cast %33 : vector<1x192x64xbf16> to vector<192x64xbf16>
      %c1_i32_34 = arith.constant 1 : i32
      %35 = arith.addi %2, %c1_i32_34 : i32
      %c0_35 = arith.constant 0 : index
      %36 = arith.index_cast %35 : i32 to index
      %c0_36 = arith.constant 0 : index
      %c0_37 = arith.constant 0 : index
      %37 = vector.load %arg2[%c0_35, %36, %c0_36, %c0_37] : memref<1x36x17x192xbf16, #tpu.memory_space<vmem>>, vector<1x1x17x192xbf16>
      %38 = vector.shape_cast %37 : vector<1x1x17x192xbf16> to vector<17x192xbf16>
      %cst_38 = arith.constant dense<0.000000e+00> : vector<17x64xf32>
      %39 = tpu.matmul %38, %34, %cst_38 {dimension_numbers = #tpu.dot_dimension_numbers<[1], [0], [0], [1], [0, 0, 1, 1], [], []>} : vector<17x192xbf16>, vector<192x64xbf16>, vector<17x64xf32> -> vector<17x64xf32>
      %40 = arith.addf %32, %39 : vector<17x64xf32>
      %c2_39 = arith.constant 2 : index
      %c0_40 = arith.constant 0 : index
      %c0_41 = arith.constant 0 : index
      %41 = vector.load %arg3[%c2_39, %c0_40, %c0_41] : memref<3x192x64xbf16, #tpu.memory_space<vmem>>, vector<1x192x64xbf16>
      %42 = vector.shape_cast %41 : vector<1x192x64xbf16> to vector<192x64xbf16>
      %c2_i32_42 = arith.constant 2 : i32
      %43 = arith.addi %2, %c2_i32_42 : i32
      %c0_43 = arith.constant 0 : index
      %44 = arith.index_cast %43 : i32 to index
      %c0_44 = arith.constant 0 : index
      %c0_45 = arith.constant 0 : index
      %45 = vector.load %arg2[%c0_43, %44, %c0_44, %c0_45] : memref<1x36x17x192xbf16, #tpu.memory_space<vmem>>, vector<1x1x17x192xbf16>
      %46 = vector.shape_cast %45 : vector<1x1x17x192xbf16> to vector<17x192xbf16>
      %cst_46 = arith.constant dense<0.000000e+00> : vector<17x64xf32>
      %47 = tpu.matmul %46, %42, %cst_46 {dimension_numbers = #tpu.dot_dimension_numbers<[1], [0], [0], [1], [0, 0, 1, 1], [], []>} : vector<17x192xbf16>, vector<192x64xbf16>, vector<17x64xf32> -> vector<17x64xf32>
      %48 = arith.addf %40, %47 : vector<17x64xf32>
      %49 = arith.maximumf %25, %48 : vector<17x64xf32>
      %c1_i32_47 = arith.constant 1 : i32
      %50 = arith.addi %2, %c1_i32_47 : i32
      %c0_48 = arith.constant 0 : index
      %c0_49 = arith.constant 0 : index
      %c0_50 = arith.constant 0 : index
      %51 = vector.load %arg3[%c0_48, %c0_49, %c0_50] : memref<3x192x64xbf16, #tpu.memory_space<vmem>>, vector<1x192x64xbf16>
      %52 = vector.shape_cast %51 : vector<1x192x64xbf16> to vector<192x64xbf16>
      %c0_i32_51 = arith.constant 0 : i32
      %53 = arith.addi %50, %c0_i32_51 : i32
      %c0_52 = arith.constant 0 : index
      %54 = arith.index_cast %53 : i32 to index
      %c0_53 = arith.constant 0 : index
      %c0_54 = arith.constant 0 : index
      %55 = vector.load %arg1[%c0_52, %54, %c0_53, %c0_54] : memref<1x36x17x192xbf16, #tpu.memory_space<vmem>>, vector<1x1x17x192xbf16>
      %56 = vector.shape_cast %55 : vector<1x1x17x192xbf16> to vector<17x192xbf16>
      %cst_55 = arith.constant dense<0.000000e+00> : vector<17x64xf32>
      %57 = tpu.matmul %56, %52, %cst_55 {dimension_numbers = #tpu.dot_dimension_numbers<[1], [0], [0], [1], [0, 0, 1, 1], [], []>} : vector<17x192xbf16>, vector<192x64xbf16>, vector<17x64xf32> -> vector<17x64xf32>
      %c1_56 = arith.constant 1 : index
      %c0_57 = arith.constant 0 : index
      %c0_58 = arith.constant 0 : index
      %58 = vector.load %arg3[%c1_56, %c0_57, %c0_58] : memref<3x192x64xbf16, #tpu.memory_space<vmem>>, vector<1x192x64xbf16>
      %59 = vector.shape_cast %58 : vector<1x192x64xbf16> to vector<192x64xbf16>
      %c1_i32_59 = arith.constant 1 : i32
      %60 = arith.addi %50, %c1_i32_59 : i32
      %c0_60 = arith.constant 0 : index
      %61 = arith.index_cast %60 : i32 to index
      %c0_61 = arith.constant 0 : index
      %c0_62 = arith.constant 0 : index
      %62 = vector.load %arg1[%c0_60, %61, %c0_61, %c0_62] : memref<1x36x17x192xbf16, #tpu.memory_space<vmem>>, vector<1x1x17x192xbf16>
      %63 = vector.shape_cast %62 : vector<1x1x17x192xbf16> to vector<17x192xbf16>
      %cst_63 = arith.constant dense<0.000000e+00> : vector<17x64xf32>
      %64 = tpu.matmul %63, %59, %cst_63 {dimension_numbers = #tpu.dot_dimension_numbers<[1], [0], [0], [1], [0, 0, 1, 1], [], []>} : vector<17x192xbf16>, vector<192x64xbf16>, vector<17x64xf32> -> vector<17x64xf32>
      %65 = arith.addf %57, %64 : vector<17x64xf32>
      %c2_64 = arith.constant 2 : index
      %c0_65 = arith.constant 0 : index
      %c0_66 = arith.constant 0 : index
      %66 = vector.load %arg3[%c2_64, %c0_65, %c0_66] : memref<3x192x64xbf16, #tpu.memory_space<vmem>>, vector<1x192x64xbf16>
      %67 = vector.shape_cast %66 : vector<1x192x64xbf16> to vector<192x64xbf16>
      %c2_i32_67 = arith.constant 2 : i32
      %68 = arith.addi %50, %c2_i32_67 : i32
      %c0_68 = arith.constant 0 : index
      %69 = arith.index_cast %68 : i32 to index
      %c0_69 = arith.constant 0 : index
      %c0_70 = arith.constant 0 : index
      %70 = vector.load %arg1[%c0_68, %69, %c0_69, %c0_70] : memref<1x36x17x192xbf16, #tpu.memory_space<vmem>>, vector<1x1x17x192xbf16>
      %71 = vector.shape_cast %70 : vector<1x1x17x192xbf16> to vector<17x192xbf16>
      %cst_71 = arith.constant dense<0.000000e+00> : vector<17x64xf32>
      %72 = tpu.matmul %71, %67, %cst_71 {dimension_numbers = #tpu.dot_dimension_numbers<[1], [0], [0], [1], [0, 0, 1, 1], [], []>} : vector<17x192xbf16>, vector<192x64xbf16>, vector<17x64xf32> -> vector<17x64xf32>
      %73 = arith.addf %65, %72 : vector<17x64xf32>
      %74 = arith.maximumf %49, %73 : vector<17x64xf32>
      %c1_i32_72 = arith.constant 1 : i32
      %75 = arith.addi %2, %c1_i32_72 : i32
      %c0_73 = arith.constant 0 : index
      %c0_74 = arith.constant 0 : index
      %c0_75 = arith.constant 0 : index
      %76 = vector.load %arg3[%c0_73, %c0_74, %c0_75] : memref<3x192x64xbf16, #tpu.memory_space<vmem>>, vector<1x192x64xbf16>
      %77 = vector.shape_cast %76 : vector<1x192x64xbf16> to vector<192x64xbf16>
      %c0_i32_76 = arith.constant 0 : i32
      %78 = arith.addi %75, %c0_i32_76 : i32
      %c0_77 = arith.constant 0 : index
      %79 = arith.index_cast %78 : i32 to index
      %c0_78 = arith.constant 0 : index
      %c0_79 = arith.constant 0 : index
      %80 = vector.load %arg2[%c0_77, %79, %c0_78, %c0_79] : memref<1x36x17x192xbf16, #tpu.memory_space<vmem>>, vector<1x1x17x192xbf16>
      %81 = vector.shape_cast %80 : vector<1x1x17x192xbf16> to vector<17x192xbf16>
      %cst_80 = arith.constant dense<0.000000e+00> : vector<17x64xf32>
      %82 = tpu.matmul %81, %77, %cst_80 {dimension_numbers = #tpu.dot_dimension_numbers<[1], [0], [0], [1], [0, 0, 1, 1], [], []>} : vector<17x192xbf16>, vector<192x64xbf16>, vector<17x64xf32> -> vector<17x64xf32>
      %c1_81 = arith.constant 1 : index
      %c0_82 = arith.constant 0 : index
      %c0_83 = arith.constant 0 : index
      %83 = vector.load %arg3[%c1_81, %c0_82, %c0_83] : memref<3x192x64xbf16, #tpu.memory_space<vmem>>, vector<1x192x64xbf16>
      %84 = vector.shape_cast %83 : vector<1x192x64xbf16> to vector<192x64xbf16>
      %c1_i32_84 = arith.constant 1 : i32
      %85 = arith.addi %75, %c1_i32_84 : i32
      %c0_85 = arith.constant 0 : index
      %86 = arith.index_cast %85 : i32 to index
      %c0_86 = arith.constant 0 : index
      %c0_87 = arith.constant 0 : index
      %87 = vector.load %arg2[%c0_85, %86, %c0_86, %c0_87] : memref<1x36x17x192xbf16, #tpu.memory_space<vmem>>, vector<1x1x17x192xbf16>
      %88 = vector.shape_cast %87 : vector<1x1x17x192xbf16> to vector<17x192xbf16>
      %cst_88 = arith.constant dense<0.000000e+00> : vector<17x64xf32>
      %89 = tpu.matmul %88, %84, %cst_88 {dimension_numbers = #tpu.dot_dimension_numbers<[1], [0], [0], [1], [0, 0, 1, 1], [], []>} : vector<17x192xbf16>, vector<192x64xbf16>, vector<17x64xf32> -> vector<17x64xf32>
      %90 = arith.addf %82, %89 : vector<17x64xf32>
      %c2_89 = arith.constant 2 : index
      %c0_90 = arith.constant 0 : index
      %c0_91 = arith.constant 0 : index
      %91 = vector.load %arg3[%c2_89, %c0_90, %c0_91] : memref<3x192x64xbf16, #tpu.memory_space<vmem>>, vector<1x192x64xbf16>
      %92 = vector.shape_cast %91 : vector<1x192x64xbf16> to vector<192x64xbf16>
      %c2_i32_92 = arith.constant 2 : i32
      %93 = arith.addi %75, %c2_i32_92 : i32
      %c0_93 = arith.constant 0 : index
      %94 = arith.index_cast %93 : i32 to index
      %c0_94 = arith.constant 0 : index
      %c0_95 = arith.constant 0 : index
      %95 = vector.load %arg2[%c0_93, %94, %c0_94, %c0_95] : memref<1x36x17x192xbf16, #tpu.memory_space<vmem>>, vector<1x1x17x192xbf16>
      %96 = vector.shape_cast %95 : vector<1x1x17x192xbf16> to vector<17x192xbf16>
      %cst_96 = arith.constant dense<0.000000e+00> : vector<17x64xf32>
      %97 = tpu.matmul %96, %92, %cst_96 {dimension_numbers = #tpu.dot_dimension_numbers<[1], [0], [0], [1], [0, 0, 1, 1], [], []>} : vector<17x192xbf16>, vector<192x64xbf16>, vector<17x64xf32> -> vector<17x64xf32>
      %98 = arith.addf %90, %97 : vector<17x64xf32>
      %99 = arith.maximumf %74, %98 : vector<17x64xf32>
      %100 = vector.broadcast %0 : vector<1x64xf32> to vector<17x64xf32>
      %101 = arith.addf %99, %100 : vector<17x64xf32>
      %cst_97 = arith.constant 0.000000e+00 : f32
      %102 = vector.broadcast %cst_97 : f32 to vector<17x64xf32>
      %103 = arith.maximumf %101, %102 : vector<17x64xf32>
      %c0_98 = arith.constant 0 : index
      %104 = arith.index_cast %arg6 : i32 to index
      %c0_99 = arith.constant 0 : index
      %c0_100 = arith.constant 0 : index
      %105 = vector.load %arg5[%c0_98, %104, %c0_99, %c0_100] : memref<1x17x17x64xf32, #tpu.memory_space<vmem>>, vector<1x1x17x64xf32>
      %106 = vector.shape_cast %105 : vector<1x1x17x64xf32> to vector<17x64xf32>
      %107 = vector.shape_cast %103 : vector<17x64xf32> to vector<1x1x17x64xf32>
      tpu.vector_store %arg5[%c0_98, %104, %c0_99, %c0_100], %107 {strides = array<i32>} : memref<1x17x17x64xf32, #tpu.memory_space<vmem>>, vector<1x1x17x64xf32>,
    }
    %c17_i32_1 = arith.constant 17 : i32
    return
  }
  func.func @transform_0(%arg0: i32) -> (i32, i32, i32, i32) {
    %c0_i32 = arith.constant 0 : i32
    %c0_i32_0 = arith.constant 0 : i32
    %c0_i32_1 = arith.constant 0 : i32
    %c0_i32_2 = arith.constant 0 : i32
    return %arg0, %c0_i32, %c0_i32_0, %c0_i32_1 : i32, i32, i32, i32
  }
  func.func @transform_1(%arg0: i32) -> (i32, i32, i32, i32) {
    %c0_i32 = arith.constant 0 : i32
    %c0_i32_0 = arith.constant 0 : i32
    %c0_i32_1 = arith.constant 0 : i32
    %c0_i32_2 = arith.constant 0 : i32
    return %arg0, %c0_i32, %c0_i32_0, %c0_i32_1 : i32, i32, i32, i32
  }
  func.func @transform_2(%arg0: i32) -> (i32, i32, i32) {
    %c0_i32 = arith.constant 0 : i32
    %c0_i32_0 = arith.constant 0 : i32
    %c0_i32_1 = arith.constant 0 : i32
    %c0_i32_2 = arith.constant 0 : i32
    return %c0_i32, %c0_i32_0, %c0_i32_1 : i32, i32, i32
  }
  func.func @transform_3(%arg0: i32) -> (i32, i32) {
    %c0_i32 = arith.constant 0 : i32
    %c0_i32_0 = arith.constant 0 : i32
    %c0_i32_1 = arith.constant 0 : i32
    return %c0_i32, %c0_i32_0 : i32, i32
  }
  func.func @transform_4(%arg0: i32) -> (i32, i32, i32, i32) {
    %c0_i32 = arith.constant 0 : i32
    %c0_i32_0 = arith.constant 0 : i32
    %c0_i32_1 = arith.constant 0 : i32
    %c0_i32_2 = arith.constant 0 : i32
    return %arg0, %c0_i32, %c0_i32_0, %c0_i32_1 : i32, i32, i32, i32
  }
}

module attributes {stable_mosaic.version = 11 : i64} {
  func.func @_dense_head_kernel(%arg0: i32, %arg1: memref<2x3712xbf16, #tpu.memory_space<vmem>>, %arg2: memref<3712x32xbf16, #tpu.memory_space<vmem>>, %arg3: memref<1x32xf32, #tpu.memory_space<vmem>>, %arg4: memref<32x2xbf16, #tpu.memory_space<vmem>>, %arg5: memref<1x2xf32, #tpu.memory_space<vmem>>, %arg6: memref<2x2xf32, #tpu.memory_space<vmem>>, %arg7: memref<2x32xf32, #tpu.memory_space<vmem>>) attributes {dimension_semantics = [#tpu.dimension_semantics<arbitrary>], iteration_bounds = array<i64: 5>, scalar_prefetch = 0 : i64, scratch_operands = 1 : i64, tpu.core_type = #tpu.core_type<tc>, window_params = [{transform_indices = @transform_0, window_bounds = array<i64: 2, 3712>}, {transform_indices = @transform_1, window_bounds = array<i64: 3712, 32>}, {pipeline_mode = #tpu.pipeline_mode<synchronous>, transform_indices = @transform_2, window_bounds = array<i64: 1, 32>}, {pipeline_mode = #tpu.pipeline_mode<synchronous>, transform_indices = @transform_3, window_bounds = array<i64: 32, 2>}, {pipeline_mode = #tpu.pipeline_mode<synchronous>, transform_indices = @transform_4, window_bounds = array<i64: 1, 2>}, {pipeline_mode = #tpu.pipeline_mode<synchronous>, transform_indices = @transform_5, window_bounds = array<i64: 2, 2>}]} {
    %c0_i32 = arith.constant 0 : i32
    %0 = arith.cmpi eq, %arg0, %c0_i32 : i32
    %1 = arith.extui %0 : i1 to i32
    %c0_i32_0 = arith.constant 0 : i32
    %2 = arith.cmpi ne, %1, %c0_i32_0 : i32
    scf.if %2 {
      %cst_9 = arith.constant 0.000000e+00 : f32
      %12 = vector.broadcast %cst_9 : f32 to vector<2x32xf32>
      %c0_10 = arith.constant 0 : index
      %c0_11 = arith.constant 0 : index
      %13 = vector.load %arg7[%c0_10, %c0_11] : memref<2x32xf32, #tpu.memory_space<vmem>>, vector<2x32xf32>
      tpu.vector_store %arg7[%c0_10, %c0_11], %12 {strides = array<i32>} : memref<2x32xf32, #tpu.memory_space<vmem>>, vector<2x32xf32>,
    } else {
    }
    %c0 = arith.constant 0 : index
    %c0_1 = arith.constant 0 : index
    %3 = vector.load %arg7[%c0, %c0_1] : memref<2x32xf32, #tpu.memory_space<vmem>>, vector<2x32xf32>
    %c0_2 = arith.constant 0 : index
    %c0_3 = arith.constant 0 : index
    %4 = vector.load %arg1[%c0_2, %c0_3] : memref<2x3712xbf16, #tpu.memory_space<vmem>>, vector<2x3712xbf16>
    %c0_4 = arith.constant 0 : index
    %c0_5 = arith.constant 0 : index
    %5 = vector.load %arg2[%c0_4, %c0_5] : memref<3712x32xbf16, #tpu.memory_space<vmem>>, vector<3712x32xbf16>
    %cst = arith.constant dense<0.000000e+00> : vector<2x32xf32>
    %6 = tpu.matmul %4, %5, %cst {dimension_numbers = #tpu.dot_dimension_numbers<[1], [0], [0], [1], [0, 0, 1, 1], [], []>} : vector<2x3712xbf16>, vector<3712x32xbf16>, vector<2x32xf32> -> vector<2x32xf32>
    %7 = arith.addf %3, %6 : vector<2x32xf32>
    %c0_6 = arith.constant 0 : index
    %c0_7 = arith.constant 0 : index
    %8 = vector.load %arg7[%c0_6, %c0_7] : memref<2x32xf32, #tpu.memory_space<vmem>>, vector<2x32xf32>
    tpu.vector_store %arg7[%c0_6, %c0_7], %7 {strides = array<i32>} : memref<2x32xf32, #tpu.memory_space<vmem>>, vector<2x32xf32>,
    %c4_i32 = arith.constant 4 : i32
    %9 = arith.cmpi eq, %arg0, %c4_i32 : i32
    %10 = arith.extui %9 : i1 to i32
    %c0_i32_8 = arith.constant 0 : i32
    %11 = arith.cmpi ne, %10, %c0_i32_8 : i32
    scf.if %11 {
      %c0_9 = arith.constant 0 : index
      %c0_10 = arith.constant 0 : index
      %12 = vector.load %arg7[%c0_9, %c0_10] : memref<2x32xf32, #tpu.memory_space<vmem>>, vector<2x32xf32>
      %c0_11 = arith.constant 0 : index
      %c0_12 = arith.constant 0 : index
      %13 = vector.load %arg3[%c0_11, %c0_12] : memref<1x32xf32, #tpu.memory_space<vmem>>, vector<1x32xf32>
      %14 = vector.broadcast %13 : vector<1x32xf32> to vector<2x32xf32>
      %15 = arith.addf %12, %14 : vector<2x32xf32>
      %cst_13 = arith.constant 0.000000e+00 : f32
      %16 = vector.broadcast %cst_13 : f32 to vector<2x32xf32>
      %17 = arith.maximumf %15, %16 : vector<2x32xf32>
      %18 = arith.truncf %17 : vector<2x32xf32> to vector<2x32xbf16>
      %c0_14 = arith.constant 0 : index
      %c0_15 = arith.constant 0 : index
      %19 = vector.load %arg4[%c0_14, %c0_15] : memref<32x2xbf16, #tpu.memory_space<vmem>>, vector<32x2xbf16>
      %cst_16 = arith.constant dense<0.000000e+00> : vector<2x2xf32>
      %20 = tpu.matmul %18, %19, %cst_16 {dimension_numbers = #tpu.dot_dimension_numbers<[1], [0], [0], [1], [0, 0, 1, 1], [], []>} : vector<2x32xbf16>, vector<32x2xbf16>, vector<2x2xf32> -> vector<2x2xf32>
      %c0_17 = arith.constant 0 : index
      %c0_18 = arith.constant 0 : index
      %21 = vector.load %arg5[%c0_17, %c0_18] : memref<1x2xf32, #tpu.memory_space<vmem>>, vector<1x2xf32>
      %22 = vector.broadcast %21 : vector<1x2xf32> to vector<2x2xf32>
      %23 = arith.addf %20, %22 : vector<2x2xf32>
      %c0_19 = arith.constant 0 : index
      %c0_20 = arith.constant 0 : index
      %24 = vector.load %arg6[%c0_19, %c0_20] : memref<2x2xf32, #tpu.memory_space<vmem>>, vector<2x2xf32>
      tpu.vector_store %arg6[%c0_19, %c0_20], %23 {strides = array<i32>} : memref<2x2xf32, #tpu.memory_space<vmem>>, vector<2x2xf32>,
    } else {
    }
    return
  }
  func.func @transform_0(%arg0: i32) -> (i32, i32) {
    %c0_i32 = arith.constant 0 : i32
    %c0_i32_0 = arith.constant 0 : i32
    return %c0_i32, %arg0 : i32, i32
  }
  func.func @transform_1(%arg0: i32) -> (i32, i32) {
    %c0_i32 = arith.constant 0 : i32
    %c0_i32_0 = arith.constant 0 : i32
    return %arg0, %c0_i32 : i32, i32
  }
  func.func @transform_2(%arg0: i32) -> (i32, i32) {
    %c0_i32 = arith.constant 0 : i32
    %c0_i32_0 = arith.constant 0 : i32
    %c0_i32_1 = arith.constant 0 : i32
    return %c0_i32, %c0_i32_0 : i32, i32
  }
  func.func @transform_3(%arg0: i32) -> (i32, i32) {
    %c0_i32 = arith.constant 0 : i32
    %c0_i32_0 = arith.constant 0 : i32
    %c0_i32_1 = arith.constant 0 : i32
    return %c0_i32, %c0_i32_0 : i32, i32
  }
  func.func @transform_4(%arg0: i32) -> (i32, i32) {
    %c0_i32 = arith.constant 0 : i32
    %c0_i32_0 = arith.constant 0 : i32
    %c0_i32_1 = arith.constant 0 : i32
    return %c0_i32, %c0_i32_0 : i32, i32
  }
  func.func @transform_5(%arg0: i32) -> (i32, i32) {
    %c0_i32 = arith.constant 0 : i32
    %c0_i32_0 = arith.constant 0 : i32
    %c0_i32_1 = arith.constant 0 : i32
    return %c0_i32, %c0_i32_0 : i32, i32
  }
}

</mosaic_0001>

<llo_original>
// kernel: petnet_forward.4
$region0: #{petnet_forward.4}
  #allocation0 [shape = 'u32[]', space=smem, size = 0x4, offset = 0x4, fixed_abs, tag = 'smem constant byte address 0x4 - core index']
  #allocation1 [shape = 'u32[144,128]{1,0:T(1,128)}', space=vmem, size = 0x12000, scoped, tag = 'internal scratch']
  %s0 = inlined_call_operand.vmem [shape: bf16[2,148,74,27], index: 0, kind: input, shape index: {}]
  %s1 = inlined_call_operand.vmem [shape: bf16[2,148,74,27], index: 1, kind: input, shape index: {}]
  %s2 = inlined_call_operand.vmem [shape: bf16[1,27,64], index: 2, kind: input, shape index: {}]
  %s3 = inlined_call_operand.vmem [shape: f32[1,64], index: 3, kind: input, shape index: {}]
  %s4 = inlined_call_operand.vmem [shape: f32[2,74,74,64], index: 4, kind: output, shape index: {}]
  %s5 = sld [smem:[#allocation0]]
  $region56: #{petnet_forward.4} parent=0
    _
  %s7 = ssub.s32 1, %s5
  %s8 = scalar_select 0, %s7, %s5
  loop: start=0, step=1, limit=4
  $region2: #{petnet_forward.4} parent=0 // loop_pre_header
    _
  $region3: #{petnet_forward.4} parent=0 // loop_header
    %s10 = sphi 0, %s14
    %p11 = scmp.ge.s32.totalorder %s10, 4
    %s20 = sphi 0, %s22
    %s23 = sphi 0, %s20
    %s24 = sphi 0, %s23
    %s40 = sphi 0, %s24
    %s46 = sphi 0, %s48
    %s49 = sphi 0, %s46
    %s50 = sphi 0, %s49
    %s66 = sphi 0, %s50
    %s70 = sphi 0, %s70
    %s72 = sphi 0, %s70
    %s73 = sphi 0, %s72
    %s87 = sphi 0, %s73
    %s91 = sphi 0, %s91
    %s93 = sphi 0, %s91
    %s94 = sphi 0, %s93
    %s108 = sphi 0, %s94
    %s114 = sphi 0, %s116
    %s117 = sphi 0, %s114
    %s118 = sphi 0, %s117
    %s134 = sphi 0, %s118
  $region4: #{petnet_forward.4} parent=0 // loop_header_branch
    %13 = sbr.rel (%p11) target = $region8
  $region5: #{petnet_forward.4} parent=0 // loop_body
    %s15 = ssub.s32 %s10, 1
    %s16 = ssub.s32 %s10, 2
    %s17 = sadd.s32 %s10, 1
    %s18 = ssub.s32 %s10, %s17
    %p19 = scmp.eq.s32.totalorder %s18, 0
    %s21 = sadd.s32 %s20, 1
    %s22 = scalar_select %p19, %s20, %s21
    %p25 = pneg %p19
    %p26 = scmp.eq.s32.totalorder %s10, 1
    %p27 = por %p25, %p26
    %p28 = scmp.ne.s32.totalorder %s20, %s23
    %p29 = scmp.eq.s32.totalorder %s10, 0
    %p30 = por %p28, %p29
    %p31 = scmp.ne.s32.totalorder %s20, %s23
    %p32 = scmp.eq.s32.totalorder %s15, 1
    %p33 = por %p31, %p32
    %p34 = scmp.ne.s32.totalorder %s23, %s24
    %p35 = scmp.eq.s32.totalorder %s15, 0
    %p36 = por %p34, %p35
    %p37 = scmp.ne.s32.totalorder %s23, %s24
    %p38 = scmp.eq.s32.totalorder %s16, 1
    %p39 = por %p37, %p38
    %p41 = scmp.ne.s32.totalorder %s24, %s40
    %p42 = scmp.eq.s32.totalorder %s16, 0
    %p43 = por %p41, %p42
    %s44 = ssub.s32 %s10, %s17
    %p45 = scmp.eq.s32.totalorder %s44, 0
    %s47 = sadd.s32 %s46, 1
    %s48 = scalar_select %p45, %s46, %s47
    %p51 = pneg %p45
    %p52 = scmp.eq.s32.totalorder %s10, 1
    %p53 = por %p51, %p52
    %p54 = scmp.ne.s32.totalorder %s46, %s49
    %p55 = scmp.eq.s32.totalorder %s10, 0
    %p56 = por %p54, %p55
    %p57 = scmp.ne.s32.totalorder %s46, %s49
    %p58 = scmp.eq.s32.totalorder %s15, 1
    %p59 = por %p57, %p58
    %p60 = scmp.ne.s32.totalorder %s49, %s50
    %p61 = scmp.eq.s32.totalorder %s15, 0
    %p62 = por %p60, %p61
    %p63 = scmp.ne.s32.totalorder %s49, %s50
    %p64 = scmp.eq.s32.totalorder %s16, 1
    %p65 = por %p63, %p64
    %p67 = scmp.ne.s32.totalorder %s50, %s66
    %p68 = scmp.eq.s32.totalorder %s16, 0
    %p69 = por %p67, %p68
    %s71 = sadd.s32 %s70, 1
    %p74 = scmp.eq.s32.totalorder %s10, 1
    %p75 = scmp.ne.s32.totalorder %s70, %s72
    %p76 = scmp.eq.s32.totalorder %s10, 0
    %p77 = por %p75, %p76
    %p78 = scmp.ne.s32.totalorder %s70, %s72
    %p79 = scmp.eq.s32.totalorder %s15, 1
    %p80 = por %p78, %p79
    %p81 = scmp.ne.s32.totalorder %s72, %s73
    %p82 = scmp.eq.s32.totalorder %s15, 0
    %p83 = por %p81, %p82
    %p84 = scmp.ne.s32.totalorder %s72, %s73
    %p85 = scmp.eq.s32.totalorder %s16, 1
    %p86 = por %p84, %p85
    %p88 = scmp.ne.s32.totalorder %s73, %s87
    %p89 = scmp.eq.s32.totalorder %s16, 0
    %p90 = por %p88, %p89
    %s92 = sadd.s32 %s91, 1
    %p95 = scmp.eq.s32.totalorder %s10, 1
    %p96 = scmp.ne.s32.totalorder %s91, %s93
    %p97 = scmp.eq.s32.totalorder %s10, 0
    %p98 = por %p96, %p97
    %p99 = scmp.ne.s32.totalorder %s91, %s93
    %p100 = scmp.eq.s32.totalorder %s15, 1
    %p101 = por %p99, %p100
    %p102 = scmp.ne.s32.totalorder %s93, %s94
    %p103 = scmp.eq.s32.totalorder %s15, 0
    %p104 = por %p102, %p103
    %p105 = scmp.ne.s32.totalorder %s93, %s94
    %p106 = scmp.eq.s32.totalorder %s16, 1
    %p107 = por %p105, %p106
    %p109 = scmp.ne.s32.totalorder %s94, %s108
    %p110 = scmp.eq.s32.totalorder %s16, 0
    %p111 = por %p109, %p110
    %s112 = ssub.s32 %s10, %s17
    %p113 = scmp.eq.s32.totalorder %s112, 0
    %s115 = sadd.s32 %s114, 1
    %s116 = scalar_select %p113, %s114, %s115
    %p119 = pneg %p113
    %p120 = scmp.eq.s32.totalorder %s10, 1
    %p121 = por %p119, %p120
    %p122 = scmp.ne.s32.totalorder %s114, %s117
    %p123 = scmp.eq.s32.totalorder %s10, 0
    %p124 = por %p122, %p123
    %p125 = scmp.ne.s32.totalorder %s114, %s117
    %p126 = scmp.eq.s32.totalorder %s15, 1
    %p127 = por %p125, %p126
    %p128 = scmp.ne.s32.totalorder %s117, %s118
    %p129 = scmp.eq.s32.totalorder %s15, 0
    %p130 = por %p128, %p129
    %p131 = scmp.ne.s32.totalorder %s117, %s118
    %p132 = scmp.eq.s32.totalorder %s16, 1
    %p133 = por %p131, %p132
    %p135 = scmp.ne.s32.totalorder %s118, %s134
    %p136 = scmp.eq.s32.totalorder %s16, 0
    %p137 = por %p135, %p136
    %p138 = scmp.le.s32.totalorder 1, %s10
    %p139 = scmp.lt.s32.totalorder %s10, 3
    %p140 = pnand %p138, %p139
    %p141 = pneg %p140
    // Predicated region
    $region9: #{petnet_forward.4} parent=5 // pred_check
      _
    $region10: #{petnet_forward.4} parent=5 // pred_check_branch
      %143 = sbr.rel (%p140) target = $region12
    $region11: #{petnet_forward.4} parent=5 // pred_region
      %s144 = ssub.s32 %s10, 1
      // Predicated region
      $region13: #{petnet_forward.4} parent=11 // pred_check
        %p145 = pneg %p83
      $region14: #{petnet_forward.4} parent=11 // pred_check_branch
        %147 = sbr.rel (%p145) target = $region16
      $region15: #{petnet_forward.4} parent=11 // pred_region
        _
      $region16: #{petnet_forward.4} parent=11 // pred_fallthru
        _
      // Predicated region
      $region17: #{petnet_forward.4} parent=11 // pred_check
        %p148 = pneg %p104
      $region18: #{petnet_forward.4} parent=11 // pred_check_branch
        %150 = sbr.rel (%p148) target = $region20
      $region19: #{petnet_forward.4} parent=11 // pred_region
        _
      $region20: #{petnet_forward.4} parent=11 // pred_fallthru
        _
    $region12: #{petnet_forward.4} parent=5 // pred_fallthru
      _
    %p151 = scmp.lt.s32.totalorder %s10, 2
    // Predicated region
    $region21: #{petnet_forward.4} parent=5 // pred_check
      %p152 = pneg %p151
    $region22: #{petnet_forward.4} parent=5 // pred_check_branch
      %154 = sbr.rel (%p152) target = $region24
    $region23: #{petnet_forward.4} parent=5 // pred_region
      // Predicated region
      $region25: #{petnet_forward.4} parent=23 // pred_check
        %p155 = pneg %p30
      $region26: #{petnet_forward.4} parent=23 // pred_check_branch
        %157 = sbr.rel (%p155) target = $region28
      $region27: #{petnet_forward.4} parent=23 // pred_region
        %p158 = scmp.lt.s32.totalorder %s10, 1
        %s159 = scalar_select %p158, %s10, 1
        %s160 = smul.addr %s159, 1480
        %s161 = smul.addr %s160, 4
        %s162 = scalar_lea.vmem %s0, %s161
      $region28: #{petnet_forward.4} parent=23 // pred_fallthru
        _
      // Predicated region
      $region29: #{petnet_forward.4} parent=23 // pred_check
        %p163 = pneg %p56
      $region30: #{petnet_forward.4} parent=23 // pred_check_branch
        %165 = sbr.rel (%p163) target = $region32
      $region31: #{petnet_forward.4} parent=23 // pred_region
        %p166 = scmp.lt.s32.totalorder %s10, 1
        %s167 = scalar_select %p166, %s10, 1
        %s168 = smul.addr %s167, 1480
        %s169 = smul.addr %s168, 4
        %s170 = scalar_lea.vmem %s1, %s169
      $region32: #{petnet_forward.4} parent=23 // pred_fallthru
        _
    $region24: #{petnet_forward.4} parent=5 // pred_fallthru
      _
    %p171 = scmp.le.s32.totalorder 1, %s10
    %p172 = scmp.lt.s32.totalorder %s10, 3
    %p173 = pnand %p171, %p172
    %p174 = pneg %p173
    // Predicated region
    $region33: #{petnet_forward.4} parent=5 // pred_check
      _
    $region34: #{petnet_forward.4} parent=5 // pred_check_branch
      %176 = sbr.rel (%p173) target = $region36
    $region35: #{petnet_forward.4} parent=5 // pred_region
      %s177 = ssub.s32 %s10, 1
      %p178 = scmp.lt.s32.totalorder %s15, 1
      %s179 = scalar_select %p178, %s15, 1
      %s180 = smul.addr %s179, 1480
      %s181 = smul.addr %s180, 4
      %s182 = scalar_lea.vmem %s0, %s181
      %p183 = pneg %p36
      %p184 = pneg %p33
      %p185 = scmp.lt.s32.totalorder %s15, 1
      %s186 = scalar_select %p185, %s15, 1
      %s187 = smul.addr %s186, 1480
      %s188 = smul.addr %s187, 4
      %s189 = scalar_lea.vmem %s1, %s188
      %p190 = pneg %p62
      %p191 = pneg %p59
      %p192 = pneg %p83
      %p193 = pneg %p80
      %p194 = pneg %p104
      %p195 = pneg %p101
      %p196 = pneg %p130
      %p197 = pneg %p127
      %p198 = scmp.lt.s32.totalorder %s15, 1
      %s199 = scalar_select %p198, %s15, 1
      %s200 = smul.addr %s199, 740
      %s201 = smul.addr %s200, 8
      %s202 = scalar_lea.vmem %s4, %s201
      %p203 = scmp.lt.s32.totalorder %s15, 1
      %s204 = scalar_select %p203, %s15, 1
      %s205 = smul.addr %s204, 1480
      %s206 = smul.addr %s205, 4
      %s207 = scalar_lea.vmem %s0, %s206
      %p208 = scmp.lt.s32.totalorder %s15, 1
      %s209 = scalar_select %p208, %s15, 1
      %s210 = smul.addr %s209, 1480
      %s211 = smul.addr %s210, 4
      %s212 = scalar_lea.vmem %s1, %s211
      %p213 = scmp.lt.s32.totalorder %s15, 1
      %s214 = scalar_select %p213, %s15, 1
      %s215 = smul.addr %s214, 740
      %s216 = smul.addr %s215, 8
      %s217 = scalar_lea.vmem %s4, %s216
      %v219 = vld [vmem:[%s3] sm:$0x1]
      %v220 = vld [vmem:[%s2] sm:$0xf]
      %v221 = vld [vmem:[%s2 + $0x4] sm:$0xf]
      %v222 = vld [vmem:[%s2 + $0x8] sm:$0xf]
      %v223 = vld [vmem:[%s2 + $0xc] sm:$0x3]
      loop: start=0, step=1, limit=74
      $region37: #{petnet_forward.4} parent=35 // loop_pre_header
        _
      $region38: #{petnet_forward.4} parent=35 // loop_header
        %s225 = sphi 0, %s229
        %p226 = scmp.ge.s32.totalorder %s225, 74
      $region39: #{petnet_forward.4} parent=35 // loop_header_branch
        %228 = sbr.rel (%p226) target = $region43
      $region40: #{petnet_forward.4} parent=35 // loop_body
        %s230 = smul.u32 %s225, 2
        %s231 = smul.u32 %s230, 10
        %s232 = smul.addr %s231, 4
        %s233 = scalar_lea.vmem %s207, %s232
        %v234 = vld [vmem:[%s233] sm:$0xf]
        %v235 = vld [vmem:[%s233 + $0x4] sm:$0xf]
        %v236 = vld [vmem:[%s233 + $0x8] sm:$0xf]
        %v237 = vld [vmem:[%s233 + $0xc] sm:$0xf]
        %v238 = vld [vmem:[%s233 + $0x10] sm:$0xf]
        %v239 = vld [vmem:[%s233 + $0x14] sm:$0xf]
        %v240 = vld [vmem:[%s233 + $0x18] sm:$0xf]
        %v241 = vld [vmem:[%s233 + $0x1c] sm:$0xf]
        %v242 = vld [vmem:[%s233 + $0x20] sm:$0xf]
        %v243 = vld [vmem:[%s233 + $0x24] sm:$0x1]
        %v254 = vunpack.c.l.b16 %v234
        %v255 = vunpack.c.l.b16 %v235
        %v256 = vunpack.c.l.b16 %v236
        %v257 = vunpack.c.l.b16 %v237
        %v258 = vunpack.c.l.b16 %v238
        %v259 = vunpack.c.l.b16 %v239
        %v260 = vunpack.c.l.b16 %v240
        %v261 = vunpack.c.l.b16 %v241
        %v262 = vunpack.c.l.b16 %v242
        %v263 = vunpack.c.l.b16 %v243
        %v264 = vpack.c.b16 %v255, %v254
        %v265 = vpack.c.b16 %v257, %v256
        %v266 = vpack.c.b16 %v259, %v258
        %v267 = vpack.c.b16 %v261, %v260
        %v268 = vpack.c.b16 %v263, %v262
        %v273 = vunpack.c.l.b16 %v220
        %v274 = vunpack.c.l.b16 %v221
        %v275 = vunpack.c.l.b16 %v222
        %v276 = vunpack.c.l.b16 %v223
        %v277 = vpack.c.b16 %v274, %v273
        %v278 = vpack.c.b16 %v276, %v275
        %vm280 = vcmask 220160
        %v282 = vsel %vm280, %v264, 0
        %v285 = vsel %vm280, %v265, 0
        %v288 = vsel %vm280, %v266, 0
        %v291 = vsel %vm280, %v267, 0
        %v294 = vsel %vm280, %v268, 0
        %vm296 = vcmask 1044480
        %vm297 = vcmask 1045504
        %v298 = vsel %vm296, 4294967295, 65535
        %v299 = vsel %vm297, %v298, 0
        %v301 = vand.u32 %v278, %v299
        %303 = vmatprep.subr.bf16.mxu0 0
        %304 = vmatpush1.bf16.msra.mxu0 0
        %305 = vmatprep.subr.bf16.mxu0 0
        %306 = vmatpush1.bf16.msra.mxu0 0
        %307 = vmatprep.subr.bf16.mxu0 0
        %308 = vmatpush1.bf16.msra.mxu0 0
        %309 = vmatprep.subr.bf16.mxu0 0
        %310 = vmatpush1.bf16.msra.mxu0 0
        %311 = vmatprep.subr.bf16.mxu0 0
        %312 = vmatpush1.bf16.msra.mxu0 0
        %313 = vmatprep.subr.bf16.mxu0 0
        %314 = vmatpush1.bf16.msra.mxu0 0
        %315 = vmatprep.subr.bf16.mxu0 0
        %316 = vmatpush1.bf16.msra.mxu0 %v301
        %317 = vmatprep.subr.bf16.mxu0 0
        %318 = vmatpush1.bf16.msra.mxu0 %v277
        %319 = vmatprep.subr.bf16.mxu0 0
        %320 = vmatpush2.bf16.msra.mxu0 0
        %321 = vmatprep.subr.bf16.mxu0 0
        %322 = vmatpush2.bf16.msra.mxu0 0
        %323 = vmatprep.subr.bf16.mxu0 0
        %324 = vmatpush2.bf16.msra.mxu0 0
        %325 = vmatprep.subr.bf16.mxu0 0
        %326 = vmatpush2.bf16.msra.mxu0 0
        %327 = vmatprep.subr.bf16.mxu0 0
        %328 = vmatpush2.bf16.msra.mxu0 0
        %329 = vmatprep.subr.bf16.mxu0 0
        %330 = vmatpush2.bf16.msra.mxu0 0
        %331 = vmatprep.subr.bf16.mxu0 0
        %332 = vmatpush2.bf16.msra.mxu0 0
        %333 = vmatprep.subr.bf16.mxu0 0
        %334 = vmatpush2.bf16.msra.mxu0 0
        %335 = vmatprep.mubr.bf16.mxu0 0
        %336 = vmatmul.mubr.bf16.gmra.mxu0 %v282
        %v337 = vpop.f32.mrf.mxu0
        %v338 = vadd.f32 0.0, %v337
        %v339 = vpop.f32.mrf.mxu0
        %v340 = vpop.f32.mrf.mxu0
        %v341 = vadd.f32 0.0, %v340
        %v342 = vpop.f32.mrf.mxu0
        %343 = vmatprep.mubr.bf16.mxu0 0
        %344 = vmatmul.mubr.bf16.gmra.mxu0 %v285
        %v345 = vpop.f32.mrf.mxu0
        %v346 = vadd.f32 0.0, %v345
        %v347 = vpop.f32.mrf.mxu0
        %v348 = vpop.f32.mrf.mxu0
        %v349 = vadd.f32 0.0, %v348
        %v350 = vpop.f32.mrf.mxu0
        %351 = vmatprep.mubr.bf16.mxu0 0
        %352 = vmatmul.mubr.bf16.gmra.mxu0 %v288
        %v353 = vpop.f32.mrf.mxu0
        %v354 = vadd.f32 0.0, %v353
        %v355 = vpop.f32.mrf.mxu0
        %v356 = vpop.f32.mrf.mxu0
        %v357 = vadd.f32 0.0, %v356
        %v358 = vpop.f32.mrf.mxu0
        %359 = vmatprep.mubr.bf16.mxu0 0
        %360 = vmatmul.mubr.bf16.gmra.mxu0 %v291
        %v361 = vpop.f32.mrf.mxu0
        %v362 = vadd.f32 0.0, %v361
        %v363 = vpop.f32.mrf.mxu0
        %v364 = vpop.f32.mrf.mxu0
        %v365 = vadd.f32 0.0, %v364
        %v366 = vpop.f32.mrf.mxu0
        %367 = vmatprep.mubr.bf16.mxu0 0
        %368 = vmatmul.mubr.bf16.gmra.mxu0 %v294
        %v369 = vpop.f32.mrf.mxu0
        %v370 = vadd.f32 0.0, %v369
        %v371 = vpop.f32.mrf.mxu0
        %v372 = vpop.f32.mrf.mxu0
        %v373 = vadd.f32 0.0, %v372
        %v374 = vpop.f32.mrf.mxu0
        %375 = vdwg.mxu0
        %s376 = smul.addr %s231, 4
        %s377 = scalar_lea.vmem %s212, %s376
        %v378 = vld [vmem:[%s377] sm:$0xf]
        %v379 = vld [vmem:[%s377 + $0x4] sm:$0xf]
        %v380 = vld [vmem:[%s377 + $0x8] sm:$0xf]
        %v381 = vld [vmem:[%s377 + $0xc] sm:$0xf]
        %v382 = vld [vmem:[%s377 + $0x10] sm:$0xf]
        %v383 = vld [vmem:[%s377 + $0x14] sm:$0xf]
        %v384 = vld [vmem:[%s377 + $0x18] sm:$0xf]
        %v385 = vld [vmem:[%s377 + $0x1c] sm:$0xf]
        %v386 = vld [vmem:[%s377 + $0x20] sm:$0xf]
        %v387 = vld [vmem:[%s377 + $0x24] sm:$0x1]
        %v398 = vunpack.c.l.b16 %v378
        %v399 = vunpack.c.l.b16 %v379
        %v400 = vunpack.c.l.b16 %v380
        %v401 = vunpack.c.l.b16 %v381
        %v402 = vunpack.c.l.b16 %v382
        %v403 = vunpack.c.l.b16 %v383
        %v404 = vunpack.c.l.b16 %v384
        %v405 = vunpack.c.l.b16 %v385
        %v406 = vunpack.c.l.b16 %v386
        %v407 = vunpack.c.l.b16 %v387
        %v408 = vpack.c.b16 %v399, %v398
        %v409 = vpack.c.b16 %v401, %v400
        %v410 = vpack.c.b16 %v403, %v402
        %v411 = vpack.c.b16 %v405, %v404
        %v412 = vpack.c.b16 %v407, %v406
        %v414 = vsel %vm280, %v408, 0
        %v417 = vsel %vm280, %v409, 0
        %v420 = vsel %vm280, %v410, 0
        %v423 = vsel %vm280, %v411, 0
        %v426 = vsel %vm280, %v412, 0
        %428 = vmatprep.subr.bf16.mxu0 0
        %429 = vmatpush1.bf16.msra.mxu0 0
        %430 = vmatprep.subr.bf16.mxu0 0
        %431 = vmatpush1.bf16.msra.mxu0 0
        %432 = vmatprep.subr.bf16.mxu0 0
        %433 = vmatpush1.bf16.msra.mxu0 0
        %434 = vmatprep.subr.bf16.mxu0 0
        %435 = vmatpush1.bf16.msra.mxu0 0
        %436 = vmatprep.subr.bf16.mxu0 0
        %437 = vmatpush1.bf16.msra.mxu0 0
        %438 = vmatprep.subr.bf16.mxu0 0
        %439 = vmatpush1.bf16.msra.mxu0 0
        %440 = vmatprep.subr.bf16.mxu0 0
        %441 = vmatpush1.bf16.msra.mxu0 %v301
        %442 = vmatprep.subr.bf16.mxu0 0
        %443 = vmatpush1.bf16.msra.mxu0 %v277
        %444 = vmatprep.subr.bf16.mxu0 0
        %445 = vmatpush2.bf16.msra.mxu0 0
        %446 = vmatprep.subr.bf16.mxu0 0
        %447 = vmatpush2.bf16.msra.mxu0 0
        %448 = vmatprep.subr.bf16.mxu0 0
        %449 = vmatpush2.bf16.msra.mxu0 0
        %450 = vmatprep.subr.bf16.mxu0 0
        %451 = vmatpush2.bf16.msra.mxu0 0
        %452 = vmatprep.subr.bf16.mxu0 0
        %453 = vmatpush2.bf16.msra.mxu0 0
        %454 = vmatprep.subr.bf16.mxu0 0
        %455 = vmatpush2.bf16.msra.mxu0 0
        %456 = vmatprep.subr.bf16.mxu0 0
        %457 = vmatpush2.bf16.msra.mxu0 0
        %458 = vmatprep.subr.bf16.mxu0 0
        %459 = vmatpush2.bf16.msra.mxu0 0
        %460 = vmatprep.mubr.bf16.mxu0 0
        %461 = vmatmul.mubr.bf16.gmra.mxu0 %v414
        %v462 = vpop.f32.mrf.mxu0
        %v463 = vadd.f32 0.0, %v462
        %v464 = vpop.f32.mrf.mxu0
        %v465 = vpop.f32.mrf.mxu0
        %v466 = vadd.f32 0.0, %v465
        %v467 = vpop.f32.mrf.mxu0
        %468 = vmatprep.mubr.bf16.mxu0 0
        %469 = vmatmul.mubr.bf16.gmra.mxu0 %v417
        %v470 = vpop.f32.mrf.mxu0
        %v471 = vadd.f32 0.0, %v470
        %v472 = vpop.f32.mrf.mxu0
        %v473 = vpop.f32.mrf.mxu0
        %v474 = vadd.f32 0.0, %v473
        %v475 = vpop.f32.mrf.mxu0
        %476 = vmatprep.mubr.bf16.mxu0 0
        %477 = vmatmul.mubr.bf16.gmra.mxu0 %v420
        %v478 = vpop.f32.mrf.mxu0
        %v479 = vadd.f32 0.0, %v478
        %v480 = vpop.f32.mrf.mxu0
        %v481 = vpop.f32.mrf.mxu0
        %v482 = vadd.f32 0.0, %v481
        %v483 = vpop.f32.mrf.mxu0
        %484 = vmatprep.mubr.bf16.mxu0 0
        %485 = vmatmul.mubr.bf16.gmra.mxu0 %v423
        %v486 = vpop.f32.mrf.mxu0
        %v487 = vadd.f32 0.0, %v486
        %v488 = vpop.f32.mrf.mxu0
        %v489 = vpop.f32.mrf.mxu0
        %v490 = vadd.f32 0.0, %v489
        %v491 = vpop.f32.mrf.mxu0
        %492 = vmatprep.mubr.bf16.mxu0 0
        %493 = vmatmul.mubr.bf16.gmra.mxu0 %v426
        %v494 = vpop.f32.mrf.mxu0
        %v495 = vadd.f32 0.0, %v494
        %v496 = vpop.f32.mrf.mxu0
        %v497 = vpop.f32.mrf.mxu0
        %v498 = vadd.f32 0.0, %v497
        %v499 = vpop.f32.mrf.mxu0
        %500 = vdwg.mxu0
        %v501 = vmax.f32 %v338, %v463
        %v502 = vmax.f32 %v341, %v466
        %v503 = vmax.f32 %v346, %v471
        %v504 = vmax.f32 %v349, %v474
        %v505 = vmax.f32 %v354, %v479
        %v506 = vmax.f32 %v357, %v482
        %v507 = vmax.f32 %v362, %v487
        %v508 = vmax.f32 %v365, %v490
        %v509 = vmax.f32 %v370, %v495
        %v510 = vmax.f32 %v373, %v498
        %s511 = sadd.s32 %s230, 1
        %s512 = smul.u32 %s511, 10
        %s513 = smul.addr %s512, 4
        %s514 = scalar_lea.vmem %s207, %s513
        %v515 = vld [vmem:[%s514] sm:$0xf]
        %v516 = vld [vmem:[%s514 + $0x4] sm:$0xf]
        %v517 = vld [vmem:[%s514 + $0x8] sm:$0xf]
        %v518 = vld [vmem:[%s514 + $0xc] sm:$0xf]
        %v519 = vld [vmem:[%s514 + $0x10] sm:$0xf]
        %v520 = vld [vmem:[%s514 + $0x14] sm:$0xf]
        %v521 = vld [vmem:[%s514 + $0x18] sm:$0xf]
        %v522 = vld [vmem:[%s514 + $0x1c] sm:$0xf]
        %v523 = vld [vmem:[%s514 + $0x20] sm:$0xf]
        %v524 = vld [vmem:[%s514 + $0x24] sm:$0x1]
        %v535 = vunpack.c.l.b16 %v515
        %v536 = vunpack.c.l.b16 %v516
        %v537 = vunpack.c.l.b16 %v517
        %v538 = vunpack.c.l.b16 %v518
        %v539 = vunpack.c.l.b16 %v519
        %v540 = vunpack.c.l.b16 %v520
        %v541 = vunpack.c.l.b16 %v521
        %v542 = vunpack.c.l.b16 %v522
        %v543 = vunpack.c.l.b16 %v523
        %v544 = vunpack.c.l.b16 %v524
        %v545 = vpack.c.b16 %v536, %v535
        %v546 = vpack.c.b16 %v538, %v537
        %v547 = vpack.c.b16 %v540, %v539
        %v548 = vpack.c.b16 %v542, %v541
        %v549 = vpack.c.b16 %v544, %v543
        %v551 = vsel %vm280, %v545, 0
        %v554 = vsel %vm280, %v546, 0
        %v557 = vsel %vm280, %v547, 0
        %v560 = vsel %vm280, %v548, 0
        %v563 = vsel %vm280, %v549, 0
        %565 = vmatprep.subr.bf16.mxu0 0
        %566 = vmatpush1.bf16.msra.mxu0 0
        %567 = vmatprep.subr.bf16.mxu0 0
        %568 = vmatpush1.bf16.msra.mxu0 0
        %569 = vmatprep.subr.bf16.mxu0 0
        %570 = vmatpush1.bf16.msra.mxu0 0
        %571 = vmatprep.subr.bf16.mxu0 0
        %572 = vmatpush1.bf16.msra.mxu0 0
        %573 = vmatprep.subr.bf16.mxu0 0
        %574 = vmatpush1.bf16.msra.mxu0 0
        %575 = vmatprep.subr.bf16.mxu0 0
        %576 = vmatpush1.bf16.msra.mxu0 0
        %577 = vmatprep.subr.bf16.mxu0 0
        %578 = vmatpush1.bf16.msra.mxu0 %v301
        %579 = vmatprep.subr.bf16.mxu0 0
        %580 = vmatpush1.bf16.msra.mxu0 %v277
        %581 = vmatprep.subr.bf16.mxu0 0
        %582 = vmatpush2.bf16.msra.mxu0 0
        %583 = vmatprep.subr.bf16.mxu0 0
        %584 = vmatpush2.bf16.msra.mxu0 0
        %585 = vmatprep.subr.bf16.mxu0 0
        %586 = vmatpush2.bf16.msra.mxu0 0
        %587 = vmatprep.subr.bf16.mxu0 0
        %588 = vmatpush2.bf16.msra.mxu0 0
        %589 = vmatprep.subr.bf16.mxu0 0
        %590 = vmatpush2.bf16.msra.mxu0 0
        %591 = vmatprep.subr.bf16.mxu0 0
        %592 = vmatpush2.bf16.msra.mxu0 0
        %593 = vmatprep.subr.bf16.mxu0 0
        %594 = vmatpush2.bf16.msra.mxu0 0
        %595 = vmatprep.subr.bf16.mxu0 0
        %596 = vmatpush2.bf16.msra.mxu0 0
        %597 = vmatprep.mubr.bf16.mxu0 0
        %598 = vmatmul.mubr.bf16.gmra.mxu0 %v551
        %v599 = vpop.f32.mrf.mxu0
        %v600 = vadd.f32 0.0, %v599
        %v601 = vpop.f32.mrf.mxu0
        %v602 = vpop.f32.mrf.mxu0
        %v603 = vadd.f32 0.0, %v602
        %v604 = vpop.f32.mrf.mxu0
        %605 = vmatprep.mubr.bf16.mxu0 0
        %606 = vmatmul.mubr.bf16.gmra.mxu0 %v554
        %v607 = vpop.f32.mrf.mxu0
        %v608 = vadd.f32 0.0, %v607
        %v609 = vpop.f32.mrf.mxu0
        %v610 = vpop.f32.mrf.mxu0
        %v611 = vadd.f32 0.0, %v610
        %v612 = vpop.f32.mrf.mxu0
        %613 = vmatprep.mubr.bf16.mxu0 0
        %614 = vmatmul.mubr.bf16.gmra.mxu0 %v557
        %v615 = vpop.f32.mrf.mxu0
        %v616 = vadd.f32 0.0, %v615
        %v617 = vpop.f32.mrf.mxu0
        %v618 = vpop.f32.mrf.mxu0
        %v619 = vadd.f32 0.0, %v618
        %v620 = vpop.f32.mrf.mxu0
        %621 = vmatprep.mubr.bf16.mxu0 0
        %622 = vmatmul.mubr.bf16.gmra.mxu0 %v560
        %v623 = vpop.f32.mrf.mxu0
        %v624 = vadd.f32 0.0, %v623
        %v625 = vpop.f32.mrf.mxu0
        %v626 = vpop.f32.mrf.mxu0
        %v627 = vadd.f32 0.0, %v626
        %v628 = vpop.f32.mrf.mxu0
        %629 = vmatprep.mubr.bf16.mxu0 0
        %630 = vmatmul.mubr.bf16.gmra.mxu0 %v563
        %v631 = vpop.f32.mrf.mxu0
        %v632 = vadd.f32 0.0, %v631
        %v633 = vpop.f32.mrf.mxu0
        %v634 = vpop.f32.mrf.mxu0
        %v635 = vadd.f32 0.0, %v634
        %v636 = vpop.f32.mrf.mxu0
        %637 = vdwg.mxu0
        %v638 = vmax.f32 %v501, %v600
        %v639 = vmax.f32 %v502, %v603
        %v640 = vmax.f32 %v503, %v608
        %v641 = vmax.f32 %v504, %v611
        %v642 = vmax.f32 %v505, %v616
        %v643 = vmax.f32 %v506, %v619
        %v644 = vmax.f32 %v507, %v624
        %v645 = vmax.f32 %v508, %v627
        %v646 = vmax.f32 %v509, %v632
        %v647 = vmax.f32 %v510, %v635
        %s648 = smul.addr %s512, 4
        %s649 = scalar_lea.vmem %s212, %s648
        %v650 = vld [vmem:[%s649] sm:$0xf]
        %v651 = vld [vmem:[%s649 + $0x4] sm:$0xf]
        %v652 = vld [vmem:[%s649 + $0x8] sm:$0xf]
        %v653 = vld [vmem:[%s649 + $0xc] sm:$0xf]
        %v654 = vld [vmem:[%s649 + $0x10] sm:$0xf]
        %v655 = vld [vmem:[%s649 + $0x14] sm:$0xf]
        %v656 = vld [vmem:[%s649 + $0x18] sm:$0xf]
        %v657 = vld [vmem:[%s649 + $0x1c] sm:$0xf]
        %v658 = vld [vmem:[%s649 + $0x20] sm:$0xf]
        %v659 = vld [vmem:[%s649 + $0x24] sm:$0x1]
        %v670 = vunpack.c.l.b16 %v650
        %v671 = vunpack.c.l.b16 %v651
        %v672 = vunpack.c.l.b16 %v652
        %v673 = vunpack.c.l.b16 %v653
        %v674 = vunpack.c.l.b16 %v654
        %v675 = vunpack.c.l.b16 %v655
        %v676 = vunpack.c.l.b16 %v656
        %v677 = vunpack.c.l.b16 %v657
        %v678 = vunpack.c.l.b16 %v658
        %v679 = vunpack.c.l.b16 %v659
        %v680 = vpack.c.b16 %v671, %v670
        %v681 = vpack.c.b16 %v673, %v672
        %v682 = vpack.c.b16 %v675, %v674
        %v683 = vpack.c.b16 %v677, %v676
        %v684 = vpack.c.b16 %v679, %v678
        %v686 = vsel %vm280, %v680, 0
        %v689 = vsel %vm280, %v681, 0
        %v692 = vsel %vm280, %v682, 0
        %v695 = vsel %vm280, %v683, 0
        %v698 = vsel %vm280, %v684, 0
        %700 = vmatprep.subr.bf16.mxu0 0
        %701 = vmatpush1.bf16.msra.mxu0 0
        %702 = vmatprep.subr.bf16.mxu0 0
        %703 = vmatpush1.bf16.msra.mxu0 0
        %704 = vmatprep.subr.bf16.mxu0 0
        %705 = vmatpush1.bf16.msra.mxu0 0
        %706 = vmatprep.subr.bf16.mxu0 0
        %707 = vmatpush1.bf16.msra.mxu0 0
        %708 = vmatprep.subr.bf16.mxu0 0
        %709 = vmatpush1.bf16.msra.mxu0 0
        %710 = vmatprep.subr.bf16.mxu0 0
        %711 = vmatpush1.bf16.msra.mxu0 0
        %712 = vmatprep.subr.bf16.mxu0 0
        %713 = vmatpush1.bf16.msra.mxu0 %v301
        %714 = vmatprep.subr.bf16.mxu0 0
        %715 = vmatpush1.bf16.msra.mxu0 %v277
        %716 = vmatprep.subr.bf16.mxu0 0
        %717 = vmatpush2.bf16.msra.mxu0 0
        %718 = vmatprep.subr.bf16.mxu0 0
        %719 = vmatpush2.bf16.msra.mxu0 0
        %720 = vmatprep.subr.bf16.mxu0 0
        %721 = vmatpush2.bf16.msra.mxu0 0
        %722 = vmatprep.subr.bf16.mxu0 0
        %723 = vmatpush2.bf16.msra.mxu0 0
        %724 = vmatprep.subr.bf16.mxu0 0
        %725 = vmatpush2.bf16.msra.mxu0 0
        %726 = vmatprep.subr.bf16.mxu0 0
        %727 = vmatpush2.bf16.msra.mxu0 0
        %728 = vmatprep.subr.bf16.mxu0 0
        %729 = vmatpush2.bf16.msra.mxu0 0
        %730 = vmatprep.subr.bf16.mxu0 0
        %731 = vmatpush2.bf16.msra.mxu0 0
        %732 = vmatprep.mubr.bf16.mxu0 0
        %733 = vmatmul.mubr.bf16.gmra.mxu0 %v686
        %v734 = vpop.f32.mrf.mxu0
        %v735 = vadd.f32 0.0, %v734
        %v736 = vpop.f32.mrf.mxu0
        %v737 = vpop.f32.mrf.mxu0
        %v738 = vadd.f32 0.0, %v737
        %v739 = vpop.f32.mrf.mxu0
        %740 = vmatprep.mubr.bf16.mxu0 0
        %741 = vmatmul.mubr.bf16.gmra.mxu0 %v689
        %v742 = vpop.f32.mrf.mxu0
        %v743 = vadd.f32 0.0, %v742
        %v744 = vpop.f32.mrf.mxu0
        %v745 = vpop.f32.mrf.mxu0
        %v746 = vadd.f32 0.0, %v745
        %v747 = vpop.f32.mrf.mxu0
        %748 = vmatprep.mubr.bf16.mxu0 0
        %749 = vmatmul.mubr.bf16.gmra.mxu0 %v692
        %v750 = vpop.f32.mrf.mxu0
        %v751 = vadd.f32 0.0, %v750
        %v752 = vpop.f32.mrf.mxu0
        %v753 = vpop.f32.mrf.mxu0
        %v754 = vadd.f32 0.0, %v753
        %v755 = vpop.f32.mrf.mxu0
        %756 = vmatprep.mubr.bf16.mxu0 0
        %757 = vmatmul.mubr.bf16.gmra.mxu0 %v695
        %v758 = vpop.f32.mrf.mxu0
        %v759 = vadd.f32 0.0, %v758
        %v760 = vpop.f32.mrf.mxu0
        %v761 = vpop.f32.mrf.mxu0
        %v762 = vadd.f32 0.0, %v761
        %v763 = vpop.f32.mrf.mxu0
        %764 = vmatprep.mubr.bf16.mxu0 0
        %765 = vmatmul.mubr.bf16.gmra.mxu0 %v698
        %v766 = vpop.f32.mrf.mxu0
        %v767 = vadd.f32 0.0, %v766
        %v768 = vpop.f32.mrf.mxu0
        %v769 = vpop.f32.mrf.mxu0
        %v770 = vadd.f32 0.0, %v769
        %v771 = vpop.f32.mrf.mxu0
        %772 = vdwg.mxu0
        %v773 = vmax.f32 %v638, %v735
        %v774 = vmax.f32 %v639, %v738
        %v775 = vmax.f32 %v640, %v743
        %v776 = vmax.f32 %v641, %v746
        %v777 = vmax.f32 %v642, %v751
        %v778 = vmax.f32 %v643, %v754
        %v779 = vmax.f32 %v644, %v759
        %v780 = vmax.f32 %v645, %v762
        %v781 = vmax.f32 %v646, %v767
        %v782 = vmax.f32 %v647, %v770
        %v784 = vlaneseq
        %v785 = vshrl.u32 %v784, 7
        %v786 = vsub.s32 0, %v785
        %v787 = vrot.slane %v219, %v786
        %v789 = vadd.f32 %v773, %v787
        %v790 = vadd.f32 %v774, %v787
        %v791 = vadd.f32 %v775, %v787
        %v792 = vadd.f32 %v776, %v787
        %v793 = vadd.f32 %v777, %v787
        %v794 = vadd.f32 %v778, %v787
        %v795 = vadd.f32 %v779, %v787
        %v796 = vadd.f32 %v780, %v787
        %v797 = vadd.f32 %v781, %v787
        %v798 = vadd.f32 %v782, %v787
        %v799 = vmax.f32 %v789, 0.0
        %v800 = vmax.f32 %v790, 0.0
        %v801 = vmax.f32 %v791, 0.0
        %v802 = vmax.f32 %v792, 0.0
        %v803 = vmax.f32 %v793, 0.0
        %v804 = vmax.f32 %v794, 0.0
        %v805 = vmax.f32 %v795, 0.0
        %v806 = vmax.f32 %v796, 0.0
        %v807 = vmax.f32 %v797, 0.0
        %v808 = vmax.f32 %v798, 0.0
        %s809 = smul.u32 %s225, 80
        %s810 = scalar_lea.vmem %s217, %s809
        %vm811 = vcmask 523264
        %812 = vst.msk [vmem:[%s810] sm:$0xff] %vm811, %v799
        %813 = vst.msk [vmem:[%s810 + $0x8] sm:$0xff] %vm811, %v800
        %814 = vst.msk [vmem:[%s810 + $0x10] sm:$0xff] %vm811, %v801
        %815 = vst.msk [vmem:[%s810 + $0x18] sm:$0xff] %vm811, %v802
        %816 = vst.msk [vmem:[%s810 + $0x20] sm:$0xff] %vm811, %v803
        %817 = vst.msk [vmem:[%s810 + $0x28] sm:$0xff] %vm811, %v804
        %818 = vst.msk [vmem:[%s810 + $0x30] sm:$0xff] %vm811, %v805
        %819 = vst.msk [vmem:[%s810 + $0x38] sm:$0xff] %vm811, %v806
        %820 = vst.msk [vmem:[%s810 + $0x40] sm:$0xff] %vm811, %v807
        %vm821 = vcmask 517120
        %822 = vst.msk [vmem:[%s810 + $0x48] sm:$0x3] %vm821, %v808
      $region41: #{petnet_forward.4} parent=35 // loop_footer
        %s229 = sadd.s32 1, %s225
      $region42: #{petnet_forward.4} parent=35 // loop_footer_branch
        %224 = sbr.rel target = $region38
      $region43: #{petnet_forward.4} parent=35 // loop_exit
        _
      %p823 = scmp.lt.s32.totalorder %s15, 1
      %s824 = scalar_select %p823, %s15, 1
      %s825 = smul.addr %s824, 740
      %s826 = smul.addr %s825, 8
      %s827 = scalar_lea.vmem %s4, %s826
      // Predicated region
      $region44: #{petnet_forward.4} parent=35 // pred_check
        %p828 = pneg %p127
      $region45: #{petnet_forward.4} parent=35 // pred_check_branch
        %830 = sbr.rel (%p828) target = $region47
      $region46: #{petnet_forward.4} parent=35 // pred_region
        _
      $region47: #{petnet_forward.4} parent=35 // pred_fallthru
        _
    $region36: #{petnet_forward.4} parent=5 // pred_fallthru
      _
    %p831 = scmp.le.s32.totalorder 2, %s10
    // Predicated region
    $region48: #{petnet_forward.4} parent=5 // pred_check
      %p832 = pneg %p831
    $region49: #{petnet_forward.4} parent=5 // pred_check_branch
      %834 = sbr.rel (%p832) target = $region51
    $region50: #{petnet_forward.4} parent=5 // pred_region
      %s835 = ssub.s32 %s10, 2
      // Predicated region
      $region52: #{petnet_forward.4} parent=50 // pred_check
        %p836 = pneg %p133
      $region53: #{petnet_forward.4} parent=50 // pred_check_branch
        %838 = sbr.rel (%p836) target = $region55
      $region54: #{petnet_forward.4} parent=50 // pred_region
        %p839 = scmp.lt.s32.totalorder %s16, 1
        %s840 = scalar_select %p839, %s16, 1
        %s841 = smul.addr %s840, 740
        %s842 = smul.addr %s841, 8
        %s843 = scalar_lea.vmem %s4, %s842
      $region55: #{petnet_forward.4} parent=50 // pred_fallthru
        _
    $region51: #{petnet_forward.4} parent=5 // pred_fallthru
      _
  $region6: #{petnet_forward.4} parent=0 // loop_footer
    %s14 = sadd.s32 1, %s10
  $region7: #{petnet_forward.4} parent=0 // loop_footer_branch
    %9 = sbr.rel target = $region3
  $region8: #{petnet_forward.4} parent=0 // loop_exit
    _

// kernel: petnet_forward.5
$region0: #{petnet_forward.5}
  #allocation0 [shape = 'u32[]', space=smem, size = 0x4, offset = 0x4, fixed_abs, tag = 'smem constant byte address 0x4 - core index']
  #allocation1 [shape = 'u32[144,128]{1,0:T(1,128)}', space=vmem, size = 0x12000, scoped, tag = 'internal scratch']
  %s0 = inlined_call_operand.vmem [shape: bf16[2,74,36,192], index: 0, kind: input, shape index: {}]
  %s1 = inlined_call_operand.vmem [shape: bf16[2,74,36,192], index: 1, kind: input, shape index: {}]
  %s2 = inlined_call_operand.vmem [shape: bf16[3,192,64], index: 2, kind: input, shape index: {}]
  %s3 = inlined_call_operand.vmem [shape: f32[1,64], index: 3, kind: input, shape index: {}]
  %s4 = inlined_call_operand.vmem [shape: f32[2,36,36,64], index: 4, kind: output, shape index: {}]
  %s5 = sld [smem:[#allocation0]]
  $region56: #{petnet_forward.5} parent=0
    _
  %s7 = ssub.s32 1, %s5
  %s8 = scalar_select 0, %s7, %s5
  loop: start=0, step=1, limit=4
  $region2: #{petnet_forward.5} parent=0 // loop_pre_header
    _
  $region3: #{petnet_forward.5} parent=0 // loop_header
    %s10 = sphi 0, %s14
    %p11 = scmp.ge.s32.totalorder %s10, 4
    %s20 = sphi 0, %s22
    %s23 = sphi 0, %s20
    %s24 = sphi 0, %s23
    %s40 = sphi 0, %s24
    %s46 = sphi 0, %s48
    %s49 = sphi 0, %s46
    %s50 = sphi 0, %s49
    %s66 = sphi 0, %s50
    %s70 = sphi 0, %s70
    %s72 = sphi 0, %s70
    %s73 = sphi 0, %s72
    %s87 = sphi 0, %s73
    %s91 = sphi 0, %s91
    %s93 = sphi 0, %s91
    %s94 = sphi 0, %s93
    %s108 = sphi 0, %s94
    %s114 = sphi 0, %s116
    %s117 = sphi 0, %s114
    %s118 = sphi 0, %s117
    %s134 = sphi 0, %s118
  $region4: #{petnet_forward.5} parent=0 // loop_header_branch
    %13 = sbr.rel (%p11) target = $region8
  $region5: #{petnet_forward.5} parent=0 // loop_body
    %s15 = ssub.s32 %s10, 1
    %s16 = ssub.s32 %s10, 2
    %s17 = sadd.s32 %s10, 1
    %s18 = ssub.s32 %s10, %s17
    %p19 = scmp.eq.s32.totalorder %s18, 0
    %s21 = sadd.s32 %s20, 1
    %s22 = scalar_select %p19, %s20, %s21
    %p25 = pneg %p19
    %p26 = scmp.eq.s32.totalorder %s10, 1
    %p27 = por %p25, %p26
    %p28 = scmp.ne.s32.totalorder %s20, %s23
    %p29 = scmp.eq.s32.totalorder %s10, 0
    %p30 = por %p28, %p29
    %p31 = scmp.ne.s32.totalorder %s20, %s23
    %p32 = scmp.eq.s32.totalorder %s15, 1
    %p33 = por %p31, %p32
    %p34 = scmp.ne.s32.totalorder %s23, %s24
    %p35 = scmp.eq.s32.totalorder %s15, 0
    %p36 = por %p34, %p35
    %p37 = scmp.ne.s32.totalorder %s23, %s24
    %p38 = scmp.eq.s32.totalorder %s16, 1
    %p39 = por %p37, %p38
    %p41 = scmp.ne.s32.totalorder %s24, %s40
    %p42 = scmp.eq.s32.totalorder %s16, 0
    %p43 = por %p41, %p42
    %s44 = ssub.s32 %s10, %s17
    %p45 = scmp.eq.s32.totalorder %s44, 0
    %s47 = sadd.s32 %s46, 1
    %s48 = scalar_select %p45, %s46, %s47
    %p51 = pneg %p45
    %p52 = scmp.eq.s32.totalorder %s10, 1
    %p53 = por %p51, %p52
    %p54 = scmp.ne.s32.totalorder %s46, %s49
    %p55 = scmp.eq.s32.totalorder %s10, 0
    %p56 = por %p54, %p55
    %p57 = scmp.ne.s32.totalorder %s46, %s49
    %p58 = scmp.eq.s32.totalorder %s15, 1
    %p59 = por %p57, %p58
    %p60 = scmp.ne.s32.totalorder %s49, %s50
    %p61 = scmp.eq.s32.totalorder %s15, 0
    %p62 = por %p60, %p61
    %p63 = scmp.ne.s32.totalorder %s49, %s50
    %p64 = scmp.eq.s32.totalorder %s16, 1
    %p65 = por %p63, %p64
    %p67 = scmp.ne.s32.totalorder %s50, %s66
    %p68 = scmp.eq.s32.totalorder %s16, 0
    %p69 = por %p67, %p68
    %s71 = sadd.s32 %s70, 1
    %p74 = scmp.eq.s32.totalorder %s10, 1
    %p75 = scmp.ne.s32.totalorder %s70, %s72
    %p76 = scmp.eq.s32.totalorder %s10, 0
    %p77 = por %p75, %p76
    %p78 = scmp.ne.s32.totalorder %s70, %s72
    %p79 = scmp.eq.s32.totalorder %s15, 1
    %p80 = por %p78, %p79
    %p81 = scmp.ne.s32.totalorder %s72, %s73
    %p82 = scmp.eq.s32.totalorder %s15, 0
    %p83 = por %p81, %p82
    %p84 = scmp.ne.s32.totalorder %s72, %s73
    %p85 = scmp.eq.s32.totalorder %s16, 1
    %p86 = por %p84, %p85
    %p88 = scmp.ne.s32.totalorder %s73, %s87
    %p89 = scmp.eq.s32.totalorder %s16, 0
    %p90 = por %p88, %p89
    %s92 = sadd.s32 %s91, 1
    %p95 = scmp.eq.s32.totalorder %s10, 1
    %p96 = scmp.ne.s32.totalorder %s91, %s93
    %p97 = scmp.eq.s32.totalorder %s10, 0
    %p98 = por %p96, %p97
    %p99 = scmp.ne.s32.totalorder %s91, %s93
    %p100 = scmp.eq.s32.totalorder %s15, 1
    %p101 = por %p99, %p100
    %p102 = scmp.ne.s32.totalorder %s93, %s94
    %p103 = scmp.eq.s32.totalorder %s15, 0
    %p104 = por %p102, %p103
    %p105 = scmp.ne.s32.totalorder %s93, %s94
    %p106 = scmp.eq.s32.totalorder %s16, 1
    %p107 = por %p105, %p106
    %p109 = scmp.ne.s32.totalorder %s94, %s108
    %p110 = scmp.eq.s32.totalorder %s16, 0
    %p111 = por %p109, %p110
    %s112 = ssub.s32 %s10, %s17
    %p113 = scmp.eq.s32.totalorder %s112, 0
    %s115 = sadd.s32 %s114, 1
    %s116 = scalar_select %p113, %s114, %s115
    %p119 = pneg %p113
    %p120 = scmp.eq.s32.totalorder %s10, 1
    %p121 = por %p119, %p120
    %p122 = scmp.ne.s32.totalorder %s114, %s117
    %p123 = scmp.eq.s32.totalorder %s10, 0
    %p124 = por %p122, %p123
    %p125 = scmp.ne.s32.totalorder %s114, %s117
    %p126 = scmp.eq.s32.totalorder %s15, 1
    %p127 = por %p125, %p126
    %p128 = scmp.ne.s32.totalorder %s117, %s118
    %p129 = scmp.eq.s32.totalorder %s15, 0
    %p130 = por %p128, %p129
    %p131 = scmp.ne.s32.totalorder %s117, %s118
    %p132 = scmp.eq.s32.totalorder %s16, 1
    %p133 = por %p131, %p132
    %p135 = scmp.ne.s32.totalorder %s118, %s134
    %p136 = scmp.eq.s32.totalorder %s16, 0
    %p137 = por %p135, %p136
    %p138 = scmp.le.s32.totalorder 1, %s10
    %p139 = scmp.lt.s32.totalorder %s10, 3
    %p140 = pnand %p138, %p139
    %p141 = pneg %p140
    // Predicated region
    $region9: #{petnet_forward.5} parent=5 // pred_check
      _
    $region10: #{petnet_forward.5} parent=5 // pred_check_branch
      %143 = sbr.rel (%p140) target = $region12
    $region11: #{petnet_forward.5} parent=5 // pred_region
      %s144 = ssub.s32 %s10, 1
      // Predicated region
      $region13: #{petnet_forward.5} parent=11 // pred_check
        %p145 = pneg %p83
      $region14: #{petnet_forward.5} parent=11 // pred_check_branch
        %147 = sbr.rel (%p145) target = $region16
      $region15: #{petnet_forward.5} parent=11 // pred_region
        _
      $region16: #{petnet_forward.5} parent=11 // pred_fallthru
        _
      // Predicated region
      $region17: #{petnet_forward.5} parent=11 // pred_check
        %p148 = pneg %p104
      $region18: #{petnet_forward.5} parent=11 // pred_check_branch
        %150 = sbr.rel (%p148) target = $region20
      $region19: #{petnet_forward.5} parent=11 // pred_region
        _
      $region20: #{petnet_forward.5} parent=11 // pred_fallthru
        _
    $region12: #{petnet_forward.5} parent=5 // pred_fallthru
      _
    %p151 = scmp.lt.s32.totalorder %s10, 2
    // Predicated region
    $region21: #{petnet_forward.5} parent=5 // pred_check
      %p152 = pneg %p151
    $region22: #{petnet_forward.5} parent=5 // pred_check_branch
      %154 = sbr.rel (%p152) target = $region24
    $region23: #{petnet_forward.5} parent=5 // pred_region
      // Predicated region
      $region25: #{petnet_forward.5} parent=23 // pred_check
        %p155 = pneg %p30
      $region26: #{petnet_forward.5} parent=23 // pred_check_branch
        %157 = sbr.rel (%p155) target = $region28
      $region27: #{petnet_forward.5} parent=23 // pred_region
        %p158 = scmp.lt.s32.totalorder %s10, 1
        %s159 = scalar_select %p158, %s10, 1
        %s160 = smul.addr %s159, 740
        %s161 = smul.addr %s160, 4
        %s162 = scalar_lea.vmem %s0, %s161
      $region28: #{petnet_forward.5} parent=23 // pred_fallthru
        _
      // Predicated region
      $region29: #{petnet_forward.5} parent=23 // pred_check
        %p163 = pneg %p56
      $region30: #{petnet_forward.5} parent=23 // pred_check_branch
        %165 = sbr.rel (%p163) target = $region32
      $region31: #{petnet_forward.5} parent=23 // pred_region
        %p166 = scmp.lt.s32.totalorder %s10, 1
        %s167 = scalar_select %p166, %s10, 1
        %s168 = smul.addr %s167, 740
        %s169 = smul.addr %s168, 4
        %s170 = scalar_lea.vmem %s1, %s169
      $region32: #{petnet_forward.5} parent=23 // pred_fallthru
        _
    $region24: #{petnet_forward.5} parent=5 // pred_fallthru
      _
    %p171 = scmp.le.s32.totalorder 1, %s10
    %p172 = scmp.lt.s32.totalorder %s10, 3
    %p173 = pnand %p171, %p172
    %p174 = pneg %p173
    // Predicated region
    $region33: #{petnet_forward.5} parent=5 // pred_check
      _
    $region34: #{petnet_forward.5} parent=5 // pred_check_branch
      %176 = sbr.rel (%p173) target = $region36
    $region35: #{petnet_forward.5} parent=5 // pred_region
      %s177 = ssub.s32 %s10, 1
      %p178 = scmp.lt.s32.totalorder %s15, 1
      %s179 = scalar_select %p178, %s15, 1
      %s180 = smul.addr %s179, 740
      %s181 = smul.addr %s180, 4
      %s182 = scalar_lea.vmem %s0, %s181
      %p183 = pneg %p36
      %p184 = pneg %p33
      %p185 = scmp.lt.s32.totalorder %s15, 1
      %s186 = scalar_select %p185, %s15, 1
      %s187 = smul.addr %s186, 740
      %s188 = smul.addr %s187, 4
      %s189 = scalar_lea.vmem %s1, %s188
      %p190 = pneg %p62
      %p191 = pneg %p59
      %p192 = pneg %p83
      %p193 = pneg %p80
      %p194 = pneg %p104
      %p195 = pneg %p101
      %p196 = pneg %p130
      %p197 = pneg %p127
      %p198 = scmp.lt.s32.totalorder %s15, 1
      %s199 = scalar_select %p198, %s15, 1
      %s200 = smul.addr %s199, 180
      %s201 = smul.addr %s200, 8
      %s202 = scalar_lea.vmem %s4, %s201
      %p203 = scmp.lt.s32.totalorder %s15, 1
      %s204 = scalar_select %p203, %s15, 1
      %s205 = smul.addr %s204, 740
      %s206 = smul.addr %s205, 4
      %s207 = scalar_lea.vmem %s0, %s206
      %p208 = scmp.lt.s32.totalorder %s15, 1
      %s209 = scalar_select %p208, %s15, 1
      %s210 = smul.addr %s209, 740
      %s211 = smul.addr %s210, 4
      %s212 = scalar_lea.vmem %s1, %s211
      %p213 = scmp.lt.s32.totalorder %s15, 1
      %s214 = scalar_select %p213, %s15, 1
      %s215 = smul.addr %s214, 180
      %s216 = smul.addr %s215, 8
      %s217 = scalar_lea.vmem %s4, %s216
      %v219 = vld [vmem:[%s3] sm:$0x1]
      loop: start=0, step=1, limit=36
      $region37: #{petnet_forward.5} parent=35 // loop_pre_header
        _
      $region38: #{petnet_forward.5} parent=35 // loop_header
        %s221 = sphi 0, %s225
        %p222 = scmp.ge.s32.totalorder %s221, 36
      $region39: #{petnet_forward.5} parent=35 // loop_header_branch
        %224 = sbr.rel (%p222) target = $region43
      $region40: #{petnet_forward.5} parent=35 // loop_body
        %s226 = smul.u32 %s221, 2
        %v227 = vld [vmem:[%s2] sm:$0xf]
        %v228 = vld [vmem:[%s2 + $0x4] sm:$0xf]
        %v229 = vld [vmem:[%s2 + $0x8] sm:$0xf]
        %v230 = vld [vmem:[%s2 + $0xc] sm:$0xf]
        %v231 = vld [vmem:[%s2 + $0x10] sm:$0xf]
        %v232 = vld [vmem:[%s2 + $0x14] sm:$0xf]
        %v233 = vld [vmem:[%s2 + $0x18] sm:$0xf]
        %v234 = vld [vmem:[%s2 + $0x1c] sm:$0xf]
        %v235 = vld [vmem:[%s2 + $0x20] sm:$0xf]
        %v236 = vld [vmem:[%s2 + $0x24] sm:$0xf]
        %v237 = vld [vmem:[%s2 + $0x28] sm:$0xf]
        %v238 = vld [vmem:[%s2 + $0x2c] sm:$0xf]
        %v239 = vld [vmem:[%s2 + $0x30] sm:$0xf]
        %v240 = vld [vmem:[%s2 + $0x34] sm:$0xf]
        %v241 = vld [vmem:[%s2 + $0x38] sm:$0xf]
        %v242 = vld [vmem:[%s2 + $0x3c] sm:$0xf]
        %v243 = vld [vmem:[%s2 + $0x40] sm:$0xf]
        %v244 = vld [vmem:[%s2 + $0x44] sm:$0xf]
        %v245 = vld [vmem:[%s2 + $0x48] sm:$0xf]
        %v246 = vld [vmem:[%s2 + $0x4c] sm:$0xf]
        %v247 = vld [vmem:[%s2 + $0x50] sm:$0xf]
        %v248 = vld [vmem:[%s2 + $0x54] sm:$0xf]
        %v249 = vld [vmem:[%s2 + $0x58] sm:$0xf]
        %v250 = vld [vmem:[%s2 + $0x5c] sm:$0xf]
        %s251 = smul.u32 %s226, 10
        %s252 = smul.addr %s251, 4
        %s253 = scalar_lea.vmem %s207, %s252
        %v254 = vld [vmem:[%s253] sm:$0xff]
        %v255 = vld [vmem:[%s253 + $0x8] sm:$0xff]
        %v256 = vld [vmem:[%s253 + $0x10] sm:$0xff]
        %v257 = vld [vmem:[%s253 + $0x18] sm:$0xff]
        %v258 = vld [vmem:[%s253 + $0x20] sm:$0x33]
        %s259 = scalar_lea.vmem %s2, 96
        %v260 = vld [vmem:[%s259] sm:$0xf]
        %v261 = vld [vmem:[%s259 + $0x4] sm:$0xf]
        %v262 = vld [vmem:[%s259 + $0x8] sm:$0xf]
        %v263 = vld [vmem:[%s259 + $0xc] sm:$0xf]
        %v264 = vld [vmem:[%s259 + $0x10] sm:$0xf]
        %v265 = vld [vmem:[%s259 + $0x14] sm:$0xf]
        %v266 = vld [vmem:[%s259 + $0x18] sm:$0xf]
        %v267 = vld [vmem:[%s259 + $0x1c] sm:$0xf]
        %v268 = vld [vmem:[%s259 + $0x20] sm:$0xf]
        %v269 = vld [vmem:[%s259 + $0x24] sm:$0xf]
        %v270 = vld [vmem:[%s259 + $0x28] sm:$0xf]
        %v271 = vld [vmem:[%s259 + $0x2c] sm:$0xf]
        %v272 = vld [vmem:[%s259 + $0x30] sm:$0xf]
        %v273 = vld [vmem:[%s259 + $0x34] sm:$0xf]
        %v274 = vld [vmem:[%s259 + $0x38] sm:$0xf]
        %v275 = vld [vmem:[%s259 + $0x3c] sm:$0xf]
        %v276 = vld [vmem:[%s259 + $0x40] sm:$0xf]
        %v277 = vld [vmem:[%s259 + $0x44] sm:$0xf]
        %v278 = vld [vmem:[%s259 + $0x48] sm:$0xf]
        %v279 = vld [vmem:[%s259 + $0x4c] sm:$0xf]
        %v280 = vld [vmem:[%s259 + $0x50] sm:$0xf]
        %v281 = vld [vmem:[%s259 + $0x54] sm:$0xf]
        %v282 = vld [vmem:[%s259 + $0x58] sm:$0xf]
        %v283 = vld [vmem:[%s259 + $0x5c] sm:$0xf]
        %s284 = sadd.s32 %s226, 1
        %s285 = smul.u32 %s284, 10
        %s286 = smul.addr %s285, 4
        %s287 = scalar_lea.vmem %s207, %s286
        %v288 = vld [vmem:[%s287] sm:$0xff]
        %v289 = vld [vmem:[%s287 + $0x8] sm:$0xff]
        %v290 = vld [vmem:[%s287 + $0x10] sm:$0xff]
        %v291 = vld [vmem:[%s287 + $0x18] sm:$0xff]
        %v292 = vld [vmem:[%s287 + $0x20] sm:$0x33]
        %v298 = vunpack.c.l.b16 %v288
        %v299 = vunpack.c.h.b16 %v288
        %v300 = vunpack.c.l.b16 %v289
        %v301 = vunpack.c.h.b16 %v289
        %v302 = vunpack.c.l.b16 %v290
        %v303 = vunpack.c.h.b16 %v290
        %v304 = vunpack.c.l.b16 %v291
        %v305 = vunpack.c.h.b16 %v291
        %v306 = vunpack.c.l.b16 %v292
        %v307 = vunpack.c.h.b16 %v292
        %v308 = vpack.c.b16 %v300, %v298
        %v309 = vpack.c.b16 %v301, %v299
        %v310 = vpack.c.b16 %v304, %v302
        %v311 = vpack.c.b16 %v305, %v303
        %v312 = vpack.c.b16 %v306, %v306
        %v313 = vpack.c.b16 %v307, %v307
        %v341 = vunpack.c.l.b16 %v260
        %v342 = vunpack.c.l.b16 %v261
        %v343 = vunpack.c.l.b16 %v262
        %v344 = vunpack.c.l.b16 %v263
        %v345 = vunpack.c.l.b16 %v264
        %v346 = vunpack.c.l.b16 %v265
        %v347 = vunpack.c.l.b16 %v266
        %v348 = vunpack.c.l.b16 %v267
        %v349 = vunpack.c.l.b16 %v268
        %v350 = vunpack.c.l.b16 %v269
        %v351 = vunpack.c.l.b16 %v270
        %v352 = vunpack.c.l.b16 %v271
        %v353 = vunpack.c.l.b16 %v272
        %v354 = vunpack.c.l.b16 %v273
        %v355 = vunpack.c.l.b16 %v274
        %v356 = vunpack.c.l.b16 %v275
        %v357 = vunpack.c.l.b16 %v276
        %v358 = vunpack.c.l.b16 %v277
        %v359 = vunpack.c.l.b16 %v278
        %v360 = vunpack.c.l.b16 %v279
        %v361 = vunpack.c.l.b16 %v280
        %v362 = vunpack.c.l.b16 %v281
        %v363 = vunpack.c.l.b16 %v282
        %v364 = vunpack.c.l.b16 %v283
        %v365 = vpack.c.b16 %v342, %v341
        %v366 = vpack.c.b16 %v344, %v343
        %v367 = vpack.c.b16 %v346, %v345
        %v368 = vpack.c.b16 %v348, %v347
        %v369 = vpack.c.b16 %v350, %v349
        %v370 = vpack.c.b16 %v352, %v351
        %v371 = vpack.c.b16 %v354, %v353
        %v372 = vpack.c.b16 %v356, %v355
        %v373 = vpack.c.b16 %v358, %v357
        %v374 = vpack.c.b16 %v360, %v359
        %v375 = vpack.c.b16 %v362, %v361
        %v376 = vpack.c.b16 %v364, %v363
        %vm389 = vcmask 523264
        %v391 = vsel %vm389, %v309, 0
        %v394 = vsel %vm389, %v311, 0
        %v397 = vsel %vm389, %v313, 0
        %399 = vmatprep.subr.bf16.mxu0 0
        %400 = vmatpush1.bf16.msra.mxu0 %v372
        %401 = vmatprep.subr.bf16.mxu0 0
        %402 = vmatpush1.bf16.msra.mxu0 %v371
        %403 = vmatprep.subr.bf16.mxu0 0
        %404 = vmatpush1.bf16.msra.mxu0 %v370
        %405 = vmatprep.subr.bf16.mxu0 0
        %406 = vmatpush1.bf16.msra.mxu0 %v369
        %407 = vmatprep.subr.bf16.mxu0 0
        %408 = vmatpush1.bf16.msra.mxu0 %v368
        %409 = vmatprep.subr.bf16.mxu0 0
        %410 = vmatpush1.bf16.msra.mxu0 %v367
        %411 = vmatprep.subr.bf16.mxu0 0
        %412 = vmatpush1.bf16.msra.mxu0 %v366
        %413 = vmatprep.subr.bf16.mxu0 0
        %414 = vmatpush1.bf16.msra.mxu0 %v365
        %415 = vmatprep.subr.bf16.mxu0 0
        %416 = vmatpush2.bf16.msra.mxu0 0
        %417 = vmatprep.subr.bf16.mxu0 0
        %418 = vmatpush2.bf16.msra.mxu0 0
        %419 = vmatprep.subr.bf16.mxu0 0
        %420 = vmatpush2.bf16.msra.mxu0 0
        %421 = vmatprep.subr.bf16.mxu0 0
        %422 = vmatpush2.bf16.msra.mxu0 0
        %423 = vmatprep.subr.bf16.mxu0 0
        %424 = vmatpush2.bf16.msra.mxu0 %v376
        %425 = vmatprep.subr.bf16.mxu0 0
        %426 = vmatpush2.bf16.msra.mxu0 %v375
        %427 = vmatprep.subr.bf16.mxu0 0
        %428 = vmatpush2.bf16.msra.mxu0 %v374
        %429 = vmatprep.subr.bf16.mxu0 0
        %430 = vmatpush2.bf16.msra.mxu0 %v373
        %431 = vmatprep.mubr.bf16.mxu0 %v391
        %432 = vmatmul.mubr.bf16.gmra.mxu0 %v308
        %v433 = vpop.f32.mrf.mxu0
        %v434 = vadd.f32 0.0, %v433
        %v435 = vpop.f32.mrf.mxu0
        %v436 = vpop.f32.mrf.mxu0
        %v437 = vadd.f32 0.0, %v436
        %v438 = vpop.f32.mrf.mxu0
        %439 = vmatprep.mubr.bf16.mxu0 %v394
        %440 = vmatmul.mubr.bf16.gmra.mxu0 %v310
        %v441 = vpop.f32.mrf.mxu0
        %v442 = vadd.f32 0.0, %v441
        %v443 = vpop.f32.mrf.mxu0
        %v444 = vpop.f32.mrf.mxu0
        %v445 = vadd.f32 0.0, %v444
        %v446 = vpop.f32.mrf.mxu0
        %447 = vmatprep.mubr.bf16.mxu0 %v397
        %448 = vmatmul.mubr.bf16.gmra.mxu0 %v312
        %v449 = vpop.f32.mrf.mxu0
        %v450 = vadd.f32 0.0, %v449
        %v451 = vpop.f32.mrf.mxu0
        %v452 = vpop.f32.mrf.mxu0
        %v453 = vpop.f32.mrf.mxu0
        %454 = vdwg.mxu0
        %v460 = vunpack.c.l.b16 %v254
        %v461 = vunpack.c.h.b16 %v254
        %v462 = vunpack.c.l.b16 %v255
        %v463 = vunpack.c.h.b16 %v255
        %v464 = vunpack.c.l.b16 %v256
        %v465 = vunpack.c.h.b16 %v256
        %v466 = vunpack.c.l.b16 %v257
        %v467 = vunpack.c.h.b16 %v257
        %v468 = vunpack.c.l.b16 %v258
        %v469 = vunpack.c.h.b16 %v258
        %v470 = vpack.c.b16 %v462, %v460
        %v471 = vpack.c.b16 %v463, %v461
        %v472 = vpack.c.b16 %v466, %v464
        %v473 = vpack.c.b16 %v467, %v465
        %v474 = vpack.c.b16 %v468, %v468
        %v475 = vpack.c.b16 %v469, %v469
        %v503 = vunpack.c.l.b16 %v227
        %v504 = vunpack.c.l.b16 %v228
        %v505 = vunpack.c.l.b16 %v229
        %v506 = vunpack.c.l.b16 %v230
        %v507 = vunpack.c.l.b16 %v231
        %v508 = vunpack.c.l.b16 %v232
        %v509 = vunpack.c.l.b16 %v233
        %v510 = vunpack.c.l.b16 %v234
        %v511 = vunpack.c.l.b16 %v235
        %v512 = vunpack.c.l.b16 %v236
        %v513 = vunpack.c.l.b16 %v237
        %v514 = vunpack.c.l.b16 %v238
        %v515 = vunpack.c.l.b16 %v239
        %v516 = vunpack.c.l.b16 %v240
        %v517 = vunpack.c.l.b16 %v241
        %v518 = vunpack.c.l.b16 %v242
        %v519 = vunpack.c.l.b16 %v243
        %v520 = vunpack.c.l.b16 %v244
        %v521 = vunpack.c.l.b16 %v245
        %v522 = vunpack.c.l.b16 %v246
        %v523 = vunpack.c.l.b16 %v247
        %v524 = vunpack.c.l.b16 %v248
        %v525 = vunpack.c.l.b16 %v249
        %v526 = vunpack.c.l.b16 %v250
        %v527 = vpack.c.b16 %v504, %v503
        %v528 = vpack.c.b16 %v506, %v505
        %v529 = vpack.c.b16 %v508, %v507
        %v530 = vpack.c.b16 %v510, %v509
        %v531 = vpack.c.b16 %v512, %v511
        %v532 = vpack.c.b16 %v514, %v513
        %v533 = vpack.c.b16 %v516, %v515
        %v534 = vpack.c.b16 %v518, %v517
        %v535 = vpack.c.b16 %v520, %v519
        %v536 = vpack.c.b16 %v522, %v521
        %v537 = vpack.c.b16 %v524, %v523
        %v538 = vpack.c.b16 %v526, %v525
        %v552 = vsel %vm389, %v471, 0
        %v555 = vsel %vm389, %v473, 0
        %v558 = vsel %vm389, %v475, 0
        %560 = vmatprep.subr.bf16.mxu0 0
        %561 = vmatpush1.bf16.msra.mxu0 %v534
        %562 = vmatprep.subr.bf16.mxu0 0
        %563 = vmatpush1.bf16.msra.mxu0 %v533
        %564 = vmatprep.subr.bf16.mxu0 0
        %565 = vmatpush1.bf16.msra.mxu0 %v532
        %566 = vmatprep.subr.bf16.mxu0 0
        %567 = vmatpush1.bf16.msra.mxu0 %v531
        %568 = vmatprep.subr.bf16.mxu0 0
        %569 = vmatpush1.bf16.msra.mxu0 %v530
        %570 = vmatprep.subr.bf16.mxu0 0
        %571 = vmatpush1.bf16.msra.mxu0 %v529
        %572 = vmatprep.subr.bf16.mxu0 0
        %573 = vmatpush1.bf16.msra.mxu0 %v528
        %574 = vmatprep.subr.bf16.mxu0 0
        %575 = vmatpush1.bf16.msra.mxu0 %v527
        %576 = vmatprep.subr.bf16.mxu0 0
        %577 = vmatpush2.bf16.msra.mxu0 0
        %578 = vmatprep.subr.bf16.mxu0 0
        %579 = vmatpush2.bf16.msra.mxu0 0
        %580 = vmatprep.subr.bf16.mxu0 0
        %581 = vmatpush2.bf16.msra.mxu0 0
        %582 = vmatprep.subr.bf16.mxu0 0
        %583 = vmatpush2.bf16.msra.mxu0 0
        %584 = vmatprep.subr.bf16.mxu0 0
        %585 = vmatpush2.bf16.msra.mxu0 %v538
        %586 = vmatprep.subr.bf16.mxu0 0
        %587 = vmatpush2.bf16.msra.mxu0 %v537
        %588 = vmatprep.subr.bf16.mxu0 0
        %589 = vmatpush2.bf16.msra.mxu0 %v536
        %590 = vmatprep.subr.bf16.mxu0 0
        %591 = vmatpush2.bf16.msra.mxu0 %v535
        %592 = vmatprep.mubr.bf16.mxu0 %v552
        %593 = vmatmul.mubr.bf16.gmra.mxu0 %v470
        %v594 = vpop.f32.mrf.mxu0
        %v595 = vadd.f32 %v434, %v594
        %v596 = vpop.f32.mrf.mxu0
        %v597 = vpop.f32.mrf.mxu0
        %v598 = vadd.f32 %v437, %v597
        %v599 = vpop.f32.mrf.mxu0
        %600 = vmatprep.mubr.bf16.mxu0 %v555
        %601 = vmatmul.mubr.bf16.gmra.mxu0 %v472
        %v602 = vpop.f32.mrf.mxu0
        %v603 = vadd.f32 %v442, %v602
        %v604 = vpop.f32.mrf.mxu0
        %v605 = vpop.f32.mrf.mxu0
        %v606 = vadd.f32 %v445, %v605
        %v607 = vpop.f32.mrf.mxu0
        %608 = vmatprep.mubr.bf16.mxu0 %v558
        %609 = vmatmul.mubr.bf16.gmra.mxu0 %v474
        %v610 = vpop.f32.mrf.mxu0
        %v611 = vadd.f32 %v450, %v610
        %v612 = vpop.f32.mrf.mxu0
        %v613 = vpop.f32.mrf.mxu0
        %v614 = vpop.f32.mrf.mxu0
        %615 = vdwg.mxu0
        %s616 = scalar_lea.vmem %s2, 192
        %v617 = vld [vmem:[%s616] sm:$0xf]
        %v618 = vld [vmem:[%s616 + $0x4] sm:$0xf]
        %v619 = vld [vmem:[%s616 + $0x8] sm:$0xf]
        %v620 = vld [vmem:[%s616 + $0xc] sm:$0xf]
        %v621 = vld [vmem:[%s616 + $0x10] sm:$0xf]
        %v622 = vld [vmem:[%s616 + $0x14] sm:$0xf]
        %v623 = vld [vmem:[%s616 + $0x18] sm:$0xf]
        %v624 = vld [vmem:[%s616 + $0x1c] sm:$0xf]
        %v625 = vld [vmem:[%s616 + $0x20] sm:$0xf]
        %v626 = vld [vmem:[%s616 + $0x24] sm:$0xf]
        %v627 = vld [vmem:[%s616 + $0x28] sm:$0xf]
        %v628 = vld [vmem:[%s616 + $0x2c] sm:$0xf]
        %v629 = vld [vmem:[%s616 + $0x30] sm:$0xf]
        %v630 = vld [vmem:[%s616 + $0x34] sm:$0xf]
        %v631 = vld [vmem:[%s616 + $0x38] sm:$0xf]
        %v632 = vld [vmem:[%s616 + $0x3c] sm:$0xf]
        %v633 = vld [vmem:[%s616 + $0x40] sm:$0xf]
        %v634 = vld [vmem:[%s616 + $0x44] sm:$0xf]
        %v635 = vld [vmem:[%s616 + $0x48] sm:$0xf]
        %v636 = vld [vmem:[%s616 + $0x4c] sm:$0xf]
        %v637 = vld [vmem:[%s616 + $0x50] sm:$0xf]
        %v638 = vld [vmem:[%s616 + $0x54] sm:$0xf]
        %v639 = vld [vmem:[%s616 + $0x58] sm:$0xf]
        %v640 = vld [vmem:[%s616 + $0x5c] sm:$0xf]
        %s641 = sadd.s32 %s226, 2
        %s642 = smul.u32 %s641, 10
        %s643 = smul.addr %s642, 4
        %s644 = scalar_lea.vmem %s207, %s643
        %v645 = vld [vmem:[%s644] sm:$0xff]
        %v646 = vld [vmem:[%s644 + $0x8] sm:$0xff]
        %v647 = vld [vmem:[%s644 + $0x10] sm:$0xff]
        %v648 = vld [vmem:[%s644 + $0x18] sm:$0xff]
        %v649 = vld [vmem:[%s644 + $0x20] sm:$0x33]
        %v655 = vunpack.c.l.b16 %v645
        %v656 = vunpack.c.h.b16 %v645
        %v657 = vunpack.c.l.b16 %v646
        %v658 = vunpack.c.h.b16 %v646
        %v659 = vunpack.c.l.b16 %v647
        %v660 = vunpack.c.h.b16 %v647
        %v661 = vunpack.c.l.b16 %v648
        %v662 = vunpack.c.h.b16 %v648
        %v663 = vunpack.c.l.b16 %v649
        %v664 = vunpack.c.h.b16 %v649
        %v665 = vpack.c.b16 %v657, %v655
        %v666 = vpack.c.b16 %v658, %v656
        %v667 = vpack.c.b16 %v661, %v659
        %v668 = vpack.c.b16 %v662, %v660
        %v669 = vpack.c.b16 %v663, %v663
        %v670 = vpack.c.b16 %v664, %v664
        %v698 = vunpack.c.l.b16 %v617
        %v699 = vunpack.c.l.b16 %v618
        %v700 = vunpack.c.l.b16 %v619
        %v701 = vunpack.c.l.b16 %v620
        %v702 = vunpack.c.l.b16 %v621
        %v703 = vunpack.c.l.b16 %v622
        %v704 = vunpack.c.l.b16 %v623
        %v705 = vunpack.c.l.b16 %v624
        %v706 = vunpack.c.l.b16 %v625
        %v707 = vunpack.c.l.b16 %v626
        %v708 = vunpack.c.l.b16 %v627
        %v709 = vunpack.c.l.b16 %v628
        %v710 = vunpack.c.l.b16 %v629
        %v711 = vunpack.c.l.b16 %v630
        %v712 = vunpack.c.l.b16 %v631
        %v713 = vunpack.c.l.b16 %v632
        %v714 = vunpack.c.l.b16 %v633
        %v715 = vunpack.c.l.b16 %v634
        %v716 = vunpack.c.l.b16 %v635
        %v717 = vunpack.c.l.b16 %v636
        %v718 = vunpack.c.l.b16 %v637
        %v719 = vunpack.c.l.b16 %v638
        %v720 = vunpack.c.l.b16 %v639
        %v721 = vunpack.c.l.b16 %v640
        %v722 = vpack.c.b16 %v699, %v698
        %v723 = vpack.c.b16 %v701, %v700
        %v724 = vpack.c.b16 %v703, %v702
        %v725 = vpack.c.b16 %v705, %v704
        %v726 = vpack.c.b16 %v707, %v706
        %v727 = vpack.c.b16 %v709, %v708
        %v728 = vpack.c.b16 %v711, %v710
        %v729 = vpack.c.b16 %v713, %v712
        %v730 = vpack.c.b16 %v715, %v714
        %v731 = vpack.c.b16 %v717, %v716
        %v732 = vpack.c.b16 %v719, %v718
        %v733 = vpack.c.b16 %v721, %v720
        %v747 = vsel %vm389, %v666, 0
        %v750 = vsel %vm389, %v668, 0
        %v753 = vsel %vm389, %v670, 0
        %755 = vmatprep.subr.bf16.mxu0 0
        %756 = vmatpush1.bf16.msra.mxu0 %v729
        %757 = vmatprep.subr.bf16.mxu0 0
        %758 = vmatpush1.bf16.msra.mxu0 %v728
        %759 = vmatprep.subr.bf16.mxu0 0
        %760 = vmatpush1.bf16.msra.mxu0 %v727
        %761 = vmatprep.subr.bf16.mxu0 0
        %762 = vmatpush1.bf16.msra.mxu0 %v726
        %763 = vmatprep.subr.bf16.mxu0 0
        %764 = vmatpush1.bf16.msra.mxu0 %v725
        %765 = vmatprep.subr.bf16.mxu0 0
        %766 = vmatpush1.bf16.msra.mxu0 %v724
        %767 = vmatprep.subr.bf16.mxu0 0
        %768 = vmatpush1.bf16.msra.mxu0 %v723
        %769 = vmatprep.subr.bf16.mxu0 0
        %770 = vmatpush1.bf16.msra.mxu0 %v722
        %771 = vmatprep.subr.bf16.mxu0 0
        %772 = vmatpush2.bf16.msra.mxu0 0
        %773 = vmatprep.subr.bf16.mxu0 0
        %774 = vmatpush2.bf16.msra.mxu0 0
        %775 = vmatprep.subr.bf16.mxu0 0
        %776 = vmatpush2.bf16.msra.mxu0 0
        %777 = vmatprep.subr.bf16.mxu0 0
        %778 = vmatpush2.bf16.msra.mxu0 0
        %779 = vmatprep.subr.bf16.mxu0 0
        %780 = vmatpush2.bf16.msra.mxu0 %v733
        %781 = vmatprep.subr.bf16.mxu0 0
        %782 = vmatpush2.bf16.msra.mxu0 %v732
        %783 = vmatprep.subr.bf16.mxu0 0
        %784 = vmatpush2.bf16.msra.mxu0 %v731
        %785 = vmatprep.subr.bf16.mxu0 0
        %786 = vmatpush2.bf16.msra.mxu0 %v730
        %787 = vmatprep.mubr.bf16.mxu0 %v747
        %788 = vmatmul.mubr.bf16.gmra.mxu0 %v665
        %v789 = vpop.f32.mrf.mxu0
        %v790 = vadd.f32 0.0, %v789
        %v791 = vpop.f32.mrf.mxu0
        %v792 = vpop.f32.mrf.mxu0
        %v793 = vadd.f32 0.0, %v792
        %v794 = vpop.f32.mrf.mxu0
        %795 = vmatprep.mubr.bf16.mxu0 %v750
        %796 = vmatmul.mubr.bf16.gmra.mxu0 %v667
        %v797 = vpop.f32.mrf.mxu0
        %v798 = vadd.f32 0.0, %v797
        %v799 = vpop.f32.mrf.mxu0
        %v800 = vpop.f32.mrf.mxu0
        %v801 = vadd.f32 0.0, %v800
        %v802 = vpop.f32.mrf.mxu0
        %803 = vmatprep.mubr.bf16.mxu0 %v753
        %804 = vmatmul.mubr.bf16.gmra.mxu0 %v669
        %v805 = vpop.f32.mrf.mxu0
        %v806 = vadd.f32 0.0, %v805
        %v807 = vpop.f32.mrf.mxu0
        %v808 = vpop.f32.mrf.mxu0
        %v809 = vpop.f32.mrf.mxu0
        %810 = vdwg.mxu0
        %v811 = vadd.f32 %v595, %v790
        %v812 = vadd.f32 %v598, %v793
        %v813 = vadd.f32 %v603, %v798
        %v814 = vadd.f32 %v606, %v801
        %v815 = vadd.f32 %v611, %v806
        %s816 = smul.addr %s251, 4
        %s817 = scalar_lea.vmem %s212, %s816
        %v818 = vld [vmem:[%s817] sm:$0xff]
        %v819 = vld [vmem:[%s817 + $0x8] sm:$0xff]
        %v820 = vld [vmem:[%s817 + $0x10] sm:$0xff]
        %v821 = vld [vmem:[%s817 + $0x18] sm:$0xff]
        %v822 = vld [vmem:[%s817 + $0x20] sm:$0x33]
        %s823 = smul.addr %s285, 4
        %s824 = scalar_lea.vmem %s212, %s823
        %v825 = vld [vmem:[%s824] sm:$0xff]
        %v826 = vld [vmem:[%s824 + $0x8] sm:$0xff]
        %v827 = vld [vmem:[%s824 + $0x10] sm:$0xff]
        %v828 = vld [vmem:[%s824 + $0x18] sm:$0xff]
        %v829 = vld [vmem:[%s824 + $0x20] sm:$0x33]
        %v835 = vunpack.c.l.b16 %v825
        %v836 = vunpack.c.h.b16 %v825
        %v837 = vunpack.c.l.b16 %v826
        %v838 = vunpack.c.h.b16 %v826
        %v839 = vunpack.c.l.b16 %v827
        %v840 = vunpack.c.h.b16 %v827
        %v841 = vunpack.c.l.b16 %v828
        %v842 = vunpack.c.h.b16 %v828
        %v843 = vunpack.c.l.b16 %v829
        %v844 = vunpack.c.h.b16 %v829
        %v845 = vpack.c.b16 %v837, %v835
        %v846 = vpack.c.b16 %v838, %v836
        %v847 = vpack.c.b16 %v841, %v839
        %v848 = vpack.c.b16 %v842, %v840
        %v849 = vpack.c.b16 %v843, %v843
        %v850 = vpack.c.b16 %v844, %v844
        %v855 = vsel %vm389, %v846, 0
        %v858 = vsel %vm389, %v848, 0
        %v861 = vsel %vm389, %v850, 0
        %863 = vmatprep.subr.bf16.mxu0 0
        %864 = vmatpush1.bf16.msra.mxu0 %v372
        %865 = vmatprep.subr.bf16.mxu0 0
        %866 = vmatpush1.bf16.msra.mxu0 %v371
        %867 = vmatprep.subr.bf16.mxu0 0
        %868 = vmatpush1.bf16.msra.mxu0 %v370
        %869 = vmatprep.subr.bf16.mxu0 0
        %870 = vmatpush1.bf16.msra.mxu0 %v369
        %871 = vmatprep.subr.bf16.mxu0 0
        %872 = vmatpush1.bf16.msra.mxu0 %v368
        %873 = vmatprep.subr.bf16.mxu0 0
        %874 = vmatpush1.bf16.msra.mxu0 %v367
        %875 = vmatprep.subr.bf16.mxu0 0
        %876 = vmatpush1.bf16.msra.mxu0 %v366
        %877 = vmatprep.subr.bf16.mxu0 0
        %878 = vmatpush1.bf16.msra.mxu0 %v365
        %879 = vmatprep.subr.bf16.mxu0 0
        %880 = vmatpush2.bf16.msra.mxu0 0
        %881 = vmatprep.subr.bf16.mxu0 0
        %882 = vmatpush2.bf16.msra.mxu0 0
        %883 = vmatprep.subr.bf16.mxu0 0
        %884 = vmatpush2.bf16.msra.mxu0 0
        %885 = vmatprep.subr.bf16.mxu0 0
        %886 = vmatpush2.bf16.msra.mxu0 0
        %887 = vmatprep.subr.bf16.mxu0 0
        %888 = vmatpush2.bf16.msra.mxu0 %v376
        %889 = vmatprep.subr.bf16.mxu0 0
        %890 = vmatpush2.bf16.msra.mxu0 %v375
        %891 = vmatprep.subr.bf16.mxu0 0
        %892 = vmatpush2.bf16.msra.mxu0 %v374
        %893 = vmatprep.subr.bf16.mxu0 0
        %894 = vmatpush2.bf16.msra.mxu0 %v373
        %895 = vmatprep.mubr.bf16.mxu0 %v855
        %896 = vmatmul.mubr.bf16.gmra.mxu0 %v845
        %v897 = vpop.f32.mrf.mxu0
        %v898 = vadd.f32 0.0, %v897
        %v899 = vpop.f32.mrf.mxu0
        %v900 = vpop.f32.mrf.mxu0
        %v901 = vadd.f32 0.0, %v900
        %v902 = vpop.f32.mrf.mxu0
        %903 = vmatprep.mubr.bf16.mxu0 %v858
        %904 = vmatmul.mubr.bf16.gmra.mxu0 %v847
        %v905 = vpop.f32.mrf.mxu0
        %v906 = vadd.f32 0.0, %v905
        %v907 = vpop.f32.mrf.mxu0
        %v908 = vpop.f32.mrf.mxu0
        %v909 = vadd.f32 0.0, %v908
        %v910 = vpop.f32.mrf.mxu0
        %911 = vmatprep.mubr.bf16.mxu0 %v861
        %912 = vmatmul.mubr.bf16.gmra.mxu0 %v849
        %v913 = vpop.f32.mrf.mxu0
        %v914 = vadd.f32 0.0, %v913
        %v915 = vpop.f32.mrf.mxu0
        %v916 = vpop.f32.mrf.mxu0
        %v917 = vpop.f32.mrf.mxu0
        %918 = vdwg.mxu0
        %v924 = vunpack.c.l.b16 %v818
        %v925 = vunpack.c.h.b16 %v818
        %v926 = vunpack.c.l.b16 %v819
        %v927 = vunpack.c.h.b16 %v819
        %v928 = vunpack.c.l.b16 %v820
        %v929 = vunpack.c.h.b16 %v820
        %v930 = vunpack.c.l.b16 %v821
        %v931 = vunpack.c.h.b16 %v821
        %v932 = vunpack.c.l.b16 %v822
        %v933 = vunpack.c.h.b16 %v822
        %v934 = vpack.c.b16 %v926, %v924
        %v935 = vpack.c.b16 %v927, %v925
        %v936 = vpack.c.b16 %v930, %v928
        %v937 = vpack.c.b16 %v931, %v929
        %v938 = vpack.c.b16 %v932, %v932
        %v939 = vpack.c.b16 %v933, %v933
        %v944 = vsel %vm389, %v935, 0
        %v947 = vsel %vm389, %v937, 0
        %v950 = vsel %vm389, %v939, 0
        %952 = vmatprep.subr.bf16.mxu0 0
        %953 = vmatpush1.bf16.msra.mxu0 %v534
        %954 = vmatprep.subr.bf16.mxu0 0
        %955 = vmatpush1.bf16.msra.mxu0 %v533
        %956 = vmatprep.subr.bf16.mxu0 0
        %957 = vmatpush1.bf16.msra.mxu0 %v532
        %958 = vmatprep.subr.bf16.mxu0 0
        %959 = vmatpush1.bf16.msra.mxu0 %v531
        %960 = vmatprep.subr.bf16.mxu0 0
        %961 = vmatpush1.bf16.msra.mxu0 %v530
        %962 = vmatprep.subr.bf16.mxu0 0
        %963 = vmatpush1.bf16.msra.mxu0 %v529
        %964 = vmatprep.subr.bf16.mxu0 0
        %965 = vmatpush1.bf16.msra.mxu0 %v528
        %966 = vmatprep.subr.bf16.mxu0 0
        %967 = vmatpush1.bf16.msra.mxu0 %v527
        %968 = vmatprep.subr.bf16.mxu0 0
        %969 = vmatpush2.bf16.msra.mxu0 0
        %970 = vmatprep.subr.bf16.mxu0 0
        %971 = vmatpush2.bf16.msra.mxu0 0
        %972 = vmatprep.subr.bf16.mxu0 0
        %973 = vmatpush2.bf16.msra.mxu0 0
        %974 = vmatprep.subr.bf16.mxu0 0
        %975 = vmatpush2.bf16.msra.mxu0 0
        %976 = vmatprep.subr.bf16.mxu0 0
        %977 = vmatpush2.bf16.msra.mxu0 %v538
        %978 = vmatprep.subr.bf16.mxu0 0
        %979 = vmatpush2.bf16.msra.mxu0 %v537
        %980 = vmatprep.subr.bf16.mxu0 0
        %981 = vmatpush2.bf16.msra.mxu0 %v536
        %982 = vmatprep.subr.bf16.mxu0 0
        %983 = vmatpush2.bf16.msra.mxu0 %v535
        %984 = vmatprep.mubr.bf16.mxu0 %v944
        %985 = vmatmul.mubr.bf16.gmra.mxu0 %v934
        %v986 = vpop.f32.mrf.mxu0
        %v987 = vadd.f32 %v898, %v986
        %v988 = vpop.f32.mrf.mxu0
        %v989 = vpop.f32.mrf.mxu0
        %v990 = vadd.f32 %v901, %v989
        %v991 = vpop.f32.mrf.mxu0
        %992 = vmatprep.mubr.bf16.mxu0 %v947
        %993 = vmatmul.mubr.bf16.gmra.mxu0 %v936
        %v994 = vpop.f32.mrf.mxu0
        %v995 = vadd.f32 %v906, %v994
        %v996 = vpop.f32.mrf.mxu0
        %v997 = vpop.f32.mrf.mxu0
        %v998 = vadd.f32 %v909, %v997
        %v999 = vpop.f32.mrf.mxu0
        %1000 = vmatprep.mubr.bf16.mxu0 %v950
        %1001 = vmatmul.mubr.bf16.gmra.mxu0 %v938
        %v1002 = vpop.f32.mrf.mxu0
        %v1003 = vadd.f32 %v914, %v1002
        %v1004 = vpop.f32.mrf.mxu0
        %v1005 = vpop.f32.mrf.mxu0
        %v1006 = vpop.f32.mrf.mxu0
        %1007 = vdwg.mxu0
        %s1008 = smul.addr %s642, 4
        %s1009 = scalar_lea.vmem %s212, %s1008
        %v1010 = vld [vmem:[%s1009] sm:$0xff]
        %v1011 = vld [vmem:[%s1009 + $0x8] sm:$0xff]
        %v1012 = vld [vmem:[%s1009 + $0x10] sm:$0xff]
        %v1013 = vld [vmem:[%s1009 + $0x18] sm:$0xff]
        %v1014 = vld [vmem:[%s1009 + $0x20] sm:$0x33]
        %v1020 = vunpack.c.l.b16 %v1010
        %v1021 = vunpack.c.h.b16 %v1010
        %v1022 = vunpack.c.l.b16 %v1011
        %v1023 = vunpack.c.h.b16 %v1011
        %v1024 = vunpack.c.l.b16 %v1012
        %v1025 = vunpack.c.h.b16 %v1012
        %v1026 = vunpack.c.l.b16 %v1013
        %v1027 = vunpack.c.h.b16 %v1013
        %v1028 = vunpack.c.l.b16 %v1014
        %v1029 = vunpack.c.h.b16 %v1014
        %v1030 = vpack.c.b16 %v1022, %v1020
        %v1031 = vpack.c.b16 %v1023, %v1021
        %v1032 = vpack.c.b16 %v1026, %v1024
        %v1033 = vpack.c.b16 %v1027, %v1025
        %v1034 = vpack.c.b16 %v1028, %v1028
        %v1035 = vpack.c.b16 %v1029, %v1029
        %v1040 = vsel %vm389, %v1031, 0
        %v1043 = vsel %vm389, %v1033, 0
        %v1046 = vsel %vm389, %v1035, 0
        %1048 = vmatprep.subr.bf16.mxu0 0
        %1049 = vmatpush1.bf16.msra.mxu0 %v729
        %1050 = vmatprep.subr.bf16.mxu0 0
        %1051 = vmatpush1.bf16.msra.mxu0 %v728
        %1052 = vmatprep.subr.bf16.mxu0 0
        %1053 = vmatpush1.bf16.msra.mxu0 %v727
        %1054 = vmatprep.subr.bf16.mxu0 0
        %1055 = vmatpush1.bf16.msra.mxu0 %v726
        %1056 = vmatprep.subr.bf16.mxu0 0
        %1057 = vmatpush1.bf16.msra.mxu0 %v725
        %1058 = vmatprep.subr.bf16.mxu0 0
        %1059 = vmatpush1.bf16.msra.mxu0 %v724
        %1060 = vmatprep.subr.bf16.mxu0 0
        %1061 = vmatpush1.bf16.msra.mxu0 %v723
        %1062 = vmatprep.subr.bf16.mxu0 0
        %1063 = vmatpush1.bf16.msra.mxu0 %v722
        %1064 = vmatprep.subr.bf16.mxu0 0
        %1065 = vmatpush2.bf16.msra.mxu0 0
        %1066 = vmatprep.subr.bf16.mxu0 0
        %1067 = vmatpush2.bf16.msra.mxu0 0
        %1068 = vmatprep.subr.bf16.mxu0 0
        %1069 = vmatpush2.bf16.msra.mxu0 0
        %1070 = vmatprep.subr.bf16.mxu0 0
        %1071 = vmatpush2.bf16.msra.mxu0 0
        %1072 = vmatprep.subr.bf16.mxu0 0
        %1073 = vmatpush2.bf16.msra.mxu0 %v733
        %1074 = vmatprep.subr.bf16.mxu0 0
        %1075 = vmatpush2.bf16.msra.mxu0 %v732
        %1076 = vmatprep.subr.bf16.mxu0 0
        %1077 = vmatpush2.bf16.msra.mxu0 %v731
        %1078 = vmatprep.subr.bf16.mxu0 0
        %1079 = vmatpush2.bf16.msra.mxu0 %v730
        %1080 = vmatprep.mubr.bf16.mxu0 %v1040
        %1081 = vmatmul.mubr.bf16.gmra.mxu0 %v1030
        %v1082 = vpop.f32.mrf.mxu0
        %v1083 = vadd.f32 0.0, %v1082
        %v1084 = vpop.f32.mrf.mxu0
        %v1085 = vpop.f32.mrf.mxu0
        %v1086 = vadd.f32 0.0, %v1085
        %v1087 = vpop.f32.mrf.mxu0
        %1088 = vmatprep.mubr.bf16.mxu0 %v1043
        %1089 = vmatmul.mubr.bf16.gmra.mxu0 %v1032
        %v1090 = vpop.f32.mrf.mxu0
        %v1091 = vadd.f32 0.0, %v1090
        %v1092 = vpop.f32.mrf.mxu0
        %v1093 = vpop.f32.mrf.mxu0
        %v1094 = vadd.f32 0.0, %v1093
        %v1095 = vpop.f32.mrf.mxu0
        %1096 = vmatprep.mubr.bf16.mxu0 %v1046
        %1097 = vmatmul.mubr.bf16.gmra.mxu0 %v1034
        %v1098 = vpop.f32.mrf.mxu0
        %v1099 = vadd.f32 0.0, %v1098
        %v1100 = vpop.f32.mrf.mxu0
        %v1101 = vpop.f32.mrf.mxu0
        %v1102 = vpop.f32.mrf.mxu0
        %1103 = vdwg.mxu0
        %v1104 = vadd.f32 %v987, %v1083
        %v1105 = vadd.f32 %v990, %v1086
        %v1106 = vadd.f32 %v995, %v1091
        %v1107 = vadd.f32 %v998, %v1094
        %v1108 = vadd.f32 %v1003, %v1099
        %v1109 = vmax.f32 %v811, %v1104
        %v1110 = vmax.f32 %v812, %v1105
        %v1111 = vmax.f32 %v813, %v1106
        %v1112 = vmax.f32 %v814, %v1107
        %v1113 = vmax.f32 %v815, %v1108
        %1114 = vmatprep.subr.bf16.mxu0 0
        %1115 = vmatpush1.bf16.msra.mxu0 %v372
        %1116 = vmatprep.subr.bf16.mxu0 0
        %1117 = vmatpush1.bf16.msra.mxu0 %v371
        %1118 = vmatprep.subr.bf16.mxu0 0
        %1119 = vmatpush1.bf16.msra.mxu0 %v370
        %1120 = vmatprep.subr.bf16.mxu0 0
        %1121 = vmatpush1.bf16.msra.mxu0 %v369
        %1122 = vmatprep.subr.bf16.mxu0 0
        %1123 = vmatpush1.bf16.msra.mxu0 %v368
        %1124 = vmatprep.subr.bf16.mxu0 0
        %1125 = vmatpush1.bf16.msra.mxu0 %v367
        %1126 = vmatprep.subr.bf16.mxu0 0
        %1127 = vmatpush1.bf16.msra.mxu0 %v366
        %1128 = vmatprep.subr.bf16.mxu0 0
        %1129 = vmatpush1.bf16.msra.mxu0 %v365
        %1130 = vmatprep.subr.bf16.mxu0 0
        %1131 = vmatpush2.bf16.msra.mxu0 0
        %1132 = vmatprep.subr.bf16.mxu0 0
        %1133 = vmatpush2.bf16.msra.mxu0 0
        %1134 = vmatprep.subr.bf16.mxu0 0
        %1135 = vmatpush2.bf16.msra.mxu0 0
        %1136 = vmatprep.subr.bf16.mxu0 0
        %1137 = vmatpush2.bf16.msra.mxu0 0
        %1138 = vmatprep.subr.bf16.mxu0 0
        %1139 = vmatpush2.bf16.msra.mxu0 %v376
        %1140 = vmatprep.subr.bf16.mxu0 0
        %1141 = vmatpush2.bf16.msra.mxu0 %v375
        %1142 = vmatprep.subr.bf16.mxu0 0
        %1143 = vmatpush2.bf16.msra.mxu0 %v374
        %1144 = vmatprep.subr.bf16.mxu0 0
        %1145 = vmatpush2.bf16.msra.mxu0 %v373
        %1146 = vmatprep.mubr.bf16.mxu0 %v747
        %1147 = vmatmul.mubr.bf16.gmra.mxu0 %v665
        %v1148 = vpop.f32.mrf.mxu0
        %v1149 = vadd.f32 0.0, %v1148
        %v1150 = vpop.f32.mrf.mxu0
        %v1151 = vpop.f32.mrf.mxu0
        %v1152 = vadd.f32 0.0, %v1151
        %v1153 = vpop.f32.mrf.mxu0
        %1154 = vmatprep.mubr.bf16.mxu0 %v750
        %1155 = vmatmul.mubr.bf16.gmra.mxu0 %v667
        %v1156 = vpop.f32.mrf.mxu0
        %v1157 = vadd.f32 0.0, %v1156
        %v1158 = vpop.f32.mrf.mxu0
        %v1159 = vpop.f32.mrf.mxu0
        %v1160 = vadd.f32 0.0, %v1159
        %v1161 = vpop.f32.mrf.mxu0
        %1162 = vmatprep.mubr.bf16.mxu0 %v753
        %1163 = vmatmul.mubr.bf16.gmra.mxu0 %v669
        %v1164 = vpop.f32.mrf.mxu0
        %v1165 = vadd.f32 0.0, %v1164
        %v1166 = vpop.f32.mrf.mxu0
        %v1167 = vpop.f32.mrf.mxu0
        %v1168 = vpop.f32.mrf.mxu0
        %1169 = vdwg.mxu0
        %1170 = vmatprep.subr.bf16.mxu0 0
        %1171 = vmatpush1.bf16.msra.mxu0 %v534
        %1172 = vmatprep.subr.bf16.mxu0 0
        %1173 = vmatpush1.bf16.msra.mxu0 %v533
        %1174 = vmatprep.subr.bf16.mxu0 0
        %1175 = vmatpush1.bf16.msra.mxu0 %v532
        %1176 = vmatprep.subr.bf16.mxu0 0
        %1177 = vmatpush1.bf16.msra.mxu0 %v531
        %1178 = vmatprep.subr.bf16.mxu0 0
        %1179 = vmatpush1.bf16.msra.mxu0 %v530
        %1180 = vmatprep.subr.bf16.mxu0 0
        %1181 = vmatpush1.bf16.msra.mxu0 %v529
        %1182 = vmatprep.subr.bf16.mxu0 0
        %1183 = vmatpush1.bf16.msra.mxu0 %v528
        %1184 = vmatprep.subr.bf16.mxu0 0
        %1185 = vmatpush1.bf16.msra.mxu0 %v527
        %1186 = vmatprep.subr.bf16.mxu0 0
        %1187 = vmatpush2.bf16.msra.mxu0 0
        %1188 = vmatprep.subr.bf16.mxu0 0
        %1189 = vmatpush2.bf16.msra.mxu0 0
        %1190 = vmatprep.subr.bf16.mxu0 0
        %1191 = vmatpush2.bf16.msra.mxu0 0
        %1192 = vmatprep.subr.bf16.mxu0 0
        %1193 = vmatpush2.bf16.msra.mxu0 0
        %1194 = vmatprep.subr.bf16.mxu0 0
        %1195 = vmatpush2.bf16.msra.mxu0 %v538
        %1196 = vmatprep.subr.bf16.mxu0 0
        %1197 = vmatpush2.bf16.msra.mxu0 %v537
        %1198 = vmatprep.subr.bf16.mxu0 0
        %1199 = vmatpush2.bf16.msra.mxu0 %v536
        %1200 = vmatprep.subr.bf16.mxu0 0
        %1201 = vmatpush2.bf16.msra.mxu0 %v535
        %1202 = vmatprep.mubr.bf16.mxu0 %v391
        %1203 = vmatmul.mubr.bf16.gmra.mxu0 %v308
        %v1204 = vpop.f32.mrf.mxu0
        %v1205 = vadd.f32 %v1149, %v1204
        %v1206 = vpop.f32.mrf.mxu0
        %v1207 = vpop.f32.mrf.mxu0
        %v1208 = vadd.f32 %v1152, %v1207
        %v1209 = vpop.f32.mrf.mxu0
        %1210 = vmatprep.mubr.bf16.mxu0 %v394
        %1211 = vmatmul.mubr.bf16.gmra.mxu0 %v310
        %v1212 = vpop.f32.mrf.mxu0
        %v1213 = vadd.f32 %v1157, %v1212
        %v1214 = vpop.f32.mrf.mxu0
        %v1215 = vpop.f32.mrf.mxu0
        %v1216 = vadd.f32 %v1160, %v1215
        %v1217 = vpop.f32.mrf.mxu0
        %1218 = vmatprep.mubr.bf16.mxu0 %v397
        %1219 = vmatmul.mubr.bf16.gmra.mxu0 %v312
        %v1220 = vpop.f32.mrf.mxu0
        %v1221 = vadd.f32 %v1165, %v1220
        %v1222 = vpop.f32.mrf.mxu0
        %v1223 = vpop.f32.mrf.mxu0
        %v1224 = vpop.f32.mrf.mxu0
        %1225 = vdwg.mxu0
        %s1226 = sadd.s32 %s226, 3
        %s1227 = smul.u32 %s1226, 10
        %s1228 = smul.addr %s1227, 4
        %s1229 = scalar_lea.vmem %s207, %s1228
        %v1230 = vld [vmem:[%s1229] sm:$0xff]
        %v1231 = vld [vmem:[%s1229 + $0x8] sm:$0xff]
        %v1232 = vld [vmem:[%s1229 + $0x10] sm:$0xff]
        %v1233 = vld [vmem:[%s1229 + $0x18] sm:$0xff]
        %v1234 = vld [vmem:[%s1229 + $0x20] sm:$0x33]
        %v1240 = vunpack.c.l.b16 %v1230
        %v1241 = vunpack.c.h.b16 %v1230
        %v1242 = vunpack.c.l.b16 %v1231
        %v1243 = vunpack.c.h.b16 %v1231
        %v1244 = vunpack.c.l.b16 %v1232
        %v1245 = vunpack.c.h.b16 %v1232
        %v1246 = vunpack.c.l.b16 %v1233
        %v1247 = vunpack.c.h.b16 %v1233
        %v1248 = vunpack.c.l.b16 %v1234
        %v1249 = vunpack.c.h.b16 %v1234
        %v1250 = vpack.c.b16 %v1242, %v1240
        %v1251 = vpack.c.b16 %v1243, %v1241
        %v1252 = vpack.c.b16 %v1246, %v1244
        %v1253 = vpack.c.b16 %v1247, %v1245
        %v1254 = vpack.c.b16 %v1248, %v1248
        %v1255 = vpack.c.b16 %v1249, %v1249
        %v1260 = vsel %vm389, %v1251, 0
        %v1263 = vsel %vm389, %v1253, 0
        %v1266 = vsel %vm389, %v1255, 0
        %1268 = vmatprep.subr.bf16.mxu0 0
        %1269 = vmatpush1.bf16.msra.mxu0 %v729
        %1270 = vmatprep.subr.bf16.mxu0 0
        %1271 = vmatpush1.bf16.msra.mxu0 %v728
        %1272 = vmatprep.subr.bf16.mxu0 0
        %1273 = vmatpush1.bf16.msra.mxu0 %v727
        %1274 = vmatprep.subr.bf16.mxu0 0
        %1275 = vmatpush1.bf16.msra.mxu0 %v726
        %1276 = vmatprep.subr.bf16.mxu0 0
        %1277 = vmatpush1.bf16.msra.mxu0 %v725
        %1278 = vmatprep.subr.bf16.mxu0 0
        %1279 = vmatpush1.bf16.msra.mxu0 %v724
        %1280 = vmatprep.subr.bf16.mxu0 0
        %1281 = vmatpush1.bf16.msra.mxu0 %v723
        %1282 = vmatprep.subr.bf16.mxu0 0
        %1283 = vmatpush1.bf16.msra.mxu0 %v722
        %1284 = vmatprep.subr.bf16.mxu0 0
        %1285 = vmatpush2.bf16.msra.mxu0 0
        %1286 = vmatprep.subr.bf16.mxu0 0
        %1287 = vmatpush2.bf16.msra.mxu0 0
        %1288 = vmatprep.subr.bf16.mxu0 0
        %1289 = vmatpush2.bf16.msra.mxu0 0
        %1290 = vmatprep.subr.bf16.mxu0 0
        %1291 = vmatpush2.bf16.msra.mxu0 0
        %1292 = vmatprep.subr.bf16.mxu0 0
        %1293 = vmatpush2.bf16.msra.mxu0 %v733
        %1294 = vmatprep.subr.bf16.mxu0 0
        %1295 = vmatpush2.bf16.msra.mxu0 %v732
        %1296 = vmatprep.subr.bf16.mxu0 0
        %1297 = vmatpush2.bf16.msra.mxu0 %v731
        %1298 = vmatprep.subr.bf16.mxu0 0
        %1299 = vmatpush2.bf16.msra.mxu0 %v730
        %1300 = vmatprep.mubr.bf16.mxu0 %v1260
        %1301 = vmatmul.mubr.bf16.gmra.mxu0 %v1250
        %v1302 = vpop.f32.mrf.mxu0
        %v1303 = vadd.f32 0.0, %v1302
        %v1304 = vpop.f32.mrf.mxu0
        %v1305 = vpop.f32.mrf.mxu0
        %v1306 = vadd.f32 0.0, %v1305
        %v1307 = vpop.f32.mrf.mxu0
        %1308 = vmatprep.mubr.bf16.mxu0 %v1263
        %1309 = vmatmul.mubr.bf16.gmra.mxu0 %v1252
        %v1310 = vpop.f32.mrf.mxu0
        %v1311 = vadd.f32 0.0, %v1310
        %v1312 = vpop.f32.mrf.mxu0
        %v1313 = vpop.f32.mrf.mxu0
        %v1314 = vadd.f32 0.0, %v1313
        %v1315 = vpop.f32.mrf.mxu0
        %1316 = vmatprep.mubr.bf16.mxu0 %v1266
        %1317 = vmatmul.mubr.bf16.gmra.mxu0 %v1254
        %v1318 = vpop.f32.mrf.mxu0
        %v1319 = vadd.f32 0.0, %v1318
        %v1320 = vpop.f32.mrf.mxu0
        %v1321 = vpop.f32.mrf.mxu0
        %v1322 = vpop.f32.mrf.mxu0
        %1323 = vdwg.mxu0
        %v1324 = vadd.f32 %v1205, %v1303
        %v1325 = vadd.f32 %v1208, %v1306
        %v1326 = vadd.f32 %v1213, %v1311
        %v1327 = vadd.f32 %v1216, %v1314
        %v1328 = vadd.f32 %v1221, %v1319
        %v1329 = vmax.f32 %v1109, %v1324
        %v1330 = vmax.f32 %v1110, %v1325
        %v1331 = vmax.f32 %v1111, %v1326
        %v1332 = vmax.f32 %v1112, %v1327
        %v1333 = vmax.f32 %v1113, %v1328
        %1334 = vmatprep.subr.bf16.mxu0 0
        %1335 = vmatpush1.bf16.msra.mxu0 %v372
        %1336 = vmatprep.subr.bf16.mxu0 0
        %1337 = vmatpush1.bf16.msra.mxu0 %v371
        %1338 = vmatprep.subr.bf16.mxu0 0
        %1339 = vmatpush1.bf16.msra.mxu0 %v370
        %1340 = vmatprep.subr.bf16.mxu0 0
        %1341 = vmatpush1.bf16.msra.mxu0 %v369
        %1342 = vmatprep.subr.bf16.mxu0 0
        %1343 = vmatpush1.bf16.msra.mxu0 %v368
        %1344 = vmatprep.subr.bf16.mxu0 0
        %1345 = vmatpush1.bf16.msra.mxu0 %v367
        %1346 = vmatprep.subr.bf16.mxu0 0
        %1347 = vmatpush1.bf16.msra.mxu0 %v366
        %1348 = vmatprep.subr.bf16.mxu0 0
        %1349 = vmatpush1.bf16.msra.mxu0 %v365
        %1350 = vmatprep.subr.bf16.mxu0 0
        %1351 = vmatpush2.bf16.msra.mxu0 0
        %1352 = vmatprep.subr.bf16.mxu0 0
        %1353 = vmatpush2.bf16.msra.mxu0 0
        %1354 = vmatprep.subr.bf16.mxu0 0
        %1355 = vmatpush2.bf16.msra.mxu0 0
        %1356 = vmatprep.subr.bf16.mxu0 0
        %1357 = vmatpush2.bf16.msra.mxu0 0
        %1358 = vmatprep.subr.bf16.mxu0 0
        %1359 = vmatpush2.bf16.msra.mxu0 %v376
        %1360 = vmatprep.subr.bf16.mxu0 0
        %1361 = vmatpush2.bf16.msra.mxu0 %v375
        %1362 = vmatprep.subr.bf16.mxu0 0
        %1363 = vmatpush2.bf16.msra.mxu0 %v374
        %1364 = vmatprep.subr.bf16.mxu0 0
        %1365 = vmatpush2.bf16.msra.mxu0 %v373
        %1366 = vmatprep.mubr.bf16.mxu0 %v1040
        %1367 = vmatmul.mubr.bf16.gmra.mxu0 %v1030
        %v1368 = vpop.f32.mrf.mxu0
        %v1369 = vadd.f32 0.0, %v1368
        %v1370 = vpop.f32.mrf.mxu0
        %v1371 = vpop.f32.mrf.mxu0
        %v1372 = vadd.f32 0.0, %v1371
        %v1373 = vpop.f32.mrf.mxu0
        %1374 = vmatprep.mubr.bf16.mxu0 %v1043
        %1375 = vmatmul.mubr.bf16.gmra.mxu0 %v1032
        %v1376 = vpop.f32.mrf.mxu0
        %v1377 = vadd.f32 0.0, %v1376
        %v1378 = vpop.f32.mrf.mxu0
        %v1379 = vpop.f32.mrf.mxu0
        %v1380 = vadd.f32 0.0, %v1379
        %v1381 = vpop.f32.mrf.mxu0
        %1382 = vmatprep.mubr.bf16.mxu0 %v1046
        %1383 = vmatmul.mubr.bf16.gmra.mxu0 %v1034
        %v1384 = vpop.f32.mrf.mxu0
        %v1385 = vadd.f32 0.0, %v1384
        %v1386 = vpop.f32.mrf.mxu0
        %v1387 = vpop.f32.mrf.mxu0
        %v1388 = vpop.f32.mrf.mxu0
        %1389 = vdwg.mxu0
        %1390 = vmatprep.subr.bf16.mxu0 0
        %1391 = vmatpush1.bf16.msra.mxu0 %v534
        %1392 = vmatprep.subr.bf16.mxu0 0
        %1393 = vmatpush1.bf16.msra.mxu0 %v533
        %1394 = vmatprep.subr.bf16.mxu0 0
        %1395 = vmatpush1.bf16.msra.mxu0 %v532
        %1396 = vmatprep.subr.bf16.mxu0 0
        %1397 = vmatpush1.bf16.msra.mxu0 %v531
        %1398 = vmatprep.subr.bf16.mxu0 0
        %1399 = vmatpush1.bf16.msra.mxu0 %v530
        %1400 = vmatprep.subr.bf16.mxu0 0
        %1401 = vmatpush1.bf16.msra.mxu0 %v529
        %1402 = vmatprep.subr.bf16.mxu0 0
        %1403 = vmatpush1.bf16.msra.mxu0 %v528
        %1404 = vmatprep.subr.bf16.mxu0 0
        %1405 = vmatpush1.bf16.msra.mxu0 %v527
        %1406 = vmatprep.subr.bf16.mxu0 0
        %1407 = vmatpush2.bf16.msra.mxu0 0
        %1408 = vmatprep.subr.bf16.mxu0 0
        %1409 = vmatpush2.bf16.msra.mxu0 0
        %1410 = vmatprep.subr.bf16.mxu0 0
        %1411 = vmatpush2.bf16.msra.mxu0 0
        %1412 = vmatprep.subr.bf16.mxu0 0
        %1413 = vmatpush2.bf16.msra.mxu0 0
        %1414 = vmatprep.subr.bf16.mxu0 0
        %1415 = vmatpush2.bf16.msra.mxu0 %v538
        %1416 = vmatprep.subr.bf16.mxu0 0
        %1417 = vmatpush2.bf16.msra.mxu0 %v537
        %1418 = vmatprep.subr.bf16.mxu0 0
        %1419 = vmatpush2.bf16.msra.mxu0 %v536
        %1420 = vmatprep.subr.bf16.mxu0 0
        %1421 = vmatpush2.bf16.msra.mxu0 %v535
        %1422 = vmatprep.mubr.bf16.mxu0 %v855
        %1423 = vmatmul.mubr.bf16.gmra.mxu0 %v845
        %v1424 = vpop.f32.mrf.mxu0
        %v1425 = vadd.f32 %v1369, %v1424
        %v1426 = vpop.f32.mrf.mxu0
        %v1427 = vpop.f32.mrf.mxu0
        %v1428 = vadd.f32 %v1372, %v1427
        %v1429 = vpop.f32.mrf.mxu0
        %1430 = vmatprep.mubr.bf16.mxu0 %v858
        %1431 = vmatmul.mubr.bf16.gmra.mxu0 %v847
        %v1432 = vpop.f32.mrf.mxu0
        %v1433 = vadd.f32 %v1377, %v1432
        %v1434 = vpop.f32.mrf.mxu0
        %v1435 = vpop.f32.mrf.mxu0
        %v1436 = vadd.f32 %v1380, %v1435
        %v1437 = vpop.f32.mrf.mxu0
        %1438 = vmatprep.mubr.bf16.mxu0 %v861
        %1439 = vmatmul.mubr.bf16.gmra.mxu0 %v849
        %v1440 = vpop.f32.mrf.mxu0
        %v1441 = vadd.f32 %v1385, %v1440
        %v1442 = vpop.f32.mrf.mxu0
        %v1443 = vpop.f32.mrf.mxu0
        %v1444 = vpop.f32.mrf.mxu0
        %1445 = vdwg.mxu0
        %s1446 = smul.addr %s1227, 4
        %s1447 = scalar_lea.vmem %s212, %s1446
        %v1448 = vld [vmem:[%s1447] sm:$0xff]
        %v1449 = vld [vmem:[%s1447 + $0x8] sm:$0xff]
        %v1450 = vld [vmem:[%s1447 + $0x10] sm:$0xff]
        %v1451 = vld [vmem:[%s1447 + $0x18] sm:$0xff]
        %v1452 = vld [vmem:[%s1447 + $0x20] sm:$0x33]
        %v1458 = vunpack.c.l.b16 %v1448
        %v1459 = vunpack.c.h.b16 %v1448
        %v1460 = vunpack.c.l.b16 %v1449
        %v1461 = vunpack.c.h.b16 %v1449
        %v1462 = vunpack.c.l.b16 %v1450
        %v1463 = vunpack.c.h.b16 %v1450
        %v1464 = vunpack.c.l.b16 %v1451
        %v1465 = vunpack.c.h.b16 %v1451
        %v1466 = vunpack.c.l.b16 %v1452
        %v1467 = vunpack.c.h.b16 %v1452
        %v1468 = vpack.c.b16 %v1460, %v1458
        %v1469 = vpack.c.b16 %v1461, %v1459
        %v1470 = vpack.c.b16 %v1464, %v1462
        %v1471 = vpack.c.b16 %v1465, %v1463
        %v1472 = vpack.c.b16 %v1466, %v1466
        %v1473 = vpack.c.b16 %v1467, %v1467
        %v1478 = vsel %vm389, %v1469, 0
        %v1481 = vsel %vm389, %v1471, 0
        %v1484 = vsel %vm389, %v1473, 0
        %1486 = vmatprep.subr.bf16.mxu0 0
        %1487 = vmatpush1.bf16.msra.mxu0 %v729
        %1488 = vmatprep.subr.bf16.mxu0 0
        %1489 = vmatpush1.bf16.msra.mxu0 %v728
        %1490 = vmatprep.subr.bf16.mxu0 0
        %1491 = vmatpush1.bf16.msra.mxu0 %v727
        %1492 = vmatprep.subr.bf16.mxu0 0
        %1493 = vmatpush1.bf16.msra.mxu0 %v726
        %1494 = vmatprep.subr.bf16.mxu0 0
        %1495 = vmatpush1.bf16.msra.mxu0 %v725
        %1496 = vmatprep.subr.bf16.mxu0 0
        %1497 = vmatpush1.bf16.msra.mxu0 %v724
        %1498 = vmatprep.subr.bf16.mxu0 0
        %1499 = vmatpush1.bf16.msra.mxu0 %v723
        %1500 = vmatprep.subr.bf16.mxu0 0
        %1501 = vmatpush1.bf16.msra.mxu0 %v722
        %1502 = vmatprep.subr.bf16.mxu0 0
        %1503 = vmatpush2.bf16.msra.mxu0 0
        %1504 = vmatprep.subr.bf16.mxu0 0
        %1505 = vmatpush2.bf16.msra.mxu0 0
        %1506 = vmatprep.subr.bf16.mxu0 0
        %1507 = vmatpush2.bf16.msra.mxu0 0
        %1508 = vmatprep.subr.bf16.mxu0 0
        %1509 = vmatpush2.bf16.msra.mxu0 0
        %1510 = vmatprep.subr.bf16.mxu0 0
        %1511 = vmatpush2.bf16.msra.mxu0 %v733
        %1512 = vmatprep.subr.bf16.mxu0 0
        %1513 = vmatpush2.bf16.msra.mxu0 %v732
        %1514 = vmatprep.subr.bf16.mxu0 0
        %1515 = vmatpush2.bf16.msra.mxu0 %v731
        %1516 = vmatprep.subr.bf16.mxu0 0
        %1517 = vmatpush2.bf16.msra.mxu0 %v730
        %1518 = vmatprep.mubr.bf16.mxu0 %v1478
        %1519 = vmatmul.mubr.bf16.gmra.mxu0 %v1468
        %v1520 = vpop.f32.mrf.mxu0
        %v1521 = vadd.f32 0.0, %v1520
        %v1522 = vpop.f32.mrf.mxu0
        %v1523 = vpop.f32.mrf.mxu0
        %v1524 = vadd.f32 0.0, %v1523
        %v1525 = vpop.f32.mrf.mxu0
        %1526 = vmatprep.mubr.bf16.mxu0 %v1481
        %1527 = vmatmul.mubr.bf16.gmra.mxu0 %v1470
        %v1528 = vpop.f32.mrf.mxu0
        %v1529 = vadd.f32 0.0, %v1528
        %v1530 = vpop.f32.mrf.mxu0
        %v1531 = vpop.f32.mrf.mxu0
        %v1532 = vadd.f32 0.0, %v1531
        %v1533 = vpop.f32.mrf.mxu0
        %1534 = vmatprep.mubr.bf16.mxu0 %v1484
        %1535 = vmatmul.mubr.bf16.gmra.mxu0 %v1472
        %v1536 = vpop.f32.mrf.mxu0
        %v1537 = vadd.f32 0.0, %v1536
        %v1538 = vpop.f32.mrf.mxu0
        %v1539 = vpop.f32.mrf.mxu0
        %v1540 = vpop.f32.mrf.mxu0
        %1541 = vdwg.mxu0
        %v1542 = vadd.f32 %v1425, %v1521
        %v1543 = vadd.f32 %v1428, %v1524
        %v1544 = vadd.f32 %v1433, %v1529
        %v1545 = vadd.f32 %v1436, %v1532
        %v1546 = vadd.f32 %v1441, %v1537
        %v1547 = vmax.f32 %v1329, %v1542
        %v1548 = vmax.f32 %v1330, %v1543
        %v1549 = vmax.f32 %v1331, %v1544
        %v1550 = vmax.f32 %v1332, %v1545
        %v1551 = vmax.f32 %v1333, %v1546
        %v1553 = vlaneseq
        %v1554 = vshrl.u32 %v1553, 7
        %v1555 = vsub.s32 0, %v1554
        %v1556 = vrot.slane %v219, %v1555
        %v1558 = vadd.f32 %v1547, %v1556
        %v1559 = vadd.f32 %v1548, %v1556
        %v1560 = vadd.f32 %v1549, %v1556
        %v1561 = vadd.f32 %v1550, %v1556
        %v1562 = vadd.f32 %v1551, %v1556
        %v1563 = vmax.f32 %v1558, 0.0
        %v1564 = vmax.f32 %v1559, 0.0
        %v1565 = vmax.f32 %v1560, 0.0
        %v1566 = vmax.f32 %v1561, 0.0
        %v1567 = vmax.f32 %v1562, 0.0
        %s1568 = smul.u32 %s221, 40
        %s1569 = scalar_lea.vmem %s217, %s1568
        %1570 = vst.msk [vmem:[%s1569] sm:$0xff] %vm389, %v1563
        %1571 = vst.msk [vmem:[%s1569 + $0x8] sm:$0xff] %vm389, %v1564
        %1572 = vst.msk [vmem:[%s1569 + $0x10] sm:$0xff] %vm389, %v1565
        %1573 = vst.msk [vmem:[%s1569 + $0x18] sm:$0xff] %vm389, %v1566
        %vm1574 = vcmask 519168
        %1575 = vst.msk [vmem:[%s1569 + $0x20] sm:$0xf] %vm1574, %v1567
      $region41: #{petnet_forward.5} parent=35 // loop_footer
        %s225 = sadd.s32 1, %s221
      $region42: #{petnet_forward.5} parent=35 // loop_footer_branch
        %220 = sbr.rel target = $region38
      $region43: #{petnet_forward.5} parent=35 // loop_exit
        _
      %p1576 = scmp.lt.s32.totalorder %s15, 1
      %s1577 = scalar_select %p1576, %s15, 1
      %s1578 = smul.addr %s1577, 180
      %s1579 = smul.addr %s1578, 8
      %s1580 = scalar_lea.vmem %s4, %s1579
      // Predicated region
      $region44: #{petnet_forward.5} parent=35 // pred_check
        %p1581 = pneg %p127
      $region45: #{petnet_forward.5} parent=35 // pred_check_branch
        %1583 = sbr.rel (%p1581) target = $region47
      $region46: #{petnet_forward.5} parent=35 // pred_region
        _
      $region47: #{petnet_forward.5} parent=35 // pred_fallthru
        _
    $region36: #{petnet_forward.5} parent=5 // pred_fallthru
      _
    %p1584 = scmp.le.s32.totalorder 2, %s10
    // Predicated region
    $region48: #{petnet_forward.5} parent=5 // pred_check
      %p1585 = pneg %p1584
    $region49: #{petnet_forward.5} parent=5 // pred_check_branch
      %1587 = sbr.rel (%p1585) target = $region51
    $region50: #{petnet_forward.5} parent=5 // pred_region
      %s1588 = ssub.s32 %s10, 2
      // Predicated region
      $region52: #{petnet_forward.5} parent=50 // pred_check
        %p1589 = pneg %p133
      $region53: #{petnet_forward.5} parent=50 // pred_check_branch
        %1591 = sbr.rel (%p1589) target = $region55
      $region54: #{petnet_forward.5} parent=50 // pred_region
        %p1592 = scmp.lt.s32.totalorder %s16, 1
        %s1593 = scalar_select %p1592, %s16, 1
        %s1594 = smul.addr %s1593, 180
        %s1595 = smul.addr %s1594, 8
        %s1596 = scalar_lea.vmem %s4, %s1595
      $region55: #{petnet_forward.5} parent=50 // pred_fallthru
        _
    $region51: #{petnet_forward.5} parent=5 // pred_fallthru
      _
  $region6: #{petnet_forward.5} parent=0 // loop_footer
    %s14 = sadd.s32 1, %s10
  $region7: #{petnet_forward.5} parent=0 // loop_footer_branch
    %9 = sbr.rel target = $region3
  $region8: #{petnet_forward.5} parent=0 // loop_exit
    _

// kernel: petnet_forward.6
$region0: #{petnet_forward.6}
  #allocation0 [shape = 'u32[]', space=smem, size = 0x4, offset = 0x4, fixed_abs, tag = 'smem constant byte address 0x4 - core index']
  #allocation1 [shape = 'u32[144,128]{1,0:T(1,128)}', space=vmem, size = 0x12000, scoped, tag = 'internal scratch']
  %s0 = inlined_call_operand.vmem [shape: bf16[2,36,17,192], index: 0, kind: input, shape index: {}]
  %s1 = inlined_call_operand.vmem [shape: bf16[2,36,17,192], index: 1, kind: input, shape index: {}]
  %s2 = inlined_call_operand.vmem [shape: bf16[3,192,64], index: 2, kind: input, shape index: {}]
  %s3 = inlined_call_operand.vmem [shape: f32[1,64], index: 3, kind: input, shape index: {}]
  %s4 = inlined_call_operand.vmem [shape: f32[2,17,17,64], index: 4, kind: output, shape index: {}]
  %s5 = sld [smem:[#allocation0]]
  $region56: #{petnet_forward.6} parent=0
    _
  %s7 = ssub.s32 1, %s5
  %s8 = scalar_select 0, %s7, %s5
  loop: start=0, step=1, limit=4
  $region2: #{petnet_forward.6} parent=0 // loop_pre_header
    _
  $region3: #{petnet_forward.6} parent=0 // loop_header
    %s10 = sphi 0, %s14
    %p11 = scmp.ge.s32.totalorder %s10, 4
    %s20 = sphi 0, %s22
    %s23 = sphi 0, %s20
    %s24 = sphi 0, %s23
    %s40 = sphi 0, %s24
    %s46 = sphi 0, %s48
    %s49 = sphi 0, %s46
    %s50 = sphi 0, %s49
    %s66 = sphi 0, %s50
    %s70 = sphi 0, %s70
    %s72 = sphi 0, %s70
    %s73 = sphi 0, %s72
    %s87 = sphi 0, %s73
    %s91 = sphi 0, %s91
    %s93 = sphi 0, %s91
    %s94 = sphi 0, %s93
    %s108 = sphi 0, %s94
    %s114 = sphi 0, %s116
    %s117 = sphi 0, %s114
    %s118 = sphi 0, %s117
    %s134 = sphi 0, %s118
  $region4: #{petnet_forward.6} parent=0 // loop_header_branch
    %13 = sbr.rel (%p11) target = $region8
  $region5: #{petnet_forward.6} parent=0 // loop_body
    %s15 = ssub.s32 %s10, 1
    %s16 = ssub.s32 %s10, 2
    %s17 = sadd.s32 %s10, 1
    %s18 = ssub.s32 %s10, %s17
    %p19 = scmp.eq.s32.totalorder %s18, 0
    %s21 = sadd.s32 %s20, 1
    %s22 = scalar_select %p19, %s20, %s21
    %p25 = pneg %p19
    %p26 = scmp.eq.s32.totalorder %s10, 1
    %p27 = por %p25, %p26
    %p28 = scmp.ne.s32.totalorder %s20, %s23
    %p29 = scmp.eq.s32.totalorder %s10, 0
    %p30 = por %p28, %p29
    %p31 = scmp.ne.s32.totalorder %s20, %s23
    %p32 = scmp.eq.s32.totalorder %s15, 1
    %p33 = por %p31, %p32
    %p34 = scmp.ne.s32.totalorder %s23, %s24
    %p35 = scmp.eq.s32.totalorder %s15, 0
    %p36 = por %p34, %p35
    %p37 = scmp.ne.s32.totalorder %s23, %s24
    %p38 = scmp.eq.s32.totalorder %s16, 1
    %p39 = por %p37, %p38
    %p41 = scmp.ne.s32.totalorder %s24, %s40
    %p42 = scmp.eq.s32.totalorder %s16, 0
    %p43 = por %p41, %p42
    %s44 = ssub.s32 %s10, %s17
    %p45 = scmp.eq.s32.totalorder %s44, 0
    %s47 = sadd.s32 %s46, 1
    %s48 = scalar_select %p45, %s46, %s47
    %p51 = pneg %p45
    %p52 = scmp.eq.s32.totalorder %s10, 1
    %p53 = por %p51, %p52
    %p54 = scmp.ne.s32.totalorder %s46, %s49
    %p55 = scmp.eq.s32.totalorder %s10, 0
    %p56 = por %p54, %p55
    %p57 = scmp.ne.s32.totalorder %s46, %s49
    %p58 = scmp.eq.s32.totalorder %s15, 1
    %p59 = por %p57, %p58
    %p60 = scmp.ne.s32.totalorder %s49, %s50
    %p61 = scmp.eq.s32.totalorder %s15, 0
    %p62 = por %p60, %p61
    %p63 = scmp.ne.s32.totalorder %s49, %s50
    %p64 = scmp.eq.s32.totalorder %s16, 1
    %p65 = por %p63, %p64
    %p67 = scmp.ne.s32.totalorder %s50, %s66
    %p68 = scmp.eq.s32.totalorder %s16, 0
    %p69 = por %p67, %p68
    %s71 = sadd.s32 %s70, 1
    %p74 = scmp.eq.s32.totalorder %s10, 1
    %p75 = scmp.ne.s32.totalorder %s70, %s72
    %p76 = scmp.eq.s32.totalorder %s10, 0
    %p77 = por %p75, %p76
    %p78 = scmp.ne.s32.totalorder %s70, %s72
    %p79 = scmp.eq.s32.totalorder %s15, 1
    %p80 = por %p78, %p79
    %p81 = scmp.ne.s32.totalorder %s72, %s73
    %p82 = scmp.eq.s32.totalorder %s15, 0
    %p83 = por %p81, %p82
    %p84 = scmp.ne.s32.totalorder %s72, %s73
    %p85 = scmp.eq.s32.totalorder %s16, 1
    %p86 = por %p84, %p85
    %p88 = scmp.ne.s32.totalorder %s73, %s87
    %p89 = scmp.eq.s32.totalorder %s16, 0
    %p90 = por %p88, %p89
    %s92 = sadd.s32 %s91, 1
    %p95 = scmp.eq.s32.totalorder %s10, 1
    %p96 = scmp.ne.s32.totalorder %s91, %s93
    %p97 = scmp.eq.s32.totalorder %s10, 0
    %p98 = por %p96, %p97
    %p99 = scmp.ne.s32.totalorder %s91, %s93
    %p100 = scmp.eq.s32.totalorder %s15, 1
    %p101 = por %p99, %p100
    %p102 = scmp.ne.s32.totalorder %s93, %s94
    %p103 = scmp.eq.s32.totalorder %s15, 0
    %p104 = por %p102, %p103
    %p105 = scmp.ne.s32.totalorder %s93, %s94
    %p106 = scmp.eq.s32.totalorder %s16, 1
    %p107 = por %p105, %p106
    %p109 = scmp.ne.s32.totalorder %s94, %s108
    %p110 = scmp.eq.s32.totalorder %s16, 0
    %p111 = por %p109, %p110
    %s112 = ssub.s32 %s10, %s17
    %p113 = scmp.eq.s32.totalorder %s112, 0
    %s115 = sadd.s32 %s114, 1
    %s116 = scalar_select %p113, %s114, %s115
    %p119 = pneg %p113
    %p120 = scmp.eq.s32.totalorder %s10, 1
    %p121 = por %p119, %p120
    %p122 = scmp.ne.s32.totalorder %s114, %s117
    %p123 = scmp.eq.s32.totalorder %s10, 0
    %p124 = por %p122, %p123
    %p125 = scmp.ne.s32.totalorder %s114, %s117
    %p126 = scmp.eq.s32.totalorder %s15, 1
    %p127 = por %p125, %p126
    %p128 = scmp.ne.s32.totalorder %s117, %s118
    %p129 = scmp.eq.s32.totalorder %s15, 0
    %p130 = por %p128, %p129
    %p131 = scmp.ne.s32.totalorder %s117, %s118
    %p132 = scmp.eq.s32.totalorder %s16, 1
    %p133 = por %p131, %p132
    %p135 = scmp.ne.s32.totalorder %s118, %s134
    %p136 = scmp.eq.s32.totalorder %s16, 0
    %p137 = por %p135, %p136
    %p138 = scmp.le.s32.totalorder 1, %s10
    %p139 = scmp.lt.s32.totalorder %s10, 3
    %p140 = pnand %p138, %p139
    %p141 = pneg %p140
    // Predicated region
    $region9: #{petnet_forward.6} parent=5 // pred_check
      _
    $region10: #{petnet_forward.6} parent=5 // pred_check_branch
      %143 = sbr.rel (%p140) target = $region12
    $region11: #{petnet_forward.6} parent=5 // pred_region
      %s144 = ssub.s32 %s10, 1
      // Predicated region
      $region13: #{petnet_forward.6} parent=11 // pred_check
        %p145 = pneg %p83
      $region14: #{petnet_forward.6} parent=11 // pred_check_branch
        %147 = sbr.rel (%p145) target = $region16
      $region15: #{petnet_forward.6} parent=11 // pred_region
        _
      $region16: #{petnet_forward.6} parent=11 // pred_fallthru
        _
      // Predicated region
      $region17: #{petnet_forward.6} parent=11 // pred_check
        %p148 = pneg %p104
      $region18: #{petnet_forward.6} parent=11 // pred_check_branch
        %150 = sbr.rel (%p148) target = $region20
      $region19: #{petnet_forward.6} parent=11 // pred_region
        _
      $region20: #{petnet_forward.6} parent=11 // pred_fallthru
        _
    $region12: #{petnet_forward.6} parent=5 // pred_fallthru
      _
    %p151 = scmp.lt.s32.totalorder %s10, 2
    // Predicated region
    $region21: #{petnet_forward.6} parent=5 // pred_check
      %p152 = pneg %p151
    $region22: #{petnet_forward.6} parent=5 // pred_check_branch
      %154 = sbr.rel (%p152) target = $region24
    $region23: #{petnet_forward.6} parent=5 // pred_region
      // Predicated region
      $region25: #{petnet_forward.6} parent=23 // pred_check
        %p155 = pneg %p30
      $region26: #{petnet_forward.6} parent=23 // pred_check_branch
        %157 = sbr.rel (%p155) target = $region28
      $region27: #{petnet_forward.6} parent=23 // pred_region
        %p158 = scmp.lt.s32.totalorder %s10, 1
        %s159 = scalar_select %p158, %s10, 1
        %s160 = smul.addr %s159, 216
        %s161 = smul.addr %s160, 4
        %s162 = scalar_lea.vmem %s0, %s161
      $region28: #{petnet_forward.6} parent=23 // pred_fallthru
        _
      // Predicated region
      $region29: #{petnet_forward.6} parent=23 // pred_check
        %p163 = pneg %p56
      $region30: #{petnet_forward.6} parent=23 // pred_check_branch
        %165 = sbr.rel (%p163) target = $region32
      $region31: #{petnet_forward.6} parent=23 // pred_region
        %p166 = scmp.lt.s32.totalorder %s10, 1
        %s167 = scalar_select %p166, %s10, 1
        %s168 = smul.addr %s167, 216
        %s169 = smul.addr %s168, 4
        %s170 = scalar_lea.vmem %s1, %s169
      $region32: #{petnet_forward.6} parent=23 // pred_fallthru
        _
    $region24: #{petnet_forward.6} parent=5 // pred_fallthru
      _
    %p171 = scmp.le.s32.totalorder 1, %s10
    %p172 = scmp.lt.s32.totalorder %s10, 3
    %p173 = pnand %p171, %p172
    %p174 = pneg %p173
    // Predicated region
    $region33: #{petnet_forward.6} parent=5 // pred_check
      _
    $region34: #{petnet_forward.6} parent=5 // pred_check_branch
      %176 = sbr.rel (%p173) target = $region36
    $region35: #{petnet_forward.6} parent=5 // pred_region
      %s177 = ssub.s32 %s10, 1
      %p178 = scmp.lt.s32.totalorder %s15, 1
      %s179 = scalar_select %p178, %s15, 1
      %s180 = smul.addr %s179, 216
      %s181 = smul.addr %s180, 4
      %s182 = scalar_lea.vmem %s0, %s181
      %p183 = pneg %p36
      %p184 = pneg %p33
      %p185 = scmp.lt.s32.totalorder %s15, 1
      %s186 = scalar_select %p185, %s15, 1
      %s187 = smul.addr %s186, 216
      %s188 = smul.addr %s187, 4
      %s189 = scalar_lea.vmem %s1, %s188
      %p190 = pneg %p62
      %p191 = pneg %p59
      %p192 = pneg %p83
      %p193 = pneg %p80
      %p194 = pneg %p104
      %p195 = pneg %p101
      %p196 = pneg %p130
      %p197 = pneg %p127
      %p198 = scmp.lt.s32.totalorder %s15, 1
      %s199 = scalar_select %p198, %s15, 1
      %s200 = smul.addr %s199, 51
      %s201 = smul.addr %s200, 8
      %s202 = scalar_lea.vmem %s4, %s201
      %p203 = scmp.lt.s32.totalorder %s15, 1
      %s204 = scalar_select %p203, %s15, 1
      %s205 = smul.addr %s204, 216
      %s206 = smul.addr %s205, 4
      %s207 = scalar_lea.vmem %s0, %s206
      %p208 = scmp.lt.s32.totalorder %s15, 1
      %s209 = scalar_select %p208, %s15, 1
      %s210 = smul.addr %s209, 216
      %s211 = smul.addr %s210, 4
      %s212 = scalar_lea.vmem %s1, %s211
      %p213 = scmp.lt.s32.totalorder %s15, 1
      %s214 = scalar_select %p213, %s15, 1
      %s215 = smul.addr %s214, 51
      %s216 = smul.addr %s215, 8
      %s217 = scalar_lea.vmem %s4, %s216
      %v219 = vld [vmem:[%s3] sm:$0x1]
      loop: start=0, step=1, limit=17
      $region37: #{petnet_forward.6} parent=35 // loop_pre_header
        _
      $region38: #{petnet_forward.6} parent=35 // loop_header
        %s221 = sphi 0, %s225
        %p222 = scmp.ge.s32.totalorder %s221, 17
      $region39: #{petnet_forward.6} parent=35 // loop_header_branch
        %224 = sbr.rel (%p222) target = $region43
      $region40: #{petnet_forward.6} parent=35 // loop_body
        %s226 = smul.u32 %s221, 2
        %v227 = vld [vmem:[%s2] sm:$0xf]
        %v228 = vld [vmem:[%s2 + $0x4] sm:$0xf]
        %v229 = vld [vmem:[%s2 + $0x8] sm:$0xf]
        %v230 = vld [vmem:[%s2 + $0xc] sm:$0xf]
        %v231 = vld [vmem:[%s2 + $0x10] sm:$0xf]
        %v232 = vld [vmem:[%s2 + $0x14] sm:$0xf]
        %v233 = vld [vmem:[%s2 + $0x18] sm:$0xf]
        %v234 = vld [vmem:[%s2 + $0x1c] sm:$0xf]
        %v235 = vld [vmem:[%s2 + $0x20] sm:$0xf]
        %v236 = vld [vmem:[%s2 + $0x24] sm:$0xf]
        %v237 = vld [vmem:[%s2 + $0x28] sm:$0xf]
        %v238 = vld [vmem:[%s2 + $0x2c] sm:$0xf]
        %v239 = vld [vmem:[%s2 + $0x30] sm:$0xf]
        %v240 = vld [vmem:[%s2 + $0x34] sm:$0xf]
        %v241 = vld [vmem:[%s2 + $0x38] sm:$0xf]
        %v242 = vld [vmem:[%s2 + $0x3c] sm:$0xf]
        %v243 = vld [vmem:[%s2 + $0x40] sm:$0xf]
        %v244 = vld [vmem:[%s2 + $0x44] sm:$0xf]
        %v245 = vld [vmem:[%s2 + $0x48] sm:$0xf]
        %v246 = vld [vmem:[%s2 + $0x4c] sm:$0xf]
        %v247 = vld [vmem:[%s2 + $0x50] sm:$0xf]
        %v248 = vld [vmem:[%s2 + $0x54] sm:$0xf]
        %v249 = vld [vmem:[%s2 + $0x58] sm:$0xf]
        %v250 = vld [vmem:[%s2 + $0x5c] sm:$0xf]
        %s251 = smul.u32 %s226, 6
        %s252 = smul.addr %s251, 4
        %s253 = scalar_lea.vmem %s207, %s252
        %v254 = vld [vmem:[%s253] sm:$0xff]
        %v255 = vld [vmem:[%s253 + $0x8] sm:$0xff]
        %v256 = vld [vmem:[%s253 + $0x10] sm:$0x11]
        %s257 = scalar_lea.vmem %s2, 96
        %v258 = vld [vmem:[%s257] sm:$0xf]
        %v259 = vld [vmem:[%s257 + $0x4] sm:$0xf]
        %v260 = vld [vmem:[%s257 + $0x8] sm:$0xf]
        %v261 = vld [vmem:[%s257 + $0xc] sm:$0xf]
        %v262 = vld [vmem:[%s257 + $0x10] sm:$0xf]
        %v263 = vld [vmem:[%s257 + $0x14] sm:$0xf]
        %v264 = vld [vmem:[%s257 + $0x18] sm:$0xf]
        %v265 = vld [vmem:[%s257 + $0x1c] sm:$0xf]
        %v266 = vld [vmem:[%s257 + $0x20] sm:$0xf]
        %v267 = vld [vmem:[%s257 + $0x24] sm:$0xf]
        %v268 = vld [vmem:[%s257 + $0x28] sm:$0xf]
        %v269 = vld [vmem:[%s257 + $0x2c] sm:$0xf]
        %v270 = vld [vmem:[%s257 + $0x30] sm:$0xf]
        %v271 = vld [vmem:[%s257 + $0x34] sm:$0xf]
        %v272 = vld [vmem:[%s257 + $0x38] sm:$0xf]
        %v273 = vld [vmem:[%s257 + $0x3c] sm:$0xf]
        %v274 = vld [vmem:[%s257 + $0x40] sm:$0xf]
        %v275 = vld [vmem:[%s257 + $0x44] sm:$0xf]
        %v276 = vld [vmem:[%s257 + $0x48] sm:$0xf]
        %v277 = vld [vmem:[%s257 + $0x4c] sm:$0xf]
        %v278 = vld [vmem:[%s257 + $0x50] sm:$0xf]
        %v279 = vld [vmem:[%s257 + $0x54] sm:$0xf]
        %v280 = vld [vmem:[%s257 + $0x58] sm:$0xf]
        %v281 = vld [vmem:[%s257 + $0x5c] sm:$0xf]
        %s282 = sadd.s32 %s226, 1
        %s283 = smul.u32 %s282, 6
        %s284 = smul.addr %s283, 4
        %s285 = scalar_lea.vmem %s207, %s284
        %v286 = vld [vmem:[%s285] sm:$0xff]
        %v287 = vld [vmem:[%s285 + $0x8] sm:$0xff]
        %v288 = vld [vmem:[%s285 + $0x10] sm:$0x11]
        %v292 = vunpack.c.l.b16 %v286
        %v293 = vunpack.c.h.b16 %v286
        %v294 = vunpack.c.l.b16 %v287
        %v295 = vunpack.c.h.b16 %v287
        %v296 = vunpack.c.l.b16 %v288
        %v297 = vunpack.c.h.b16 %v288
        %v298 = vpack.c.b16 %v294, %v292
        %v299 = vpack.c.b16 %v295, %v293
        %v300 = vpack.c.b16 %v296, %v296
        %v301 = vpack.c.b16 %v297, %v297
        %v328 = vunpack.c.l.b16 %v258
        %v329 = vunpack.c.l.b16 %v259
        %v330 = vunpack.c.l.b16 %v260
        %v331 = vunpack.c.l.b16 %v261
        %v332 = vunpack.c.l.b16 %v262
        %v333 = vunpack.c.l.b16 %v263
        %v334 = vunpack.c.l.b16 %v264
        %v335 = vunpack.c.l.b16 %v265
        %v336 = vunpack.c.l.b16 %v266
        %v337 = vunpack.c.l.b16 %v267
        %v338 = vunpack.c.l.b16 %v268
        %v339 = vunpack.c.l.b16 %v269
        %v340 = vunpack.c.l.b16 %v270
        %v341 = vunpack.c.l.b16 %v271
        %v342 = vunpack.c.l.b16 %v272
        %v343 = vunpack.c.l.b16 %v273
        %v344 = vunpack.c.l.b16 %v274
        %v345 = vunpack.c.l.b16 %v275
        %v346 = vunpack.c.l.b16 %v276
        %v347 = vunpack.c.l.b16 %v277
        %v348 = vunpack.c.l.b16 %v278
        %v349 = vunpack.c.l.b16 %v279
        %v350 = vunpack.c.l.b16 %v280
        %v351 = vunpack.c.l.b16 %v281
        %v352 = vpack.c.b16 %v329, %v328
        %v353 = vpack.c.b16 %v331, %v330
        %v354 = vpack.c.b16 %v333, %v332
        %v355 = vpack.c.b16 %v335, %v334
        %v356 = vpack.c.b16 %v337, %v336
        %v357 = vpack.c.b16 %v339, %v338
        %v358 = vpack.c.b16 %v341, %v340
        %v359 = vpack.c.b16 %v343, %v342
        %v360 = vpack.c.b16 %v345, %v344
        %v361 = vpack.c.b16 %v347, %v346
        %v362 = vpack.c.b16 %v349, %v348
        %v363 = vpack.c.b16 %v351, %v350
        %vm376 = vcmask 523264
        %v378 = vsel %vm376, %v299, 0
        %v381 = vsel %vm376, %v301, 0
        %383 = vmatprep.subr.bf16.mxu0 0
        %384 = vmatpush1.bf16.msra.mxu0 %v359
        %385 = vmatprep.subr.bf16.mxu0 0
        %386 = vmatpush1.bf16.msra.mxu0 %v358
        %387 = vmatprep.subr.bf16.mxu0 0
        %388 = vmatpush1.bf16.msra.mxu0 %v357
        %389 = vmatprep.subr.bf16.mxu0 0
        %390 = vmatpush1.bf16.msra.mxu0 %v356
        %391 = vmatprep.subr.bf16.mxu0 0
        %392 = vmatpush1.bf16.msra.mxu0 %v355
        %393 = vmatprep.subr.bf16.mxu0 0
        %394 = vmatpush1.bf16.msra.mxu0 %v354
        %395 = vmatprep.subr.bf16.mxu0 0
        %396 = vmatpush1.bf16.msra.mxu0 %v353
        %397 = vmatprep.subr.bf16.mxu0 0
        %398 = vmatpush1.bf16.msra.mxu0 %v352
        %399 = vmatprep.subr.bf16.mxu0 0
        %400 = vmatpush2.bf16.msra.mxu0 0
        %401 = vmatprep.subr.bf16.mxu0 0
        %402 = vmatpush2.bf16.msra.mxu0 0
        %403 = vmatprep.subr.bf16.mxu0 0
        %404 = vmatpush2.bf16.msra.mxu0 0
        %405 = vmatprep.subr.bf16.mxu0 0
        %406 = vmatpush2.bf16.msra.mxu0 0
        %407 = vmatprep.subr.bf16.mxu0 0
        %408 = vmatpush2.bf16.msra.mxu0 %v363
        %409 = vmatprep.subr.bf16.mxu0 0
        %410 = vmatpush2.bf16.msra.mxu0 %v362
        %411 = vmatprep.subr.bf16.mxu0 0
        %412 = vmatpush2.bf16.msra.mxu0 %v361
        %413 = vmatprep.subr.bf16.mxu0 0
        %414 = vmatpush2.bf16.msra.mxu0 %v360
        %415 = vmatprep.mubr.bf16.mxu0 %v378
        %416 = vmatmul.mubr.bf16.gmra.mxu0 %v298
        %v417 = vpop.f32.mrf.mxu0
        %v418 = vadd.f32 0.0, %v417
        %v419 = vpop.f32.mrf.mxu0
        %v420 = vpop.f32.mrf.mxu0
        %v421 = vadd.f32 0.0, %v420
        %v422 = vpop.f32.mrf.mxu0
        %423 = vmatprep.mubr.bf16.mxu0 %v381
        %424 = vmatmul.mubr.bf16.gmra.mxu0 %v300
        %v425 = vpop.f32.mrf.mxu0
        %v426 = vadd.f32 0.0, %v425
        %v427 = vpop.f32.mrf.mxu0
        %v428 = vpop.f32.mrf.mxu0
        %v429 = vpop.f32.mrf.mxu0
        %430 = vdwg.mxu0
        %v434 = vunpack.c.l.b16 %v254
        %v435 = vunpack.c.h.b16 %v254
        %v436 = vunpack.c.l.b16 %v255
        %v437 = vunpack.c.h.b16 %v255
        %v438 = vunpack.c.l.b16 %v256
        %v439 = vunpack.c.h.b16 %v256
        %v440 = vpack.c.b16 %v436, %v434
        %v441 = vpack.c.b16 %v437, %v435
        %v442 = vpack.c.b16 %v438, %v438
        %v443 = vpack.c.b16 %v439, %v439
        %v470 = vunpack.c.l.b16 %v227
        %v471 = vunpack.c.l.b16 %v228
        %v472 = vunpack.c.l.b16 %v229
        %v473 = vunpack.c.l.b16 %v230
        %v474 = vunpack.c.l.b16 %v231
        %v475 = vunpack.c.l.b16 %v232
        %v476 = vunpack.c.l.b16 %v233
        %v477 = vunpack.c.l.b16 %v234
        %v478 = vunpack.c.l.b16 %v235
        %v479 = vunpack.c.l.b16 %v236
        %v480 = vunpack.c.l.b16 %v237
        %v481 = vunpack.c.l.b16 %v238
        %v482 = vunpack.c.l.b16 %v239
        %v483 = vunpack.c.l.b16 %v240
        %v484 = vunpack.c.l.b16 %v241
        %v485 = vunpack.c.l.b16 %v242
        %v486 = vunpack.c.l.b16 %v243
        %v487 = vunpack.c.l.b16 %v244
        %v488 = vunpack.c.l.b16 %v245
        %v489 = vunpack.c.l.b16 %v246
        %v490 = vunpack.c.l.b16 %v247
        %v491 = vunpack.c.l.b16 %v248
        %v492 = vunpack.c.l.b16 %v249
        %v493 = vunpack.c.l.b16 %v250
        %v494 = vpack.c.b16 %v471, %v470
        %v495 = vpack.c.b16 %v473, %v472
        %v496 = vpack.c.b16 %v475, %v474
        %v497 = vpack.c.b16 %v477, %v476
        %v498 = vpack.c.b16 %v479, %v478
        %v499 = vpack.c.b16 %v481, %v480
        %v500 = vpack.c.b16 %v483, %v482
        %v501 = vpack.c.b16 %v485, %v484
        %v502 = vpack.c.b16 %v487, %v486
        %v503 = vpack.c.b16 %v489, %v488
        %v504 = vpack.c.b16 %v491, %v490
        %v505 = vpack.c.b16 %v493, %v492
        %v519 = vsel %vm376, %v441, 0
        %v522 = vsel %vm376, %v443, 0
        %524 = vmatprep.subr.bf16.mxu0 0
        %525 = vmatpush1.bf16.msra.mxu0 %v501
        %526 = vmatprep.subr.bf16.mxu0 0
        %527 = vmatpush1.bf16.msra.mxu0 %v500
        %528 = vmatprep.subr.bf16.mxu0 0
        %529 = vmatpush1.bf16.msra.mxu0 %v499
        %530 = vmatprep.subr.bf16.mxu0 0
        %531 = vmatpush1.bf16.msra.mxu0 %v498
        %532 = vmatprep.subr.bf16.mxu0 0
        %533 = vmatpush1.bf16.msra.mxu0 %v497
        %534 = vmatprep.subr.bf16.mxu0 0
        %535 = vmatpush1.bf16.msra.mxu0 %v496
        %536 = vmatprep.subr.bf16.mxu0 0
        %537 = vmatpush1.bf16.msra.mxu0 %v495
        %538 = vmatprep.subr.bf16.mxu0 0
        %539 = vmatpush1.bf16.msra.mxu0 %v494
        %540 = vmatprep.subr.bf16.mxu0 0
        %541 = vmatpush2.bf16.msra.mxu0 0
        %542 = vmatprep.subr.bf16.mxu0 0
        %543 = vmatpush2.bf16.msra.mxu0 0
        %544 = vmatprep.subr.bf16.mxu0 0
        %545 = vmatpush2.bf16.msra.mxu0 0
        %546 = vmatprep.subr.bf16.mxu0 0
        %547 = vmatpush2.bf16.msra.mxu0 0
        %548 = vmatprep.subr.bf16.mxu0 0
        %549 = vmatpush2.bf16.msra.mxu0 %v505
        %550 = vmatprep.subr.bf16.mxu0 0
        %551 = vmatpush2.bf16.msra.mxu0 %v504
        %552 = vmatprep.subr.bf16.mxu0 0
        %553 = vmatpush2.bf16.msra.mxu0 %v503
        %554 = vmatprep.subr.bf16.mxu0 0
        %555 = vmatpush2.bf16.msra.mxu0 %v502
        %556 = vmatprep.mubr.bf16.mxu0 %v519
        %557 = vmatmul.mubr.bf16.gmra.mxu0 %v440
        %v558 = vpop.f32.mrf.mxu0
        %v559 = vadd.f32 %v418, %v558
        %v560 = vpop.f32.mrf.mxu0
        %v561 = vpop.f32.mrf.mxu0
        %v562 = vadd.f32 %v421, %v561
        %v563 = vpop.f32.mrf.mxu0
        %564 = vmatprep.mubr.bf16.mxu0 %v522
        %565 = vmatmul.mubr.bf16.gmra.mxu0 %v442
        %v566 = vpop.f32.mrf.mxu0
        %v567 = vadd.f32 %v426, %v566
        %v568 = vpop.f32.mrf.mxu0
        %v569 = vpop.f32.mrf.mxu0
        %v570 = vpop.f32.mrf.mxu0
        %571 = vdwg.mxu0
        %s572 = scalar_lea.vmem %s2, 192
        %v573 = vld [vmem:[%s572] sm:$0xf]
        %v574 = vld [vmem:[%s572 + $0x4] sm:$0xf]
        %v575 = vld [vmem:[%s572 + $0x8] sm:$0xf]
        %v576 = vld [vmem:[%s572 + $0xc] sm:$0xf]
        %v577 = vld [vmem:[%s572 + $0x10] sm:$0xf]
        %v578 = vld [vmem:[%s572 + $0x14] sm:$0xf]
        %v579 = vld [vmem:[%s572 + $0x18] sm:$0xf]
        %v580 = vld [vmem:[%s572 + $0x1c] sm:$0xf]
        %v581 = vld [vmem:[%s572 + $0x20] sm:$0xf]
        %v582 = vld [vmem:[%s572 + $0x24] sm:$0xf]
        %v583 = vld [vmem:[%s572 + $0x28] sm:$0xf]
        %v584 = vld [vmem:[%s572 + $0x2c] sm:$0xf]
        %v585 = vld [vmem:[%s572 + $0x30] sm:$0xf]
        %v586 = vld [vmem:[%s572 + $0x34] sm:$0xf]
        %v587 = vld [vmem:[%s572 + $0x38] sm:$0xf]
        %v588 = vld [vmem:[%s572 + $0x3c] sm:$0xf]
        %v589 = vld [vmem:[%s572 + $0x40] sm:$0xf]
        %v590 = vld [vmem:[%s572 + $0x44] sm:$0xf]
        %v591 = vld [vmem:[%s572 + $0x48] sm:$0xf]
        %v592 = vld [vmem:[%s572 + $0x4c] sm:$0xf]
        %v593 = vld [vmem:[%s572 + $0x50] sm:$0xf]
        %v594 = vld [vmem:[%s572 + $0x54] sm:$0xf]
        %v595 = vld [vmem:[%s572 + $0x58] sm:$0xf]
        %v596 = vld [vmem:[%s572 + $0x5c] sm:$0xf]
        %s597 = sadd.s32 %s226, 2
        %s598 = smul.u32 %s597, 6
        %s599 = smul.addr %s598, 4
        %s600 = scalar_lea.vmem %s207, %s599
        %v601 = vld [vmem:[%s600] sm:$0xff]
        %v602 = vld [vmem:[%s600 + $0x8] sm:$0xff]
        %v603 = vld [vmem:[%s600 + $0x10] sm:$0x11]
        %v607 = vunpack.c.l.b16 %v601
        %v608 = vunpack.c.h.b16 %v601
        %v609 = vunpack.c.l.b16 %v602
        %v610 = vunpack.c.h.b16 %v602
        %v611 = vunpack.c.l.b16 %v603
        %v612 = vunpack.c.h.b16 %v603
        %v613 = vpack.c.b16 %v609, %v607
        %v614 = vpack.c.b16 %v610, %v608
        %v615 = vpack.c.b16 %v611, %v611
        %v616 = vpack.c.b16 %v612, %v612
        %v643 = vunpack.c.l.b16 %v573
        %v644 = vunpack.c.l.b16 %v574
        %v645 = vunpack.c.l.b16 %v575
        %v646 = vunpack.c.l.b16 %v576
        %v647 = vunpack.c.l.b16 %v577
        %v648 = vunpack.c.l.b16 %v578
        %v649 = vunpack.c.l.b16 %v579
        %v650 = vunpack.c.l.b16 %v580
        %v651 = vunpack.c.l.b16 %v581
        %v652 = vunpack.c.l.b16 %v582
        %v653 = vunpack.c.l.b16 %v583
        %v654 = vunpack.c.l.b16 %v584
        %v655 = vunpack.c.l.b16 %v585
        %v656 = vunpack.c.l.b16 %v586
        %v657 = vunpack.c.l.b16 %v587
        %v658 = vunpack.c.l.b16 %v588
        %v659 = vunpack.c.l.b16 %v589
        %v660 = vunpack.c.l.b16 %v590
        %v661 = vunpack.c.l.b16 %v591
        %v662 = vunpack.c.l.b16 %v592
        %v663 = vunpack.c.l.b16 %v593
        %v664 = vunpack.c.l.b16 %v594
        %v665 = vunpack.c.l.b16 %v595
        %v666 = vunpack.c.l.b16 %v596
        %v667 = vpack.c.b16 %v644, %v643
        %v668 = vpack.c.b16 %v646, %v645
        %v669 = vpack.c.b16 %v648, %v647
        %v670 = vpack.c.b16 %v650, %v649
        %v671 = vpack.c.b16 %v652, %v651
        %v672 = vpack.c.b16 %v654, %v653
        %v673 = vpack.c.b16 %v656, %v655
        %v674 = vpack.c.b16 %v658, %v657
        %v675 = vpack.c.b16 %v660, %v659
        %v676 = vpack.c.b16 %v662, %v661
        %v677 = vpack.c.b16 %v664, %v663
        %v678 = vpack.c.b16 %v666, %v665
        %v692 = vsel %vm376, %v614, 0
        %v695 = vsel %vm376, %v616, 0
        %697 = vmatprep.subr.bf16.mxu0 0
        %698 = vmatpush1.bf16.msra.mxu0 %v674
        %699 = vmatprep.subr.bf16.mxu0 0
        %700 = vmatpush1.bf16.msra.mxu0 %v673
        %701 = vmatprep.subr.bf16.mxu0 0
        %702 = vmatpush1.bf16.msra.mxu0 %v672
        %703 = vmatprep.subr.bf16.mxu0 0
        %704 = vmatpush1.bf16.msra.mxu0 %v671
        %705 = vmatprep.subr.bf16.mxu0 0
        %706 = vmatpush1.bf16.msra.mxu0 %v670
        %707 = vmatprep.subr.bf16.mxu0 0
        %708 = vmatpush1.bf16.msra.mxu0 %v669
        %709 = vmatprep.subr.bf16.mxu0 0
        %710 = vmatpush1.bf16.msra.mxu0 %v668
        %711 = vmatprep.subr.bf16.mxu0 0
        %712 = vmatpush1.bf16.msra.mxu0 %v667
        %713 = vmatprep.subr.bf16.mxu0 0
        %714 = vmatpush2.bf16.msra.mxu0 0
        %715 = vmatprep.subr.bf16.mxu0 0
        %716 = vmatpush2.bf16.msra.mxu0 0
        %717 = vmatprep.subr.bf16.mxu0 0
        %718 = vmatpush2.bf16.msra.mxu0 0
        %719 = vmatprep.subr.bf16.mxu0 0
        %720 = vmatpush2.bf16.msra.mxu0 0
        %721 = vmatprep.subr.bf16.mxu0 0
        %722 = vmatpush2.bf16.msra.mxu0 %v678
        %723 = vmatprep.subr.bf16.mxu0 0
        %724 = vmatpush2.bf16.msra.mxu0 %v677
        %725 = vmatprep.subr.bf16.mxu0 0
        %726 = vmatpush2.bf16.msra.mxu0 %v676
        %727 = vmatprep.subr.bf16.mxu0 0
        %728 = vmatpush2.bf16.msra.mxu0 %v675
        %729 = vmatprep.mubr.bf16.mxu0 %v692
        %730 = vmatmul.mubr.bf16.gmra.mxu0 %v613
        %v731 = vpop.f32.mrf.mxu0
        %v732 = vadd.f32 0.0, %v731
        %v733 = vpop.f32.mrf.mxu0
        %v734 = vpop.f32.mrf.mxu0
        %v735 = vadd.f32 0.0, %v734
        %v736 = vpop.f32.mrf.mxu0
        %737 = vmatprep.mubr.bf16.mxu0 %v695
        %738 = vmatmul.mubr.bf16.gmra.mxu0 %v615
        %v739 = vpop.f32.mrf.mxu0
        %v740 = vadd.f32 0.0, %v739
        %v741 = vpop.f32.mrf.mxu0
        %v742 = vpop.f32.mrf.mxu0
        %v743 = vpop.f32.mrf.mxu0
        %744 = vdwg.mxu0
        %v745 = vadd.f32 %v559, %v732
        %v746 = vadd.f32 %v562, %v735
        %v747 = vadd.f32 %v567, %v740
        %s748 = smul.addr %s251, 4
        %s749 = scalar_lea.vmem %s212, %s748
        %v750 = vld [vmem:[%s749] sm:$0xff]
        %v751 = vld [vmem:[%s749 + $0x8] sm:$0xff]
        %v752 = vld [vmem:[%s749 + $0x10] sm:$0x11]
        %s753 = smul.addr %s283, 4
        %s754 = scalar_lea.vmem %s212, %s753
        %v755 = vld [vmem:[%s754] sm:$0xff]
        %v756 = vld [vmem:[%s754 + $0x8] sm:$0xff]
        %v757 = vld [vmem:[%s754 + $0x10] sm:$0x11]
        %v761 = vunpack.c.l.b16 %v755
        %v762 = vunpack.c.h.b16 %v755
        %v763 = vunpack.c.l.b16 %v756
        %v764 = vunpack.c.h.b16 %v756
        %v765 = vunpack.c.l.b16 %v757
        %v766 = vunpack.c.h.b16 %v757
        %v767 = vpack.c.b16 %v763, %v761
        %v768 = vpack.c.b16 %v764, %v762
        %v769 = vpack.c.b16 %v765, %v765
        %v770 = vpack.c.b16 %v766, %v766
        %v774 = vsel %vm376, %v768, 0
        %v777 = vsel %vm376, %v770, 0
        %779 = vmatprep.subr.bf16.mxu0 0
        %780 = vmatpush1.bf16.msra.mxu0 %v359
        %781 = vmatprep.subr.bf16.mxu0 0
        %782 = vmatpush1.bf16.msra.mxu0 %v358
        %783 = vmatprep.subr.bf16.mxu0 0
        %784 = vmatpush1.bf16.msra.mxu0 %v357
        %785 = vmatprep.subr.bf16.mxu0 0
        %786 = vmatpush1.bf16.msra.mxu0 %v356
        %787 = vmatprep.subr.bf16.mxu0 0
        %788 = vmatpush1.bf16.msra.mxu0 %v355
        %789 = vmatprep.subr.bf16.mxu0 0
        %790 = vmatpush1.bf16.msra.mxu0 %v354
        %791 = vmatprep.subr.bf16.mxu0 0
        %792 = vmatpush1.bf16.msra.mxu0 %v353
        %793 = vmatprep.subr.bf16.mxu0 0
        %794 = vmatpush1.bf16.msra.mxu0 %v352
        %795 = vmatprep.subr.bf16.mxu0 0
        %796 = vmatpush2.bf16.msra.mxu0 0
        %797 = vmatprep.subr.bf16.mxu0 0
        %798 = vmatpush2.bf16.msra.mxu0 0
        %799 = vmatprep.subr.bf16.mxu0 0
        %800 = vmatpush2.bf16.msra.mxu0 0
        %801 = vmatprep.subr.bf16.mxu0 0
        %802 = vmatpush2.bf16.msra.mxu0 0
        %803 = vmatprep.subr.bf16.mxu0 0
        %804 = vmatpush2.bf16.msra.mxu0 %v363
        %805 = vmatprep.subr.bf16.mxu0 0
        %806 = vmatpush2.bf16.msra.mxu0 %v362
        %807 = vmatprep.subr.bf16.mxu0 0
        %808 = vmatpush2.bf16.msra.mxu0 %v361
        %809 = vmatprep.subr.bf16.mxu0 0
        %810 = vmatpush2.bf16.msra.mxu0 %v360
        %811 = vmatprep.mubr.bf16.mxu0 %v774
        %812 = vmatmul.mubr.bf16.gmra.mxu0 %v767
        %v813 = vpop.f32.mrf.mxu0
        %v814 = vadd.f32 0.0, %v813
        %v815 = vpop.f32.mrf.mxu0
        %v816 = vpop.f32.mrf.mxu0
        %v817 = vadd.f32 0.0, %v816
        %v818 = vpop.f32.mrf.mxu0
        %819 = vmatprep.mubr.bf16.mxu0 %v777
        %820 = vmatmul.mubr.bf16.gmra.mxu0 %v769
        %v821 = vpop.f32.mrf.mxu0
        %v822 = vadd.f32 0.0, %v821
        %v823 = vpop.f32.mrf.mxu0
        %v824 = vpop.f32.mrf.mxu0
        %v825 = vpop.f32.mrf.mxu0
        %826 = vdwg.mxu0
        %v830 = vunpack.c.l.b16 %v750
        %v831 = vunpack.c.h.b16 %v750
        %v832 = vunpack.c.l.b16 %v751
        %v833 = vunpack.c.h.b16 %v751
        %v834 = vunpack.c.l.b16 %v752
        %v835 = vunpack.c.h.b16 %v752
        %v836 = vpack.c.b16 %v832, %v830
        %v837 = vpack.c.b16 %v833, %v831
        %v838 = vpack.c.b16 %v834, %v834
        %v839 = vpack.c.b16 %v835, %v835
        %v843 = vsel %vm376, %v837, 0
        %v846 = vsel %vm376, %v839, 0
        %848 = vmatprep.subr.bf16.mxu0 0
        %849 = vmatpush1.bf16.msra.mxu0 %v501
        %850 = vmatprep.subr.bf16.mxu0 0
        %851 = vmatpush1.bf16.msra.mxu0 %v500
        %852 = vmatprep.subr.bf16.mxu0 0
        %853 = vmatpush1.bf16.msra.mxu0 %v499
        %854 = vmatprep.subr.bf16.mxu0 0
        %855 = vmatpush1.bf16.msra.mxu0 %v498
        %856 = vmatprep.subr.bf16.mxu0 0
        %857 = vmatpush1.bf16.msra.mxu0 %v497
        %858 = vmatprep.subr.bf16.mxu0 0
        %859 = vmatpush1.bf16.msra.mxu0 %v496
        %860 = vmatprep.subr.bf16.mxu0 0
        %861 = vmatpush1.bf16.msra.mxu0 %v495
        %862 = vmatprep.subr.bf16.mxu0 0
        %863 = vmatpush1.bf16.msra.mxu0 %v494
        %864 = vmatprep.subr.bf16.mxu0 0
        %865 = vmatpush2.bf16.msra.mxu0 0
        %866 = vmatprep.subr.bf16.mxu0 0
        %867 = vmatpush2.bf16.msra.mxu0 0
        %868 = vmatprep.subr.bf16.mxu0 0
        %869 = vmatpush2.bf16.msra.mxu0 0
        %870 = vmatprep.subr.bf16.mxu0 0
        %871 = vmatpush2.bf16.msra.mxu0 0
        %872 = vmatprep.subr.bf16.mxu0 0
        %873 = vmatpush2.bf16.msra.mxu0 %v505
        %874 = vmatprep.subr.bf16.mxu0 0
        %875 = vmatpush2.bf16.msra.mxu0 %v504
        %876 = vmatprep.subr.bf16.mxu0 0
        %877 = vmatpush2.bf16.msra.mxu0 %v503
        %878 = vmatprep.subr.bf16.mxu0 0
        %879 = vmatpush2.bf16.msra.mxu0 %v502
        %880 = vmatprep.mubr.bf16.mxu0 %v843
        %881 = vmatmul.mubr.bf16.gmra.mxu0 %v836
        %v882 = vpop.f32.mrf.mxu0
        %v883 = vadd.f32 %v814, %v882
        %v884 = vpop.f32.mrf.mxu0
        %v885 = vpop.f32.mrf.mxu0
        %v886 = vadd.f32 %v817, %v885
        %v887 = vpop.f32.mrf.mxu0
        %888 = vmatprep.mubr.bf16.mxu0 %v846
        %889 = vmatmul.mubr.bf16.gmra.mxu0 %v838
        %v890 = vpop.f32.mrf.mxu0
        %v891 = vadd.f32 %v822, %v890
        %v892 = vpop.f32.mrf.mxu0
        %v893 = vpop.f32.mrf.mxu0
        %v894 = vpop.f32.mrf.mxu0
        %895 = vdwg.mxu0
        %s896 = smul.addr %s598, 4
        %s897 = scalar_lea.vmem %s212, %s896
        %v898 = vld [vmem:[%s897] sm:$0xff]
        %v899 = vld [vmem:[%s897 + $0x8] sm:$0xff]
        %v900 = vld [vmem:[%s897 + $0x10] sm:$0x11]
        %v904 = vunpack.c.l.b16 %v898
        %v905 = vunpack.c.h.b16 %v898
        %v906 = vunpack.c.l.b16 %v899
        %v907 = vunpack.c.h.b16 %v899
        %v908 = vunpack.c.l.b16 %v900
        %v909 = vunpack.c.h.b16 %v900
        %v910 = vpack.c.b16 %v906, %v904
        %v911 = vpack.c.b16 %v907, %v905
        %v912 = vpack.c.b16 %v908, %v908
        %v913 = vpack.c.b16 %v909, %v909
        %v917 = vsel %vm376, %v911, 0
        %v920 = vsel %vm376, %v913, 0
        %922 = vmatprep.subr.bf16.mxu0 0
        %923 = vmatpush1.bf16.msra.mxu0 %v674
        %924 = vmatprep.subr.bf16.mxu0 0
        %925 = vmatpush1.bf16.msra.mxu0 %v673
        %926 = vmatprep.subr.bf16.mxu0 0
        %927 = vmatpush1.bf16.msra.mxu0 %v672
        %928 = vmatprep.subr.bf16.mxu0 0
        %929 = vmatpush1.bf16.msra.mxu0 %v671
        %930 = vmatprep.subr.bf16.mxu0 0
        %931 = vmatpush1.bf16.msra.mxu0 %v670
        %932 = vmatprep.subr.bf16.mxu0 0
        %933 = vmatpush1.bf16.msra.mxu0 %v669
        %934 = vmatprep.subr.bf16.mxu0 0
        %935 = vmatpush1.bf16.msra.mxu0 %v668
        %936 = vmatprep.subr.bf16.mxu0 0
        %937 = vmatpush1.bf16.msra.mxu0 %v667
        %938 = vmatprep.subr.bf16.mxu0 0
        %939 = vmatpush2.bf16.msra.mxu0 0
        %940 = vmatprep.subr.bf16.mxu0 0
        %941 = vmatpush2.bf16.msra.mxu0 0
        %942 = vmatprep.subr.bf16.mxu0 0
        %943 = vmatpush2.bf16.msra.mxu0 0
        %944 = vmatprep.subr.bf16.mxu0 0
        %945 = vmatpush2.bf16.msra.mxu0 0
        %946 = vmatprep.subr.bf16.mxu0 0
        %947 = vmatpush2.bf16.msra.mxu0 %v678
        %948 = vmatprep.subr.bf16.mxu0 0
        %949 = vmatpush2.bf16.msra.mxu0 %v677
        %950 = vmatprep.subr.bf16.mxu0 0
        %951 = vmatpush2.bf16.msra.mxu0 %v676
        %952 = vmatprep.subr.bf16.mxu0 0
        %953 = vmatpush2.bf16.msra.mxu0 %v675
        %954 = vmatprep.mubr.bf16.mxu0 %v917
        %955 = vmatmul.mubr.bf16.gmra.mxu0 %v910
        %v956 = vpop.f32.mrf.mxu0
        %v957 = vadd.f32 0.0, %v956
        %v958 = vpop.f32.mrf.mxu0
        %v959 = vpop.f32.mrf.mxu0
        %v960 = vadd.f32 0.0, %v959
        %v961 = vpop.f32.mrf.mxu0
        %962 = vmatprep.mubr.bf16.mxu0 %v920
        %963 = vmatmul.mubr.bf16.gmra.mxu0 %v912
        %v964 = vpop.f32.mrf.mxu0
        %v965 = vadd.f32 0.0, %v964
        %v966 = vpop.f32.mrf.mxu0
        %v967 = vpop.f32.mrf.mxu0
        %v968 = vpop.f32.mrf.mxu0
        %969 = vdwg.mxu0
        %v970 = vadd.f32 %v883, %v957
        %v971 = vadd.f32 %v886, %v960
        %v972 = vadd.f32 %v891, %v965
        %v973 = vmax.f32 %v745, %v970
        %v974 = vmax.f32 %v746, %v971
        %v975 = vmax.f32 %v747, %v972
        %976 = vmatprep.subr.bf16.mxu0 0
        %977 = vmatpush1.bf16.msra.mxu0 %v359
        %978 = vmatprep.subr.bf16.mxu0 0
        %979 = vmatpush1.bf16.msra.mxu0 %v358
        %980 = vmatprep.subr.bf16.mxu0 0
        %981 = vmatpush1.bf16.msra.mxu0 %v357
        %982 = vmatprep.subr.bf16.mxu0 0
        %983 = vmatpush1.bf16.msra.mxu0 %v356
        %984 = vmatprep.subr.bf16.mxu0 0
        %985 = vmatpush1.bf16.msra.mxu0 %v355
        %986 = vmatprep.subr.bf16.mxu0 0
        %987 = vmatpush1.bf16.msra.mxu0 %v354
        %988 = vmatprep.subr.bf16.mxu0 0
        %989 = vmatpush1.bf16.msra.mxu0 %v353
        %990 = vmatprep.subr.bf16.mxu0 0
        %991 = vmatpush1.bf16.msra.mxu0 %v352
        %992 = vmatprep.subr.bf16.mxu0 0
        %993 = vmatpush2.bf16.msra.mxu0 0
        %994 = vmatprep.subr.bf16.mxu0 0
        %995 = vmatpush2.bf16.msra.mxu0 0
        %996 = vmatprep.subr.bf16.mxu0 0
        %997 = vmatpush2.bf16.msra.mxu0 0
        %998 = vmatprep.subr.bf16.mxu0 0
        %999 = vmatpush2.bf16.msra.mxu0 0
        %1000 = vmatprep.subr.bf16.mxu0 0
        %1001 = vmatpush2.bf16.msra.mxu0 %v363
        %1002 = vmatprep.subr.bf16.mxu0 0
        %1003 = vmatpush2.bf16.msra.mxu0 %v362
        %1004 = vmatprep.subr.bf16.mxu0 0
        %1005 = vmatpush2.bf16.msra.mxu0 %v361
        %1006 = vmatprep.subr.bf16.mxu0 0
        %1007 = vmatpush2.bf16.msra.mxu0 %v360
        %1008 = vmatprep.mubr.bf16.mxu0 %v692
        %1009 = vmatmul.mubr.bf16.gmra.mxu0 %v613
        %v1010 = vpop.f32.mrf.mxu0
        %v1011 = vadd.f32 0.0, %v1010
        %v1012 = vpop.f32.mrf.mxu0
        %v1013 = vpop.f32.mrf.mxu0
        %v1014 = vadd.f32 0.0, %v1013
        %v1015 = vpop.f32.mrf.mxu0
        %1016 = vmatprep.mubr.bf16.mxu0 %v695
        %1017 = vmatmul.mubr.bf16.gmra.mxu0 %v615
        %v1018 = vpop.f32.mrf.mxu0
        %v1019 = vadd.f32 0.0, %v1018
        %v1020 = vpop.f32.mrf.mxu0
        %v1021 = vpop.f32.mrf.mxu0
        %v1022 = vpop.f32.mrf.mxu0
        %1023 = vdwg.mxu0
        %1024 = vmatprep.subr.bf16.mxu0 0
        %1025 = vmatpush1.bf16.msra.mxu0 %v501
        %1026 = vmatprep.subr.bf16.mxu0 0
        %1027 = vmatpush1.bf16.msra.mxu0 %v500
        %1028 = vmatprep.subr.bf16.mxu0 0
        %1029 = vmatpush1.bf16.msra.mxu0 %v499
        %1030 = vmatprep.subr.bf16.mxu0 0
        %1031 = vmatpush1.bf16.msra.mxu0 %v498
        %1032 = vmatprep.subr.bf16.mxu0 0
        %1033 = vmatpush1.bf16.msra.mxu0 %v497
        %1034 = vmatprep.subr.bf16.mxu0 0
        %1035 = vmatpush1.bf16.msra.mxu0 %v496
        %1036 = vmatprep.subr.bf16.mxu0 0
        %1037 = vmatpush1.bf16.msra.mxu0 %v495
        %1038 = vmatprep.subr.bf16.mxu0 0
        %1039 = vmatpush1.bf16.msra.mxu0 %v494
        %1040 = vmatprep.subr.bf16.mxu0 0
        %1041 = vmatpush2.bf16.msra.mxu0 0
        %1042 = vmatprep.subr.bf16.mxu0 0
        %1043 = vmatpush2.bf16.msra.mxu0 0
        %1044 = vmatprep.subr.bf16.mxu0 0
        %1045 = vmatpush2.bf16.msra.mxu0 0
        %1046 = vmatprep.subr.bf16.mxu0 0
        %1047 = vmatpush2.bf16.msra.mxu0 0
        %1048 = vmatprep.subr.bf16.mxu0 0
        %1049 = vmatpush2.bf16.msra.mxu0 %v505
        %1050 = vmatprep.subr.bf16.mxu0 0
        %1051 = vmatpush2.bf16.msra.mxu0 %v504
        %1052 = vmatprep.subr.bf16.mxu0 0
        %1053 = vmatpush2.bf16.msra.mxu0 %v503
        %1054 = vmatprep.subr.bf16.mxu0 0
        %1055 = vmatpush2.bf16.msra.mxu0 %v502
        %1056 = vmatprep.mubr.bf16.mxu0 %v378
        %1057 = vmatmul.mubr.bf16.gmra.mxu0 %v298
        %v1058 = vpop.f32.mrf.mxu0
        %v1059 = vadd.f32 %v1011, %v1058
        %v1060 = vpop.f32.mrf.mxu0
        %v1061 = vpop.f32.mrf.mxu0
        %v1062 = vadd.f32 %v1014, %v1061
        %v1063 = vpop.f32.mrf.mxu0
        %1064 = vmatprep.mubr.bf16.mxu0 %v381
        %1065 = vmatmul.mubr.bf16.gmra.mxu0 %v300
        %v1066 = vpop.f32.mrf.mxu0
        %v1067 = vadd.f32 %v1019, %v1066
        %v1068 = vpop.f32.mrf.mxu0
        %v1069 = vpop.f32.mrf.mxu0
        %v1070 = vpop.f32.mrf.mxu0
        %1071 = vdwg.mxu0
        %s1072 = sadd.s32 %s226, 3
        %s1073 = smul.u32 %s1072, 6
        %s1074 = smul.addr %s1073, 4
        %s1075 = scalar_lea.vmem %s207, %s1074
        %v1076 = vld [vmem:[%s1075] sm:$0xff]
        %v1077 = vld [vmem:[%s1075 + $0x8] sm:$0xff]
        %v1078 = vld [vmem:[%s1075 + $0x10] sm:$0x11]
        %v1082 = vunpack.c.l.b16 %v1076
        %v1083 = vunpack.c.h.b16 %v1076
        %v1084 = vunpack.c.l.b16 %v1077
        %v1085 = vunpack.c.h.b16 %v1077
        %v1086 = vunpack.c.l.b16 %v1078
        %v1087 = vunpack.c.h.b16 %v1078
        %v1088 = vpack.c.b16 %v1084, %v1082
        %v1089 = vpack.c.b16 %v1085, %v1083
        %v1090 = vpack.c.b16 %v1086, %v1086
        %v1091 = vpack.c.b16 %v1087, %v1087
        %v1095 = vsel %vm376, %v1089, 0
        %v1098 = vsel %vm376, %v1091, 0
        %1100 = vmatprep.subr.bf16.mxu0 0
        %1101 = vmatpush1.bf16.msra.mxu0 %v674
        %1102 = vmatprep.subr.bf16.mxu0 0
        %1103 = vmatpush1.bf16.msra.mxu0 %v673
        %1104 = vmatprep.subr.bf16.mxu0 0
        %1105 = vmatpush1.bf16.msra.mxu0 %v672
        %1106 = vmatprep.subr.bf16.mxu0 0
        %1107 = vmatpush1.bf16.msra.mxu0 %v671
        %1108 = vmatprep.subr.bf16.mxu0 0
        %1109 = vmatpush1.bf16.msra.mxu0 %v670
        %1110 = vmatprep.subr.bf16.mxu0 0
        %1111 = vmatpush1.bf16.msra.mxu0 %v669
        %1112 = vmatprep.subr.bf16.mxu0 0
        %1113 = vmatpush1.bf16.msra.mxu0 %v668
        %1114 = vmatprep.subr.bf16.mxu0 0
        %1115 = vmatpush1.bf16.msra.mxu0 %v667
        %1116 = vmatprep.subr.bf16.mxu0 0
        %1117 = vmatpush2.bf16.msra.mxu0 0
        %1118 = vmatprep.subr.bf16.mxu0 0
        %1119 = vmatpush2.bf16.msra.mxu0 0
        %1120 = vmatprep.subr.bf16.mxu0 0
        %1121 = vmatpush2.bf16.msra.mxu0 0
        %1122 = vmatprep.subr.bf16.mxu0 0
        %1123 = vmatpush2.bf16.msra.mxu0 0
        %1124 = vmatprep.subr.bf16.mxu0 0
        %1125 = vmatpush2.bf16.msra.mxu0 %v678
        %1126 = vmatprep.subr.bf16.mxu0 0
        %1127 = vmatpush2.bf16.msra.mxu0 %v677
        %1128 = vmatprep.subr.bf16.mxu0 0
        %1129 = vmatpush2.bf16.msra.mxu0 %v676
        %1130 = vmatprep.subr.bf16.mxu0 0
        %1131 = vmatpush2.bf16.msra.mxu0 %v675
        %1132 = vmatprep.mubr.bf16.mxu0 %v1095
        %1133 = vmatmul.mubr.bf16.gmra.mxu0 %v1088
        %v1134 = vpop.f32.mrf.mxu0
        %v1135 = vadd.f32 0.0, %v1134
        %v1136 = vpop.f32.mrf.mxu0
        %v1137 = vpop.f32.mrf.mxu0
        %v1138 = vadd.f32 0.0, %v1137
        %v1139 = vpop.f32.mrf.mxu0
        %1140 = vmatprep.mubr.bf16.mxu0 %v1098
        %1141 = vmatmul.mubr.bf16.gmra.mxu0 %v1090
        %v1142 = vpop.f32.mrf.mxu0
        %v1143 = vadd.f32 0.0, %v1142
        %v1144 = vpop.f32.mrf.mxu0
        %v1145 = vpop.f32.mrf.mxu0
        %v1146 = vpop.f32.mrf.mxu0
        %1147 = vdwg.mxu0
        %v1148 = vadd.f32 %v1059, %v1135
        %v1149 = vadd.f32 %v1062, %v1138
        %v1150 = vadd.f32 %v1067, %v1143
        %v1151 = vmax.f32 %v973, %v1148
        %v1152 = vmax.f32 %v974, %v1149
        %v1153 = vmax.f32 %v975, %v1150
        %1154 = vmatprep.subr.bf16.mxu0 0
        %1155 = vmatpush1.bf16.msra.mxu0 %v359
        %1156 = vmatprep.subr.bf16.mxu0 0
        %1157 = vmatpush1.bf16.msra.mxu0 %v358
        %1158 = vmatprep.subr.bf16.mxu0 0
        %1159 = vmatpush1.bf16.msra.mxu0 %v357
        %1160 = vmatprep.subr.bf16.mxu0 0
        %1161 = vmatpush1.bf16.msra.mxu0 %v356
        %1162 = vmatprep.subr.bf16.mxu0 0
        %1163 = vmatpush1.bf16.msra.mxu0 %v355
        %1164 = vmatprep.subr.bf16.mxu0 0
        %1165 = vmatpush1.bf16.msra.mxu0 %v354
        %1166 = vmatprep.subr.bf16.mxu0 0
        %1167 = vmatpush1.bf16.msra.mxu0 %v353
        %1168 = vmatprep.subr.bf16.mxu0 0
        %1169 = vmatpush1.bf16.msra.mxu0 %v352
        %1170 = vmatprep.subr.bf16.mxu0 0
        %1171 = vmatpush2.bf16.msra.mxu0 0
        %1172 = vmatprep.subr.bf16.mxu0 0
        %1173 = vmatpush2.bf16.msra.mxu0 0
        %1174 = vmatprep.subr.bf16.mxu0 0
        %1175 = vmatpush2.bf16.msra.mxu0 0
        %1176 = vmatprep.subr.bf16.mxu0 0
        %1177 = vmatpush2.bf16.msra.mxu0 0
        %1178 = vmatprep.subr.bf16.mxu0 0
        %1179 = vmatpush2.bf16.msra.mxu0 %v363
        %1180 = vmatprep.subr.bf16.mxu0 0
        %1181 = vmatpush2.bf16.msra.mxu0 %v362
        %1182 = vmatprep.subr.bf16.mxu0 0
        %1183 = vmatpush2.bf16.msra.mxu0 %v361
        %1184 = vmatprep.subr.bf16.mxu0 0
        %1185 = vmatpush2.bf16.msra.mxu0 %v360
        %1186 = vmatprep.mubr.bf16.mxu0 %v917
        %1187 = vmatmul.mubr.bf16.gmra.mxu0 %v910
        %v1188 = vpop.f32.mrf.mxu0
        %v1189 = vadd.f32 0.0, %v1188
        %v1190 = vpop.f32.mrf.mxu0
        %v1191 = vpop.f32.mrf.mxu0
        %v1192 = vadd.f32 0.0, %v1191
        %v1193 = vpop.f32.mrf.mxu0
        %1194 = vmatprep.mubr.bf16.mxu0 %v920
        %1195 = vmatmul.mubr.bf16.gmra.mxu0 %v912
        %v1196 = vpop.f32.mrf.mxu0
        %v1197 = vadd.f32 0.0, %v1196
        %v1198 = vpop.f32.mrf.mxu0
        %v1199 = vpop.f32.mrf.mxu0
        %v1200 = vpop.f32.mrf.mxu0
        %1201 = vdwg.mxu0
        %1202 = vmatprep.subr.bf16.mxu0 0
        %1203 = vmatpush1.bf16.msra.mxu0 %v501
        %1204 = vmatprep.subr.bf16.mxu0 0
        %1205 = vmatpush1.bf16.msra.mxu0 %v500
        %1206 = vmatprep.subr.bf16.mxu0 0
        %1207 = vmatpush1.bf16.msra.mxu0 %v499
        %1208 = vmatprep.subr.bf16.mxu0 0
        %1209 = vmatpush1.bf16.msra.mxu0 %v498
        %1210 = vmatprep.subr.bf16.mxu0 0
        %1211 = vmatpush1.bf16.msra.mxu0 %v497
        %1212 = vmatprep.subr.bf16.mxu0 0
        %1213 = vmatpush1.bf16.msra.mxu0 %v496
        %1214 = vmatprep.subr.bf16.mxu0 0
        %1215 = vmatpush1.bf16.msra.mxu0 %v495
        %1216 = vmatprep.subr.bf16.mxu0 0
        %1217 = vmatpush1.bf16.msra.mxu0 %v494
        %1218 = vmatprep.subr.bf16.mxu0 0
        %1219 = vmatpush2.bf16.msra.mxu0 0
        %1220 = vmatprep.subr.bf16.mxu0 0
        %1221 = vmatpush2.bf16.msra.mxu0 0
        %1222 = vmatprep.subr.bf16.mxu0 0
        %1223 = vmatpush2.bf16.msra.mxu0 0
        %1224 = vmatprep.subr.bf16.mxu0 0
        %1225 = vmatpush2.bf16.msra.mxu0 0
        %1226 = vmatprep.subr.bf16.mxu0 0
        %1227 = vmatpush2.bf16.msra.mxu0 %v505
        %1228 = vmatprep.subr.bf16.mxu0 0
        %1229 = vmatpush2.bf16.msra.mxu0 %v504
        %1230 = vmatprep.subr.bf16.mxu0 0
        %1231 = vmatpush2.bf16.msra.mxu0 %v503
        %1232 = vmatprep.subr.bf16.mxu0 0
        %1233 = vmatpush2.bf16.msra.mxu0 %v502
        %1234 = vmatprep.mubr.bf16.mxu0 %v774
        %1235 = vmatmul.mubr.bf16.gmra.mxu0 %v767
        %v1236 = vpop.f32.mrf.mxu0
        %v1237 = vadd.f32 %v1189, %v1236
        %v1238 = vpop.f32.mrf.mxu0
        %v1239 = vpop.f32.mrf.mxu0
        %v1240 = vadd.f32 %v1192, %v1239
        %v1241 = vpop.f32.mrf.mxu0
        %1242 = vmatprep.mubr.bf16.mxu0 %v777
        %1243 = vmatmul.mubr.bf16.gmra.mxu0 %v769
        %v1244 = vpop.f32.mrf.mxu0
        %v1245 = vadd.f32 %v1197, %v1244
        %v1246 = vpop.f32.mrf.mxu0
        %v1247 = vpop.f32.mrf.mxu0
        %v1248 = vpop.f32.mrf.mxu0
        %1249 = vdwg.mxu0
        %s1250 = smul.addr %s1073, 4
        %s1251 = scalar_lea.vmem %s212, %s1250
        %v1252 = vld [vmem:[%s1251] sm:$0xff]
        %v1253 = vld [vmem:[%s1251 + $0x8] sm:$0xff]
        %v1254 = vld [vmem:[%s1251 + $0x10] sm:$0x11]
        %v1258 = vunpack.c.l.b16 %v1252
        %v1259 = vunpack.c.h.b16 %v1252
        %v1260 = vunpack.c.l.b16 %v1253
        %v1261 = vunpack.c.h.b16 %v1253
        %v1262 = vunpack.c.l.b16 %v1254
        %v1263 = vunpack.c.h.b16 %v1254
        %v1264 = vpack.c.b16 %v1260, %v1258
        %v1265 = vpack.c.b16 %v1261, %v1259
        %v1266 = vpack.c.b16 %v1262, %v1262
        %v1267 = vpack.c.b16 %v1263, %v1263
        %v1271 = vsel %vm376, %v1265, 0
        %v1274 = vsel %vm376, %v1267, 0
        %1276 = vmatprep.subr.bf16.mxu0 0
        %1277 = vmatpush1.bf16.msra.mxu0 %v674
        %1278 = vmatprep.subr.bf16.mxu0 0
        %1279 = vmatpush1.bf16.msra.mxu0 %v673
        %1280 = vmatprep.subr.bf16.mxu0 0
        %1281 = vmatpush1.bf16.msra.mxu0 %v672
        %1282 = vmatprep.subr.bf16.mxu0 0
        %1283 = vmatpush1.bf16.msra.mxu0 %v671
        %1284 = vmatprep.subr.bf16.mxu0 0
        %1285 = vmatpush1.bf16.msra.mxu0 %v670
        %1286 = vmatprep.subr.bf16.mxu0 0
        %1287 = vmatpush1.bf16.msra.mxu0 %v669
        %1288 = vmatprep.subr.bf16.mxu0 0
        %1289 = vmatpush1.bf16.msra.mxu0 %v668
        %1290 = vmatprep.subr.bf16.mxu0 0
        %1291 = vmatpush1.bf16.msra.mxu0 %v667
        %1292 = vmatprep.subr.bf16.mxu0 0
        %1293 = vmatpush2.bf16.msra.mxu0 0
        %1294 = vmatprep.subr.bf16.mxu0 0
        %1295 = vmatpush2.bf16.msra.mxu0 0
        %1296 = vmatprep.subr.bf16.mxu0 0
        %1297 = vmatpush2.bf16.msra.mxu0 0
        %1298 = vmatprep.subr.bf16.mxu0 0
        %1299 = vmatpush2.bf16.msra.mxu0 0
        %1300 = vmatprep.subr.bf16.mxu0 0
        %1301 = vmatpush2.bf16.msra.mxu0 %v678
        %1302 = vmatprep.subr.bf16.mxu0 0
        %1303 = vmatpush2.bf16.msra.mxu0 %v677
        %1304 = vmatprep.subr.bf16.mxu0 0
        %1305 = vmatpush2.bf16.msra.mxu0 %v676
        %1306 = vmatprep.subr.bf16.mxu0 0
        %1307 = vmatpush2.bf16.msra.mxu0 %v675
        %1308 = vmatprep.mubr.bf16.mxu0 %v1271
        %1309 = vmatmul.mubr.bf16.gmra.mxu0 %v1264
        %v1310 = vpop.f32.mrf.mxu0
        %v1311 = vadd.f32 0.0, %v1310
        %v1312 = vpop.f32.mrf.mxu0
        %v1313 = vpop.f32.mrf.mxu0
        %v1314 = vadd.f32 0.0, %v1313
        %v1315 = vpop.f32.mrf.mxu0
        %1316 = vmatprep.mubr.bf16.mxu0 %v1274
        %1317 = vmatmul.mubr.bf16.gmra.mxu0 %v1266
        %v1318 = vpop.f32.mrf.mxu0
        %v1319 = vadd.f32 0.0, %v1318
        %v1320 = vpop.f32.mrf.mxu0
        %v1321 = vpop.f32.mrf.mxu0
        %v1322 = vpop.f32.mrf.mxu0
        %1323 = vdwg.mxu0
        %v1324 = vadd.f32 %v1237, %v1311
        %v1325 = vadd.f32 %v1240, %v1314
        %v1326 = vadd.f32 %v1245, %v1319
        %v1327 = vmax.f32 %v1151, %v1324
        %v1328 = vmax.f32 %v1152, %v1325
        %v1329 = vmax.f32 %v1153, %v1326
        %v1331 = vlaneseq
        %v1332 = vshrl.u32 %v1331, 7
        %v1333 = vsub.s32 0, %v1332
        %v1334 = vrot.slane %v219, %v1333
        %v1336 = vadd.f32 %v1327, %v1334
        %v1337 = vadd.f32 %v1328, %v1334
        %v1338 = vadd.f32 %v1329, %v1334
        %v1339 = vmax.f32 %v1336, 0.0
        %v1340 = vmax.f32 %v1337, 0.0
        %v1341 = vmax.f32 %v1338, 0.0
        %s1342 = smul.u32 %s221, 24
        %s1343 = scalar_lea.vmem %s217, %s1342
        %1344 = vst.msk [vmem:[%s1343] sm:$0xff] %vm376, %v1339
        %1345 = vst.msk [vmem:[%s1343 + $0x8] sm:$0xff] %vm376, %v1340
        %vm1346 = vcmask 516096
        %1347 = vst.msk [vmem:[%s1343 + $0x10] sm:$0x1] %vm1346, %v1341
      $region41: #{petnet_forward.6} parent=35 // loop_footer
        %s225 = sadd.s32 1, %s221
      $region42: #{petnet_forward.6} parent=35 // loop_footer_branch
        %220 = sbr.rel target = $region38
      $region43: #{petnet_forward.6} parent=35 // loop_exit
        _
      %p1348 = scmp.lt.s32.totalorder %s15, 1
      %s1349 = scalar_select %p1348, %s15, 1
      %s1350 = smul.addr %s1349, 51
      %s1351 = smul.addr %s1350, 8
      %s1352 = scalar_lea.vmem %s4, %s1351
      // Predicated region
      $region44: #{petnet_forward.6} parent=35 // pred_check
        %p1353 = pneg %p127
      $region45: #{petnet_forward.6} parent=35 // pred_check_branch
        %1355 = sbr.rel (%p1353) target = $region47
      $region46: #{petnet_forward.6} parent=35 // pred_region
        _
      $region47: #{petnet_forward.6} parent=35 // pred_fallthru
        _
    $region36: #{petnet_forward.6} parent=5 // pred_fallthru
      _
    %p1356 = scmp.le.s32.totalorder 2, %s10
    // Predicated region
    $region48: #{petnet_forward.6} parent=5 // pred_check
      %p1357 = pneg %p1356
    $region49: #{petnet_forward.6} parent=5 // pred_check_branch
      %1359 = sbr.rel (%p1357) target = $region51
    $region50: #{petnet_forward.6} parent=5 // pred_region
      %s1360 = ssub.s32 %s10, 2
      // Predicated region
      $region52: #{petnet_forward.6} parent=50 // pred_check
        %p1361 = pneg %p133
      $region53: #{petnet_forward.6} parent=50 // pred_check_branch
        %1363 = sbr.rel (%p1361) target = $region55
      $region54: #{petnet_forward.6} parent=50 // pred_region
        %p1364 = scmp.lt.s32.totalorder %s16, 1
        %s1365 = scalar_select %p1364, %s16, 1
        %s1366 = smul.addr %s1365, 51
        %s1367 = smul.addr %s1366, 8
        %s1368 = scalar_lea.vmem %s4, %s1367
      $region55: #{petnet_forward.6} parent=50 // pred_fallthru
        _
    $region51: #{petnet_forward.6} parent=5 // pred_fallthru
      _
  $region6: #{petnet_forward.6} parent=0 // loop_footer
    %s14 = sadd.s32 1, %s10
  $region7: #{petnet_forward.6} parent=0 // loop_footer_branch
    %9 = sbr.rel target = $region3
  $region8: #{petnet_forward.6} parent=0 // loop_exit
    _

// kernel: petnet_forward.7
$region0: #{petnet_forward.7}
  #allocation0 [shape = 'u32[]', space=smem, size = 0x4, offset = 0x4, fixed_abs, tag = 'smem constant byte address 0x4 - core index']
  #allocation1 [shape = 'u32[144,128]{1,0:T(1,128)}', space=vmem, size = 0x12000, scoped, tag = 'internal scratch']
  #allocation2 [shape = 'f32[2,32]{1,0:T(2,128)}', space=vmem, size = 0x400, scoped, tag = 'scratch operand']
  %s0 = inlined_call_operand.vmem [shape: bf16[2,18560], index: 0, kind: input, shape index: {}]
  %s1 = inlined_call_operand.vmem [shape: bf16[18560,32], index: 1, kind: input, shape index: {}]
  %s2 = inlined_call_operand.vmem [shape: f32[1,32], index: 2, kind: input, shape index: {}]
  %s3 = inlined_call_operand.vmem [shape: bf16[32,2], index: 3, kind: input, shape index: {}]
  %s4 = inlined_call_operand.vmem [shape: f32[1,2], index: 4, kind: input, shape index: {}]
  %s5 = inlined_call_operand.hbm [shape: f32[2,2], index: 5, kind: output, shape index: {}]
  %s6 = sld [smem:[#allocation0]]
  $region61: #{petnet_forward.7} parent=0
    _
  %s8 = ssub.s32 1, %s6
  %s9 = scalar_select 0, %s8, %s6
  $region1: #{petnet_forward.7} parent=0
    #allocation3 [shape = 'u8[1024]{0}', space=vmem, size = 0x400, scoped, tag = 'output window, operand 0, single buffered']
    #allocation4 [shape = 's32[2]{0}', space=sflag, size = 0x8, scoped, tag = 'scoped memory for petnet_forward.7']
    %10 = vsyncpa [#allocation4], 0
    loop: start=0, step=1, limit=7
    $region2: #{petnet_forward.7} parent=1 // loop_pre_header
      _
    $region3: #{petnet_forward.7} parent=1 // loop_header
      %s12 = sphi 0, %s16
      %p13 = scmp.ge.s32.totalorder %s12, 7
      %s22 = sphi 0, %s24
      %s25 = sphi 0, %s22
      %s26 = sphi 0, %s25
      %s42 = sphi 0, %s26
      %s48 = sphi 0, %s50
      %s51 = sphi 0, %s48
      %s52 = sphi 0, %s51
      %s68 = sphi 0, %s52
      %s72 = sphi 0, %s72
      %s74 = sphi 0, %s72
      %s75 = sphi 0, %s74
      %s89 = sphi 0, %s75
      %s93 = sphi 0, %s93
      %s95 = sphi 0, %s93
      %s96 = sphi 0, %s95
      %s110 = sphi 0, %s96
      %s114 = sphi 0, %s114
      %s116 = sphi 0, %s114
      %s117 = sphi 0, %s116
      %s131 = sphi 0, %s117
      %s135 = sphi 0, %s135
      %s137 = sphi 0, %s135
      %s138 = sphi 0, %s137
      %s152 = sphi 0, %s138
    $region4: #{petnet_forward.7} parent=1 // loop_header_branch
      %15 = sbr.rel (%p13) target = $region8
    $region5: #{petnet_forward.7} parent=1 // loop_body
      %s17 = ssub.s32 %s12, 1
      %s18 = ssub.s32 %s12, 2
      %s19 = sadd.s32 %s12, 1
      %s20 = ssub.s32 %s12, %s19
      %p21 = scmp.eq.s32.totalorder %s20, 0
      %s23 = sadd.s32 %s22, 1
      %s24 = scalar_select %p21, %s22, %s23
      %p27 = pneg %p21
      %p28 = scmp.eq.s32.totalorder %s12, 4
      %p29 = por %p27, %p28
      %p30 = scmp.ne.s32.totalorder %s22, %s25
      %p31 = scmp.eq.s32.totalorder %s12, 0
      %p32 = por %p30, %p31
      %p33 = scmp.ne.s32.totalorder %s22, %s25
      %p34 = scmp.eq.s32.totalorder %s17, 4
      %p35 = por %p33, %p34
      %p36 = scmp.ne.s32.totalorder %s25, %s26
      %p37 = scmp.eq.s32.totalorder %s17, 0
      %p38 = por %p36, %p37
      %p39 = scmp.ne.s32.totalorder %s25, %s26
      %p40 = scmp.eq.s32.totalorder %s18, 4
      %p41 = por %p39, %p40
      %p43 = scmp.ne.s32.totalorder %s26, %s42
      %p44 = scmp.eq.s32.totalorder %s18, 0
      %p45 = por %p43, %p44
      %s46 = ssub.s32 %s12, %s19
      %p47 = scmp.eq.s32.totalorder %s46, 0
      %s49 = sadd.s32 %s48, 1
      %s50 = scalar_select %p47, %s48, %s49
      %p53 = pneg %p47
      %p54 = scmp.eq.s32.totalorder %s12, 4
      %p55 = por %p53, %p54
      %p56 = scmp.ne.s32.totalorder %s48, %s51
      %p57 = scmp.eq.s32.totalorder %s12, 0
      %p58 = por %p56, %p57
      %p59 = scmp.ne.s32.totalorder %s48, %s51
      %p60 = scmp.eq.s32.totalorder %s17, 4
      %p61 = por %p59, %p60
      %p62 = scmp.ne.s32.totalorder %s51, %s52
      %p63 = scmp.eq.s32.totalorder %s17, 0
      %p64 = por %p62, %p63
      %p65 = scmp.ne.s32.totalorder %s51, %s52
      %p66 = scmp.eq.s32.totalorder %s18, 4
      %p67 = por %p65, %p66
      %p69 = scmp.ne.s32.totalorder %s52, %s68
      %p70 = scmp.eq.s32.totalorder %s18, 0
      %p71 = por %p69, %p70
      %s73 = sadd.s32 %s72, 1
      %p76 = scmp.eq.s32.totalorder %s12, 4
      %p77 = scmp.ne.s32.totalorder %s72, %s74
      %p78 = scmp.eq.s32.totalorder %s12, 0
      %p79 = por %p77, %p78
      %p80 = scmp.ne.s32.totalorder %s72, %s74
      %p81 = scmp.eq.s32.totalorder %s17, 4
      %p82 = por %p80, %p81
      %p83 = scmp.ne.s32.totalorder %s74, %s75
      %p84 = scmp.eq.s32.totalorder %s17, 0
      %p85 = por %p83, %p84
      %p86 = scmp.ne.s32.totalorder %s74, %s75
      %p87 = scmp.eq.s32.totalorder %s18, 4
      %p88 = por %p86, %p87
      %p90 = scmp.ne.s32.totalorder %s75, %s89
      %p91 = scmp.eq.s32.totalorder %s18, 0
      %p92 = por %p90, %p91
      %s94 = sadd.s32 %s93, 1
      %p97 = scmp.eq.s32.totalorder %s12, 4
      %p98 = scmp.ne.s32.totalorder %s93, %s95
      %p99 = scmp.eq.s32.totalorder %s12, 0
      %p100 = por %p98, %p99
      %p101 = scmp.ne.s32.totalorder %s93, %s95
      %p102 = scmp.eq.s32.totalorder %s17, 4
      %p103 = por %p101, %p102
      %p104 = scmp.ne.s32.totalorder %s95, %s96
      %p105 = scmp.eq.s32.totalorder %s17, 0
      %p106 = por %p104, %p105
      %p107 = scmp.ne.s32.totalorder %s95, %s96
      %p108 = scmp.eq.s32.totalorder %s18, 4
      %p109 = por %p107, %p108
      %p111 = scmp.ne.s32.totalorder %s96, %s110
      %p112 = scmp.eq.s32.totalorder %s18, 0
      %p113 = por %p111, %p112
      %s115 = sadd.s32 %s114, 1
      %p118 = scmp.eq.s32.totalorder %s12, 4
      %p119 = scmp.ne.s32.totalorder %s114, %s116
      %p120 = scmp.eq.s32.totalorder %s12, 0
      %p121 = por %p119, %p120
      %p122 = scmp.ne.s32.totalorder %s114, %s116
      %p123 = scmp.eq.s32.totalorder %s17, 4
      %p124 = por %p122, %p123
      %p125 = scmp.ne.s32.totalorder %s116, %s117
      %p126 = scmp.eq.s32.totalorder %s17, 0
      %p127 = por %p125, %p126
      %p128 = scmp.ne.s32.totalorder %s116, %s117
      %p129 = scmp.eq.s32.totalorder %s18, 4
      %p130 = por %p128, %p129
      %p132 = scmp.ne.s32.totalorder %s117, %s131
      %p133 = scmp.eq.s32.totalorder %s18, 0
      %p134 = por %p132, %p133
      %s136 = sadd.s32 %s135, 1
      %p139 = scmp.eq.s32.totalorder %s12, 4
      %p140 = scmp.ne.s32.totalorder %s135, %s137
      %p141 = scmp.eq.s32.totalorder %s12, 0
      %p142 = por %p140, %p141
      %p143 = scmp.ne.s32.totalorder %s135, %s137
      %p144 = scmp.eq.s32.totalorder %s17, 4
      %p145 = por %p143, %p144
      %p146 = scmp.ne.s32.totalorder %s137, %s138
      %p147 = scmp.eq.s32.totalorder %s17, 0
      %p148 = por %p146, %p147
      %p149 = scmp.ne.s32.totalorder %s137, %s138
      %p150 = scmp.eq.s32.totalorder %s18, 4
      %p151 = por %p149, %p150
      %p153 = scmp.ne.s32.totalorder %s138, %s152
      %p154 = scmp.eq.s32.totalorder %s18, 0
      %p155 = por %p153, %p154
      %p156 = scmp.le.s32.totalorder 1, %s12
      %p157 = scmp.lt.s32.totalorder %s12, 6
      %p158 = pnand %p156, %p157
      %p159 = pneg %p158
      // Predicated region
      $region9: #{petnet_forward.7} parent=5 // pred_check
        _
      $region10: #{petnet_forward.7} parent=5 // pred_check_branch
        %161 = sbr.rel (%p158) target = $region12
      $region11: #{petnet_forward.7} parent=5 // pred_region
        %s162 = ssub.s32 %s12, 1
        // Predicated region
        $region13: #{petnet_forward.7} parent=11 // pred_check
          %p163 = pneg %p85
        $region14: #{petnet_forward.7} parent=11 // pred_check_branch
          %165 = sbr.rel (%p163) target = $region16
        $region15: #{petnet_forward.7} parent=11 // pred_region
          _
        $region16: #{petnet_forward.7} parent=11 // pred_fallthru
          _
        // Predicated region
        $region17: #{petnet_forward.7} parent=11 // pred_check
          %p166 = pneg %p106
        $region18: #{petnet_forward.7} parent=11 // pred_check_branch
          %168 = sbr.rel (%p166) target = $region20
        $region19: #{petnet_forward.7} parent=11 // pred_region
          _
        $region20: #{petnet_forward.7} parent=11 // pred_fallthru
          _
        // Predicated region
        $region21: #{petnet_forward.7} parent=11 // pred_check
          %p169 = pneg %p127
        $region22: #{petnet_forward.7} parent=11 // pred_check_branch
          %171 = sbr.rel (%p169) target = $region24
        $region23: #{petnet_forward.7} parent=11 // pred_region
          _
        $region24: #{petnet_forward.7} parent=11 // pred_fallthru
          _
      $region12: #{petnet_forward.7} parent=5 // pred_fallthru
        _
      %p172 = scmp.lt.s32.totalorder %s12, 5
      // Predicated region
      $region25: #{petnet_forward.7} parent=5 // pred_check
        %p173 = pneg %p172
      $region26: #{petnet_forward.7} parent=5 // pred_check_branch
        %175 = sbr.rel (%p173) target = $region28
      $region27: #{petnet_forward.7} parent=5 // pred_region
        // Predicated region
        $region29: #{petnet_forward.7} parent=27 // pred_check
          %p176 = pneg %p32
        $region30: #{petnet_forward.7} parent=27 // pred_check_branch
          %178 = sbr.rel (%p176) target = $region32
        $region31: #{petnet_forward.7} parent=27 // pred_region
          %s179 = smul.u32 29, %s12
          %p180 = scmp.lt.s32.totalorder %s179, 144
          %s181 = scalar_select %p180, %s179, 144
          %s182 = scalar_lea.vmem %s0, %s181
          %s183 = smul.u32 29, %s12
        $region32: #{petnet_forward.7} parent=27 // pred_fallthru
          _
        // Predicated region
        $region33: #{petnet_forward.7} parent=27 // pred_check
          %p184 = pneg %p58
        $region34: #{petnet_forward.7} parent=27 // pred_check_branch
          %186 = sbr.rel (%p184) target = $region36
        $region35: #{petnet_forward.7} parent=27 // pred_region
          %s187 = smul.u32 464, %s12
          %p188 = scmp.lt.s32.totalorder %s187, 2319
          %s189 = scalar_select %p188, %s187, 2319
          %s190 = smul.addr %s189, 4
          %s191 = scalar_lea.vmem %s1, %s190
          %s192 = smul.u32 464, %s12
        $region36: #{petnet_forward.7} parent=27 // pred_fallthru
          _
      $region28: #{petnet_forward.7} parent=5 // pred_fallthru
        _
      %p193 = scmp.le.s32.totalorder 1, %s12
      %p194 = scmp.lt.s32.totalorder %s12, 6
      %p195 = pnand %p193, %p194
      %p196 = pneg %p195
      // Predicated region
      $region37: #{petnet_forward.7} parent=5 // pred_check
        _
      $region38: #{petnet_forward.7} parent=5 // pred_check_branch
        %198 = sbr.rel (%p195) target = $region40
      $region39: #{petnet_forward.7} parent=5 // pred_region
        %s199 = ssub.s32 %s12, 1
        %s200 = smul.u32 29, %s17
        %p201 = scmp.lt.s32.totalorder %s200, 144
        %s202 = scalar_select %p201, %s200, 144
        %s203 = scalar_lea.vmem %s0, %s202
        %p204 = pneg %p38
        %p205 = pneg %p35
        %s206 = smul.u32 464, %s17
        %p207 = scmp.lt.s32.totalorder %s206, 2319
        %s208 = scalar_select %p207, %s206, 2319
        %s209 = smul.addr %s208, 4
        %s210 = scalar_lea.vmem %s1, %s209
        %p211 = pneg %p64
        %p212 = pneg %p61
        %p213 = pneg %p85
        %p214 = pneg %p82
        %p215 = pneg %p106
        %p216 = pneg %p103
        %p217 = pneg %p127
        %p218 = pneg %p124
        %p219 = pneg %p148
        %p220 = pneg %p145
        %s221 = smul.u32 29, %s17
        %p222 = scmp.lt.s32.totalorder %s221, 144
        %s223 = scalar_select %p222, %s221, 144
        %s224 = scalar_lea.vmem %s0, %s223
        %s225 = smul.u32 29, %s17
        %s226 = smul.u32 464, %s17
        %p227 = scmp.lt.s32.totalorder %s226, 2319
        %s228 = scalar_select %p227, %s226, 2319
        %s229 = smul.addr %s228, 4
        %s230 = scalar_lea.vmem %s1, %s229
        %s231 = smul.u32 464, %s17
        %p233 = scmp.eq.s32.totalorder %s17, 0
        // Predicated region
        $region41: #{petnet_forward.7} parent=39 // pred_check
          %p234 = pneg %p233
        $region42: #{petnet_forward.7} parent=39 // pred_check_branch
          %236 = sbr.rel (%p234) target = $region44
        $region43: #{petnet_forward.7} parent=39 // pred_region
          %vm237 = vcmask 254976
          %238 = vst.msk [vmem:[#allocation2] sm:$0x3] %vm237, 0.0
        $region44: #{petnet_forward.7} parent=39 // pred_fallthru
          _
        %v239 = vld [vmem:[#allocation2] sm:$0x3]
        %v240 = vld [vmem:[%s224] sm:$0xff]
        %v241 = vld [vmem:[%s224 + $0x8] sm:$0xff]
        %v242 = vld [vmem:[%s224 + $0x10] sm:$0xff]
        %v243 = vld [vmem:[%s224 + $0x18] sm:$0x1f]
        %v244 = vld [vmem:[%s230] sm:$0xf]
        %v245 = vld [vmem:[%s230 + $0x4] sm:$0xf]
        %v246 = vld [vmem:[%s230 + $0x8] sm:$0xf]
        %v247 = vld [vmem:[%s230 + $0xc] sm:$0xf]
        %v248 = vld [vmem:[%s230 + $0x10] sm:$0xf]
        %v249 = vld [vmem:[%s230 + $0x14] sm:$0xf]
        %v250 = vld [vmem:[%s230 + $0x18] sm:$0xf]
        %v251 = vld [vmem:[%s230 + $0x1c] sm:$0xf]
        %v252 = vld [vmem:[%s230 + $0x20] sm:$0xf]
        %v253 = vld [vmem:[%s230 + $0x24] sm:$0xf]
        %v254 = vld [vmem:[%s230 + $0x28] sm:$0xf]
        %v255 = vld [vmem:[%s230 + $0x2c] sm:$0xf]
        %v256 = vld [vmem:[%s230 + $0x30] sm:$0xf]
        %v257 = vld [vmem:[%s230 + $0x34] sm:$0xf]
        %v258 = vld [vmem:[%s230 + $0x38] sm:$0xf]
        %v259 = vld [vmem:[%s230 + $0x3c] sm:$0xf]
        %v260 = vld [vmem:[%s230 + $0x40] sm:$0xf]
        %v261 = vld [vmem:[%s230 + $0x44] sm:$0xf]
        %v262 = vld [vmem:[%s230 + $0x48] sm:$0xf]
        %v263 = vld [vmem:[%s230 + $0x4c] sm:$0xf]
        %v264 = vld [vmem:[%s230 + $0x50] sm:$0xf]
        %v265 = vld [vmem:[%s230 + $0x54] sm:$0xf]
        %v266 = vld [vmem:[%s230 + $0x58] sm:$0xf]
        %v267 = vld [vmem:[%s230 + $0x5c] sm:$0xf]
        %v268 = vld [vmem:[%s230 + $0x60] sm:$0xf]
        %v269 = vld [vmem:[%s230 + $0x64] sm:$0xf]
        %v270 = vld [vmem:[%s230 + $0x68] sm:$0xf]
        %v271 = vld [vmem:[%s230 + $0x6c] sm:$0xf]
        %v272 = vld [vmem:[%s230 + $0x70] sm:$0xf]
        %v273 = vld [vmem:[%s230 + $0x74] sm:$0xf]
        %v274 = vld [vmem:[%s230 + $0x78] sm:$0xf]
        %v275 = vld [vmem:[%s230 + $0x7c] sm:$0xf]
        %v276 = vld [vmem:[%s230 + $0x80] sm:$0xf]
        %v277 = vld [vmem:[%s230 + $0x84] sm:$0xf]
        %v278 = vld [vmem:[%s230 + $0x88] sm:$0xf]
        %v279 = vld [vmem:[%s230 + $0x8c] sm:$0xf]
        %v280 = vld [vmem:[%s230 + $0x90] sm:$0xf]
        %v281 = vld [vmem:[%s230 + $0x94] sm:$0xf]
        %v282 = vld [vmem:[%s230 + $0x98] sm:$0xf]
        %v283 = vld [vmem:[%s230 + $0x9c] sm:$0xf]
        %v284 = vld [vmem:[%s230 + $0xa0] sm:$0xf]
        %v285 = vld [vmem:[%s230 + $0xa4] sm:$0xf]
        %v286 = vld [vmem:[%s230 + $0xa8] sm:$0xf]
        %v287 = vld [vmem:[%s230 + $0xac] sm:$0xf]
        %v288 = vld [vmem:[%s230 + $0xb0] sm:$0xf]
        %v289 = vld [vmem:[%s230 + $0xb4] sm:$0xf]
        %v290 = vld [vmem:[%s230 + $0xb8] sm:$0xf]
        %v291 = vld [vmem:[%s230 + $0xbc] sm:$0xf]
        %v292 = vld [vmem:[%s230 + $0xc0] sm:$0xf]
        %v293 = vld [vmem:[%s230 + $0xc4] sm:$0xf]
        %v294 = vld [vmem:[%s230 + $0xc8] sm:$0xf]
        %v295 = vld [vmem:[%s230 + $0xcc] sm:$0xf]
        %v296 = vld [vmem:[%s230 + $0xd0] sm:$0xf]
        %v297 = vld [vmem:[%s230 + $0xd4] sm:$0xf]
        %v298 = vld [vmem:[%s230 + $0xd8] sm:$0xf]
        %v299 = vld [vmem:[%s230 + $0xdc] sm:$0xf]
        %v300 = vld [vmem:[%s230 + $0xe0] sm:$0xf]
        %v301 = vld [vmem:[%s230 + $0xe4] sm:$0xf]
        %v302 = vld [vmem:[%s230 + $0xe8] sm:$0xf]
        %v303 = vld [vmem:[%s230 + $0xec] sm:$0xf]
        %v304 = vld [vmem:[%s230 + $0xf0] sm:$0xf]
        %v305 = vld [vmem:[%s230 + $0xf4] sm:$0xf]
        %v306 = vld [vmem:[%s230 + $0xf8] sm:$0xf]
        %v307 = vld [vmem:[%s230 + $0xfc] sm:$0xf]
        %v308 = vld [vmem:[%s230 + $0x100] sm:$0xf]
        %v309 = vld [vmem:[%s230 + $0x104] sm:$0xf]
        %v310 = vld [vmem:[%s230 + $0x108] sm:$0xf]
        %v311 = vld [vmem:[%s230 + $0x10c] sm:$0xf]
        %v312 = vld [vmem:[%s230 + $0x110] sm:$0xf]
        %v313 = vld [vmem:[%s230 + $0x114] sm:$0xf]
        %v314 = vld [vmem:[%s230 + $0x118] sm:$0xf]
        %v315 = vld [vmem:[%s230 + $0x11c] sm:$0xf]
        %v316 = vld [vmem:[%s230 + $0x120] sm:$0xf]
        %v317 = vld [vmem:[%s230 + $0x124] sm:$0xf]
        %v318 = vld [vmem:[%s230 + $0x128] sm:$0xf]
        %v319 = vld [vmem:[%s230 + $0x12c] sm:$0xf]
        %v320 = vld [vmem:[%s230 + $0x130] sm:$0xf]
        %v321 = vld [vmem:[%s230 + $0x134] sm:$0xf]
        %v322 = vld [vmem:[%s230 + $0x138] sm:$0xf]
        %v323 = vld [vmem:[%s230 + $0x13c] sm:$0xf]
        %v324 = vld [vmem:[%s230 + $0x140] sm:$0xf]
        %v325 = vld [vmem:[%s230 + $0x144] sm:$0xf]
        %v326 = vld [vmem:[%s230 + $0x148] sm:$0xf]
        %v327 = vld [vmem:[%s230 + $0x14c] sm:$0xf]
        %v328 = vld [vmem:[%s230 + $0x150] sm:$0xf]
        %v329 = vld [vmem:[%s230 + $0x154] sm:$0xf]
        %v330 = vld [vmem:[%s230 + $0x158] sm:$0xf]
        %v331 = vld [vmem:[%s230 + $0x15c] sm:$0xf]
        %v332 = vld [vmem:[%s230 + $0x160] sm:$0xf]
        %v333 = vld [vmem:[%s230 + $0x164] sm:$0xf]
        %v334 = vld [vmem:[%s230 + $0x168] sm:$0xf]
        %v335 = vld [vmem:[%s230 + $0x16c] sm:$0xf]
        %v336 = vld [vmem:[%s230 + $0x170] sm:$0xf]
        %v337 = vld [vmem:[%s230 + $0x174] sm:$0xf]
        %v338 = vld [vmem:[%s230 + $0x178] sm:$0xf]
        %v339 = vld [vmem:[%s230 + $0x17c] sm:$0xf]
        %v340 = vld [vmem:[%s230 + $0x180] sm:$0xf]
        %v341 = vld [vmem:[%s230 + $0x184] sm:$0xf]
        %v342 = vld [vmem:[%s230 + $0x188] sm:$0xf]
        %v343 = vld [vmem:[%s230 + $0x18c] sm:$0xf]
        %v344 = vld [vmem:[%s230 + $0x190] sm:$0xf]
        %v345 = vld [vmem:[%s230 + $0x194] sm:$0xf]
        %v346 = vld [vmem:[%s230 + $0x198] sm:$0xf]
        %v347 = vld [vmem:[%s230 + $0x19c] sm:$0xf]
        %v348 = vld [vmem:[%s230 + $0x1a0] sm:$0xf]
        %v349 = vld [vmem:[%s230 + $0x1a4] sm:$0xf]
        %v350 = vld [vmem:[%s230 + $0x1a8] sm:$0xf]
        %v351 = vld [vmem:[%s230 + $0x1ac] sm:$0xf]
        %v352 = vld [vmem:[%s230 + $0x1b0] sm:$0xf]
        %v353 = vld [vmem:[%s230 + $0x1b4] sm:$0xf]
        %v354 = vld [vmem:[%s230 + $0x1b8] sm:$0xf]
        %v355 = vld [vmem:[%s230 + $0x1bc] sm:$0xf]
        %v356 = vld [vmem:[%s230 + $0x1c0] sm:$0xf]
        %v357 = vld [vmem:[%s230 + $0x1c4] sm:$0xf]
        %v358 = vld [vmem:[%s230 + $0x1c8] sm:$0xf]
        %v359 = vld [vmem:[%s230 + $0x1cc] sm:$0xf]
        %v360 = vld [vmem:[%s230 + $0x1d0] sm:$0xf]
        %v361 = vld [vmem:[%s230 + $0x1d4] sm:$0xf]
        %v362 = vld [vmem:[%s230 + $0x1d8] sm:$0xf]
        %v363 = vld [vmem:[%s230 + $0x1dc] sm:$0xf]
        %v364 = vld [vmem:[%s230 + $0x1e0] sm:$0xf]
        %v365 = vld [vmem:[%s230 + $0x1e4] sm:$0xf]
        %v366 = vld [vmem:[%s230 + $0x1e8] sm:$0xf]
        %v367 = vld [vmem:[%s230 + $0x1ec] sm:$0xf]
        %v368 = vld [vmem:[%s230 + $0x1f0] sm:$0xf]
        %v369 = vld [vmem:[%s230 + $0x1f4] sm:$0xf]
        %v370 = vld [vmem:[%s230 + $0x1f8] sm:$0xf]
        %v371 = vld [vmem:[%s230 + $0x1fc] sm:$0xf]
        %v372 = vld [vmem:[%s230 + $0x200] sm:$0xf]
        %v373 = vld [vmem:[%s230 + $0x204] sm:$0xf]
        %v374 = vld [vmem:[%s230 + $0x208] sm:$0xf]
        %v375 = vld [vmem:[%s230 + $0x20c] sm:$0xf]
        %v376 = vld [vmem:[%s230 + $0x210] sm:$0xf]
        %v377 = vld [vmem:[%s230 + $0x214] sm:$0xf]
        %v378 = vld [vmem:[%s230 + $0x218] sm:$0xf]
        %v379 = vld [vmem:[%s230 + $0x21c] sm:$0xf]
        %v380 = vld [vmem:[%s230 + $0x220] sm:$0xf]
        %v381 = vld [vmem:[%s230 + $0x224] sm:$0xf]
        %v382 = vld [vmem:[%s230 + $0x228] sm:$0xf]
        %v383 = vld [vmem:[%s230 + $0x22c] sm:$0xf]
        %v384 = vld [vmem:[%s230 + $0x230] sm:$0xf]
        %v385 = vld [vmem:[%s230 + $0x234] sm:$0xf]
        %v386 = vld [vmem:[%s230 + $0x238] sm:$0xf]
        %v387 = vld [vmem:[%s230 + $0x23c] sm:$0xf]
        %v388 = vld [vmem:[%s230 + $0x240] sm:$0xf]
        %v389 = vld [vmem:[%s230 + $0x244] sm:$0xf]
        %v390 = vld [vmem:[%s230 + $0x248] sm:$0xf]
        %v391 = vld [vmem:[%s230 + $0x24c] sm:$0xf]
        %v392 = vld [vmem:[%s230 + $0x250] sm:$0xf]
        %v393 = vld [vmem:[%s230 + $0x254] sm:$0xf]
        %v394 = vld [vmem:[%s230 + $0x258] sm:$0xf]
        %v395 = vld [vmem:[%s230 + $0x25c] sm:$0xf]
        %v396 = vld [vmem:[%s230 + $0x260] sm:$0xf]
        %v397 = vld [vmem:[%s230 + $0x264] sm:$0xf]
        %v398 = vld [vmem:[%s230 + $0x268] sm:$0xf]
        %v399 = vld [vmem:[%s230 + $0x26c] sm:$0xf]
        %v400 = vld [vmem:[%s230 + $0x270] sm:$0xf]
        %v401 = vld [vmem:[%s230 + $0x274] sm:$0xf]
        %v402 = vld [vmem:[%s230 + $0x278] sm:$0xf]
        %v403 = vld [vmem:[%s230 + $0x27c] sm:$0xf]
        %v404 = vld [vmem:[%s230 + $0x280] sm:$0xf]
        %v405 = vld [vmem:[%s230 + $0x284] sm:$0xf]
        %v406 = vld [vmem:[%s230 + $0x288] sm:$0xf]
        %v407 = vld [vmem:[%s230 + $0x28c] sm:$0xf]
        %v408 = vld [vmem:[%s230 + $0x290] sm:$0xf]
        %v409 = vld [vmem:[%s230 + $0x294] sm:$0xf]
        %v410 = vld [vmem:[%s230 + $0x298] sm:$0xf]
        %v411 = vld [vmem:[%s230 + $0x29c] sm:$0xf]
        %v412 = vld [vmem:[%s230 + $0x2a0] sm:$0xf]
        %v413 = vld [vmem:[%s230 + $0x2a4] sm:$0xf]
        %v414 = vld [vmem:[%s230 + $0x2a8] sm:$0xf]
        %v415 = vld [vmem:[%s230 + $0x2ac] sm:$0xf]
        %v416 = vld [vmem:[%s230 + $0x2b0] sm:$0xf]
        %v417 = vld [vmem:[%s230 + $0x2b4] sm:$0xf]
        %v418 = vld [vmem:[%s230 + $0x2b8] sm:$0xf]
        %v419 = vld [vmem:[%s230 + $0x2bc] sm:$0xf]
        %v420 = vld [vmem:[%s230 + $0x2c0] sm:$0xf]
        %v421 = vld [vmem:[%s230 + $0x2c4] sm:$0xf]
        %v422 = vld [vmem:[%s230 + $0x2c8] sm:$0xf]
        %v423 = vld [vmem:[%s230 + $0x2cc] sm:$0xf]
        %v424 = vld [vmem:[%s230 + $0x2d0] sm:$0xf]
        %v425 = vld [vmem:[%s230 + $0x2d4] sm:$0xf]
        %v426 = vld [vmem:[%s230 + $0x2d8] sm:$0xf]
        %v427 = vld [vmem:[%s230 + $0x2dc] sm:$0xf]
        %v428 = vld [vmem:[%s230 + $0x2e0] sm:$0xf]
        %v429 = vld [vmem:[%s230 + $0x2e4] sm:$0xf]
        %v430 = vld [vmem:[%s230 + $0x2e8] sm:$0xf]
        %v431 = vld [vmem:[%s230 + $0x2ec] sm:$0xf]
        %v432 = vld [vmem:[%s230 + $0x2f0] sm:$0xf]
        %v433 = vld [vmem:[%s230 + $0x2f4] sm:$0xf]
        %v434 = vld [vmem:[%s230 + $0x2f8] sm:$0xf]
        %v435 = vld [vmem:[%s230 + $0x2fc] sm:$0xf]
        %v436 = vld [vmem:[%s230 + $0x300] sm:$0xf]
        %v437 = vld [vmem:[%s230 + $0x304] sm:$0xf]
        %v438 = vld [vmem:[%s230 + $0x308] sm:$0xf]
        %v439 = vld [vmem:[%s230 + $0x30c] sm:$0xf]
        %v440 = vld [vmem:[%s230 + $0x310] sm:$0xf]
        %v441 = vld [vmem:[%s230 + $0x314] sm:$0xf]
        %v442 = vld [vmem:[%s230 + $0x318] sm:$0xf]
        %v443 = vld [vmem:[%s230 + $0x31c] sm:$0xf]
        %v444 = vld [vmem:[%s230 + $0x320] sm:$0xf]
        %v445 = vld [vmem:[%s230 + $0x324] sm:$0xf]
        %v446 = vld [vmem:[%s230 + $0x328] sm:$0xf]
        %v447 = vld [vmem:[%s230 + $0x32c] sm:$0xf]
        %v448 = vld [vmem:[%s230 + $0x330] sm:$0xf]
        %v449 = vld [vmem:[%s230 + $0x334] sm:$0xf]
        %v450 = vld [vmem:[%s230 + $0x338] sm:$0xf]
        %v451 = vld [vmem:[%s230 + $0x33c] sm:$0xf]
        %v452 = vld [vmem:[%s230 + $0x340] sm:$0xf]
        %v453 = vld [vmem:[%s230 + $0x344] sm:$0xf]
        %v454 = vld [vmem:[%s230 + $0x348] sm:$0xf]
        %v455 = vld [vmem:[%s230 + $0x34c] sm:$0xf]
        %v456 = vld [vmem:[%s230 + $0x350] sm:$0xf]
        %v457 = vld [vmem:[%s230 + $0x354] sm:$0xf]
        %v458 = vld [vmem:[%s230 + $0x358] sm:$0xf]
        %v459 = vld [vmem:[%s230 + $0x35c] sm:$0xf]
        %v460 = vld [vmem:[%s230 + $0x360] sm:$0xf]
        %v461 = vld [vmem:[%s230 + $0x364] sm:$0xf]
        %v462 = vld [vmem:[%s230 + $0x368] sm:$0xf]
        %v463 = vld [vmem:[%s230 + $0x36c] sm:$0xf]
        %v464 = vld [vmem:[%s230 + $0x370] sm:$0xf]
        %v465 = vld [vmem:[%s230 + $0x374] sm:$0xf]
        %v466 = vld [vmem:[%s230 + $0x378] sm:$0xf]
        %v467 = vld [vmem:[%s230 + $0x37c] sm:$0xf]
        %v468 = vld [vmem:[%s230 + $0x380] sm:$0xf]
        %v469 = vld [vmem:[%s230 + $0x384] sm:$0xf]
        %v470 = vld [vmem:[%s230 + $0x388] sm:$0xf]
        %v471 = vld [vmem:[%s230 + $0x38c] sm:$0xf]
        %v472 = vld [vmem:[%s230 + $0x390] sm:$0xf]
        %v473 = vld [vmem:[%s230 + $0x394] sm:$0xf]
        %v474 = vld [vmem:[%s230 + $0x398] sm:$0xf]
        %v475 = vld [vmem:[%s230 + $0x39c] sm:$0xf]
        %v476 = vld [vmem:[%s230 + $0x3a0] sm:$0xf]
        %v477 = vld [vmem:[%s230 + $0x3a4] sm:$0xf]
        %v478 = vld [vmem:[%s230 + $0x3a8] sm:$0xf]
        %v479 = vld [vmem:[%s230 + $0x3ac] sm:$0xf]
        %v480 = vld [vmem:[%s230 + $0x3b0] sm:$0xf]
        %v481 = vld [vmem:[%s230 + $0x3b4] sm:$0xf]
        %v482 = vld [vmem:[%s230 + $0x3b8] sm:$0xf]
        %v483 = vld [vmem:[%s230 + $0x3bc] sm:$0xf]
        %v484 = vld [vmem:[%s230 + $0x3c0] sm:$0xf]
        %v485 = vld [vmem:[%s230 + $0x3c4] sm:$0xf]
        %v486 = vld [vmem:[%s230 + $0x3c8] sm:$0xf]
        %v487 = vld [vmem:[%s230 + $0x3cc] sm:$0xf]
        %v488 = vld [vmem:[%s230 + $0x3d0] sm:$0xf]
        %v489 = vld [vmem:[%s230 + $0x3d4] sm:$0xf]
        %v490 = vld [vmem:[%s230 + $0x3d8] sm:$0xf]
        %v491 = vld [vmem:[%s230 + $0x3dc] sm:$0xf]
        %v492 = vld [vmem:[%s230 + $0x3e0] sm:$0xf]
        %v493 = vld [vmem:[%s230 + $0x3e4] sm:$0xf]
        %v494 = vld [vmem:[%s230 + $0x3e8] sm:$0xf]
        %v495 = vld [vmem:[%s230 + $0x3ec] sm:$0xf]
        %v496 = vld [vmem:[%s230 + $0x3f0] sm:$0xf]
        %v497 = vld [vmem:[%s230 + $0x3f4] sm:$0xf]
        %v498 = vld [vmem:[%s230 + $0x3f8] sm:$0xf]
        %v499 = vld [vmem:[%s230 + $0x3fc] sm:$0xf]
        %v500 = vld [vmem:[%s230 + $0x400] sm:$0xf]
        %v501 = vld [vmem:[%s230 + $0x404] sm:$0xf]
        %v502 = vld [vmem:[%s230 + $0x408] sm:$0xf]
        %v503 = vld [vmem:[%s230 + $0x40c] sm:$0xf]
        %v504 = vld [vmem:[%s230 + $0x410] sm:$0xf]
        %v505 = vld [vmem:[%s230 + $0x414] sm:$0xf]
        %v506 = vld [vmem:[%s230 + $0x418] sm:$0xf]
        %v507 = vld [vmem:[%s230 + $0x41c] sm:$0xf]
        %v508 = vld [vmem:[%s230 + $0x420] sm:$0xf]
        %v509 = vld [vmem:[%s230 + $0x424] sm:$0xf]
        %v510 = vld [vmem:[%s230 + $0x428] sm:$0xf]
        %v511 = vld [vmem:[%s230 + $0x42c] sm:$0xf]
        %v512 = vld [vmem:[%s230 + $0x430] sm:$0xf]
        %v513 = vld [vmem:[%s230 + $0x434] sm:$0xf]
        %v514 = vld [vmem:[%s230 + $0x438] sm:$0xf]
        %v515 = vld [vmem:[%s230 + $0x43c] sm:$0xf]
        %v516 = vld [vmem:[%s230 + $0x440] sm:$0xf]
        %v517 = vld [vmem:[%s230 + $0x444] sm:$0xf]
        %v518 = vld [vmem:[%s230 + $0x448] sm:$0xf]
        %v519 = vld [vmem:[%s230 + $0x44c] sm:$0xf]
        %v520 = vld [vmem:[%s230 + $0x450] sm:$0xf]
        %v521 = vld [vmem:[%s230 + $0x454] sm:$0xf]
        %v522 = vld [vmem:[%s230 + $0x458] sm:$0xf]
        %v523 = vld [vmem:[%s230 + $0x45c] sm:$0xf]
        %v524 = vld [vmem:[%s230 + $0x460] sm:$0xf]
        %v525 = vld [vmem:[%s230 + $0x464] sm:$0xf]
        %v526 = vld [vmem:[%s230 + $0x468] sm:$0xf]
        %v527 = vld [vmem:[%s230 + $0x46c] sm:$0xf]
        %v528 = vld [vmem:[%s230 + $0x470] sm:$0xf]
        %v529 = vld [vmem:[%s230 + $0x474] sm:$0xf]
        %v530 = vld [vmem:[%s230 + $0x478] sm:$0xf]
        %v531 = vld [vmem:[%s230 + $0x47c] sm:$0xf]
        %v532 = vld [vmem:[%s230 + $0x480] sm:$0xf]
        %v533 = vld [vmem:[%s230 + $0x484] sm:$0xf]
        %v534 = vld [vmem:[%s230 + $0x488] sm:$0xf]
        %v535 = vld [vmem:[%s230 + $0x48c] sm:$0xf]
        %v536 = vld [vmem:[%s230 + $0x490] sm:$0xf]
        %v537 = vld [vmem:[%s230 + $0x494] sm:$0xf]
        %v538 = vld [vmem:[%s230 + $0x498] sm:$0xf]
        %v539 = vld [vmem:[%s230 + $0x49c] sm:$0xf]
        %v540 = vld [vmem:[%s230 + $0x4a0] sm:$0xf]
        %v541 = vld [vmem:[%s230 + $0x4a4] sm:$0xf]
        %v542 = vld [vmem:[%s230 + $0x4a8] sm:$0xf]
        %v543 = vld [vmem:[%s230 + $0x4ac] sm:$0xf]
        %v544 = vld [vmem:[%s230 + $0x4b0] sm:$0xf]
        %v545 = vld [vmem:[%s230 + $0x4b4] sm:$0xf]
        %v546 = vld [vmem:[%s230 + $0x4b8] sm:$0xf]
        %v547 = vld [vmem:[%s230 + $0x4bc] sm:$0xf]
        %v548 = vld [vmem:[%s230 + $0x4c0] sm:$0xf]
        %v549 = vld [vmem:[%s230 + $0x4c4] sm:$0xf]
        %v550 = vld [vmem:[%s230 + $0x4c8] sm:$0xf]
        %v551 = vld [vmem:[%s230 + $0x4cc] sm:$0xf]
        %v552 = vld [vmem:[%s230 + $0x4d0] sm:$0xf]
        %v553 = vld [vmem:[%s230 + $0x4d4] sm:$0xf]
        %v554 = vld [vmem:[%s230 + $0x4d8] sm:$0xf]
        %v555 = vld [vmem:[%s230 + $0x4dc] sm:$0xf]
        %v556 = vld [vmem:[%s230 + $0x4e0] sm:$0xf]
        %v557 = vld [vmem:[%s230 + $0x4e4] sm:$0xf]
        %v558 = vld [vmem:[%s230 + $0x4e8] sm:$0xf]
        %v559 = vld [vmem:[%s230 + $0x4ec] sm:$0xf]
        %v560 = vld [vmem:[%s230 + $0x4f0] sm:$0xf]
        %v561 = vld [vmem:[%s230 + $0x4f4] sm:$0xf]
        %v562 = vld [vmem:[%s230 + $0x4f8] sm:$0xf]
        %v563 = vld [vmem:[%s230 + $0x4fc] sm:$0xf]
        %v564 = vld [vmem:[%s230 + $0x500] sm:$0xf]
        %v565 = vld [vmem:[%s230 + $0x504] sm:$0xf]
        %v566 = vld [vmem:[%s230 + $0x508] sm:$0xf]
        %v567 = vld [vmem:[%s230 + $0x50c] sm:$0xf]
        %v568 = vld [vmem:[%s230 + $0x510] sm:$0xf]
        %v569 = vld [vmem:[%s230 + $0x514] sm:$0xf]
        %v570 = vld [vmem:[%s230 + $0x518] sm:$0xf]
        %v571 = vld [vmem:[%s230 + $0x51c] sm:$0xf]
        %v572 = vld [vmem:[%s230 + $0x520] sm:$0xf]
        %v573 = vld [vmem:[%s230 + $0x524] sm:$0xf]
        %v574 = vld [vmem:[%s230 + $0x528] sm:$0xf]
        %v575 = vld [vmem:[%s230 + $0x52c] sm:$0xf]
        %v576 = vld [vmem:[%s230 + $0x530] sm:$0xf]
        %v577 = vld [vmem:[%s230 + $0x534] sm:$0xf]
        %v578 = vld [vmem:[%s230 + $0x538] sm:$0xf]
        %v579 = vld [vmem:[%s230 + $0x53c] sm:$0xf]
        %v580 = vld [vmem:[%s230 + $0x540] sm:$0xf]
        %v581 = vld [vmem:[%s230 + $0x544] sm:$0xf]
        %v582 = vld [vmem:[%s230 + $0x548] sm:$0xf]
        %v583 = vld [vmem:[%s230 + $0x54c] sm:$0xf]
        %v584 = vld [vmem:[%s230 + $0x550] sm:$0xf]
        %v585 = vld [vmem:[%s230 + $0x554] sm:$0xf]
        %v586 = vld [vmem:[%s230 + $0x558] sm:$0xf]
        %v587 = vld [vmem:[%s230 + $0x55c] sm:$0xf]
        %v588 = vld [vmem:[%s230 + $0x560] sm:$0xf]
        %v589 = vld [vmem:[%s230 + $0x564] sm:$0xf]
        %v590 = vld [vmem:[%s230 + $0x568] sm:$0xf]
        %v591 = vld [vmem:[%s230 + $0x56c] sm:$0xf]
        %v592 = vld [vmem:[%s230 + $0x570] sm:$0xf]
        %v593 = vld [vmem:[%s230 + $0x574] sm:$0xf]
        %v594 = vld [vmem:[%s230 + $0x578] sm:$0xf]
        %v595 = vld [vmem:[%s230 + $0x57c] sm:$0xf]
        %v596 = vld [vmem:[%s230 + $0x580] sm:$0xf]
        %v597 = vld [vmem:[%s230 + $0x584] sm:$0xf]
        %v598 = vld [vmem:[%s230 + $0x588] sm:$0xf]
        %v599 = vld [vmem:[%s230 + $0x58c] sm:$0xf]
        %v600 = vld [vmem:[%s230 + $0x590] sm:$0xf]
        %v601 = vld [vmem:[%s230 + $0x594] sm:$0xf]
        %v602 = vld [vmem:[%s230 + $0x598] sm:$0xf]
        %v603 = vld [vmem:[%s230 + $0x59c] sm:$0xf]
        %v604 = vld [vmem:[%s230 + $0x5a0] sm:$0xf]
        %v605 = vld [vmem:[%s230 + $0x5a4] sm:$0xf]
        %v606 = vld [vmem:[%s230 + $0x5a8] sm:$0xf]
        %v607 = vld [vmem:[%s230 + $0x5ac] sm:$0xf]
        %v608 = vld [vmem:[%s230 + $0x5b0] sm:$0xf]
        %v609 = vld [vmem:[%s230 + $0x5b4] sm:$0xf]
        %v610 = vld [vmem:[%s230 + $0x5b8] sm:$0xf]
        %v611 = vld [vmem:[%s230 + $0x5bc] sm:$0xf]
        %v612 = vld [vmem:[%s230 + $0x5c0] sm:$0xf]
        %v613 = vld [vmem:[%s230 + $0x5c4] sm:$0xf]
        %v614 = vld [vmem:[%s230 + $0x5c8] sm:$0xf]
        %v615 = vld [vmem:[%s230 + $0x5cc] sm:$0xf]
        %v616 = vld [vmem:[%s230 + $0x5d0] sm:$0xf]
        %v617 = vld [vmem:[%s230 + $0x5d4] sm:$0xf]
        %v618 = vld [vmem:[%s230 + $0x5d8] sm:$0xf]
        %v619 = vld [vmem:[%s230 + $0x5dc] sm:$0xf]
        %v620 = vld [vmem:[%s230 + $0x5e0] sm:$0xf]
        %v621 = vld [vmem:[%s230 + $0x5e4] sm:$0xf]
        %v622 = vld [vmem:[%s230 + $0x5e8] sm:$0xf]
        %v623 = vld [vmem:[%s230 + $0x5ec] sm:$0xf]
        %v624 = vld [vmem:[%s230 + $0x5f0] sm:$0xf]
        %v625 = vld [vmem:[%s230 + $0x5f4] sm:$0xf]
        %v626 = vld [vmem:[%s230 + $0x5f8] sm:$0xf]
        %v627 = vld [vmem:[%s230 + $0x5fc] sm:$0xf]
        %v628 = vld [vmem:[%s230 + $0x600] sm:$0xf]
        %v629 = vld [vmem:[%s230 + $0x604] sm:$0xf]
        %v630 = vld [vmem:[%s230 + $0x608] sm:$0xf]
        %v631 = vld [vmem:[%s230 + $0x60c] sm:$0xf]
        %v632 = vld [vmem:[%s230 + $0x610] sm:$0xf]
        %v633 = vld [vmem:[%s230 + $0x614] sm:$0xf]
        %v634 = vld [vmem:[%s230 + $0x618] sm:$0xf]
        %v635 = vld [vmem:[%s230 + $0x61c] sm:$0xf]
        %v636 = vld [vmem:[%s230 + $0x620] sm:$0xf]
        %v637 = vld [vmem:[%s230 + $0x624] sm:$0xf]
        %v638 = vld [vmem:[%s230 + $0x628] sm:$0xf]
        %v639 = vld [vmem:[%s230 + $0x62c] sm:$0xf]
        %v640 = vld [vmem:[%s230 + $0x630] sm:$0xf]
        %v641 = vld [vmem:[%s230 + $0x634] sm:$0xf]
        %v642 = vld [vmem:[%s230 + $0x638] sm:$0xf]
        %v643 = vld [vmem:[%s230 + $0x63c] sm:$0xf]
        %v644 = vld [vmem:[%s230 + $0x640] sm:$0xf]
        %v645 = vld [vmem:[%s230 + $0x644] sm:$0xf]
        %v646 = vld [vmem:[%s230 + $0x648] sm:$0xf]
        %v647 = vld [vmem:[%s230 + $0x64c] sm:$0xf]
        %v648 = vld [vmem:[%s230 + $0x650] sm:$0xf]
        %v649 = vld [vmem:[%s230 + $0x654] sm:$0xf]
        %v650 = vld [vmem:[%s230 + $0x658] sm:$0xf]
        %v651 = vld [vmem:[%s230 + $0x65c] sm:$0xf]
        %v652 = vld [vmem:[%s230 + $0x660] sm:$0xf]
        %v653 = vld [vmem:[%s230 + $0x664] sm:$0xf]
        %v654 = vld [vmem:[%s230 + $0x668] sm:$0xf]
        %v655 = vld [vmem:[%s230 + $0x66c] sm:$0xf]
        %v656 = vld [vmem:[%s230 + $0x670] sm:$0xf]
        %v657 = vld [vmem:[%s230 + $0x674] sm:$0xf]
        %v658 = vld [vmem:[%s230 + $0x678] sm:$0xf]
        %v659 = vld [vmem:[%s230 + $0x67c] sm:$0xf]
        %v660 = vld [vmem:[%s230 + $0x680] sm:$0xf]
        %v661 = vld [vmem:[%s230 + $0x684] sm:$0xf]
        %v662 = vld [vmem:[%s230 + $0x688] sm:$0xf]
        %v663 = vld [vmem:[%s230 + $0x68c] sm:$0xf]
        %v664 = vld [vmem:[%s230 + $0x690] sm:$0xf]
        %v665 = vld [vmem:[%s230 + $0x694] sm:$0xf]
        %v666 = vld [vmem:[%s230 + $0x698] sm:$0xf]
        %v667 = vld [vmem:[%s230 + $0x69c] sm:$0xf]
        %v668 = vld [vmem:[%s230 + $0x6a0] sm:$0xf]
        %v669 = vld [vmem:[%s230 + $0x6a4] sm:$0xf]
        %v670 = vld [vmem:[%s230 + $0x6a8] sm:$0xf]
        %v671 = vld [vmem:[%s230 + $0x6ac] sm:$0xf]
        %v672 = vld [vmem:[%s230 + $0x6b0] sm:$0xf]
        %v673 = vld [vmem:[%s230 + $0x6b4] sm:$0xf]
        %v674 = vld [vmem:[%s230 + $0x6b8] sm:$0xf]
        %v675 = vld [vmem:[%s230 + $0x6bc] sm:$0xf]
        %v676 = vld [vmem:[%s230 + $0x6c0] sm:$0xf]
        %v677 = vld [vmem:[%s230 + $0x6c4] sm:$0xf]
        %v678 = vld [vmem:[%s230 + $0x6c8] sm:$0xf]
        %v679 = vld [vmem:[%s230 + $0x6cc] sm:$0xf]
        %v680 = vld [vmem:[%s230 + $0x6d0] sm:$0xf]
        %v681 = vld [vmem:[%s230 + $0x6d4] sm:$0xf]
        %v682 = vld [vmem:[%s230 + $0x6d8] sm:$0xf]
        %v683 = vld [vmem:[%s230 + $0x6dc] sm:$0xf]
        %v684 = vld [vmem:[%s230 + $0x6e0] sm:$0xf]
        %v685 = vld [vmem:[%s230 + $0x6e4] sm:$0xf]
        %v686 = vld [vmem:[%s230 + $0x6e8] sm:$0xf]
        %v687 = vld [vmem:[%s230 + $0x6ec] sm:$0xf]
        %v688 = vld [vmem:[%s230 + $0x6f0] sm:$0xf]
        %v689 = vld [vmem:[%s230 + $0x6f4] sm:$0xf]
        %v690 = vld [vmem:[%s230 + $0x6f8] sm:$0xf]
        %v691 = vld [vmem:[%s230 + $0x6fc] sm:$0xf]
        %v692 = vld [vmem:[%s230 + $0x700] sm:$0xf]
        %v693 = vld [vmem:[%s230 + $0x704] sm:$0xf]
        %v694 = vld [vmem:[%s230 + $0x708] sm:$0xf]
        %v695 = vld [vmem:[%s230 + $0x70c] sm:$0xf]
        %v696 = vld [vmem:[%s230 + $0x710] sm:$0xf]
        %v697 = vld [vmem:[%s230 + $0x714] sm:$0xf]
        %v698 = vld [vmem:[%s230 + $0x718] sm:$0xf]
        %v699 = vld [vmem:[%s230 + $0x71c] sm:$0xf]
        %v700 = vld [vmem:[%s230 + $0x720] sm:$0xf]
        %v701 = vld [vmem:[%s230 + $0x724] sm:$0xf]
        %v702 = vld [vmem:[%s230 + $0x728] sm:$0xf]
        %v703 = vld [vmem:[%s230 + $0x72c] sm:$0xf]
        %v704 = vld [vmem:[%s230 + $0x730] sm:$0xf]
        %v705 = vld [vmem:[%s230 + $0x734] sm:$0xf]
        %v706 = vld [vmem:[%s230 + $0x738] sm:$0xf]
        %v707 = vld [vmem:[%s230 + $0x73c] sm:$0xf]
        %v712 = vcombine.high %v240, %v240
        %v714 = vunpack.c.l.s4 1966171168
        %v715 = vunpack.c.0.s8 %v714
        %v716 = vlaneseq
        %v717 = vshrl.u32 %v716, 7
        %v718 = vsub.s32 %v715, %v717
        %v719 = vrot.slane %v240, %v718
        %v721 = vunpack.c.l.s4 1966171168
        %v722 = vunpack.c.0.s8 %v721
        %v723 = vlaneseq
        %v724 = vshrl.u32 %v723, 7
        %v725 = vsub.s32 %v722, %v724
        %v726 = vrot.slane %v712, %v725
        %v727 = vcombine.high %v719, %v719
        %v728 = vcombine.high %v726, %v726
        %v730 = vunpack.c.l.s4 1966171168
        %v731 = vunpack.c.0.s8 %v730
        %v732 = vlaneseq
        %v733 = vshrl.u32 %v732, 7
        %v734 = vsub.s32 %v731, %v733
        %v735 = vrot.slane %v719, %v734
        %v737 = vunpack.c.l.s4 1966171168
        %v738 = vunpack.c.0.s8 %v737
        %v739 = vlaneseq
        %v740 = vshrl.u32 %v739, 7
        %v741 = vsub.s32 %v738, %v740
        %v742 = vrot.slane %v726, %v741
        %v744 = vunpack.c.l.s4 1966171168
        %v745 = vunpack.c.0.s8 %v744
        %v746 = vlaneseq
        %v747 = vshrl.u32 %v746, 7
        %v748 = vsub.s32 %v745, %v747
        %v749 = vrot.slane %v727, %v748
        %v751 = vunpack.c.l.s4 1966171168
        %v752 = vunpack.c.0.s8 %v751
        %v753 = vlaneseq
        %v754 = vshrl.u32 %v753, 7
        %v755 = vsub.s32 %v752, %v754
        %v756 = vrot.slane %v728, %v755
        %v757 = vcombine.high %v735, %v735
        %v758 = vcombine.high %v742, %v742
        %v759 = vcombine.high %v749, %v749
        %v760 = vcombine.high %v756, %v756
        %v761 = vcombine.high %v241, %v241
        %v763 = vunpack.c.l.s4 1966171168
        %v764 = vunpack.c.0.s8 %v763
        %v765 = vlaneseq
        %v766 = vshrl.u32 %v765, 7
        %v767 = vsub.s32 %v764, %v766
        %v768 = vrot.slane %v241, %v767
        %v770 = vunpack.c.l.s4 1966171168
        %v771 = vunpack.c.0.s8 %v770
        %v772 = vlaneseq
        %v773 = vshrl.u32 %v772, 7
        %v774 = vsub.s32 %v771, %v773
        %v775 = vrot.slane %v761, %v774
        %v776 = vcombine.high %v768, %v768
        %v777 = vcombine.high %v775, %v775
        %v779 = vunpack.c.l.s4 1966171168
        %v780 = vunpack.c.0.s8 %v779
        %v781 = vlaneseq
        %v782 = vshrl.u32 %v781, 7
        %v783 = vsub.s32 %v780, %v782
        %v784 = vrot.slane %v768, %v783
        %v786 = vunpack.c.l.s4 1966171168
        %v787 = vunpack.c.0.s8 %v786
        %v788 = vlaneseq
        %v789 = vshrl.u32 %v788, 7
        %v790 = vsub.s32 %v787, %v789
        %v791 = vrot.slane %v775, %v790
        %v793 = vunpack.c.l.s4 1966171168
        %v794 = vunpack.c.0.s8 %v793
        %v795 = vlaneseq
        %v796 = vshrl.u32 %v795, 7
        %v797 = vsub.s32 %v794, %v796
        %v798 = vrot.slane %v776, %v797
        %v800 = vunpack.c.l.s4 1966171168
        %v801 = vunpack.c.0.s8 %v800
        %v802 = vlaneseq
        %v803 = vshrl.u32 %v802, 7
        %v804 = vsub.s32 %v801, %v803
        %v805 = vrot.slane %v777, %v804
        %v806 = vcombine.high %v784, %v784
        %v807 = vcombine.high %v791, %v791
        %v808 = vcombine.high %v798, %v798
        %v809 = vcombine.high %v805, %v805
        %v810 = vcombine.high %v242, %v242
        %v812 = vunpack.c.l.s4 1966171168
        %v813 = vunpack.c.0.s8 %v812
        %v814 = vlaneseq
        %v815 = vshrl.u32 %v814, 7
        %v816 = vsub.s32 %v813, %v815
        %v817 = vrot.slane %v242, %v816
        %v819 = vunpack.c.l.s4 1966171168
        %v820 = vunpack.c.0.s8 %v819
        %v821 = vlaneseq
        %v822 = vshrl.u32 %v821, 7
        %v823 = vsub.s32 %v820, %v822
        %v824 = vrot.slane %v810, %v823
        %v825 = vcombine.high %v817, %v817
        %v826 = vcombine.high %v824, %v824
        %v828 = vunpack.c.l.s4 1966171168
        %v829 = vunpack.c.0.s8 %v828
        %v830 = vlaneseq
        %v831 = vshrl.u32 %v830, 7
        %v832 = vsub.s32 %v829, %v831
        %v833 = vrot.slane %v817, %v832
        %v835 = vunpack.c.l.s4 1966171168
        %v836 = vunpack.c.0.s8 %v835
        %v837 = vlaneseq
        %v838 = vshrl.u32 %v837, 7
        %v839 = vsub.s32 %v836, %v838
        %v840 = vrot.slane %v824, %v839
        %v842 = vunpack.c.l.s4 1966171168
        %v843 = vunpack.c.0.s8 %v842
        %v844 = vlaneseq
        %v845 = vshrl.u32 %v844, 7
        %v846 = vsub.s32 %v843, %v845
        %v847 = vrot.slane %v825, %v846
        %v849 = vunpack.c.l.s4 1966171168
        %v850 = vunpack.c.0.s8 %v849
        %v851 = vlaneseq
        %v852 = vshrl.u32 %v851, 7
        %v853 = vsub.s32 %v850, %v852
        %v854 = vrot.slane %v826, %v853
        %v855 = vcombine.high %v833, %v833
        %v856 = vcombine.high %v840, %v840
        %v857 = vcombine.high %v847, %v847
        %v858 = vcombine.high %v854, %v854
        %v859 = vcombine.high %v243, %v243
        %v861 = vunpack.c.l.s4 1966171168
        %v862 = vunpack.c.0.s8 %v861
        %v863 = vlaneseq
        %v864 = vshrl.u32 %v863, 7
        %v865 = vsub.s32 %v862, %v864
        %v866 = vrot.slane %v243, %v865
        %v868 = vunpack.c.l.s4 1966171168
        %v869 = vunpack.c.0.s8 %v868
        %v870 = vlaneseq
        %v871 = vshrl.u32 %v870, 7
        %v872 = vsub.s32 %v869, %v871
        %v873 = vrot.slane %v859, %v872
        %v874 = vcombine.high %v866, %v866
        %v876 = vunpack.c.l.s4 1966171168
        %v877 = vunpack.c.0.s8 %v876
        %v878 = vlaneseq
        %v879 = vshrl.u32 %v878, 7
        %v880 = vsub.s32 %v877, %v879
        %v881 = vrot.slane %v866, %v880
        %v883 = vunpack.c.l.s4 1966171168
        %v884 = vunpack.c.0.s8 %v883
        %v885 = vlaneseq
        %v886 = vshrl.u32 %v885, 7
        %v887 = vsub.s32 %v884, %v886
        %v888 = vrot.slane %v873, %v887
        %v890 = vunpack.c.l.s4 1966171168
        %v891 = vunpack.c.0.s8 %v890
        %v892 = vlaneseq
        %v893 = vshrl.u32 %v892, 7
        %v894 = vsub.s32 %v891, %v893
        %v895 = vrot.slane %v874, %v894
        %v896 = vcombine.high %v881, %v881
        %v897 = vcombine.high %v895, %v895
        %v1391 = vunpack.c.l.b16 %v244
        %v1392 = vunpack.c.l.b16 %v245
        %v1393 = vunpack.c.l.b16 %v246
        %v1394 = vunpack.c.l.b16 %v247
        %v1395 = vunpack.c.l.b16 %v248
        %v1396 = vunpack.c.l.b16 %v249
        %v1397 = vunpack.c.l.b16 %v250
        %v1398 = vunpack.c.l.b16 %v251
        %v1399 = vunpack.c.l.b16 %v252
        %v1400 = vunpack.c.l.b16 %v253
        %v1401 = vunpack.c.l.b16 %v254
        %v1402 = vunpack.c.l.b16 %v255
        %v1403 = vunpack.c.l.b16 %v256
        %v1404 = vunpack.c.l.b16 %v257
        %v1405 = vunpack.c.l.b16 %v258
        %v1406 = vunpack.c.l.b16 %v259
        %v1407 = vunpack.c.l.b16 %v260
        %v1408 = vunpack.c.l.b16 %v261
        %v1409 = vunpack.c.l.b16 %v262
        %v1410 = vunpack.c.l.b16 %v263
        %v1411 = vunpack.c.l.b16 %v264
        %v1412 = vunpack.c.l.b16 %v265
        %v1413 = vunpack.c.l.b16 %v266
        %v1414 = vunpack.c.l.b16 %v267
        %v1415 = vunpack.c.l.b16 %v268
        %v1416 = vunpack.c.l.b16 %v269
        %v1417 = vunpack.c.l.b16 %v270
        %v1418 = vunpack.c.l.b16 %v271
        %v1419 = vunpack.c.l.b16 %v272
        %v1420 = vunpack.c.l.b16 %v273
        %v1421 = vunpack.c.l.b16 %v274
        %v1422 = vunpack.c.l.b16 %v275
        %v1423 = vunpack.c.l.b16 %v276
        %v1424 = vunpack.c.l.b16 %v277
        %v1425 = vunpack.c.l.b16 %v278
        %v1426 = vunpack.c.l.b16 %v279
        %v1427 = vunpack.c.l.b16 %v280
        %v1428 = vunpack.c.l.b16 %v281
        %v1429 = vunpack.c.l.b16 %v282
        %v1430 = vunpack.c.l.b16 %v283
        %v1431 = vunpack.c.l.b16 %v284
        %v1432 = vunpack.c.l.b16 %v285
        %v1433 = vunpack.c.l.b16 %v286
        %v1434 = vunpack.c.l.b16 %v287
        %v1435 = vunpack.c.l.b16 %v288
        %v1436 = vunpack.c.l.b16 %v289
        %v1437 = vunpack.c.l.b16 %v290
        %v1438 = vunpack.c.l.b16 %v291
        %v1439 = vunpack.c.l.b16 %v292
        %v1440 = vunpack.c.l.b16 %v293
        %v1441 = vunpack.c.l.b16 %v294
        %v1442 = vunpack.c.l.b16 %v295
        %v1443 = vunpack.c.l.b16 %v296
        %v1444 = vunpack.c.l.b16 %v297
        %v1445 = vunpack.c.l.b16 %v298
        %v1446 = vunpack.c.l.b16 %v299
        %v1447 = vunpack.c.l.b16 %v300
        %v1448 = vunpack.c.l.b16 %v301
        %v1449 = vunpack.c.l.b16 %v302
        %v1450 = vunpack.c.l.b16 %v303
        %v1451 = vunpack.c.l.b16 %v304
        %v1452 = vunpack.c.l.b16 %v305
        %v1453 = vunpack.c.l.b16 %v306
        %v1454 = vunpack.c.l.b16 %v307
        %v1455 = vunpack.c.l.b16 %v308
        %v1456 = vunpack.c.l.b16 %v309
        %v1457 = vunpack.c.l.b16 %v310
        %v1458 = vunpack.c.l.b16 %v311
        %v1459 = vunpack.c.l.b16 %v312
        %v1460 = vunpack.c.l.b16 %v313
        %v1461 = vunpack.c.l.b16 %v314
        %v1462 = vunpack.c.l.b16 %v315
        %v1463 = vunpack.c.l.b16 %v316
        %v1464 = vunpack.c.l.b16 %v317
        %v1465 = vunpack.c.l.b16 %v318
        %v1466 = vunpack.c.l.b16 %v319
        %v1467 = vunpack.c.l.b16 %v320
        %v1468 = vunpack.c.l.b16 %v321
        %v1469 = vunpack.c.l.b16 %v322
        %v1470 = vunpack.c.l.b16 %v323
        %v1471 = vunpack.c.l.b16 %v324
        %v1472 = vunpack.c.l.b16 %v325
        %v1473 = vunpack.c.l.b16 %v326
        %v1474 = vunpack.c.l.b16 %v327
        %v1475 = vunpack.c.l.b16 %v328
        %v1476 = vunpack.c.l.b16 %v329
        %v1477 = vunpack.c.l.b16 %v330
        %v1478 = vunpack.c.l.b16 %v331
        %v1479 = vunpack.c.l.b16 %v332
        %v1480 = vunpack.c.l.b16 %v333
        %v1481 = vunpack.c.l.b16 %v334
        %v1482 = vunpack.c.l.b16 %v335
        %v1483 = vunpack.c.l.b16 %v336
        %v1484 = vunpack.c.l.b16 %v337
        %v1485 = vunpack.c.l.b16 %v338
        %v1486 = vunpack.c.l.b16 %v339
        %v1487 = vunpack.c.l.b16 %v340
        %v1488 = vunpack.c.l.b16 %v341
        %v1489 = vunpack.c.l.b16 %v342
        %v1490 = vunpack.c.l.b16 %v343
        %v1491 = vunpack.c.l.b16 %v344
        %v1492 = vunpack.c.l.b16 %v345
        %v1493 = vunpack.c.l.b16 %v346
        %v1494 = vunpack.c.l.b16 %v347
        %v1495 = vunpack.c.l.b16 %v348
        %v1496 = vunpack.c.l.b16 %v349
        %v1497 = vunpack.c.l.b16 %v350
        %v1498 = vunpack.c.l.b16 %v351
        %v1499 = vunpack.c.l.b16 %v352
        %v1500 = vunpack.c.l.b16 %v353
        %v1501 = vunpack.c.l.b16 %v354
        %v1502 = vunpack.c.l.b16 %v355
        %v1503 = vunpack.c.l.b16 %v356
        %v1504 = vunpack.c.l.b16 %v357
        %v1505 = vunpack.c.l.b16 %v358
        %v1506 = vunpack.c.l.b16 %v359
        %v1507 = vunpack.c.l.b16 %v360
        %v1508 = vunpack.c.l.b16 %v361
        %v1509 = vunpack.c.l.b16 %v362
        %v1510 = vunpack.c.l.b16 %v363
        %v1511 = vunpack.c.l.b16 %v364
        %v1512 = vunpack.c.l.b16 %v365
        %v1513 = vunpack.c.l.b16 %v366
        %v1514 = vunpack.c.l.b16 %v367
        %v1515 = vunpack.c.l.b16 %v368
        %v1516 = vunpack.c.l.b16 %v369
        %v1517 = vunpack.c.l.b16 %v370
        %v1518 = vunpack.c.l.b16 %v371
        %v1519 = vunpack.c.l.b16 %v372
        %v1520 = vunpack.c.l.b16 %v373
        %v1521 = vunpack.c.l.b16 %v374
        %v1522 = vunpack.c.l.b16 %v375
        %v1523 = vunpack.c.l.b16 %v376
        %v1524 = vunpack.c.l.b16 %v377
        %v1525 = vunpack.c.l.b16 %v378
        %v1526 = vunpack.c.l.b16 %v379
        %v1527 = vunpack.c.l.b16 %v380
        %v1528 = vunpack.c.l.b16 %v381
        %v1529 = vunpack.c.l.b16 %v382
        %v1530 = vunpack.c.l.b16 %v383
        %v1531 = vunpack.c.l.b16 %v384
        %v1532 = vunpack.c.l.b16 %v385
        %v1533 = vunpack.c.l.b16 %v386
        %v1534 = vunpack.c.l.b16 %v387
        %v1535 = vunpack.c.l.b16 %v388
        %v1536 = vunpack.c.l.b16 %v389
        %v1537 = vunpack.c.l.b16 %v390
        %v1538 = vunpack.c.l.b16 %v391
        %v1539 = vunpack.c.l.b16 %v392
        %v1540 = vunpack.c.l.b16 %v393
        %v1541 = vunpack.c.l.b16 %v394
        %v1542 = vunpack.c.l.b16 %v395
        %v1543 = vunpack.c.l.b16 %v396
        %v1544 = vunpack.c.l.b16 %v397
        %v1545 = vunpack.c.l.b16 %v398
        %v1546 = vunpack.c.l.b16 %v399
        %v1547 = vunpack.c.l.b16 %v400
        %v1548 = vunpack.c.l.b16 %v401
        %v1549 = vunpack.c.l.b16 %v402
        %v1550 = vunpack.c.l.b16 %v403
        %v1551 = vunpack.c.l.b16 %v404
        %v1552 = vunpack.c.l.b16 %v405
        %v1553 = vunpack.c.l.b16 %v406
        %v1554 = vunpack.c.l.b16 %v407
        %v1555 = vunpack.c.l.b16 %v408
        %v1556 = vunpack.c.l.b16 %v409
        %v1557 = vunpack.c.l.b16 %v410
        %v1558 = vunpack.c.l.b16 %v411
        %v1559 = vunpack.c.l.b16 %v412
        %v1560 = vunpack.c.l.b16 %v413
        %v1561 = vunpack.c.l.b16 %v414
        %v1562 = vunpack.c.l.b16 %v415
        %v1563 = vunpack.c.l.b16 %v416
        %v1564 = vunpack.c.l.b16 %v417
        %v1565 = vunpack.c.l.b16 %v418
        %v1566 = vunpack.c.l.b16 %v419
        %v1567 = vunpack.c.l.b16 %v420
        %v1568 = vunpack.c.l.b16 %v421
        %v1569 = vunpack.c.l.b16 %v422
        %v1570 = vunpack.c.l.b16 %v423
        %v1571 = vunpack.c.l.b16 %v424
        %v1572 = vunpack.c.l.b16 %v425
        %v1573 = vunpack.c.l.b16 %v426
        %v1574 = vunpack.c.l.b16 %v427
        %v1575 = vunpack.c.l.b16 %v428
        %v1576 = vunpack.c.l.b16 %v429
        %v1577 = vunpack.c.l.b16 %v430
        %v1578 = vunpack.c.l.b16 %v431
        %v1579 = vunpack.c.l.b16 %v432
        %v1580 = vunpack.c.l.b16 %v433
        %v1581 = vunpack.c.l.b16 %v434
        %v1582 = vunpack.c.l.b16 %v435
        %v1583 = vunpack.c.l.b16 %v436
        %v1584 = vunpack.c.l.b16 %v437
        %v1585 = vunpack.c.l.b16 %v438
        %v1586 = vunpack.c.l.b16 %v439
        %v1587 = vunpack.c.l.b16 %v440
        %v1588 = vunpack.c.l.b16 %v441
        %v1589 = vunpack.c.l.b16 %v442
        %v1590 = vunpack.c.l.b16 %v443
        %v1591 = vunpack.c.l.b16 %v444
        %v1592 = vunpack.c.l.b16 %v445
        %v1593 = vunpack.c.l.b16 %v446
        %v1594 = vunpack.c.l.b16 %v447
        %v1595 = vunpack.c.l.b16 %v448
        %v1596 = vunpack.c.l.b16 %v449
        %v1597 = vunpack.c.l.b16 %v450
        %v1598 = vunpack.c.l.b16 %v451
        %v1599 = vunpack.c.l.b16 %v452
        %v1600 = vunpack.c.l.b16 %v453
        %v1601 = vunpack.c.l.b16 %v454
        %v1602 = vunpack.c.l.b16 %v455
        %v1603 = vunpack.c.l.b16 %v456
        %v1604 = vunpack.c.l.b16 %v457
        %v1605 = vunpack.c.l.b16 %v458
        %v1606 = vunpack.c.l.b16 %v459
        %v1607 = vunpack.c.l.b16 %v460
        %v1608 = vunpack.c.l.b16 %v461
        %v1609 = vunpack.c.l.b16 %v462
        %v1610 = vunpack.c.l.b16 %v463
        %v1611 = vunpack.c.l.b16 %v464
        %v1612 = vunpack.c.l.b16 %v465
        %v1613 = vunpack.c.l.b16 %v466
        %v1614 = vunpack.c.l.b16 %v467
        %v1615 = vunpack.c.l.b16 %v468
        %v1616 = vunpack.c.l.b16 %v469
        %v1617 = vunpack.c.l.b16 %v470
        %v1618 = vunpack.c.l.b16 %v471
        %v1619 = vunpack.c.l.b16 %v472
        %v1620 = vunpack.c.l.b16 %v473
        %v1621 = vunpack.c.l.b16 %v474
        %v1622 = vunpack.c.l.b16 %v475
        %v1623 = vunpack.c.l.b16 %v476
        %v1624 = vunpack.c.l.b16 %v477
        %v1625 = vunpack.c.l.b16 %v478
        %v1626 = vunpack.c.l.b16 %v479
        %v1627 = vunpack.c.l.b16 %v480
        %v1628 = vunpack.c.l.b16 %v481
        %v1629 = vunpack.c.l.b16 %v482
        %v1630 = vunpack.c.l.b16 %v483
        %v1631 = vunpack.c.l.b16 %v484
        %v1632 = vunpack.c.l.b16 %v485
        %v1633 = vunpack.c.l.b16 %v486
        %v1634 = vunpack.c.l.b16 %v487
        %v1635 = vunpack.c.l.b16 %v488
        %v1636 = vunpack.c.l.b16 %v489
        %v1637 = vunpack.c.l.b16 %v490
        %v1638 = vunpack.c.l.b16 %v491
        %v1639 = vunpack.c.l.b16 %v492
        %v1640 = vunpack.c.l.b16 %v493
        %v1641 = vunpack.c.l.b16 %v494
        %v1642 = vunpack.c.l.b16 %v495
        %v1643 = vunpack.c.l.b16 %v496
        %v1644 = vunpack.c.l.b16 %v497
        %v1645 = vunpack.c.l.b16 %v498
        %v1646 = vunpack.c.l.b16 %v499
        %v1647 = vunpack.c.l.b16 %v500
        %v1648 = vunpack.c.l.b16 %v501
        %v1649 = vunpack.c.l.b16 %v502
        %v1650 = vunpack.c.l.b16 %v503
        %v1651 = vunpack.c.l.b16 %v504
        %v1652 = vunpack.c.l.b16 %v505
        %v1653 = vunpack.c.l.b16 %v506
        %v1654 = vunpack.c.l.b16 %v507
        %v1655 = vunpack.c.l.b16 %v508
        %v1656 = vunpack.c.l.b16 %v509
        %v1657 = vunpack.c.l.b16 %v510
        %v1658 = vunpack.c.l.b16 %v511
        %v1659 = vunpack.c.l.b16 %v512
        %v1660 = vunpack.c.l.b16 %v513
        %v1661 = vunpack.c.l.b16 %v514
        %v1662 = vunpack.c.l.b16 %v515
        %v1663 = vunpack.c.l.b16 %v516
        %v1664 = vunpack.c.l.b16 %v517
        %v1665 = vunpack.c.l.b16 %v518
        %v1666 = vunpack.c.l.b16 %v519
        %v1667 = vunpack.c.l.b16 %v520
        %v1668 = vunpack.c.l.b16 %v521
        %v1669 = vunpack.c.l.b16 %v522
        %v1670 = vunpack.c.l.b16 %v523
        %v1671 = vunpack.c.l.b16 %v524
        %v1672 = vunpack.c.l.b16 %v525
        %v1673 = vunpack.c.l.b16 %v526
        %v1674 = vunpack.c.l.b16 %v527
        %v1675 = vunpack.c.l.b16 %v528
        %v1676 = vunpack.c.l.b16 %v529
        %v1677 = vunpack.c.l.b16 %v530
        %v1678 = vunpack.c.l.b16 %v531
        %v1679 = vunpack.c.l.b16 %v532
        %v1680 = vunpack.c.l.b16 %v533
        %v1681 = vunpack.c.l.b16 %v534
        %v1682 = vunpack.c.l.b16 %v535
        %v1683 = vunpack.c.l.b16 %v536
        %v1684 = vunpack.c.l.b16 %v537
        %v1685 = vunpack.c.l.b16 %v538
        %v1686 = vunpack.c.l.b16 %v539
        %v1687 = vunpack.c.l.b16 %v540
        %v1688 = vunpack.c.l.b16 %v541
        %v1689 = vunpack.c.l.b16 %v542
        %v1690 = vunpack.c.l.b16 %v543
        %v1691 = vunpack.c.l.b16 %v544
        %v1692 = vunpack.c.l.b16 %v545
        %v1693 = vunpack.c.l.b16 %v546
        %v1694 = vunpack.c.l.b16 %v547
        %v1695 = vunpack.c.l.b16 %v548
        %v1696 = vunpack.c.l.b16 %v549
        %v1697 = vunpack.c.l.b16 %v550
        %v1698 = vunpack.c.l.b16 %v551
        %v1699 = vunpack.c.l.b16 %v552
        %v1700 = vunpack.c.l.b16 %v553
        %v1701 = vunpack.c.l.b16 %v554
        %v1702 = vunpack.c.l.b16 %v555
        %v1703 = vunpack.c.l.b16 %v556
        %v1704 = vunpack.c.l.b16 %v557
        %v1705 = vunpack.c.l.b16 %v558
        %v1706 = vunpack.c.l.b16 %v559
        %v1707 = vunpack.c.l.b16 %v560
        %v1708 = vunpack.c.l.b16 %v561
        %v1709 = vunpack.c.l.b16 %v562
        %v1710 = vunpack.c.l.b16 %v563
        %v1711 = vunpack.c.l.b16 %v564
        %v1712 = vunpack.c.l.b16 %v565
        %v1713 = vunpack.c.l.b16 %v566
        %v1714 = vunpack.c.l.b16 %v567
        %v1715 = vunpack.c.l.b16 %v568
        %v1716 = vunpack.c.l.b16 %v569
        %v1717 = vunpack.c.l.b16 %v570
        %v1718 = vunpack.c.l.b16 %v571
        %v1719 = vunpack.c.l.b16 %v572
        %v1720 = vunpack.c.l.b16 %v573
        %v1721 = vunpack.c.l.b16 %v574
        %v1722 = vunpack.c.l.b16 %v575
        %v1723 = vunpack.c.l.b16 %v576
        %v1724 = vunpack.c.l.b16 %v577
        %v1725 = vunpack.c.l.b16 %v578
        %v1726 = vunpack.c.l.b16 %v579
        %v1727 = vunpack.c.l.b16 %v580
        %v1728 = vunpack.c.l.b16 %v581
        %v1729 = vunpack.c.l.b16 %v582
        %v1730 = vunpack.c.l.b16 %v583
        %v1731 = vunpack.c.l.b16 %v584
        %v1732 = vunpack.c.l.b16 %v585
        %v1733 = vunpack.c.l.b16 %v586
        %v1734 = vunpack.c.l.b16 %v587
        %v1735 = vunpack.c.l.b16 %v588
        %v1736 = vunpack.c.l.b16 %v589
        %v1737 = vunpack.c.l.b16 %v590
        %v1738 = vunpack.c.l.b16 %v591
        %v1739 = vunpack.c.l.b16 %v592
        %v1740 = vunpack.c.l.b16 %v593
        %v1741 = vunpack.c.l.b16 %v594
        %v1742 = vunpack.c.l.b16 %v595
        %v1743 = vunpack.c.l.b16 %v596
        %v1744 = vunpack.c.l.b16 %v597
        %v1745 = vunpack.c.l.b16 %v598
        %v1746 = vunpack.c.l.b16 %v599
        %v1747 = vunpack.c.l.b16 %v600
        %v1748 = vunpack.c.l.b16 %v601
        %v1749 = vunpack.c.l.b16 %v602
        %v1750 = vunpack.c.l.b16 %v603
        %v1751 = vunpack.c.l.b16 %v604
        %v1752 = vunpack.c.l.b16 %v605
        %v1753 = vunpack.c.l.b16 %v606
        %v1754 = vunpack.c.l.b16 %v607
        %v1755 = vunpack.c.l.b16 %v608
        %v1756 = vunpack.c.l.b16 %v609
        %v1757 = vunpack.c.l.b16 %v610
        %v1758 = vunpack.c.l.b16 %v611
        %v1759 = vunpack.c.l.b16 %v612
        %v1760 = vunpack.c.l.b16 %v613
        %v1761 = vunpack.c.l.b16 %v614
        %v1762 = vunpack.c.l.b16 %v615
        %v1763 = vunpack.c.l.b16 %v616
        %v1764 = vunpack.c.l.b16 %v617
        %v1765 = vunpack.c.l.b16 %v618
        %v1766 = vunpack.c.l.b16 %v619
        %v1767 = vunpack.c.l.b16 %v620
        %v1768 = vunpack.c.l.b16 %v621
        %v1769 = vunpack.c.l.b16 %v622
        %v1770 = vunpack.c.l.b16 %v623
        %v1771 = vunpack.c.l.b16 %v624
        %v1772 = vunpack.c.l.b16 %v625
        %v1773 = vunpack.c.l.b16 %v626
        %v1774 = vunpack.c.l.b16 %v627
        %v1775 = vunpack.c.l.b16 %v628
        %v1776 = vunpack.c.l.b16 %v629
        %v1777 = vunpack.c.l.b16 %v630
        %v1778 = vunpack.c.l.b16 %v631
        %v1779 = vunpack.c.l.b16 %v632
        %v1780 = vunpack.c.l.b16 %v633
        %v1781 = vunpack.c.l.b16 %v634
        %v1782 = vunpack.c.l.b16 %v635
        %v1783 = vunpack.c.l.b16 %v636
        %v1784 = vunpack.c.l.b16 %v637
        %v1785 = vunpack.c.l.b16 %v638
        %v1786 = vunpack.c.l.b16 %v639
        %v1787 = vunpack.c.l.b16 %v640
        %v1788 = vunpack.c.l.b16 %v641
        %v1789 = vunpack.c.l.b16 %v642
        %v1790 = vunpack.c.l.b16 %v643
        %v1791 = vunpack.c.l.b16 %v644
        %v1792 = vunpack.c.l.b16 %v645
        %v1793 = vunpack.c.l.b16 %v646
        %v1794 = vunpack.c.l.b16 %v647
        %v1795 = vunpack.c.l.b16 %v648
        %v1796 = vunpack.c.l.b16 %v649
        %v1797 = vunpack.c.l.b16 %v650
        %v1798 = vunpack.c.l.b16 %v651
        %v1799 = vunpack.c.l.b16 %v652
        %v1800 = vunpack.c.l.b16 %v653
        %v1801 = vunpack.c.l.b16 %v654
        %v1802 = vunpack.c.l.b16 %v655
        %v1803 = vunpack.c.l.b16 %v656
        %v1804 = vunpack.c.l.b16 %v657
        %v1805 = vunpack.c.l.b16 %v658
        %v1806 = vunpack.c.l.b16 %v659
        %v1807 = vunpack.c.l.b16 %v660
        %v1808 = vunpack.c.l.b16 %v661
        %v1809 = vunpack.c.l.b16 %v662
        %v1810 = vunpack.c.l.b16 %v663
        %v1811 = vunpack.c.l.b16 %v664
        %v1812 = vunpack.c.l.b16 %v665
        %v1813 = vunpack.c.l.b16 %v666
        %v1814 = vunpack.c.l.b16 %v667
        %v1815 = vunpack.c.l.b16 %v668
        %v1816 = vunpack.c.l.b16 %v669
        %v1817 = vunpack.c.l.b16 %v670
        %v1818 = vunpack.c.l.b16 %v671
        %v1819 = vunpack.c.l.b16 %v672
        %v1820 = vunpack.c.l.b16 %v673
        %v1821 = vunpack.c.l.b16 %v674
        %v1822 = vunpack.c.l.b16 %v675
        %v1823 = vunpack.c.l.b16 %v676
        %v1824 = vunpack.c.l.b16 %v677
        %v1825 = vunpack.c.l.b16 %v678
        %v1826 = vunpack.c.l.b16 %v679
        %v1827 = vunpack.c.l.b16 %v680
        %v1828 = vunpack.c.l.b16 %v681
        %v1829 = vunpack.c.l.b16 %v682
        %v1830 = vunpack.c.l.b16 %v683
        %v1831 = vunpack.c.l.b16 %v684
        %v1832 = vunpack.c.l.b16 %v685
        %v1833 = vunpack.c.l.b16 %v686
        %v1834 = vunpack.c.l.b16 %v687
        %v1835 = vunpack.c.l.b16 %v688
        %v1836 = vunpack.c.l.b16 %v689
        %v1837 = vunpack.c.l.b16 %v690
        %v1838 = vunpack.c.l.b16 %v691
        %v1839 = vunpack.c.l.b16 %v692
        %v1840 = vunpack.c.l.b16 %v693
        %v1841 = vunpack.c.l.b16 %v694
        %v1842 = vunpack.c.l.b16 %v695
        %v1843 = vunpack.c.l.b16 %v696
        %v1844 = vunpack.c.l.b16 %v697
        %v1845 = vunpack.c.l.b16 %v698
        %v1846 = vunpack.c.l.b16 %v699
        %v1847 = vunpack.c.l.b16 %v700
        %v1848 = vunpack.c.l.b16 %v701
        %v1849 = vunpack.c.l.b16 %v702
        %v1850 = vunpack.c.l.b16 %v703
        %v1851 = vunpack.c.l.b16 %v704
        %v1852 = vunpack.c.l.b16 %v705
        %v1853 = vunpack.c.l.b16 %v706
        %v1854 = vunpack.c.l.b16 %v707
        %v1855 = vpack.c.b16 %v1392, %v1391
        %v1856 = vpack.c.b16 %v1394, %v1393
        %v1857 = vpack.c.b16 %v1396, %v1395
        %v1858 = vpack.c.b16 %v1398, %v1397
        %v1859 = vpack.c.b16 %v1400, %v1399
        %v1860 = vpack.c.b16 %v1402, %v1401
        %v1861 = vpack.c.b16 %v1404, %v1403
        %v1862 = vpack.c.b16 %v1406, %v1405
        %v1863 = vpack.c.b16 %v1408, %v1407
        %v1864 = vpack.c.b16 %v1410, %v1409
        %v1865 = vpack.c.b16 %v1412, %v1411
        %v1866 = vpack.c.b16 %v1414, %v1413
        %v1867 = vpack.c.b16 %v1416, %v1415
        %v1868 = vpack.c.b16 %v1418, %v1417
        %v1869 = vpack.c.b16 %v1420, %v1419
        %v1870 = vpack.c.b16 %v1422, %v1421
        %v1871 = vpack.c.b16 %v1424, %v1423
        %v1872 = vpack.c.b16 %v1426, %v1425
        %v1873 = vpack.c.b16 %v1428, %v1427
        %v1874 = vpack.c.b16 %v1430, %v1429
        %v1875 = vpack.c.b16 %v1432, %v1431
        %v1876 = vpack.c.b16 %v1434, %v1433
        %v1877 = vpack.c.b16 %v1436, %v1435
        %v1878 = vpack.c.b16 %v1438, %v1437
        %v1879 = vpack.c.b16 %v1440, %v1439
        %v1880 = vpack.c.b16 %v1442, %v1441
        %v1881 = vpack.c.b16 %v1444, %v1443
        %v1882 = vpack.c.b16 %v1446, %v1445
        %v1883 = vpack.c.b16 %v1448, %v1447
        %v1884 = vpack.c.b16 %v1450, %v1449
        %v1885 = vpack.c.b16 %v1452, %v1451
        %v1886 = vpack.c.b16 %v1454, %v1453
        %v1887 = vpack.c.b16 %v1456, %v1455
        %v1888 = vpack.c.b16 %v1458, %v1457
        %v1889 = vpack.c.b16 %v1460, %v1459
        %v1890 = vpack.c.b16 %v1462, %v1461
        %v1891 = vpack.c.b16 %v1464, %v1463
        %v1892 = vpack.c.b16 %v1466, %v1465
        %v1893 = vpack.c.b16 %v1468, %v1467
        %v1894 = vpack.c.b16 %v1470, %v1469
        %v1895 = vpack.c.b16 %v1472, %v1471
        %v1896 = vpack.c.b16 %v1474, %v1473
        %v1897 = vpack.c.b16 %v1476, %v1475
        %v1898 = vpack.c.b16 %v1478, %v1477
        %v1899 = vpack.c.b16 %v1480, %v1479
        %v1900 = vpack.c.b16 %v1482, %v1481
        %v1901 = vpack.c.b16 %v1484, %v1483
        %v1902 = vpack.c.b16 %v1486, %v1485
        %v1903 = vpack.c.b16 %v1488, %v1487
        %v1904 = vpack.c.b16 %v1490, %v1489
        %v1905 = vpack.c.b16 %v1492, %v1491
        %v1906 = vpack.c.b16 %v1494, %v1493
        %v1907 = vpack.c.b16 %v1496, %v1495
        %v1908 = vpack.c.b16 %v1498, %v1497
        %v1909 = vpack.c.b16 %v1500, %v1499
        %v1910 = vpack.c.b16 %v1502, %v1501
        %v1911 = vpack.c.b16 %v1504, %v1503
        %v1912 = vpack.c.b16 %v1506, %v1505
        %v1913 = vpack.c.b16 %v1508, %v1507
        %v1914 = vpack.c.b16 %v1510, %v1509
        %v1915 = vpack.c.b16 %v1512, %v1511
        %v1916 = vpack.c.b16 %v1514, %v1513
        %v1917 = vpack.c.b16 %v1516, %v1515
        %v1918 = vpack.c.b16 %v1518, %v1517
        %v1919 = vpack.c.b16 %v1520, %v1519
        %v1920 = vpack.c.b16 %v1522, %v1521
        %v1921 = vpack.c.b16 %v1524, %v1523
        %v1922 = vpack.c.b16 %v1526, %v1525
        %v1923 = vpack.c.b16 %v1528, %v1527
        %v1924 = vpack.c.b16 %v1530, %v1529
        %v1925 = vpack.c.b16 %v1532, %v1531
        %v1926 = vpack.c.b16 %v1534, %v1533
        %v1927 = vpack.c.b16 %v1536, %v1535
        %v1928 = vpack.c.b16 %v1538, %v1537
        %v1929 = vpack.c.b16 %v1540, %v1539
        %v1930 = vpack.c.b16 %v1542, %v1541
        %v1931 = vpack.c.b16 %v1544, %v1543
        %v1932 = vpack.c.b16 %v1546, %v1545
        %v1933 = vpack.c.b16 %v1548, %v1547
        %v1934 = vpack.c.b16 %v1550, %v1549
        %v1935 = vpack.c.b16 %v1552, %v1551
        %v1936 = vpack.c.b16 %v1554, %v1553
        %v1937 = vpack.c.b16 %v1556, %v1555
        %v1938 = vpack.c.b16 %v1558, %v1557
        %v1939 = vpack.c.b16 %v1560, %v1559
        %v1940 = vpack.c.b16 %v1562, %v1561
        %v1941 = vpack.c.b16 %v1564, %v1563
        %v1942 = vpack.c.b16 %v1566, %v1565
        %v1943 = vpack.c.b16 %v1568, %v1567
        %v1944 = vpack.c.b16 %v1570, %v1569
        %v1945 = vpack.c.b16 %v1572, %v1571
        %v1946 = vpack.c.b16 %v1574, %v1573
        %v1947 = vpack.c.b16 %v1576, %v1575
        %v1948 = vpack.c.b16 %v1578, %v1577
        %v1949 = vpack.c.b16 %v1580, %v1579
        %v1950 = vpack.c.b16 %v1582, %v1581
        %v1951 = vpack.c.b16 %v1584, %v1583
        %v1952 = vpack.c.b16 %v1586, %v1585
        %v1953 = vpack.c.b16 %v1588, %v1587
        %v1954 = vpack.c.b16 %v1590, %v1589
        %v1955 = vpack.c.b16 %v1592, %v1591
        %v1956 = vpack.c.b16 %v1594, %v1593
        %v1957 = vpack.c.b16 %v1596, %v1595
        %v1958 = vpack.c.b16 %v1598, %v1597
        %v1959 = vpack.c.b16 %v1600, %v1599
        %v1960 = vpack.c.b16 %v1602, %v1601
        %v1961 = vpack.c.b16 %v1604, %v1603
        %v1962 = vpack.c.b16 %v1606, %v1605
        %v1963 = vpack.c.b16 %v1608, %v1607
        %v1964 = vpack.c.b16 %v1610, %v1609
        %v1965 = vpack.c.b16 %v1612, %v1611
        %v1966 = vpack.c.b16 %v1614, %v1613
        %v1967 = vpack.c.b16 %v1616, %v1615
        %v1968 = vpack.c.b16 %v1618, %v1617
        %v1969 = vpack.c.b16 %v1620, %v1619
        %v1970 = vpack.c.b16 %v1622, %v1621
        %v1971 = vpack.c.b16 %v1624, %v1623
        %v1972 = vpack.c.b16 %v1626, %v1625
        %v1973 = vpack.c.b16 %v1628, %v1627
        %v1974 = vpack.c.b16 %v1630, %v1629
        %v1975 = vpack.c.b16 %v1632, %v1631
        %v1976 = vpack.c.b16 %v1634, %v1633
        %v1977 = vpack.c.b16 %v1636, %v1635
        %v1978 = vpack.c.b16 %v1638, %v1637
        %v1979 = vpack.c.b16 %v1640, %v1639
        %v1980 = vpack.c.b16 %v1642, %v1641
        %v1981 = vpack.c.b16 %v1644, %v1643
        %v1982 = vpack.c.b16 %v1646, %v1645
        %v1983 = vpack.c.b16 %v1648, %v1647
        %v1984 = vpack.c.b16 %v1650, %v1649
        %v1985 = vpack.c.b16 %v1652, %v1651
        %v1986 = vpack.c.b16 %v1654, %v1653
        %v1987 = vpack.c.b16 %v1656, %v1655
        %v1988 = vpack.c.b16 %v1658, %v1657
        %v1989 = vpack.c.b16 %v1660, %v1659
        %v1990 = vpack.c.b16 %v1662, %v1661
        %v1991 = vpack.c.b16 %v1664, %v1663
        %v1992 = vpack.c.b16 %v1666, %v1665
        %v1993 = vpack.c.b16 %v1668, %v1667
        %v1994 = vpack.c.b16 %v1670, %v1669
        %v1995 = vpack.c.b16 %v1672, %v1671
        %v1996 = vpack.c.b16 %v1674, %v1673
        %v1997 = vpack.c.b16 %v1676, %v1675
        %v1998 = vpack.c.b16 %v1678, %v1677
        %v1999 = vpack.c.b16 %v1680, %v1679
        %v2000 = vpack.c.b16 %v1682, %v1681
        %v2001 = vpack.c.b16 %v1684, %v1683
        %v2002 = vpack.c.b16 %v1686, %v1685
        %v2003 = vpack.c.b16 %v1688, %v1687
        %v2004 = vpack.c.b16 %v1690, %v1689
        %v2005 = vpack.c.b16 %v1692, %v1691
        %v2006 = vpack.c.b16 %v1694, %v1693
        %v2007 = vpack.c.b16 %v1696, %v1695
        %v2008 = vpack.c.b16 %v1698, %v1697
        %v2009 = vpack.c.b16 %v1700, %v1699
        %v2010 = vpack.c.b16 %v1702, %v1701
        %v2011 = vpack.c.b16 %v1704, %v1703
        %v2012 = vpack.c.b16 %v1706, %v1705
        %v2013 = vpack.c.b16 %v1708, %v1707
        %v2014 = vpack.c.b16 %v1710, %v1709
        %v2015 = vpack.c.b16 %v1712, %v1711
        %v2016 = vpack.c.b16 %v1714, %v1713
        %v2017 = vpack.c.b16 %v1716, %v1715
        %v2018 = vpack.c.b16 %v1718, %v1717
        %v2019 = vpack.c.b16 %v1720, %v1719
        %v2020 = vpack.c.b16 %v1722, %v1721
        %v2021 = vpack.c.b16 %v1724, %v1723
        %v2022 = vpack.c.b16 %v1726, %v1725
        %v2023 = vpack.c.b16 %v1728, %v1727
        %v2024 = vpack.c.b16 %v1730, %v1729
        %v2025 = vpack.c.b16 %v1732, %v1731
        %v2026 = vpack.c.b16 %v1734, %v1733
        %v2027 = vpack.c.b16 %v1736, %v1735
        %v2028 = vpack.c.b16 %v1738, %v1737
        %v2029 = vpack.c.b16 %v1740, %v1739
        %v2030 = vpack.c.b16 %v1742, %v1741
        %v2031 = vpack.c.b16 %v1744, %v1743
        %v2032 = vpack.c.b16 %v1746, %v1745
        %v2033 = vpack.c.b16 %v1748, %v1747
        %v2034 = vpack.c.b16 %v1750, %v1749
        %v2035 = vpack.c.b16 %v1752, %v1751
        %v2036 = vpack.c.b16 %v1754, %v1753
        %v2037 = vpack.c.b16 %v1756, %v1755
        %v2038 = vpack.c.b16 %v1758, %v1757
        %v2039 = vpack.c.b16 %v1760, %v1759
        %v2040 = vpack.c.b16 %v1762, %v1761
        %v2041 = vpack.c.b16 %v1764, %v1763
        %v2042 = vpack.c.b16 %v1766, %v1765
        %v2043 = vpack.c.b16 %v1768, %v1767
        %v2044 = vpack.c.b16 %v1770, %v1769
        %v2045 = vpack.c.b16 %v1772, %v1771
        %v2046 = vpack.c.b16 %v1774, %v1773
        %v2047 = vpack.c.b16 %v1776, %v1775
        %v2048 = vpack.c.b16 %v1778, %v1777
        %v2049 = vpack.c.b16 %v1780, %v1779
        %v2050 = vpack.c.b16 %v1782, %v1781
        %v2051 = vpack.c.b16 %v1784, %v1783
        %v2052 = vpack.c.b16 %v1786, %v1785
        %v2053 = vpack.c.b16 %v1788, %v1787
        %v2054 = vpack.c.b16 %v1790, %v1789
        %v2055 = vpack.c.b16 %v1792, %v1791
        %v2056 = vpack.c.b16 %v1794, %v1793
        %v2057 = vpack.c.b16 %v1796, %v1795
        %v2058 = vpack.c.b16 %v1798, %v1797
        %v2059 = vpack.c.b16 %v1800, %v1799
        %v2060 = vpack.c.b16 %v1802, %v1801
        %v2061 = vpack.c.b16 %v1804, %v1803
        %v2062 = vpack.c.b16 %v1806, %v1805
        %v2063 = vpack.c.b16 %v1808, %v1807
        %v2064 = vpack.c.b16 %v1810, %v1809
        %v2065 = vpack.c.b16 %v1812, %v1811
        %v2066 = vpack.c.b16 %v1814, %v1813
        %v2067 = vpack.c.b16 %v1816, %v1815
        %v2068 = vpack.c.b16 %v1818, %v1817
        %v2069 = vpack.c.b16 %v1820, %v1819
        %v2070 = vpack.c.b16 %v1822, %v1821
        %v2071 = vpack.c.b16 %v1824, %v1823
        %v2072 = vpack.c.b16 %v1826, %v1825
        %v2073 = vpack.c.b16 %v1828, %v1827
        %v2074 = vpack.c.b16 %v1830, %v1829
        %v2075 = vpack.c.b16 %v1832, %v1831
        %v2076 = vpack.c.b16 %v1834, %v1833
        %v2077 = vpack.c.b16 %v1836, %v1835
        %v2078 = vpack.c.b16 %v1838, %v1837
        %v2079 = vpack.c.b16 %v1840, %v1839
        %v2080 = vpack.c.b16 %v1842, %v1841
        %v2081 = vpack.c.b16 %v1844, %v1843
        %v2082 = vpack.c.b16 %v1846, %v1845
        %v2083 = vpack.c.b16 %v1848, %v1847
        %v2084 = vpack.c.b16 %v1850, %v1849
        %v2085 = vpack.c.b16 %v1852, %v1851
        %v2086 = vpack.c.b16 %v1854, %v1853
        %2319 = vmatprep.subr.bf16.mxu0 0
        %2320 = vmatpush1.bf16.msra.mxu0 %v1862
        %2321 = vmatprep.subr.bf16.mxu0 0
        %2322 = vmatpush1.bf16.msra.mxu0 %v1861
        %2323 = vmatprep.subr.bf16.mxu0 0
        %2324 = vmatpush1.bf16.msra.mxu0 %v1860
        %2325 = vmatprep.subr.bf16.mxu0 0
        %2326 = vmatpush1.bf16.msra.mxu0 %v1859
        %2327 = vmatprep.subr.bf16.mxu0 0
        %2328 = vmatpush1.bf16.msra.mxu0 %v1858
        %2329 = vmatprep.subr.bf16.mxu0 0
        %2330 = vmatpush1.bf16.msra.mxu0 %v1857
        %2331 = vmatprep.subr.bf16.mxu0 0
        %2332 = vmatpush1.bf16.msra.mxu0 %v1856
        %2333 = vmatprep.subr.bf16.mxu0 0
        %2334 = vmatpush1.bf16.msra.mxu0 %v1855
        %2335 = vmatprep.subr.bf16.mxu0 0
        %2336 = vmatpush2.bf16.msra.mxu0 %v1870
        %2337 = vmatprep.subr.bf16.mxu0 0
        %2338 = vmatpush2.bf16.msra.mxu0 %v1869
        %2339 = vmatprep.subr.bf16.mxu0 0
        %2340 = vmatpush2.bf16.msra.mxu0 %v1868
        %2341 = vmatprep.subr.bf16.mxu0 0
        %2342 = vmatpush2.bf16.msra.mxu0 %v1867
        %2343 = vmatprep.subr.bf16.mxu0 0
        %2344 = vmatpush2.bf16.msra.mxu0 %v1866
        %2345 = vmatprep.subr.bf16.mxu0 0
        %2346 = vmatpush2.bf16.msra.mxu0 %v1865
        %2347 = vmatprep.subr.bf16.mxu0 0
        %2348 = vmatpush2.bf16.msra.mxu0 %v1864
        %2349 = vmatprep.subr.bf16.mxu0 0
        %2350 = vmatpush2.bf16.msra.mxu0 %v1863
        %2351 = vmatprep.mubr.bf16.mxu0 %v749
        %2352 = vmatmul.mubr.bf16.gmra.mxu0 %v735
        %v2353 = vpop.f32.mrf.mxu0
        %v2354 = vadd.f32 0.0, %v2353
        %v2355 = vpop.f32.mrf.mxu0
        %v2356 = vpop.f32.mrf.mxu0
        %v2357 = vpop.f32.mrf.mxu0
        %2358 = vdwg.mxu0
        %2359 = vmatprep.subr.bf16.mxu0 0
        %2360 = vmatpush1.bf16.msra.mxu0 %v1878
        %2361 = vmatprep.subr.bf16.mxu0 0
        %2362 = vmatpush1.bf16.msra.mxu0 %v1877
        %2363 = vmatprep.subr.bf16.mxu0 0
        %2364 = vmatpush1.bf16.msra.mxu0 %v1876
        %2365 = vmatprep.subr.bf16.mxu0 0
        %2366 = vmatpush1.bf16.msra.mxu0 %v1875
        %2367 = vmatprep.subr.bf16.mxu0 0
        %2368 = vmatpush1.bf16.msra.mxu0 %v1874
        %2369 = vmatprep.subr.bf16.mxu0 0
        %2370 = vmatpush1.bf16.msra.mxu0 %v1873
        %2371 = vmatprep.subr.bf16.mxu0 0
        %2372 = vmatpush1.bf16.msra.mxu0 %v1872
        %2373 = vmatprep.subr.bf16.mxu0 0
        %2374 = vmatpush1.bf16.msra.mxu0 %v1871
        %2375 = vmatprep.subr.bf16.mxu0 0
        %2376 = vmatpush2.bf16.msra.mxu0 %v1886
        %2377 = vmatprep.subr.bf16.mxu0 0
        %2378 = vmatpush2.bf16.msra.mxu0 %v1885
        %2379 = vmatprep.subr.bf16.mxu0 0
        %2380 = vmatpush2.bf16.msra.mxu0 %v1884
        %2381 = vmatprep.subr.bf16.mxu0 0
        %2382 = vmatpush2.bf16.msra.mxu0 %v1883
        %2383 = vmatprep.subr.bf16.mxu0 0
        %2384 = vmatpush2.bf16.msra.mxu0 %v1882
        %2385 = vmatprep.subr.bf16.mxu0 0
        %2386 = vmatpush2.bf16.msra.mxu0 %v1881
        %2387 = vmatprep.subr.bf16.mxu0 0
        %2388 = vmatpush2.bf16.msra.mxu0 %v1880
        %2389 = vmatprep.subr.bf16.mxu0 0
        %2390 = vmatpush2.bf16.msra.mxu0 %v1879
        %2391 = vmatprep.mubr.bf16.mxu0 %v759
        %2392 = vmatmul.mubr.bf16.gmra.mxu0 %v757
        %v2393 = vpop.f32.mrf.mxu0
        %v2394 = vadd.f32 %v2354, %v2393
        %v2395 = vpop.f32.mrf.mxu0
        %v2396 = vpop.f32.mrf.mxu0
        %v2397 = vpop.f32.mrf.mxu0
        %2398 = vdwg.mxu0
        %2399 = vmatprep.subr.bf16.mxu0 0
        %2400 = vmatpush1.bf16.msra.mxu0 %v1894
        %2401 = vmatprep.subr.bf16.mxu0 0
        %2402 = vmatpush1.bf16.msra.mxu0 %v1893
        %2403 = vmatprep.subr.bf16.mxu0 0
        %2404 = vmatpush1.bf16.msra.mxu0 %v1892
        %2405 = vmatprep.subr.bf16.mxu0 0
        %2406 = vmatpush1.bf16.msra.mxu0 %v1891
        %2407 = vmatprep.subr.bf16.mxu0 0
        %2408 = vmatpush1.bf16.msra.mxu0 %v1890
        %2409 = vmatprep.subr.bf16.mxu0 0
        %2410 = vmatpush1.bf16.msra.mxu0 %v1889
        %2411 = vmatprep.subr.bf16.mxu0 0
        %2412 = vmatpush1.bf16.msra.mxu0 %v1888
        %2413 = vmatprep.subr.bf16.mxu0 0
        %2414 = vmatpush1.bf16.msra.mxu0 %v1887
        %2415 = vmatprep.subr.bf16.mxu0 0
        %2416 = vmatpush2.bf16.msra.mxu0 %v1902
        %2417 = vmatprep.subr.bf16.mxu0 0
        %2418 = vmatpush2.bf16.msra.mxu0 %v1901
        %2419 = vmatprep.subr.bf16.mxu0 0
        %2420 = vmatpush2.bf16.msra.mxu0 %v1900
        %2421 = vmatprep.subr.bf16.mxu0 0
        %2422 = vmatpush2.bf16.msra.mxu0 %v1899
        %2423 = vmatprep.subr.bf16.mxu0 0
        %2424 = vmatpush2.bf16.msra.mxu0 %v1898
        %2425 = vmatprep.subr.bf16.mxu0 0
        %2426 = vmatpush2.bf16.msra.mxu0 %v1897
        %2427 = vmatprep.subr.bf16.mxu0 0
        %2428 = vmatpush2.bf16.msra.mxu0 %v1896
        %2429 = vmatprep.subr.bf16.mxu0 0
        %2430 = vmatpush2.bf16.msra.mxu0 %v1895
        %2431 = vmatprep.mubr.bf16.mxu0 %v756
        %2432 = vmatmul.mubr.bf16.gmra.mxu0 %v742
        %v2433 = vpop.f32.mrf.mxu0
        %v2434 = vadd.f32 %v2394, %v2433
        %v2435 = vpop.f32.mrf.mxu0
        %v2436 = vpop.f32.mrf.mxu0
        %v2437 = vpop.f32.mrf.mxu0
        %2438 = vdwg.mxu0
        %2439 = vmatprep.subr.bf16.mxu0 0
        %2440 = vmatpush1.bf16.msra.mxu0 %v1910
        %2441 = vmatprep.subr.bf16.mxu0 0
        %2442 = vmatpush1.bf16.msra.mxu0 %v1909
        %2443 = vmatprep.subr.bf16.mxu0 0
        %2444 = vmatpush1.bf16.msra.mxu0 %v1908
        %2445 = vmatprep.subr.bf16.mxu0 0
        %2446 = vmatpush1.bf16.msra.mxu0 %v1907
        %2447 = vmatprep.subr.bf16.mxu0 0
        %2448 = vmatpush1.bf16.msra.mxu0 %v1906
        %2449 = vmatprep.subr.bf16.mxu0 0
        %2450 = vmatpush1.bf16.msra.mxu0 %v1905
        %2451 = vmatprep.subr.bf16.mxu0 0
        %2452 = vmatpush1.bf16.msra.mxu0 %v1904
        %2453 = vmatprep.subr.bf16.mxu0 0
        %2454 = vmatpush1.bf16.msra.mxu0 %v1903
        %2455 = vmatprep.subr.bf16.mxu0 0
        %2456 = vmatpush2.bf16.msra.mxu0 %v1918
        %2457 = vmatprep.subr.bf16.mxu0 0
        %2458 = vmatpush2.bf16.msra.mxu0 %v1917
        %2459 = vmatprep.subr.bf16.mxu0 0
        %2460 = vmatpush2.bf16.msra.mxu0 %v1916
        %2461 = vmatprep.subr.bf16.mxu0 0
        %2462 = vmatpush2.bf16.msra.mxu0 %v1915
        %2463 = vmatprep.subr.bf16.mxu0 0
        %2464 = vmatpush2.bf16.msra.mxu0 %v1914
        %2465 = vmatprep.subr.bf16.mxu0 0
        %2466 = vmatpush2.bf16.msra.mxu0 %v1913
        %2467 = vmatprep.subr.bf16.mxu0 0
        %2468 = vmatpush2.bf16.msra.mxu0 %v1912
        %2469 = vmatprep.subr.bf16.mxu0 0
        %2470 = vmatpush2.bf16.msra.mxu0 %v1911
        %2471 = vmatprep.mubr.bf16.mxu0 %v760
        %2472 = vmatmul.mubr.bf16.gmra.mxu0 %v758
        %v2473 = vpop.f32.mrf.mxu0
        %v2474 = vadd.f32 %v2434, %v2473
        %v2475 = vpop.f32.mrf.mxu0
        %v2476 = vpop.f32.mrf.mxu0
        %v2477 = vpop.f32.mrf.mxu0
        %2478 = vdwg.mxu0
        %2479 = vmatprep.subr.bf16.mxu0 0
        %2480 = vmatpush1.bf16.msra.mxu0 %v1926
        %2481 = vmatprep.subr.bf16.mxu0 0
        %2482 = vmatpush1.bf16.msra.mxu0 %v1925
        %2483 = vmatprep.subr.bf16.mxu0 0
        %2484 = vmatpush1.bf16.msra.mxu0 %v1924
        %2485 = vmatprep.subr.bf16.mxu0 0
        %2486 = vmatpush1.bf16.msra.mxu0 %v1923
        %2487 = vmatprep.subr.bf16.mxu0 0
        %2488 = vmatpush1.bf16.msra.mxu0 %v1922
        %2489 = vmatprep.subr.bf16.mxu0 0
        %2490 = vmatpush1.bf16.msra.mxu0 %v1921
        %2491 = vmatprep.subr.bf16.mxu0 0
        %2492 = vmatpush1.bf16.msra.mxu0 %v1920
        %2493 = vmatprep.subr.bf16.mxu0 0
        %2494 = vmatpush1.bf16.msra.mxu0 %v1919
        %2495 = vmatprep.subr.bf16.mxu0 0
        %2496 = vmatpush2.bf16.msra.mxu0 %v1934
        %2497 = vmatprep.subr.bf16.mxu0 0
        %2498 = vmatpush2.bf16.msra.mxu0 %v1933
        %2499 = vmatprep.subr.bf16.mxu0 0
        %2500 = vmatpush2.bf16.msra.mxu0 %v1932
        %2501 = vmatprep.subr.bf16.mxu0 0
        %2502 = vmatpush2.bf16.msra.mxu0 %v1931
        %2503 = vmatprep.subr.bf16.mxu0 0
        %2504 = vmatpush2.bf16.msra.mxu0 %v1930
        %2505 = vmatprep.subr.bf16.mxu0 0
        %2506 = vmatpush2.bf16.msra.mxu0 %v1929
        %2507 = vmatprep.subr.bf16.mxu0 0
        %2508 = vmatpush2.bf16.msra.mxu0 %v1928
        %2509 = vmatprep.subr.bf16.mxu0 0
        %2510 = vmatpush2.bf16.msra.mxu0 %v1927
        %2511 = vmatprep.mubr.bf16.mxu0 %v798
        %2512 = vmatmul.mubr.bf16.gmra.mxu0 %v784
        %v2513 = vpop.f32.mrf.mxu0
        %v2514 = vadd.f32 %v2474, %v2513
        %v2515 = vpop.f32.mrf.mxu0
        %v2516 = vpop.f32.mrf.mxu0
        %v2517 = vpop.f32.mrf.mxu0
        %2518 = vdwg.mxu0
        %2519 = vmatprep.subr.bf16.mxu0 0
        %2520 = vmatpush1.bf16.msra.mxu0 %v1942
        %2521 = vmatprep.subr.bf16.mxu0 0
        %2522 = vmatpush1.bf16.msra.mxu0 %v1941
        %2523 = vmatprep.subr.bf16.mxu0 0
        %2524 = vmatpush1.bf16.msra.mxu0 %v1940
        %2525 = vmatprep.subr.bf16.mxu0 0
        %2526 = vmatpush1.bf16.msra.mxu0 %v1939
        %2527 = vmatprep.subr.bf16.mxu0 0
        %2528 = vmatpush1.bf16.msra.mxu0 %v1938
        %2529 = vmatprep.subr.bf16.mxu0 0
        %2530 = vmatpush1.bf16.msra.mxu0 %v1937
        %2531 = vmatprep.subr.bf16.mxu0 0
        %2532 = vmatpush1.bf16.msra.mxu0 %v1936
        %2533 = vmatprep.subr.bf16.mxu0 0
        %2534 = vmatpush1.bf16.msra.mxu0 %v1935
        %2535 = vmatprep.subr.bf16.mxu0 0
        %2536 = vmatpush2.bf16.msra.mxu0 %v1950
        %2537 = vmatprep.subr.bf16.mxu0 0
        %2538 = vmatpush2.bf16.msra.mxu0 %v1949
        %2539 = vmatprep.subr.bf16.mxu0 0
        %2540 = vmatpush2.bf16.msra.mxu0 %v1948
        %2541 = vmatprep.subr.bf16.mxu0 0
        %2542 = vmatpush2.bf16.msra.mxu0 %v1947
        %2543 = vmatprep.subr.bf16.mxu0 0
        %2544 = vmatpush2.bf16.msra.mxu0 %v1946
        %2545 = vmatprep.subr.bf16.mxu0 0
        %2546 = vmatpush2.bf16.msra.mxu0 %v1945
        %2547 = vmatprep.subr.bf16.mxu0 0
        %2548 = vmatpush2.bf16.msra.mxu0 %v1944
        %2549 = vmatprep.subr.bf16.mxu0 0
        %2550 = vmatpush2.bf16.msra.mxu0 %v1943
        %2551 = vmatprep.mubr.bf16.mxu0 %v808
        %2552 = vmatmul.mubr.bf16.gmra.mxu0 %v806
        %v2553 = vpop.f32.mrf.mxu0
        %v2554 = vadd.f32 %v2514, %v2553
        %v2555 = vpop.f32.mrf.mxu0
        %v2556 = vpop.f32.mrf.mxu0
        %v2557 = vpop.f32.mrf.mxu0
        %2558 = vdwg.mxu0
        %2559 = vmatprep.subr.bf16.mxu0 0
        %2560 = vmatpush1.bf16.msra.mxu0 %v1958
        %2561 = vmatprep.subr.bf16.mxu0 0
        %2562 = vmatpush1.bf16.msra.mxu0 %v1957
        %2563 = vmatprep.subr.bf16.mxu0 0
        %2564 = vmatpush1.bf16.msra.mxu0 %v1956
        %2565 = vmatprep.subr.bf16.mxu0 0
        %2566 = vmatpush1.bf16.msra.mxu0 %v1955
        %2567 = vmatprep.subr.bf16.mxu0 0
        %2568 = vmatpush1.bf16.msra.mxu0 %v1954
        %2569 = vmatprep.subr.bf16.mxu0 0
        %2570 = vmatpush1.bf16.msra.mxu0 %v1953
        %2571 = vmatprep.subr.bf16.mxu0 0
        %2572 = vmatpush1.bf16.msra.mxu0 %v1952
        %2573 = vmatprep.subr.bf16.mxu0 0
        %2574 = vmatpush1.bf16.msra.mxu0 %v1951
        %2575 = vmatprep.subr.bf16.mxu0 0
        %2576 = vmatpush2.bf16.msra.mxu0 %v1966
        %2577 = vmatprep.subr.bf16.mxu0 0
        %2578 = vmatpush2.bf16.msra.mxu0 %v1965
        %2579 = vmatprep.subr.bf16.mxu0 0
        %2580 = vmatpush2.bf16.msra.mxu0 %v1964
        %2581 = vmatprep.subr.bf16.mxu0 0
        %2582 = vmatpush2.bf16.msra.mxu0 %v1963
        %2583 = vmatprep.subr.bf16.mxu0 0
        %2584 = vmatpush2.bf16.msra.mxu0 %v1962
        %2585 = vmatprep.subr.bf16.mxu0 0
        %2586 = vmatpush2.bf16.msra.mxu0 %v1961
        %2587 = vmatprep.subr.bf16.mxu0 0
        %2588 = vmatpush2.bf16.msra.mxu0 %v1960
        %2589 = vmatprep.subr.bf16.mxu0 0
        %2590 = vmatpush2.bf16.msra.mxu0 %v1959
        %2591 = vmatprep.mubr.bf16.mxu0 %v805
        %2592 = vmatmul.mubr.bf16.gmra.mxu0 %v791
        %v2593 = vpop.f32.mrf.mxu0
        %v2594 = vadd.f32 %v2554, %v2593
        %v2595 = vpop.f32.mrf.mxu0
        %v2596 = vpop.f32.mrf.mxu0
        %v2597 = vpop.f32.mrf.mxu0
        %2598 = vdwg.mxu0
        %2599 = vmatprep.subr.bf16.mxu0 0
        %2600 = vmatpush1.bf16.msra.mxu0 %v1974
        %2601 = vmatprep.subr.bf16.mxu0 0
        %2602 = vmatpush1.bf16.msra.mxu0 %v1973
        %2603 = vmatprep.subr.bf16.mxu0 0
        %2604 = vmatpush1.bf16.msra.mxu0 %v1972
        %2605 = vmatprep.subr.bf16.mxu0 0
        %2606 = vmatpush1.bf16.msra.mxu0 %v1971
        %2607 = vmatprep.subr.bf16.mxu0 0
        %2608 = vmatpush1.bf16.msra.mxu0 %v1970
        %2609 = vmatprep.subr.bf16.mxu0 0
        %2610 = vmatpush1.bf16.msra.mxu0 %v1969
        %2611 = vmatprep.subr.bf16.mxu0 0
        %2612 = vmatpush1.bf16.msra.mxu0 %v1968
        %2613 = vmatprep.subr.bf16.mxu0 0
        %2614 = vmatpush1.bf16.msra.mxu0 %v1967
        %2615 = vmatprep.subr.bf16.mxu0 0
        %2616 = vmatpush2.bf16.msra.mxu0 %v1982
        %2617 = vmatprep.subr.bf16.mxu0 0
        %2618 = vmatpush2.bf16.msra.mxu0 %v1981
        %2619 = vmatprep.subr.bf16.mxu0 0
        %2620 = vmatpush2.bf16.msra.mxu0 %v1980
        %2621 = vmatprep.subr.bf16.mxu0 0
        %2622 = vmatpush2.bf16.msra.mxu0 %v1979
        %2623 = vmatprep.subr.bf16.mxu0 0
        %2624 = vmatpush2.bf16.msra.mxu0 %v1978
        %2625 = vmatprep.subr.bf16.mxu0 0
        %2626 = vmatpush2.bf16.msra.mxu0 %v1977
        %2627 = vmatprep.subr.bf16.mxu0 0
        %2628 = vmatpush2.bf16.msra.mxu0 %v1976
        %2629 = vmatprep.subr.bf16.mxu0 0
        %2630 = vmatpush2.bf16.msra.mxu0 %v1975
        %2631 = vmatprep.mubr.bf16.mxu0 %v809
        %2632 = vmatmul.mubr.bf16.gmra.mxu0 %v807
        %v2633 = vpop.f32.mrf.mxu0
        %v2634 = vadd.f32 %v2594, %v2633
        %v2635 = vpop.f32.mrf.mxu0
        %v2636 = vpop.f32.mrf.mxu0
        %v2637 = vpop.f32.mrf.mxu0
        %2638 = vdwg.mxu0
        %2639 = vmatprep.subr.bf16.mxu0 0
        %2640 = vmatpush1.bf16.msra.mxu0 %v1990
        %2641 = vmatprep.subr.bf16.mxu0 0
        %2642 = vmatpush1.bf16.msra.mxu0 %v1989
        %2643 = vmatprep.subr.bf16.mxu0 0
        %2644 = vmatpush1.bf16.msra.mxu0 %v1988
        %2645 = vmatprep.subr.bf16.mxu0 0
        %2646 = vmatpush1.bf16.msra.mxu0 %v1987
        %2647 = vmatprep.subr.bf16.mxu0 0
        %2648 = vmatpush1.bf16.msra.mxu0 %v1986
        %2649 = vmatprep.subr.bf16.mxu0 0
        %2650 = vmatpush1.bf16.msra.mxu0 %v1985
        %2651 = vmatprep.subr.bf16.mxu0 0
        %2652 = vmatpush1.bf16.msra.mxu0 %v1984
        %2653 = vmatprep.subr.bf16.mxu0 0
        %2654 = vmatpush1.bf16.msra.mxu0 %v1983
        %2655 = vmatprep.subr.bf16.mxu0 0
        %2656 = vmatpush2.bf16.msra.mxu0 %v1998
        %2657 = vmatprep.subr.bf16.mxu0 0
        %2658 = vmatpush2.bf16.msra.mxu0 %v1997
        %2659 = vmatprep.subr.bf16.mxu0 0
        %2660 = vmatpush2.bf16.msra.mxu0 %v1996
        %2661 = vmatprep.subr.bf16.mxu0 0
        %2662 = vmatpush2.bf16.msra.mxu0 %v1995
        %2663 = vmatprep.subr.bf16.mxu0 0
        %2664 = vmatpush2.bf16.msra.mxu0 %v1994
        %2665 = vmatprep.subr.bf16.mxu0 0
        %2666 = vmatpush2.bf16.msra.mxu0 %v1993
        %2667 = vmatprep.subr.bf16.mxu0 0
        %2668 = vmatpush2.bf16.msra.mxu0 %v1992
        %2669 = vmatprep.subr.bf16.mxu0 0
        %2670 = vmatpush2.bf16.msra.mxu0 %v1991
        %2671 = vmatprep.mubr.bf16.mxu0 %v847
        %2672 = vmatmul.mubr.bf16.gmra.mxu0 %v833
        %v2673 = vpop.f32.mrf.mxu0
        %v2674 = vadd.f32 %v2634, %v2673
        %v2675 = vpop.f32.mrf.mxu0
        %v2676 = vpop.f32.mrf.mxu0
        %v2677 = vpop.f32.mrf.mxu0
        %2678 = vdwg.mxu0
        %2679 = vmatprep.subr.bf16.mxu0 0
        %2680 = vmatpush1.bf16.msra.mxu0 %v2006
        %2681 = vmatprep.subr.bf16.mxu0 0
        %2682 = vmatpush1.bf16.msra.mxu0 %v2005
        %2683 = vmatprep.subr.bf16.mxu0 0
        %2684 = vmatpush1.bf16.msra.mxu0 %v2004
        %2685 = vmatprep.subr.bf16.mxu0 0
        %2686 = vmatpush1.bf16.msra.mxu0 %v2003
        %2687 = vmatprep.subr.bf16.mxu0 0
        %2688 = vmatpush1.bf16.msra.mxu0 %v2002
        %2689 = vmatprep.subr.bf16.mxu0 0
        %2690 = vmatpush1.bf16.msra.mxu0 %v2001
        %2691 = vmatprep.subr.bf16.mxu0 0
        %2692 = vmatpush1.bf16.msra.mxu0 %v2000
        %2693 = vmatprep.subr.bf16.mxu0 0
        %2694 = vmatpush1.bf16.msra.mxu0 %v1999
        %2695 = vmatprep.subr.bf16.mxu0 0
        %2696 = vmatpush2.bf16.msra.mxu0 %v2014
        %2697 = vmatprep.subr.bf16.mxu0 0
        %2698 = vmatpush2.bf16.msra.mxu0 %v2013
        %2699 = vmatprep.subr.bf16.mxu0 0
        %2700 = vmatpush2.bf16.msra.mxu0 %v2012
        %2701 = vmatprep.subr.bf16.mxu0 0
        %2702 = vmatpush2.bf16.msra.mxu0 %v2011
        %2703 = vmatprep.subr.bf16.mxu0 0
        %2704 = vmatpush2.bf16.msra.mxu0 %v2010
        %2705 = vmatprep.subr.bf16.mxu0 0
        %2706 = vmatpush2.bf16.msra.mxu0 %v2009
        %2707 = vmatprep.subr.bf16.mxu0 0
        %2708 = vmatpush2.bf16.msra.mxu0 %v2008
        %2709 = vmatprep.subr.bf16.mxu0 0
        %2710 = vmatpush2.bf16.msra.mxu0 %v2007
        %2711 = vmatprep.mubr.bf16.mxu0 %v857
        %2712 = vmatmul.mubr.bf16.gmra.mxu0 %v855
        %v2713 = vpop.f32.mrf.mxu0
        %v2714 = vadd.f32 %v2674, %v2713
        %v2715 = vpop.f32.mrf.mxu0
        %v2716 = vpop.f32.mrf.mxu0
        %v2717 = vpop.f32.mrf.mxu0
        %2718 = vdwg.mxu0
        %2719 = vmatprep.subr.bf16.mxu0 0
        %2720 = vmatpush1.bf16.msra.mxu0 %v2022
        %2721 = vmatprep.subr.bf16.mxu0 0
        %2722 = vmatpush1.bf16.msra.mxu0 %v2021
        %2723 = vmatprep.subr.bf16.mxu0 0
        %2724 = vmatpush1.bf16.msra.mxu0 %v2020
        %2725 = vmatprep.subr.bf16.mxu0 0
        %2726 = vmatpush1.bf16.msra.mxu0 %v2019
        %2727 = vmatprep.subr.bf16.mxu0 0
        %2728 = vmatpush1.bf16.msra.mxu0 %v2018
        %2729 = vmatprep.subr.bf16.mxu0 0
        %2730 = vmatpush1.bf16.msra.mxu0 %v2017
        %2731 = vmatprep.subr.bf16.mxu0 0
        %2732 = vmatpush1.bf16.msra.mxu0 %v2016
        %2733 = vmatprep.subr.bf16.mxu0 0
        %2734 = vmatpush1.bf16.msra.mxu0 %v2015
        %2735 = vmatprep.subr.bf16.mxu0 0
        %2736 = vmatpush2.bf16.msra.mxu0 %v2030
        %2737 = vmatprep.subr.bf16.mxu0 0
        %2738 = vmatpush2.bf16.msra.mxu0 %v2029
        %2739 = vmatprep.subr.bf16.mxu0 0
        %2740 = vmatpush2.bf16.msra.mxu0 %v2028
        %2741 = vmatprep.subr.bf16.mxu0 0
        %2742 = vmatpush2.bf16.msra.mxu0 %v2027
        %2743 = vmatprep.subr.bf16.mxu0 0
        %2744 = vmatpush2.bf16.msra.mxu0 %v2026
        %2745 = vmatprep.subr.bf16.mxu0 0
        %2746 = vmatpush2.bf16.msra.mxu0 %v2025
        %2747 = vmatprep.subr.bf16.mxu0 0
        %2748 = vmatpush2.bf16.msra.mxu0 %v2024
        %2749 = vmatprep.subr.bf16.mxu0 0
        %2750 = vmatpush2.bf16.msra.mxu0 %v2023
        %2751 = vmatprep.mubr.bf16.mxu0 %v854
        %2752 = vmatmul.mubr.bf16.gmra.mxu0 %v840
        %v2753 = vpop.f32.mrf.mxu0
        %v2754 = vadd.f32 %v2714, %v2753
        %v2755 = vpop.f32.mrf.mxu0
        %v2756 = vpop.f32.mrf.mxu0
        %v2757 = vpop.f32.mrf.mxu0
        %2758 = vdwg.mxu0
        %2759 = vmatprep.subr.bf16.mxu0 0
        %2760 = vmatpush1.bf16.msra.mxu0 %v2038
        %2761 = vmatprep.subr.bf16.mxu0 0
        %2762 = vmatpush1.bf16.msra.mxu0 %v2037
        %2763 = vmatprep.subr.bf16.mxu0 0
        %2764 = vmatpush1.bf16.msra.mxu0 %v2036
        %2765 = vmatprep.subr.bf16.mxu0 0
        %2766 = vmatpush1.bf16.msra.mxu0 %v2035
        %2767 = vmatprep.subr.bf16.mxu0 0
        %2768 = vmatpush1.bf16.msra.mxu0 %v2034
        %2769 = vmatprep.subr.bf16.mxu0 0
        %2770 = vmatpush1.bf16.msra.mxu0 %v2033
        %2771 = vmatprep.subr.bf16.mxu0 0
        %2772 = vmatpush1.bf16.msra.mxu0 %v2032
        %2773 = vmatprep.subr.bf16.mxu0 0
        %2774 = vmatpush1.bf16.msra.mxu0 %v2031
        %2775 = vmatprep.subr.bf16.mxu0 0
        %2776 = vmatpush2.bf16.msra.mxu0 %v2046
        %2777 = vmatprep.subr.bf16.mxu0 0
        %2778 = vmatpush2.bf16.msra.mxu0 %v2045
        %2779 = vmatprep.subr.bf16.mxu0 0
        %2780 = vmatpush2.bf16.msra.mxu0 %v2044
        %2781 = vmatprep.subr.bf16.mxu0 0
        %2782 = vmatpush2.bf16.msra.mxu0 %v2043
        %2783 = vmatprep.subr.bf16.mxu0 0
        %2784 = vmatpush2.bf16.msra.mxu0 %v2042
        %2785 = vmatprep.subr.bf16.mxu0 0
        %2786 = vmatpush2.bf16.msra.mxu0 %v2041
        %2787 = vmatprep.subr.bf16.mxu0 0
        %2788 = vmatpush2.bf16.msra.mxu0 %v2040
        %2789 = vmatprep.subr.bf16.mxu0 0
        %2790 = vmatpush2.bf16.msra.mxu0 %v2039
        %2791 = vmatprep.mubr.bf16.mxu0 %v858
        %2792 = vmatmul.mubr.bf16.gmra.mxu0 %v856
        %v2793 = vpop.f32.mrf.mxu0
        %v2794 = vadd.f32 %v2754, %v2793
        %v2795 = vpop.f32.mrf.mxu0
        %v2796 = vpop.f32.mrf.mxu0
        %v2797 = vpop.f32.mrf.mxu0
        %2798 = vdwg.mxu0
        %2799 = vmatprep.subr.bf16.mxu0 0
        %2800 = vmatpush1.bf16.msra.mxu0 %v2054
        %2801 = vmatprep.subr.bf16.mxu0 0
        %2802 = vmatpush1.bf16.msra.mxu0 %v2053
        %2803 = vmatprep.subr.bf16.mxu0 0
        %2804 = vmatpush1.bf16.msra.mxu0 %v2052
        %2805 = vmatprep.subr.bf16.mxu0 0
        %2806 = vmatpush1.bf16.msra.mxu0 %v2051
        %2807 = vmatprep.subr.bf16.mxu0 0
        %2808 = vmatpush1.bf16.msra.mxu0 %v2050
        %2809 = vmatprep.subr.bf16.mxu0 0
        %2810 = vmatpush1.bf16.msra.mxu0 %v2049
        %2811 = vmatprep.subr.bf16.mxu0 0
        %2812 = vmatpush1.bf16.msra.mxu0 %v2048
        %2813 = vmatprep.subr.bf16.mxu0 0
        %2814 = vmatpush1.bf16.msra.mxu0 %v2047
        %2815 = vmatprep.subr.bf16.mxu0 0
        %2816 = vmatpush2.bf16.msra.mxu0 %v2062
        %2817 = vmatprep.subr.bf16.mxu0 0
        %2818 = vmatpush2.bf16.msra.mxu0 %v2061
        %2819 = vmatprep.subr.bf16.mxu0 0
        %2820 = vmatpush2.bf16.msra.mxu0 %v2060
        %2821 = vmatprep.subr.bf16.mxu0 0
        %2822 = vmatpush2.bf16.msra.mxu0 %v2059
        %2823 = vmatprep.subr.bf16.mxu0 0
        %2824 = vmatpush2.bf16.msra.mxu0 %v2058
        %2825 = vmatprep.subr.bf16.mxu0 0
        %2826 = vmatpush2.bf16.msra.mxu0 %v2057
        %2827 = vmatprep.subr.bf16.mxu0 0
        %2828 = vmatpush2.bf16.msra.mxu0 %v2056
        %2829 = vmatprep.subr.bf16.mxu0 0
        %2830 = vmatpush2.bf16.msra.mxu0 %v2055
        %2831 = vmatprep.mubr.bf16.mxu0 %v895
        %2832 = vmatmul.mubr.bf16.gmra.mxu0 %v881
        %v2833 = vpop.f32.mrf.mxu0
        %v2834 = vadd.f32 %v2794, %v2833
        %v2835 = vpop.f32.mrf.mxu0
        %v2836 = vpop.f32.mrf.mxu0
        %v2837 = vpop.f32.mrf.mxu0
        %2838 = vdwg.mxu0
        %2839 = vmatprep.subr.bf16.mxu0 0
        %2840 = vmatpush1.bf16.msra.mxu0 %v2070
        %2841 = vmatprep.subr.bf16.mxu0 0
        %2842 = vmatpush1.bf16.msra.mxu0 %v2069
        %2843 = vmatprep.subr.bf16.mxu0 0
        %2844 = vmatpush1.bf16.msra.mxu0 %v2068
        %2845 = vmatprep.subr.bf16.mxu0 0
        %2846 = vmatpush1.bf16.msra.mxu0 %v2067
        %2847 = vmatprep.subr.bf16.mxu0 0
        %2848 = vmatpush1.bf16.msra.mxu0 %v2066
        %2849 = vmatprep.subr.bf16.mxu0 0
        %2850 = vmatpush1.bf16.msra.mxu0 %v2065
        %2851 = vmatprep.subr.bf16.mxu0 0
        %2852 = vmatpush1.bf16.msra.mxu0 %v2064
        %2853 = vmatprep.subr.bf16.mxu0 0
        %2854 = vmatpush1.bf16.msra.mxu0 %v2063
        %2855 = vmatprep.subr.bf16.mxu0 0
        %2856 = vmatpush2.bf16.msra.mxu0 %v2078
        %2857 = vmatprep.subr.bf16.mxu0 0
        %2858 = vmatpush2.bf16.msra.mxu0 %v2077
        %2859 = vmatprep.subr.bf16.mxu0 0
        %2860 = vmatpush2.bf16.msra.mxu0 %v2076
        %2861 = vmatprep.subr.bf16.mxu0 0
        %2862 = vmatpush2.bf16.msra.mxu0 %v2075
        %2863 = vmatprep.subr.bf16.mxu0 0
        %2864 = vmatpush2.bf16.msra.mxu0 %v2074
        %2865 = vmatprep.subr.bf16.mxu0 0
        %2866 = vmatpush2.bf16.msra.mxu0 %v2073
        %2867 = vmatprep.subr.bf16.mxu0 0
        %2868 = vmatpush2.bf16.msra.mxu0 %v2072
        %2869 = vmatprep.subr.bf16.mxu0 0
        %2870 = vmatpush2.bf16.msra.mxu0 %v2071
        %2871 = vmatprep.mubr.bf16.mxu0 %v897
        %2872 = vmatmul.mubr.bf16.gmra.mxu0 %v896
        %v2873 = vpop.f32.mrf.mxu0
        %v2874 = vadd.f32 %v2834, %v2873
        %v2875 = vpop.f32.mrf.mxu0
        %v2876 = vpop.f32.mrf.mxu0
        %v2877 = vpop.f32.mrf.mxu0
        %2878 = vdwg.mxu0
        %2879 = vmatprep.subr.bf16.mxu0 0
        %2880 = vmatpush1.bf16.msra.mxu0 %v2086
        %2881 = vmatprep.subr.bf16.mxu0 0
        %2882 = vmatpush1.bf16.msra.mxu0 %v2085
        %2883 = vmatprep.subr.bf16.mxu0 0
        %2884 = vmatpush1.bf16.msra.mxu0 %v2084
        %2885 = vmatprep.subr.bf16.mxu0 0
        %2886 = vmatpush1.bf16.msra.mxu0 %v2083
        %2887 = vmatprep.subr.bf16.mxu0 0
        %2888 = vmatpush1.bf16.msra.mxu0 %v2082
        %2889 = vmatprep.subr.bf16.mxu0 0
        %2890 = vmatpush1.bf16.msra.mxu0 %v2081
        %2891 = vmatprep.subr.bf16.mxu0 0
        %2892 = vmatpush1.bf16.msra.mxu0 %v2080
        %2893 = vmatprep.subr.bf16.mxu0 0
        %2894 = vmatpush1.bf16.msra.mxu0 %v2079
        %2895 = vmatprep.subr.bf16.mxu0 0
        %2896 = vmatpush2.bf16.msra.mxu0 0
        %2897 = vmatprep.subr.bf16.mxu0 0
        %2898 = vmatpush2.bf16.msra.mxu0 0
        %2899 = vmatprep.subr.bf16.mxu0 0
        %2900 = vmatpush2.bf16.msra.mxu0 0
        %2901 = vmatprep.subr.bf16.mxu0 0
        %2902 = vmatpush2.bf16.msra.mxu0 0
        %2903 = vmatprep.subr.bf16.mxu0 0
        %2904 = vmatpush2.bf16.msra.mxu0 0
        %2905 = vmatprep.subr.bf16.mxu0 0
        %2906 = vmatpush2.bf16.msra.mxu0 0
        %2907 = vmatprep.subr.bf16.mxu0 0
        %2908 = vmatpush2.bf16.msra.mxu0 0
        %2909 = vmatprep.subr.bf16.mxu0 0
        %2910 = vmatpush2.bf16.msra.mxu0 0
        %2911 = vmatprep.mubr.bf16.mxu0 0
        %2912 = vmatmul.mubr.bf16.gmra.mxu0 %v888
        %v2913 = vpop.f32.mrf.mxu0
        %v2914 = vadd.f32 %v2874, %v2913
        %v2915 = vpop.f32.mrf.mxu0
        %v2916 = vpop.f32.mrf.mxu0
        %v2917 = vpop.f32.mrf.mxu0
        %2918 = vdwg.mxu0
        %v2919 = vadd.f32 %v239, %v2914
        %vm2920 = vcmask 254976
        %2921 = vst.msk [vmem:[#allocation2] sm:$0x3] %vm2920, %v2919
        %p2922 = scmp.eq.s32.totalorder %s17, 4
        // Predicated region
        $region45: #{petnet_forward.7} parent=39 // pred_check
          %p2923 = pneg %p2922
        $region46: #{petnet_forward.7} parent=39 // pred_check_branch
          %2925 = sbr.rel (%p2923) target = $region48
        $region47: #{petnet_forward.7} parent=39 // pred_region
          %v2926 = vld [vmem:[#allocation2] sm:$0x3]
          %v2927 = vld [vmem:[%s2] sm:$0x1]
          %v2929 = vlaneseq
          %v2930 = vshrl.u32 %v2929, 7
          %v2931 = vsub.s32 0, %v2930
          %v2932 = vrot.slane %v2927, %v2931
          %v2934 = vadd.f32 %v2926, %v2932
          %v2935 = vmax.f32 %v2934, 0.0
          %v2936 = vpack.c.bf16 %v2935, %v2935
          %v2937 = vld [vmem:[%s3] sm:$0xf]
          %v2938 = vld [vmem:[%s3 + $0x4] sm:$0xf]
          %v2939 = vld [vmem:[%s3 + $0x8] sm:$0xf]
          %v2940 = vld [vmem:[%s3 + $0xc] sm:$0xf]
          %v2941 = vld [vmem:[%s4] sm:$0x1]
          %v2943 = vlaneseq
          %v2944 = vshrl.u32 %v2943, 7
          %v2945 = vsub.s32 0, %v2944
          %v2946 = vrot.slane %v2941, %v2945
          %v2952 = vunpack.c.l.b16 %v2937
          %v2953 = vunpack.c.l.b16 %v2938
          %v2954 = vunpack.c.l.b16 %v2939
          %v2955 = vunpack.c.l.b16 %v2940
          %v2956 = vpack.c.b16 %v2953, %v2952
          %v2957 = vpack.c.b16 %v2955, %v2954
          %vm2960 = vcmask 261120
          %v2962 = vsel %vm2960, %v2936, 0
          %2964 = vmatprep.subr.bf16.mxu0 0
          %2965 = vmatpush1.bf16.msra.mxu0 0
          %2966 = vmatprep.subr.bf16.mxu0 0
          %2967 = vmatpush1.bf16.msra.mxu0 0
          %2968 = vmatprep.subr.bf16.mxu0 0
          %2969 = vmatpush1.bf16.msra.mxu0 0
          %2970 = vmatprep.subr.bf16.mxu0 0
          %2971 = vmatpush1.bf16.msra.mxu0 0
          %2972 = vmatprep.subr.bf16.mxu0 0
          %2973 = vmatpush1.bf16.msra.mxu0 0
          %2974 = vmatprep.subr.bf16.mxu0 0
          %2975 = vmatpush1.bf16.msra.mxu0 0
          %2976 = vmatprep.subr.bf16.mxu0 0
          %2977 = vmatpush1.bf16.msra.mxu0 %v2957
          %2978 = vmatprep.subr.bf16.mxu0 0
          %2979 = vmatpush1.bf16.msra.mxu0 %v2956
          %2980 = vmatprep.subr.bf16.mxu0 0
          %2981 = vmatpush2.bf16.msra.mxu0 0
          %2982 = vmatprep.subr.bf16.mxu0 0
          %2983 = vmatpush2.bf16.msra.mxu0 0
          %2984 = vmatprep.subr.bf16.mxu0 0
          %2985 = vmatpush2.bf16.msra.mxu0 0
          %2986 = vmatprep.subr.bf16.mxu0 0
          %2987 = vmatpush2.bf16.msra.mxu0 0
          %2988 = vmatprep.subr.bf16.mxu0 0
          %2989 = vmatpush2.bf16.msra.mxu0 0
          %2990 = vmatprep.subr.bf16.mxu0 0
          %2991 = vmatpush2.bf16.msra.mxu0 0
          %2992 = vmatprep.subr.bf16.mxu0 0
          %2993 = vmatpush2.bf16.msra.mxu0 0
          %2994 = vmatprep.subr.bf16.mxu0 0
          %2995 = vmatpush2.bf16.msra.mxu0 0
          %2996 = vmatprep.mubr.bf16.mxu0 0
          %2997 = vmatmul.mubr.bf16.gmra.mxu0 %v2962
          %v2998 = vpop.f32.mrf.mxu0
          %v2999 = vadd.f32 %v2946, %v2998
          %v3000 = vpop.f32.mrf.mxu0
          %v3001 = vpop.f32.mrf.mxu0
          %v3002 = vpop.f32.mrf.mxu0
          %3003 = vdwg.mxu0
          %vm3004 = vcmask 9216
          %3005 = vst.msk [vmem:[#allocation3] sm:$0x3] %vm3004, %v2999
        $region48: #{petnet_forward.7} parent=39 // pred_fallthru
          _
        // Predicated region
        $region49: #{petnet_forward.7} parent=39 // pred_check
          %p3006 = pneg %p145
        $region50: #{petnet_forward.7} parent=39 // pred_check_branch
          %3008 = sbr.rel (%p3006) target = $region52
        $region51: #{petnet_forward.7} parent=39 // pred_region
          %s3010 = ssub.s32 32, 32
          %3011 = vsyncadd [#allocation4], %s3010
          %s3013 = sshll.u32 [#allocation3], 4
          %s3014 = int_to_ptr.vmem [resolvable:$true] %s3013
          %3016 = dma.vmem_to_hbm [thread:$0]  %s3014, 32, %s5, [#allocation4]
        $region52: #{petnet_forward.7} parent=39 // pred_fallthru
          _
        // Predicated region
        $region53: #{petnet_forward.7} parent=39 // pred_check
          %p3017 = pneg %p145
        $region54: #{petnet_forward.7} parent=39 // pred_check_branch
          %3019 = sbr.rel (%p3017) target = $region56
        $region55: #{petnet_forward.7} parent=39 // pred_region
          %3020 = dma.done [#allocation4], 32
        $region56: #{petnet_forward.7} parent=39 // pred_fallthru
          _
      $region40: #{petnet_forward.7} parent=5 // pred_fallthru
        _
      %p3021 = scmp.le.s32.totalorder 2, %s12
      // Predicated region
      $region57: #{petnet_forward.7} parent=5 // pred_check
        %p3022 = pneg %p3021
      $region58: #{petnet_forward.7} parent=5 // pred_check_branch
        %3024 = sbr.rel (%p3022) target = $region60
      $region59: #{petnet_forward.7} parent=5 // pred_region
        %s3025 = ssub.s32 %s12, 2
      $region60: #{petnet_forward.7} parent=5 // pred_fallthru
        _
    $region6: #{petnet_forward.7} parent=1 // loop_footer
      %s16 = sadd.s32 1, %s12
    $region7: #{petnet_forward.7} parent=1 // loop_footer_branch
      %11 = sbr.rel target = $region3
    $region8: #{petnet_forward.7} parent=1 // loop_exit
      _
    %3026 = vsyncpa [#allocation4], 1
    %s3027 = scalar_lea.sflag [#allocation4], 1
    %3028 = vsyncpa %s3027, 1

</llo_original>
